<compile_context>
chip_gen: v6e
topology: v6e:2x2x1
jax: 0.10.0
libtpu: 0.0.40
codegen_flags: <defaults>
</compile_context>

<pallas_src>
import functools

import jax
import jax.numpy as jnp
import numpy as np
from jax.experimental import pallas as pl
from jax.experimental.pallas import tpu as pltpu


# ----------------------------------------------------------------------------
# Fused LayerBlock kernel
# ----------------------------------------------------------------------------

def _layer_block_kernel(feat_ref, d_ref, wa_ref, wc2_ref, vec_ref, iw_ref,
                        d_out_ref, logits_ref, cs_ref, ds_ref,
                        *, head, layer_names, in_eps):
    f32, bf16 = jnp.float32, jnp.bfloat16
    C = feat_ref.shape[1]
    hd = C // head
    L = len(layer_names)

    def mmT(wt, xb):
        # wt: (Cin, Cout) bf16, xb: (Cin, N) bf16 -> (Cout, N), f32 MXU accumulation.
        return jax.lax.dot_general(wt, xb, (((0,), (0,)), ((), ())),
                                   preferred_element_type=f32)

    def col(j, rows):
        # One packed bias/scale column (rows, 1), f32.
        return vec_ref[0:rows, j:j + 1]

    feat = feat_ref[0].astype(f32)          # (C, N)
    d = d_ref[0].astype(f32)                # (C, N)
    d_old = d

    for li, name in enumerate(layer_names):
        emit_scores = (name == "cluster")
        if name == "cluster":
            x1, x2 = feat, d
        elif name == "context":
            x1, x2 = feat, feat
        elif name == "decluster":
            x1, x2 = d, feat
        else:
            raise KeyError(name)

        wa = wa_ref[li]                      # (C, 8C) bf16: [q|k|v|mh|cat1_a|cat1_b]^T
        j0 = 5 * li
        bq = col(j0 + 0, C)
        bkv = col(j0 + 1, 2 * C)
        bmh = col(j0 + 2, C)
        bcat1 = col(j0 + 3, 2 * C)
        bcat2 = col(j0 + 4, C)

        x1b = x1.astype(bf16)
        if name == "context":
            # x1 is x2: one stacked (3C) projection.
            qkv = mmT(wa[:, 0:3 * C], x1b)
            q = qkv[0:C] + bq
            kv = qkv[C:3 * C] + bkv
        else:
            x2b = x2.astype(bf16)
            q = mmT(wa[:, 0:C], x1b) + bq            # 1/sqrt(hd) folded into wq/bq
            kv = mmT(wa[:, C:3 * C], x2b) + bkv
        k, v = kv[0:C], kv[C:2 * C]

        avs = []
        cs_acc = ds_acc = None
        for hh in range(head):
            qh = q[hh * hd:(hh + 1) * hd].astype(bf16)
            kh = k[hh * hd:(hh + 1) * hd].astype(bf16)
            vh = v[hh * hd:(hh + 1) * hd].astype(bf16)
            s = jax.lax.dot_general(qh, kh, (((0,), (0,)), ((), ())),
                                    preferred_element_type=f32)     # (N1, N2)
            # Row softmax (over keys) for the attention output.
            p = jnp.exp(s - jnp.max(s, axis=-1, keepdims=True))
            srow = p * pl.reciprocal(jnp.sum(p, axis=-1, keepdims=True), approx=True)
            avs.append(jax.lax.dot_general(vh, srow.astype(bf16),
                                           (((1,), (1,)), ((), ())),
                                           preferred_element_type=f32))  # (hd, N1)
            if emit_scores:
                # Column softmax only needed for the 'cluster' layer.
                pc = jnp.exp(s - jnp.max(s, axis=0, keepdims=True))
                scol = pc * pl.reciprocal(jnp.sum(pc, axis=0, keepdims=True), approx=True)
                cs_acc = srow if cs_acc is None else cs_acc + srow
                ds_acc = scol if ds_acc is None else ds_acc + scol

        av = jnp.concatenate(avs, axis=0)                            # (C, N1)
        m = mmT(wa[:, 3 * C:4 * C], av.astype(bf16)) + bmh
        # cat1 conv (eval-BN folded) split into two halves: no [x1, m] concat.
        h1 = jnp.maximum(mmT(wa[:, 4 * C:6 * C], x1b)
                         + mmT(wa[:, 6 * C:8 * C], m.astype(bf16)) + bcat1, 0.0)
        h2 = mmT(wc2_ref[li], h1.astype(bf16)) + bcat2
        x1_new = x1 + h2

        if emit_scores:
            inv_h = 1.0 / head
            cs_ref[0] = (cs_acc * inv_h).astype(cs_ref.dtype)                 # (N1, N2)
            ds_ref[0] = jnp.transpose(ds_acc * inv_h).astype(ds_ref.dtype)    # (N2, N1)

        if name == "decluster":
            d = x1_new
        else:
            feat = x1_new

    d_out_ref[0] = d.astype(d_out_ref.dtype)

    # ---- InlinerPredictor on (d - d_old): 4 convs + 3x (IN + eval-BN + ReLU) --
    jb = 5 * L

    def in_bn_relu(t, s, sh):
        mu = jnp.mean(t, axis=-1, keepdims=True)
        var = jnp.mean((t - mu) ** 2, axis=-1, keepdims=True)
        return jnp.maximum((t - mu) * jax.lax.rsqrt(var + in_eps) * s + sh, 0.0)

    x = d - d_old                                                    # (C, N)
    h = in_bn_relu(mmT(iw_ref[0:C, 0:64], x.astype(bf16)) + col(jb + 0, 64),
                   col(jb + 1, 64), col(jb + 2, 64))                 # (64, N)
    h = in_bn_relu(mmT(iw_ref[0:64, 64:80], h.astype(bf16)) + col(jb + 3, 16),
                   col(jb + 4, 16), col(jb + 5, 16))                 # (16, N)
    h = in_bn_relu(mmT(iw_ref[0:16, 80:84], h.astype(bf16)) + col(jb + 6, 4),
                   col(jb + 7, 4), col(jb + 8, 4))                   # (4, N)
    logits = mmT(iw_ref[0:4, 84:85], h.astype(bf16)) + col(jb + 9, 1)  # (1, N)
    logits_ref[0] = logits.astype(logits_ref.dtype)


def layer_block_forward(kparams, xs, d, feat_piece, *, layer_names, head):
    """LayerBlock.forward for logits=None, loss=False, cluster_score=None,
    topk_index_list=[], local=False, decrease_flag=False."""
    del xs  # only consumed by weighted_8points when loss=True
    assert "cluster" in layer_names
    B, C, N = d.shape
    L = len(layer_names)
    NV = 5 * L + 10
    VEC_ROWS = kparams["vecs"].shape[0]
    IW_ROWS, IW_COLS = kparams["inlier_w"].shape

    flops = int(B * L * (20 * C * C * N + 4 * C * N * N)
                + B * 2 * (64 * C + 16 * 64 + 4 * 16 + 1 * 4) * N)
    transcendentals = int(B * (L + 1) * head * N * N)
    bytes_accessed = int(2 * B * C * N * 4
                         + kparams["attn_wa"].size * 2
                         + kparams["attn_wc2"].size * 2
                         + kparams["inlier_w"].size * 2
                         + kparams["vecs"].size * 4
                         + B * C * N * 4 + B * N * 4 + 2 * B * N * N * 4)

    kernel = functools.partial(_layer_block_kernel, head=head,
                               layer_names=tuple(layer_names), in_eps=1e-3)

    d_new, logits, cscore, dscore = pl.pallas_call(
        kernel,
        out_shape=(jax.ShapeDtypeStruct((B, C, N), d.dtype),
                   jax.ShapeDtypeStruct((B, 1, N), d.dtype),
                   jax.ShapeDtypeStruct((B, N, N), jnp.float32),
                   jax.ShapeDtypeStruct((B, N, N), jnp.float32)),
        grid=(B,),
        in_specs=[
            pl.BlockSpec((1, C, N), lambda b: (b, 0, 0)),
            pl.BlockSpec((1, C, N), lambda b: (b, 0, 0)),
            pl.BlockSpec((L, C, 8 * C), lambda b: (0, 0, 0)),
            pl.BlockSpec((L, 2 * C, C), lambda b: (0, 0, 0)),
            pl.BlockSpec((VEC_ROWS, NV), lambda b: (0, 0)),
            pl.BlockSpec((IW_ROWS, IW_COLS), lambda b: (0, 0)),
        ],
        out_specs=(
            pl.BlockSpec((1, C, N), lambda b: (b, 0, 0)),
            pl.BlockSpec((1, 1, N), lambda b: (b, 0, 0)),
            pl.BlockSpec((1, N, N), lambda b: (b, 0, 0)),
            pl.BlockSpec((1, N, N), lambda b: (b, 0, 0)),
        ),
        compiler_params=pltpu.CompilerParams(dimension_semantics=("parallel",)),
        cost_estimate=pl.CostEstimate(flops=flops,
                                      transcendentals=transcendentals,
                                      bytes_accessed=bytes_accessed),
    )(feat_piece, d, kparams["attn_wa"], kparams["attn_wc2"],
      kparams["vecs"], kparams["inlier_w"])

    # TODO(synk): weighted_8points/batch_symeig needs torch.linalg.eigh; only
    # required when loss=True, so e_hat stays None.
    e_hat = None
    topk_index_new = None  # decrease_flag=False
    return d_new, logits[:, 0, :], e_hat, cscore, dscore, topk_index_new


# ----------------------------------------------------------------------------
# Raw parameter init (mirrors the PyTorch module) + kernel-param packing
# (Q/KV stacking, cat1 split, eval-BN & 1/sqrt(hd) folding, bf16 weights).
# ----------------------------------------------------------------------------

def init_conv(key, cout, cin, std=0.05):
    kw, kb = jax.random.split(key)
    return {"w": jax.random.normal(kw, (cout, cin), jnp.float32) * std,
            "b": jax.random.normal(kb, (cout,), jnp.float32) * std}


def _bn_eval(c):
    # BatchNorm1d, eval mode, default params -> scale = 1/sqrt(1+eps), shift = 0.
    return (jnp.full((c, 1), (1.0 + 1e-5) ** -0.5, jnp.float32),
            jnp.zeros((c, 1), jnp.float32))


def init_attention_params(key, c):
    ks = jax.random.split(key, 6)
    scale, shift = _bn_eval(2 * c)
    return {"q": init_conv(ks[0], c, c), "k": init_conv(ks[1], c, c),
            "v": init_conv(ks[2], c, c), "mh": init_conv(ks[3], c, c),
            "cat1": init_conv(ks[4], 2 * c, 2 * c),
            "cat2": init_conv(ks[5], c, 2 * c),
            "bn_scale": scale, "bn_shift": shift}


def init_inlier_params(key, c):
    ks = jax.random.split(key, 4)
    s1, sh1 = _bn_eval(64)
    s2, sh2 = _bn_eval(16)
    s3, sh3 = _bn_eval(4)
    return {"c1": init_conv(ks[0], 64, c), "s1": s1, "sh1": sh1,
            "c2": init_conv(ks[1], 16, 64), "s2": s2, "sh2": sh2,
            "c3": init_conv(ks[2], 4, 16), "s3": s3, "sh3": sh3,
            "c4": init_conv(ks[3], 1, 4)}


def init_layer_block_params(key, c, n_layers):
    ks = jax.random.split(key, n_layers + 1)
    return {"cluster_layers": [init_attention_params(ks[i], c) for i in range(n_layers)],
            "inlier": init_inlier_params(ks[-1], c)}


def prepare_layer_block_params(raw, *, head):
    """Pack raw (PyTorch-layout) params into the fused kernel's operands."""
    C = raw["cluster_layers"][0]["q"]["w"].shape[0]
    hd = C // head
    inv_sqrt_hd = 1.0 / float(np.sqrt(hd))
    VEC_ROWS = max(2 * C, 64)
    IW_ROWS = max(C, 64)

    def colvec(v):
        v = jnp.asarray(v, jnp.float32).reshape(-1)
        return jnp.pad(v, (0, VEC_ROWS - v.shape[0]))

    wa_list, wc2_list, cols = [], [], []
    for p in raw["cluster_layers"]:
        scale = p["bn_scale"].reshape(-1, 1)
        shift = p["bn_shift"].reshape(-1, 1)
        wq = p["q"]["w"] * inv_sqrt_hd                      # fold 1/sqrt(hd)
        bq = p["q"]["b"] * inv_sqrt_hd
        wcat1 = p["cat1"]["w"] * scale                      # fold eval-BN
        bcat1 = p["cat1"]["b"].reshape(-1, 1) * scale + shift
        # Transposed & lane-packed: (Cin=C, [q|k|v|mh|cat1_a|cat1_b]) -> (C, 8C)
        wa = jnp.concatenate([wq.T, p["k"]["w"].T, p["v"]["w"].T, p["mh"]["w"].T,
                              wcat1[:, :C].T, wcat1[:, C:].T], axis=1)
        wa_list.append(wa)
        wc2_list.append(p["cat2"]["w"].T)                   # (2C, C)
        cols += [colvec(bq),
                 colvec(jnp.concatenate([p["k"]["b"], p["v"]["b"]])),
                 colvec(p["mh"]["b"]),
                 colvec(bcat1),
                 colvec(p["cat2"]["b"])]

    ip = raw["inlier"]

    def padrows(wt):
        return jnp.pad(wt, ((0, IW_ROWS - wt.shape[0]), (0, 0)))

    inlier_w = jnp.concatenate(
        [padrows(ip["c1"]["w"].T),     # (C, 64)
         padrows(ip["c2"]["w"].T),     # (64, 16)
         padrows(ip["c3"]["w"].T),     # (16, 4)
         padrows(ip["c4"]["w"].T)],    # (4, 1)
        axis=1)                        # (IW_ROWS, 85)
    cols += [colvec(ip["c1"]["b"]), colvec(ip["s1"]), colvec(ip["sh1"]),
             colvec(ip["c2"]["b"]), colvec(ip["s2"]), colvec(ip["sh2"]),
             colvec(ip["c3"]["b"]), colvec(ip["s3"]), colvec(ip["sh3"]),
             colvec(ip["c4"]["b"])]

    return {"attn_wa": jnp.stack(wa_list).astype(jnp.bfloat16),     # (L, C, 8C)
            "attn_wc2": jnp.stack(wc2_list).astype(jnp.bfloat16),   # (L, 2C, C)
            "vecs": jnp.stack(cols, axis=1),                        # (VEC_ROWS, 5L+10) f32
            "inlier_w": inlier_w.astype(jnp.bfloat16)}              # (IW_ROWS, 85)


# ----------------------------------------------------------------------------
# Pure-JAX reference (from the RAW, un-folded f32 parameters) for correctness
# ----------------------------------------------------------------------------

def _conv_ref(x, w, b):
    return jnp.einsum("oc,bcn->bon", w, x) + b[None, :, None]


def attention_propagation_ref(p, x1, x2, head, local=False):
    B, C, N1 = x1.shape
    hd = C // head
    q = _conv_ref(x1, p["q"]["w"], p["q"]["b"]).reshape(B, head, hd, N1)
    k = _conv_ref(x2, p["k"]["w"], p["k"]["b"]).reshape(B, head, hd, -1)
    v = _conv_ref(x2, p["v"]["w"], p["v"]["b"]).reshape(B, head, hd, -1)
    s = jnp.einsum("bhdn,bhdm->bhnm", q, k) / (hd ** 0.5)
    srow = jax.nn.softmax(s, axis=-1)
    av = jnp.einsum("bhnm,bhdm->bhdn", srow, v).reshape(B, C, N1)
    av = _conv_ref(av, p["mh"]["w"], p["mh"]["b"])
    cat = jnp.concatenate([x1, av], axis=1)
    h = _conv_ref(cat, p["cat1"]["w"], p["cat1"]["b"])
    h = jnp.maximum(h * p["bn_scale"][None] + p["bn_shift"][None], 0.0)
    h = _conv_ref(h, p["cat2"]["w"], p["cat2"]["b"])
    x1_new = x1 + h
    if local:
        scol = jax.nn.softmax(s, axis=-2)
        cluster_score = jnp.mean(srow, axis=1)
        decluster_score = jnp.transpose(jnp.mean(scol, axis=1), (0, 2, 1))
        return x1_new, cluster_score, decluster_score
    return x1_new


def inlier_predictor_ref(p, x):
    def in_bn_relu(t, s, sh):
        mu = jnp.mean(t, axis=-1, keepdims=True)
        var = jnp.mean((t - mu) ** 2, axis=-1, keepdims=True)
        tn = (t - mu) / jnp.sqrt(var + 1e-3)
        return jnp.maximum(tn * s[None] + sh[None], 0.0)
    h = in_bn_relu(_conv_ref(x, p["c1"]["w"], p["c1"]["b"]), p["s1"], p["sh1"])
    h = in_bn_relu(_conv_ref(h, p["c2"]["w"], p["c2"]["b"]), p["s2"], p["sh2"])
    h = in_bn_relu(_conv_ref(h, p["c3"]["w"], p["c3"]["b"]), p["s3"], p["sh3"])
    return _conv_ref(h, p["c4"]["w"], p["c4"]["b"])


def layer_block_ref(raw, xs, d, feat_piece, *, layer_names, head):
    del xs
    d_old = d
    cs = ds = None
    for p, name in zip(raw["cluster_layers"], layer_names):
        if name == "cluster":
            feat_piece, cs, ds = attention_propagation_ref(p, feat_piece, d, head, local=True)
        elif name == "context":
            feat_piece = attention_propagation_ref(p, feat_piece, feat_piece, head)
        elif name == "decluster":
            d = attention_propagation_ref(p, d, feat_piece, head)
        else:
            raise KeyError(name)
    logits = inlier_predictor_ref(raw["inlier"], d - d_old)[:, 0, :]
    return d, logits, None, cs, ds, None


# ----------------------------------------------------------------------------

if __name__ == "__main__":
    B, C, N, HEAD = 2, 32, 128, 4
    LAYER_NAMES = ("cluster", "context", "decluster")

    key = jax.random.PRNGKey(0)
    k_d, k_f, k_x, k_p = jax.random.split(key, 4)
    d = jax.random.normal(k_d, (B, C, N), jnp.float32)
    feat_piece = jax.random.normal(k_f, (B, C, N), jnp.float32)
    xs = jax.random.normal(k_x, (B, 1, N, 4), jnp.float32)  # unused (loss=False)

    raw_params = init_layer_block_params(k_p, C, len(LAYER_NAMES))
    kparams = prepare_layer_block_params(raw_params, head=HEAD)

    fwd = jax.jit(functools.partial(layer_block_forward,
                                    layer_names=LAYER_NAMES, head=HEAD))
    d_out, logits, e_hat, cscore, dcscore, topk = fwd(kparams, xs, d, feat_piece)
    jax.block_until_ready((d_out, logits, cscore, dcscore))

    # Pure-JAX reference check from raw params (validates fusion, BN/scale
    # folding, weight packing and the bf16/approx-reciprocal fast paths).
    ref_fn = jax.jit(functools.partial(layer_block_ref,
                                       layer_names=LAYER_NAMES, head=HEAD))
    d_r, l_r, _, cs_r, dcs_r, _ = ref_fn(raw_params, xs, d, feat_piece)
    jax.block_until_ready((d_r, l_r, cs_r, dcs_r))
    for got, ref in ((d_out, d_r), (logits, l_r), (cscore, cs_r), (dcscore, dcs_r)):
        np.testing.assert_allclose(np.asarray(got), np.asarray(ref),
                                   rtol=5e-2, atol=5e-2)

    assert d_out.shape == (B, C, N)
    assert logits.shape == (B, N)
    assert cscore.shape == (B, N, N) and dcscore.shape == (B, N, N)
    assert e_hat is None and topk is None
    print("KERNEL_OK")
</pallas_src>

<mosaic_0001>
module attributes {stable_mosaic.version = 11 : i64} {
  func.func @_layer_block_kernel(%arg0: i32, %arg1: memref<1x32x128xf32, #tpu.memory_space<vmem>>, %arg2: memref<1x32x128xf32, #tpu.memory_space<vmem>>, %arg3: memref<3x32x256xbf16, #tpu.memory_space<vmem>>, %arg4: memref<3x64x32xbf16, #tpu.memory_space<vmem>>, %arg5: memref<64x25xf32, #tpu.memory_space<vmem>>, %arg6: memref<64x85xbf16, #tpu.memory_space<vmem>>, %arg7: memref<1x32x128xf32, #tpu.memory_space<vmem>>, %arg8: memref<1x1x128xf32, #tpu.memory_space<vmem>>, %arg9: memref<1x128x128xf32, #tpu.memory_space<vmem>>, %arg10: memref<1x128x128xf32, #tpu.memory_space<vmem>>) attributes {dimension_semantics = [#tpu.dimension_semantics<parallel>], iteration_bounds = array<i64: 2>, scalar_prefetch = 0 : i64, scratch_operands = 0 : i64, tpu.core_type = #tpu.core_type<tc>, window_params = [{transform_indices = @transform_0, window_bounds = array<i64: 1, 32, 128>}, {transform_indices = @transform_1, window_bounds = array<i64: 1, 32, 128>}, {pipeline_mode = #tpu.pipeline_mode<synchronous>, transform_indices = @transform_2, window_bounds = array<i64: 3, 32, 256>}, {pipeline_mode = #tpu.pipeline_mode<synchronous>, transform_indices = @transform_3, window_bounds = array<i64: 3, 64, 32>}, {pipeline_mode = #tpu.pipeline_mode<synchronous>, transform_indices = @transform_4, window_bounds = array<i64: 64, 25>}, {pipeline_mode = #tpu.pipeline_mode<synchronous>, transform_indices = @transform_5, window_bounds = array<i64: 64, 85>}, {transform_indices = @transform_6, window_bounds = array<i64: 1, 32, 128>}, {transform_indices = @transform_7, window_bounds = array<i64: 1, 1, 128>}, {transform_indices = @transform_8, window_bounds = array<i64: 1, 128, 128>}, {transform_indices = @transform_9, window_bounds = array<i64: 1, 128, 128>}]} {
    %c0 = arith.constant 0 : index
    %c0_0 = arith.constant 0 : index
    %c0_1 = arith.constant 0 : index
    %0 = vector.load %arg1[%c0, %c0_0, %c0_1] : memref<1x32x128xf32, #tpu.memory_space<vmem>>, vector<1x32x128xf32>
    %1 = vector.shape_cast %0 : vector<1x32x128xf32> to vector<32x128xf32>
    %c0_2 = arith.constant 0 : index
    %c0_3 = arith.constant 0 : index
    %c0_4 = arith.constant 0 : index
    %2 = vector.load %arg2[%c0_2, %c0_3, %c0_4] : memref<1x32x128xf32, #tpu.memory_space<vmem>>, vector<1x32x128xf32>
    %3 = vector.shape_cast %2 : vector<1x32x128xf32> to vector<32x128xf32>
    %c0_5 = arith.constant 0 : index
    %c0_6 = arith.constant 0 : index
    %c0_7 = arith.constant 0 : index
    %4 = vector.load %arg3[%c0_5, %c0_6, %c0_7] : memref<3x32x256xbf16, #tpu.memory_space<vmem>>, vector<1x32x256xbf16>
    %5 = vector.shape_cast %4 : vector<1x32x256xbf16> to vector<32x256xbf16>
    %c0_8 = arith.constant 0 : index
    %c0_9 = arith.constant 0 : index
    %6 = vector.load %arg5[%c0_8, %c0_9] : memref<64x25xf32, #tpu.memory_space<vmem>>, vector<32x1xf32>
    %c0_10 = arith.constant 0 : index
    %c1 = arith.constant 1 : index
    %7 = vector.load %arg5[%c0_10, %c1] : memref<64x25xf32, #tpu.memory_space<vmem>>, vector<64x1xf32>
    %c0_11 = arith.constant 0 : index
    %c2 = arith.constant 2 : index
    %8 = vector.load %arg5[%c0_11, %c2] : memref<64x25xf32, #tpu.memory_space<vmem>>, vector<32x1xf32>
    %c0_12 = arith.constant 0 : index
    %c3 = arith.constant 3 : index
    %9 = vector.load %arg5[%c0_12, %c3] : memref<64x25xf32, #tpu.memory_space<vmem>>, vector<64x1xf32>
    %c0_13 = arith.constant 0 : index
    %c4 = arith.constant 4 : index
    %10 = vector.load %arg5[%c0_13, %c4] : memref<64x25xf32, #tpu.memory_space<vmem>>, vector<32x1xf32>
    %11 = arith.truncf %1 : vector<32x128xf32> to vector<32x128xbf16>
    %12 = arith.truncf %3 : vector<32x128xf32> to vector<32x128xbf16>
    %13 = vector.extract_strided_slice %5 {offsets = [0, 0], sizes = [32, 32], strides = [1, 1]} : vector<32x256xbf16> to vector<32x32xbf16>
    %cst = arith.constant dense<0.000000e+00> : vector<32x128xf32>
    %14 = tpu.matmul %13, %11, %cst {dimension_numbers = #tpu.dot_dimension_numbers<[0], [0], [1], [1], [0, 1, 1, 1], [], []>} : vector<32x32xbf16>, vector<32x128xbf16>, vector<32x128xf32> -> vector<32x128xf32>
    %15 = vector.broadcast %6 : vector<32x1xf32> to vector<32x128xf32>
    %16 = arith.addf %14, %15 : vector<32x128xf32>
    %17 = vector.extract_strided_slice %5 {offsets = [0, 32], sizes = [32, 64], strides = [1, 1]} : vector<32x256xbf16> to vector<32x64xbf16>
    %cst_14 = arith.constant dense<0.000000e+00> : vector<64x128xf32>
    %18 = tpu.matmul %17, %12, %cst_14 {dimension_numbers = #tpu.dot_dimension_numbers<[0], [0], [1], [1], [0, 1, 1, 1], [], []>} : vector<32x64xbf16>, vector<32x128xbf16>, vector<64x128xf32> -> vector<64x128xf32>
    %19 = vector.broadcast %7 : vector<64x1xf32> to vector<64x128xf32>
    %20 = arith.addf %18, %19 : vector<64x128xf32>
    %21 = vector.extract_strided_slice %20 {offsets = [0, 0], sizes = [32, 128], strides = [1, 1]} : vector<64x128xf32> to vector<32x128xf32>
    %22 = vector.extract_strided_slice %20 {offsets = [32, 0], sizes = [32, 128], strides = [1, 1]} : vector<64x128xf32> to vector<32x128xf32>
    %23 = vector.extract_strided_slice %16 {offsets = [0, 0], sizes = [8, 128], strides = [1, 1]} : vector<32x128xf32> to vector<8x128xf32>
    %24 = arith.truncf %23 : vector<8x128xf32> to vector<8x128xbf16>
    %25 = vector.extract_strided_slice %21 {offsets = [0, 0], sizes = [8, 128], strides = [1, 1]} : vector<32x128xf32> to vector<8x128xf32>
    %26 = arith.truncf %25 : vector<8x128xf32> to vector<8x128xbf16>
    %27 = vector.extract_strided_slice %22 {offsets = [0, 0], sizes = [8, 128], strides = [1, 1]} : vector<32x128xf32> to vector<8x128xf32>
    %28 = arith.truncf %27 : vector<8x128xf32> to vector<8x128xbf16>
    %cst_15 = arith.constant dense<0.000000e+00> : vector<128x128xf32>
    %29 = tpu.matmul %24, %26, %cst_15 {dimension_numbers = #tpu.dot_dimension_numbers<[0], [0], [1], [1], [0, 1, 1, 1], [], []>} : vector<8x128xbf16>, vector<8x128xbf16>, vector<128x128xf32> -> vector<128x128xf32>
    %cst_16 = arith.constant dense<0xFF800000> : vector<128xf32>
    %30 = vector.multi_reduction <maximumf>, %29, %cst_16 [1] : vector<128x128xf32> to vector<128xf32>
    %31 = vector.shape_cast %30 : vector<128xf32> to vector<128x1xf32>
    %32 = vector.broadcast %31 : vector<128x1xf32> to vector<128x128xf32>
    %33 = arith.subf %29, %32 : vector<128x128xf32>
    %34 = math.exp %33 : vector<128x128xf32>
    %cst_17 = arith.constant dense<0.000000e+00> : vector<128xf32>
    %35 = vector.multi_reduction <add>, %34, %cst_17 [1] : vector<128x128xf32> to vector<128xf32>
    %36 = vector.shape_cast %35 : vector<128xf32> to vector<128x1xf32>
    %37 = tpu.reciprocal %36 {approx = true} : vector<128x1xf32> -> vector<128x1xf32>
    %38 = vector.broadcast %37 : vector<128x1xf32> to vector<128x128xf32>
    %39 = arith.mulf %34, %38 : vector<128x128xf32>
    %40 = arith.truncf %39 : vector<128x128xf32> to vector<128x128xbf16>
    %cst_18 = arith.constant dense<0.000000e+00> : vector<8x128xf32>
    %41 = tpu.matmul %28, %40, %cst_18 {dimension_numbers = #tpu.dot_dimension_numbers<[1], [1], [0], [0], [0, 0, 1, 0], [], []>} : vector<8x128xbf16>, vector<128x128xbf16>, vector<8x128xf32> -> vector<8x128xf32>
    %cst_19 = arith.constant dense<0xFF800000> : vector<128xf32>
    %42 = vector.multi_reduction <maximumf>, %29, %cst_19 [0] : vector<128x128xf32> to vector<128xf32>
    %43 = vector.shape_cast %42 : vector<128xf32> to vector<1x128xf32>
    %44 = vector.broadcast %43 : vector<1x128xf32> to vector<128x128xf32>
    %45 = arith.subf %29, %44 : vector<128x128xf32>
    %46 = math.exp %45 : vector<128x128xf32>
    %cst_20 = arith.constant dense<0.000000e+00> : vector<128xf32>
    %47 = vector.multi_reduction <add>, %46, %cst_20 [0] : vector<128x128xf32> to vector<128xf32>
    %48 = vector.shape_cast %47 : vector<128xf32> to vector<1x128xf32>
    %49 = tpu.reciprocal %48 {approx = true} : vector<1x128xf32> -> vector<1x128xf32>
    %50 = vector.broadcast %49 : vector<1x128xf32> to vector<128x128xf32>
    %51 = arith.mulf %46, %50 : vector<128x128xf32>
    %52 = vector.extract_strided_slice %16 {offsets = [8, 0], sizes = [8, 128], strides = [1, 1]} : vector<32x128xf32> to vector<8x128xf32>
    %53 = arith.truncf %52 : vector<8x128xf32> to vector<8x128xbf16>
    %54 = vector.extract_strided_slice %21 {offsets = [8, 0], sizes = [8, 128], strides = [1, 1]} : vector<32x128xf32> to vector<8x128xf32>
    %55 = arith.truncf %54 : vector<8x128xf32> to vector<8x128xbf16>
    %56 = vector.extract_strided_slice %22 {offsets = [8, 0], sizes = [8, 128], strides = [1, 1]} : vector<32x128xf32> to vector<8x128xf32>
    %57 = arith.truncf %56 : vector<8x128xf32> to vector<8x128xbf16>
    %cst_21 = arith.constant dense<0.000000e+00> : vector<128x128xf32>
    %58 = tpu.matmul %53, %55, %cst_21 {dimension_numbers = #tpu.dot_dimension_numbers<[0], [0], [1], [1], [0, 1, 1, 1], [], []>} : vector<8x128xbf16>, vector<8x128xbf16>, vector<128x128xf32> -> vector<128x128xf32>
    %cst_22 = arith.constant dense<0xFF800000> : vector<128xf32>
    %59 = vector.multi_reduction <maximumf>, %58, %cst_22 [1] : vector<128x128xf32> to vector<128xf32>
    %60 = vector.shape_cast %59 : vector<128xf32> to vector<128x1xf32>
    %61 = vector.broadcast %60 : vector<128x1xf32> to vector<128x128xf32>
    %62 = arith.subf %58, %61 : vector<128x128xf32>
    %63 = math.exp %62 : vector<128x128xf32>
    %cst_23 = arith.constant dense<0.000000e+00> : vector<128xf32>
    %64 = vector.multi_reduction <add>, %63, %cst_23 [1] : vector<128x128xf32> to vector<128xf32>
    %65 = vector.shape_cast %64 : vector<128xf32> to vector<128x1xf32>
    %66 = tpu.reciprocal %65 {approx = true} : vector<128x1xf32> -> vector<128x1xf32>
    %67 = vector.broadcast %66 : vector<128x1xf32> to vector<128x128xf32>
    %68 = arith.mulf %63, %67 : vector<128x128xf32>
    %69 = arith.truncf %68 : vector<128x128xf32> to vector<128x128xbf16>
    %cst_24 = arith.constant dense<0.000000e+00> : vector<8x128xf32>
    %70 = tpu.matmul %57, %69, %cst_24 {dimension_numbers = #tpu.dot_dimension_numbers<[1], [1], [0], [0], [0, 0, 1, 0], [], []>} : vector<8x128xbf16>, vector<128x128xbf16>, vector<8x128xf32> -> vector<8x128xf32>
    %cst_25 = arith.constant dense<0xFF800000> : vector<128xf32>
    %71 = vector.multi_reduction <maximumf>, %58, %cst_25 [0] : vector<128x128xf32> to vector<128xf32>
    %72 = vector.shape_cast %71 : vector<128xf32> to vector<1x128xf32>
    %73 = vector.broadcast %72 : vector<1x128xf32> to vector<128x128xf32>
    %74 = arith.subf %58, %73 : vector<128x128xf32>
    %75 = math.exp %74 : vector<128x128xf32>
    %cst_26 = arith.constant dense<0.000000e+00> : vector<128xf32>
    %76 = vector.multi_reduction <add>, %75, %cst_26 [0] : vector<128x128xf32> to vector<128xf32>
    %77 = vector.shape_cast %76 : vector<128xf32> to vector<1x128xf32>
    %78 = tpu.reciprocal %77 {approx = true} : vector<1x128xf32> -> vector<1x128xf32>
    %79 = vector.broadcast %78 : vector<1x128xf32> to vector<128x128xf32>
    %80 = arith.mulf %75, %79 : vector<128x128xf32>
    %81 = arith.addf %39, %68 : vector<128x128xf32>
    %82 = arith.addf %51, %80 : vector<128x128xf32>
    %83 = vector.extract_strided_slice %16 {offsets = [16, 0], sizes = [8, 128], strides = [1, 1]} : vector<32x128xf32> to vector<8x128xf32>
    %84 = arith.truncf %83 : vector<8x128xf32> to vector<8x128xbf16>
    %85 = vector.extract_strided_slice %21 {offsets = [16, 0], sizes = [8, 128], strides = [1, 1]} : vector<32x128xf32> to vector<8x128xf32>
    %86 = arith.truncf %85 : vector<8x128xf32> to vector<8x128xbf16>
    %87 = vector.extract_strided_slice %22 {offsets = [16, 0], sizes = [8, 128], strides = [1, 1]} : vector<32x128xf32> to vector<8x128xf32>
    %88 = arith.truncf %87 : vector<8x128xf32> to vector<8x128xbf16>
    %cst_27 = arith.constant dense<0.000000e+00> : vector<128x128xf32>
    %89 = tpu.matmul %84, %86, %cst_27 {dimension_numbers = #tpu.dot_dimension_numbers<[0], [0], [1], [1], [0, 1, 1, 1], [], []>} : vector<8x128xbf16>, vector<8x128xbf16>, vector<128x128xf32> -> vector<128x128xf32>
    %cst_28 = arith.constant dense<0xFF800000> : vector<128xf32>
    %90 = vector.multi_reduction <maximumf>, %89, %cst_28 [1] : vector<128x128xf32> to vector<128xf32>
    %91 = vector.shape_cast %90 : vector<128xf32> to vector<128x1xf32>
    %92 = vector.broadcast %91 : vector<128x1xf32> to vector<128x128xf32>
    %93 = arith.subf %89, %92 : vector<128x128xf32>
    %94 = math.exp %93 : vector<128x128xf32>
    %cst_29 = arith.constant dense<0.000000e+00> : vector<128xf32>
    %95 = vector.multi_reduction <add>, %94, %cst_29 [1] : vector<128x128xf32> to vector<128xf32>
    %96 = vector.shape_cast %95 : vector<128xf32> to vector<128x1xf32>
    %97 = tpu.reciprocal %96 {approx = true} : vector<128x1xf32> -> vector<128x1xf32>
    %98 = vector.broadcast %97 : vector<128x1xf32> to vector<128x128xf32>
    %99 = arith.mulf %94, %98 : vector<128x128xf32>
    %100 = arith.truncf %99 : vector<128x128xf32> to vector<128x128xbf16>
    %cst_30 = arith.constant dense<0.000000e+00> : vector<8x128xf32>
    %101 = tpu.matmul %88, %100, %cst_30 {dimension_numbers = #tpu.dot_dimension_numbers<[1], [1], [0], [0], [0, 0, 1, 0], [], []>} : vector<8x128xbf16>, vector<128x128xbf16>, vector<8x128xf32> -> vector<8x128xf32>
    %cst_31 = arith.constant dense<0xFF800000> : vector<128xf32>
    %102 = vector.multi_reduction <maximumf>, %89, %cst_31 [0] : vector<128x128xf32> to vector<128xf32>
    %103 = vector.shape_cast %102 : vector<128xf32> to vector<1x128xf32>
    %104 = vector.broadcast %103 : vector<1x128xf32> to vector<128x128xf32>
    %105 = arith.subf %89, %104 : vector<128x128xf32>
    %106 = math.exp %105 : vector<128x128xf32>
    %cst_32 = arith.constant dense<0.000000e+00> : vector<128xf32>
    %107 = vector.multi_reduction <add>, %106, %cst_32 [0] : vector<128x128xf32> to vector<128xf32>
    %108 = vector.shape_cast %107 : vector<128xf32> to vector<1x128xf32>
    %109 = tpu.reciprocal %108 {approx = true} : vector<1x128xf32> -> vector<1x128xf32>
    %110 = vector.broadcast %109 : vector<1x128xf32> to vector<128x128xf32>
    %111 = arith.mulf %106, %110 : vector<128x128xf32>
    %112 = arith.addf %81, %99 : vector<128x128xf32>
    %113 = arith.addf %82, %111 : vector<128x128xf32>
    %114 = vector.extract_strided_slice %16 {offsets = [24, 0], sizes = [8, 128], strides = [1, 1]} : vector<32x128xf32> to vector<8x128xf32>
    %115 = arith.truncf %114 : vector<8x128xf32> to vector<8x128xbf16>
    %116 = vector.extract_strided_slice %21 {offsets = [24, 0], sizes = [8, 128], strides = [1, 1]} : vector<32x128xf32> to vector<8x128xf32>
    %117 = arith.truncf %116 : vector<8x128xf32> to vector<8x128xbf16>
    %118 = vector.extract_strided_slice %22 {offsets = [24, 0], sizes = [8, 128], strides = [1, 1]} : vector<32x128xf32> to vector<8x128xf32>
    %119 = arith.truncf %118 : vector<8x128xf32> to vector<8x128xbf16>
    %cst_33 = arith.constant dense<0.000000e+00> : vector<128x128xf32>
    %120 = tpu.matmul %115, %117, %cst_33 {dimension_numbers = #tpu.dot_dimension_numbers<[0], [0], [1], [1], [0, 1, 1, 1], [], []>} : vector<8x128xbf16>, vector<8x128xbf16>, vector<128x128xf32> -> vector<128x128xf32>
    %cst_34 = arith.constant dense<0xFF800000> : vector<128xf32>
    %121 = vector.multi_reduction <maximumf>, %120, %cst_34 [1] : vector<128x128xf32> to vector<128xf32>
    %122 = vector.shape_cast %121 : vector<128xf32> to vector<128x1xf32>
    %123 = vector.broadcast %122 : vector<128x1xf32> to vector<128x128xf32>
    %124 = arith.subf %120, %123 : vector<128x128xf32>
    %125 = math.exp %124 : vector<128x128xf32>
    %cst_35 = arith.constant dense<0.000000e+00> : vector<128xf32>
    %126 = vector.multi_reduction <add>, %125, %cst_35 [1] : vector<128x128xf32> to vector<128xf32>
    %127 = vector.shape_cast %126 : vector<128xf32> to vector<128x1xf32>
    %128 = tpu.reciprocal %127 {approx = true} : vector<128x1xf32> -> vector<128x1xf32>
    %129 = vector.broadcast %128 : vector<128x1xf32> to vector<128x128xf32>
    %130 = arith.mulf %125, %129 : vector<128x128xf32>
    %131 = arith.truncf %130 : vector<128x128xf32> to vector<128x128xbf16>
    %cst_36 = arith.constant dense<0.000000e+00> : vector<8x128xf32>
    %132 = tpu.matmul %119, %131, %cst_36 {dimension_numbers = #tpu.dot_dimension_numbers<[1], [1], [0], [0], [0, 0, 1, 0], [], []>} : vector<8x128xbf16>, vector<128x128xbf16>, vector<8x128xf32> -> vector<8x128xf32>
    %cst_37 = arith.constant dense<0xFF800000> : vector<128xf32>
    %133 = vector.multi_reduction <maximumf>, %120, %cst_37 [0] : vector<128x128xf32> to vector<128xf32>
    %134 = vector.shape_cast %133 : vector<128xf32> to vector<1x128xf32>
    %135 = vector.broadcast %134 : vector<1x128xf32> to vector<128x128xf32>
    %136 = arith.subf %120, %135 : vector<128x128xf32>
    %137 = math.exp %136 : vector<128x128xf32>
    %cst_38 = arith.constant dense<0.000000e+00> : vector<128xf32>
    %138 = vector.multi_reduction <add>, %137, %cst_38 [0] : vector<128x128xf32> to vector<128xf32>
    %139 = vector.shape_cast %138 : vector<128xf32> to vector<1x128xf32>
    %140 = tpu.reciprocal %139 {approx = true} : vector<1x128xf32> -> vector<1x128xf32>
    %141 = vector.broadcast %140 : vector<1x128xf32> to vector<128x128xf32>
    %142 = arith.mulf %137, %141 : vector<128x128xf32>
    %143 = arith.addf %112, %130 : vector<128x128xf32>
    %144 = arith.addf %113, %142 : vector<128x128xf32>
    %145 = tpu.concatenate %41, %70, %101, %132 in 0 : vector<8x128xf32>, vector<8x128xf32>, vector<8x128xf32>, vector<8x128xf32> -> vector<32x128xf32>
    %146 = vector.extract_strided_slice %5 {offsets = [0, 96], sizes = [32, 32], strides = [1, 1]} : vector<32x256xbf16> to vector<32x32xbf16>
    %147 = arith.truncf %145 : vector<32x128xf32> to vector<32x128xbf16>
    %cst_39 = arith.constant dense<0.000000e+00> : vector<32x128xf32>
    %148 = tpu.matmul %146, %147, %cst_39 {dimension_numbers = #tpu.dot_dimension_numbers<[0], [0], [1], [1], [0, 1, 1, 1], [], []>} : vector<32x32xbf16>, vector<32x128xbf16>, vector<32x128xf32> -> vector<32x128xf32>
    %149 = vector.broadcast %8 : vector<32x1xf32> to vector<32x128xf32>
    %150 = arith.addf %148, %149 : vector<32x128xf32>
    %151 = vector.extract_strided_slice %5 {offsets = [0, 128], sizes = [32, 64], strides = [1, 1]} : vector<32x256xbf16> to vector<32x64xbf16>
    %cst_40 = arith.constant dense<0.000000e+00> : vector<64x128xf32>
    %152 = tpu.matmul %151, %11, %cst_40 {dimension_numbers = #tpu.dot_dimension_numbers<[0], [0], [1], [1], [0, 1, 1, 1], [], []>} : vector<32x64xbf16>, vector<32x128xbf16>, vector<64x128xf32> -> vector<64x128xf32>
    %153 = vector.extract_strided_slice %5 {offsets = [0, 192], sizes = [32, 64], strides = [1, 1]} : vector<32x256xbf16> to vector<32x64xbf16>
    %154 = arith.truncf %150 : vector<32x128xf32> to vector<32x128xbf16>
    %cst_41 = arith.constant dense<0.000000e+00> : vector<64x128xf32>
    %155 = tpu.matmul %153, %154, %cst_41 {dimension_numbers = #tpu.dot_dimension_numbers<[0], [0], [1], [1], [0, 1, 1, 1], [], []>} : vector<32x64xbf16>, vector<32x128xbf16>, vector<64x128xf32> -> vector<64x128xf32>
    %156 = arith.addf %152, %155 : vector<64x128xf32>
    %157 = vector.broadcast %9 : vector<64x1xf32> to vector<64x128xf32>
    %158 = arith.addf %156, %157 : vector<64x128xf32>
    %cst_42 = arith.constant 0.000000e+00 : f32
    %159 = vector.broadcast %cst_42 : f32 to vector<64x128xf32>
    %160 = arith.maximumf %158, %159 : vector<64x128xf32>
    %c0_43 = arith.constant 0 : index
    %c0_44 = arith.constant 0 : index
    %c0_45 = arith.constant 0 : index
    %161 = vector.load %arg4[%c0_43, %c0_44, %c0_45] : memref<3x64x32xbf16, #tpu.memory_space<vmem>>, vector<1x64x32xbf16>
    %162 = vector.shape_cast %161 : vector<1x64x32xbf16> to vector<64x32xbf16>
    %163 = arith.truncf %160 : vector<64x128xf32> to vector<64x128xbf16>
    %cst_46 = arith.constant dense<0.000000e+00> : vector<32x128xf32>
    %164 = tpu.matmul %162, %163, %cst_46 {dimension_numbers = #tpu.dot_dimension_numbers<[0], [0], [1], [1], [0, 1, 1, 1], [], []>} : vector<64x32xbf16>, vector<64x128xbf16>, vector<32x128xf32> -> vector<32x128xf32>
    %165 = vector.broadcast %10 : vector<32x1xf32> to vector<32x128xf32>
    %166 = arith.addf %164, %165 : vector<32x128xf32>
    %167 = arith.addf %1, %166 : vector<32x128xf32>
    %cst_47 = arith.constant 2.500000e-01 : f32
    %168 = vector.broadcast %cst_47 : f32 to vector<128x128xf32>
    %169 = arith.mulf %143, %168 : vector<128x128xf32>
    %c0_48 = arith.constant 0 : index
    %c0_49 = arith.constant 0 : index
    %c0_50 = arith.constant 0 : index
    %170 = vector.load %arg9[%c0_48, %c0_49, %c0_50] : memref<1x128x128xf32, #tpu.memory_space<vmem>>, vector<1x128x128xf32>
    %171 = vector.shape_cast %170 : vector<1x128x128xf32> to vector<128x128xf32>
    %172 = vector.shape_cast %169 : vector<128x128xf32> to vector<1x128x128xf32>
    tpu.vector_store %arg9[%c0_48, %c0_49, %c0_50], %172 {strides = array<i32>} : memref<1x128x128xf32, #tpu.memory_space<vmem>>, vector<1x128x128xf32>,
    %cst_51 = arith.constant 2.500000e-01 : f32
    %173 = vector.broadcast %cst_51 : f32 to vector<128x128xf32>
    %174 = arith.mulf %144, %173 : vector<128x128xf32>
    %175 = tpu.transpose %174, [1, 0] : vector<128x128xf32> -> vector<128x128xf32>
    %c0_52 = arith.constant 0 : index
    %c0_53 = arith.constant 0 : index
    %c0_54 = arith.constant 0 : index
    %176 = vector.load %arg10[%c0_52, %c0_53, %c0_54] : memref<1x128x128xf32, #tpu.memory_space<vmem>>, vector<1x128x128xf32>
    %177 = vector.shape_cast %176 : vector<1x128x128xf32> to vector<128x128xf32>
    %178 = vector.shape_cast %175 : vector<128x128xf32> to vector<1x128x128xf32>
    tpu.vector_store %arg10[%c0_52, %c0_53, %c0_54], %178 {strides = array<i32>} : memref<1x128x128xf32, #tpu.memory_space<vmem>>, vector<1x128x128xf32>,
    %c1_55 = arith.constant 1 : index
    %c0_56 = arith.constant 0 : index
    %c0_57 = arith.constant 0 : index
    %179 = vector.load %arg3[%c1_55, %c0_56, %c0_57] : memref<3x32x256xbf16, #tpu.memory_space<vmem>>, vector<1x32x256xbf16>
    %180 = vector.shape_cast %179 : vector<1x32x256xbf16> to vector<32x256xbf16>
    %c0_58 = arith.constant 0 : index
    %c5 = arith.constant 5 : index
    %181 = vector.load %arg5[%c0_58, %c5] : memref<64x25xf32, #tpu.memory_space<vmem>>, vector<32x1xf32>
    %c0_59 = arith.constant 0 : index
    %c6 = arith.constant 6 : index
    %182 = vector.load %arg5[%c0_59, %c6] : memref<64x25xf32, #tpu.memory_space<vmem>>, vector<64x1xf32>
    %c0_60 = arith.constant 0 : index
    %c7 = arith.constant 7 : index
    %183 = vector.load %arg5[%c0_60, %c7] : memref<64x25xf32, #tpu.memory_space<vmem>>, vector<32x1xf32>
    %c0_61 = arith.constant 0 : index
    %c8 = arith.constant 8 : index
    %184 = vector.load %arg5[%c0_61, %c8] : memref<64x25xf32, #tpu.memory_space<vmem>>, vector<64x1xf32>
    %c0_62 = arith.constant 0 : index
    %c9 = arith.constant 9 : index
    %185 = vector.load %arg5[%c0_62, %c9] : memref<64x25xf32, #tpu.memory_space<vmem>>, vector<32x1xf32>
    %186 = arith.truncf %167 : vector<32x128xf32> to vector<32x128xbf16>
    %187 = vector.extract_strided_slice %180 {offsets = [0, 0], sizes = [32, 96], strides = [1, 1]} : vector<32x256xbf16> to vector<32x96xbf16>
    %cst_63 = arith.constant dense<0.000000e+00> : vector<96x128xf32>
    %188 = tpu.matmul %187, %186, %cst_63 {dimension_numbers = #tpu.dot_dimension_numbers<[0], [0], [1], [1], [0, 1, 1, 1], [], []>} : vector<32x96xbf16>, vector<32x128xbf16>, vector<96x128xf32> -> vector<96x128xf32>
    %189 = vector.extract_strided_slice %188 {offsets = [0, 0], sizes = [32, 128], strides = [1, 1]} : vector<96x128xf32> to vector<32x128xf32>
    %190 = vector.broadcast %181 : vector<32x1xf32> to vector<32x128xf32>
    %191 = arith.addf %189, %190 : vector<32x128xf32>
    %192 = vector.extract_strided_slice %188 {offsets = [32, 0], sizes = [64, 128], strides = [1, 1]} : vector<96x128xf32> to vector<64x128xf32>
    %193 = vector.broadcast %182 : vector<64x1xf32> to vector<64x128xf32>
    %194 = arith.addf %192, %193 : vector<64x128xf32>
    %195 = vector.extract_strided_slice %194 {offsets = [0, 0], sizes = [32, 128], strides = [1, 1]} : vector<64x128xf32> to vector<32x128xf32>
    %196 = vector.extract_strided_slice %194 {offsets = [32, 0], sizes = [32, 128], strides = [1, 1]} : vector<64x128xf32> to vector<32x128xf32>
    %197 = vector.extract_strided_slice %191 {offsets = [0, 0], sizes = [8, 128], strides = [1, 1]} : vector<32x128xf32> to vector<8x128xf32>
    %198 = arith.truncf %197 : vector<8x128xf32> to vector<8x128xbf16>
    %199 = vector.extract_strided_slice %195 {offsets = [0, 0], sizes = [8, 128], strides = [1, 1]} : vector<32x128xf32> to vector<8x128xf32>
    %200 = arith.truncf %199 : vector<8x128xf32> to vector<8x128xbf16>
    %201 = vector.extract_strided_slice %196 {offsets = [0, 0], sizes = [8, 128], strides = [1, 1]} : vector<32x128xf32> to vector<8x128xf32>
    %202 = arith.truncf %201 : vector<8x128xf32> to vector<8x128xbf16>
    %cst_64 = arith.constant dense<0.000000e+00> : vector<128x128xf32>
    %203 = tpu.matmul %198, %200, %cst_64 {dimension_numbers = #tpu.dot_dimension_numbers<[0], [0], [1], [1], [0, 1, 1, 1], [], []>} : vector<8x128xbf16>, vector<8x128xbf16>, vector<128x128xf32> -> vector<128x128xf32>
    %cst_65 = arith.constant dense<0xFF800000> : vector<128xf32>
    %204 = vector.multi_reduction <maximumf>, %203, %cst_65 [1] : vector<128x128xf32> to vector<128xf32>
    %205 = vector.shape_cast %204 : vector<128xf32> to vector<128x1xf32>
    %206 = vector.broadcast %205 : vector<128x1xf32> to vector<128x128xf32>
    %207 = arith.subf %203, %206 : vector<128x128xf32>
    %208 = math.exp %207 : vector<128x128xf32>
    %cst_66 = arith.constant dense<0.000000e+00> : vector<128xf32>
    %209 = vector.multi_reduction <add>, %208, %cst_66 [1] : vector<128x128xf32> to vector<128xf32>
    %210 = vector.shape_cast %209 : vector<128xf32> to vector<128x1xf32>
    %211 = tpu.reciprocal %210 {approx = true} : vector<128x1xf32> -> vector<128x1xf32>
    %212 = vector.broadcast %211 : vector<128x1xf32> to vector<128x128xf32>
    %213 = arith.mulf %208, %212 : vector<128x128xf32>
    %214 = arith.truncf %213 : vector<128x128xf32> to vector<128x128xbf16>
    %cst_67 = arith.constant dense<0.000000e+00> : vector<8x128xf32>
    %215 = tpu.matmul %202, %214, %cst_67 {dimension_numbers = #tpu.dot_dimension_numbers<[1], [1], [0], [0], [0, 0, 1, 0], [], []>} : vector<8x128xbf16>, vector<128x128xbf16>, vector<8x128xf32> -> vector<8x128xf32>
    %216 = vector.extract_strided_slice %191 {offsets = [8, 0], sizes = [8, 128], strides = [1, 1]} : vector<32x128xf32> to vector<8x128xf32>
    %217 = arith.truncf %216 : vector<8x128xf32> to vector<8x128xbf16>
    %218 = vector.extract_strided_slice %195 {offsets = [8, 0], sizes = [8, 128], strides = [1, 1]} : vector<32x128xf32> to vector<8x128xf32>
    %219 = arith.truncf %218 : vector<8x128xf32> to vector<8x128xbf16>
    %220 = vector.extract_strided_slice %196 {offsets = [8, 0], sizes = [8, 128], strides = [1, 1]} : vector<32x128xf32> to vector<8x128xf32>
    %221 = arith.truncf %220 : vector<8x128xf32> to vector<8x128xbf16>
    %cst_68 = arith.constant dense<0.000000e+00> : vector<128x128xf32>
    %222 = tpu.matmul %217, %219, %cst_68 {dimension_numbers = #tpu.dot_dimension_numbers<[0], [0], [1], [1], [0, 1, 1, 1], [], []>} : vector<8x128xbf16>, vector<8x128xbf16>, vector<128x128xf32> -> vector<128x128xf32>
    %cst_69 = arith.constant dense<0xFF800000> : vector<128xf32>
    %223 = vector.multi_reduction <maximumf>, %222, %cst_69 [1] : vector<128x128xf32> to vector<128xf32>
    %224 = vector.shape_cast %223 : vector<128xf32> to vector<128x1xf32>
    %225 = vector.broadcast %224 : vector<128x1xf32> to vector<128x128xf32>
    %226 = arith.subf %222, %225 : vector<128x128xf32>
    %227 = math.exp %226 : vector<128x128xf32>
    %cst_70 = arith.constant dense<0.000000e+00> : vector<128xf32>
    %228 = vector.multi_reduction <add>, %227, %cst_70 [1] : vector<128x128xf32> to vector<128xf32>
    %229 = vector.shape_cast %228 : vector<128xf32> to vector<128x1xf32>
    %230 = tpu.reciprocal %229 {approx = true} : vector<128x1xf32> -> vector<128x1xf32>
    %231 = vector.broadcast %230 : vector<128x1xf32> to vector<128x128xf32>
    %232 = arith.mulf %227, %231 : vector<128x128xf32>
    %233 = arith.truncf %232 : vector<128x128xf32> to vector<128x128xbf16>
    %cst_71 = arith.constant dense<0.000000e+00> : vector<8x128xf32>
    %234 = tpu.matmul %221, %233, %cst_71 {dimension_numbers = #tpu.dot_dimension_numbers<[1], [1], [0], [0], [0, 0, 1, 0], [], []>} : vector<8x128xbf16>, vector<128x128xbf16>, vector<8x128xf32> -> vector<8x128xf32>
    %235 = vector.extract_strided_slice %191 {offsets = [16, 0], sizes = [8, 128], strides = [1, 1]} : vector<32x128xf32> to vector<8x128xf32>
    %236 = arith.truncf %235 : vector<8x128xf32> to vector<8x128xbf16>
    %237 = vector.extract_strided_slice %195 {offsets = [16, 0], sizes = [8, 128], strides = [1, 1]} : vector<32x128xf32> to vector<8x128xf32>
    %238 = arith.truncf %237 : vector<8x128xf32> to vector<8x128xbf16>
    %239 = vector.extract_strided_slice %196 {offsets = [16, 0], sizes = [8, 128], strides = [1, 1]} : vector<32x128xf32> to vector<8x128xf32>
    %240 = arith.truncf %239 : vector<8x128xf32> to vector<8x128xbf16>
    %cst_72 = arith.constant dense<0.000000e+00> : vector<128x128xf32>
    %241 = tpu.matmul %236, %238, %cst_72 {dimension_numbers = #tpu.dot_dimension_numbers<[0], [0], [1], [1], [0, 1, 1, 1], [], []>} : vector<8x128xbf16>, vector<8x128xbf16>, vector<128x128xf32> -> vector<128x128xf32>
    %cst_73 = arith.constant dense<0xFF800000> : vector<128xf32>
    %242 = vector.multi_reduction <maximumf>, %241, %cst_73 [1] : vector<128x128xf32> to vector<128xf32>
    %243 = vector.shape_cast %242 : vector<128xf32> to vector<128x1xf32>
    %244 = vector.broadcast %243 : vector<128x1xf32> to vector<128x128xf32>
    %245 = arith.subf %241, %244 : vector<128x128xf32>
    %246 = math.exp %245 : vector<128x128xf32>
    %cst_74 = arith.constant dense<0.000000e+00> : vector<128xf32>
    %247 = vector.multi_reduction <add>, %246, %cst_74 [1] : vector<128x128xf32> to vector<128xf32>
    %248 = vector.shape_cast %247 : vector<128xf32> to vector<128x1xf32>
    %249 = tpu.reciprocal %248 {approx = true} : vector<128x1xf32> -> vector<128x1xf32>
    %250 = vector.broadcast %249 : vector<128x1xf32> to vector<128x128xf32>
    %251 = arith.mulf %246, %250 : vector<128x128xf32>
    %252 = arith.truncf %251 : vector<128x128xf32> to vector<128x128xbf16>
    %cst_75 = arith.constant dense<0.000000e+00> : vector<8x128xf32>
    %253 = tpu.matmul %240, %252, %cst_75 {dimension_numbers = #tpu.dot_dimension_numbers<[1], [1], [0], [0], [0, 0, 1, 0], [], []>} : vector<8x128xbf16>, vector<128x128xbf16>, vector<8x128xf32> -> vector<8x128xf32>
    %254 = vector.extract_strided_slice %191 {offsets = [24, 0], sizes = [8, 128], strides = [1, 1]} : vector<32x128xf32> to vector<8x128xf32>
    %255 = arith.truncf %254 : vector<8x128xf32> to vector<8x128xbf16>
    %256 = vector.extract_strided_slice %195 {offsets = [24, 0], sizes = [8, 128], strides = [1, 1]} : vector<32x128xf32> to vector<8x128xf32>
    %257 = arith.truncf %256 : vector<8x128xf32> to vector<8x128xbf16>
    %258 = vector.extract_strided_slice %196 {offsets = [24, 0], sizes = [8, 128], strides = [1, 1]} : vector<32x128xf32> to vector<8x128xf32>
    %259 = arith.truncf %258 : vector<8x128xf32> to vector<8x128xbf16>
    %cst_76 = arith.constant dense<0.000000e+00> : vector<128x128xf32>
    %260 = tpu.matmul %255, %257, %cst_76 {dimension_numbers = #tpu.dot_dimension_numbers<[0], [0], [1], [1], [0, 1, 1, 1], [], []>} : vector<8x128xbf16>, vector<8x128xbf16>, vector<128x128xf32> -> vector<128x128xf32>
    %cst_77 = arith.constant dense<0xFF800000> : vector<128xf32>
    %261 = vector.multi_reduction <maximumf>, %260, %cst_77 [1] : vector<128x128xf32> to vector<128xf32>
    %262 = vector.shape_cast %261 : vector<128xf32> to vector<128x1xf32>
    %263 = vector.broadcast %262 : vector<128x1xf32> to vector<128x128xf32>
    %264 = arith.subf %260, %263 : vector<128x128xf32>
    %265 = math.exp %264 : vector<128x128xf32>
    %cst_78 = arith.constant dense<0.000000e+00> : vector<128xf32>
    %266 = vector.multi_reduction <add>, %265, %cst_78 [1] : vector<128x128xf32> to vector<128xf32>
    %267 = vector.shape_cast %266 : vector<128xf32> to vector<128x1xf32>
    %268 = tpu.reciprocal %267 {approx = true} : vector<128x1xf32> -> vector<128x1xf32>
    %269 = vector.broadcast %268 : vector<128x1xf32> to vector<128x128xf32>
    %270 = arith.mulf %265, %269 : vector<128x128xf32>
    %271 = arith.truncf %270 : vector<128x128xf32> to vector<128x128xbf16>
    %cst_79 = arith.constant dense<0.000000e+00> : vector<8x128xf32>
    %272 = tpu.matmul %259, %271, %cst_79 {dimension_numbers = #tpu.dot_dimension_numbers<[1], [1], [0], [0], [0, 0, 1, 0], [], []>} : vector<8x128xbf16>, vector<128x128xbf16>, vector<8x128xf32> -> vector<8x128xf32>
    %273 = tpu.concatenate %215, %234, %253, %272 in 0 : vector<8x128xf32>, vector<8x128xf32>, vector<8x128xf32>, vector<8x128xf32> -> vector<32x128xf32>
    %274 = vector.extract_strided_slice %180 {offsets = [0, 96], sizes = [32, 32], strides = [1, 1]} : vector<32x256xbf16> to vector<32x32xbf16>
    %275 = arith.truncf %273 : vector<32x128xf32> to vector<32x128xbf16>
    %cst_80 = arith.constant dense<0.000000e+00> : vector<32x128xf32>
    %276 = tpu.matmul %274, %275, %cst_80 {dimension_numbers = #tpu.dot_dimension_numbers<[0], [0], [1], [1], [0, 1, 1, 1], [], []>} : vector<32x32xbf16>, vector<32x128xbf16>, vector<32x128xf32> -> vector<32x128xf32>
    %277 = vector.broadcast %183 : vector<32x1xf32> to vector<32x128xf32>
    %278 = arith.addf %276, %277 : vector<32x128xf32>
    %279 = vector.extract_strided_slice %180 {offsets = [0, 128], sizes = [32, 64], strides = [1, 1]} : vector<32x256xbf16> to vector<32x64xbf16>
    %cst_81 = arith.constant dense<0.000000e+00> : vector<64x128xf32>
    %280 = tpu.matmul %279, %186, %cst_81 {dimension_numbers = #tpu.dot_dimension_numbers<[0], [0], [1], [1], [0, 1, 1, 1], [], []>} : vector<32x64xbf16>, vector<32x128xbf16>, vector<64x128xf32> -> vector<64x128xf32>
    %281 = vector.extract_strided_slice %180 {offsets = [0, 192], sizes = [32, 64], strides = [1, 1]} : vector<32x256xbf16> to vector<32x64xbf16>
    %282 = arith.truncf %278 : vector<32x128xf32> to vector<32x128xbf16>
    %cst_82 = arith.constant dense<0.000000e+00> : vector<64x128xf32>
    %283 = tpu.matmul %281, %282, %cst_82 {dimension_numbers = #tpu.dot_dimension_numbers<[0], [0], [1], [1], [0, 1, 1, 1], [], []>} : vector<32x64xbf16>, vector<32x128xbf16>, vector<64x128xf32> -> vector<64x128xf32>
    %284 = arith.addf %280, %283 : vector<64x128xf32>
    %285 = vector.broadcast %184 : vector<64x1xf32> to vector<64x128xf32>
    %286 = arith.addf %284, %285 : vector<64x128xf32>
    %cst_83 = arith.constant 0.000000e+00 : f32
    %287 = vector.broadcast %cst_83 : f32 to vector<64x128xf32>
    %288 = arith.maximumf %286, %287 : vector<64x128xf32>
    %c1_84 = arith.constant 1 : index
    %c0_85 = arith.constant 0 : index
    %c0_86 = arith.constant 0 : index
    %289 = vector.load %arg4[%c1_84, %c0_85, %c0_86] : memref<3x64x32xbf16, #tpu.memory_space<vmem>>, vector<1x64x32xbf16>
    %290 = vector.shape_cast %289 : vector<1x64x32xbf16> to vector<64x32xbf16>
    %291 = arith.truncf %288 : vector<64x128xf32> to vector<64x128xbf16>
    %cst_87 = arith.constant dense<0.000000e+00> : vector<32x128xf32>
    %292 = tpu.matmul %290, %291, %cst_87 {dimension_numbers = #tpu.dot_dimension_numbers<[0], [0], [1], [1], [0, 1, 1, 1], [], []>} : vector<64x32xbf16>, vector<64x128xbf16>, vector<32x128xf32> -> vector<32x128xf32>
    %293 = vector.broadcast %185 : vector<32x1xf32> to vector<32x128xf32>
    %294 = arith.addf %292, %293 : vector<32x128xf32>
    %295 = arith.addf %167, %294 : vector<32x128xf32>
    %c2_88 = arith.constant 2 : index
    %c0_89 = arith.constant 0 : index
    %c0_90 = arith.constant 0 : index
    %296 = vector.load %arg3[%c2_88, %c0_89, %c0_90] : memref<3x32x256xbf16, #tpu.memory_space<vmem>>, vector<1x32x256xbf16>
    %297 = vector.shape_cast %296 : vector<1x32x256xbf16> to vector<32x256xbf16>
    %c0_91 = arith.constant 0 : index
    %c10 = arith.constant 10 : index
    %298 = vector.load %arg5[%c0_91, %c10] : memref<64x25xf32, #tpu.memory_space<vmem>>, vector<32x1xf32>
    %c0_92 = arith.constant 0 : index
    %c11 = arith.constant 11 : index
    %299 = vector.load %arg5[%c0_92, %c11] : memref<64x25xf32, #tpu.memory_space<vmem>>, vector<64x1xf32>
    %c0_93 = arith.constant 0 : index
    %c12 = arith.constant 12 : index
    %300 = vector.load %arg5[%c0_93, %c12] : memref<64x25xf32, #tpu.memory_space<vmem>>, vector<32x1xf32>
    %c0_94 = arith.constant 0 : index
    %c13 = arith.constant 13 : index
    %301 = vector.load %arg5[%c0_94, %c13] : memref<64x25xf32, #tpu.memory_space<vmem>>, vector<64x1xf32>
    %c0_95 = arith.constant 0 : index
    %c14 = arith.constant 14 : index
    %302 = vector.load %arg5[%c0_95, %c14] : memref<64x25xf32, #tpu.memory_space<vmem>>, vector<32x1xf32>
    %303 = arith.truncf %3 : vector<32x128xf32> to vector<32x128xbf16>
    %304 = arith.truncf %295 : vector<32x128xf32> to vector<32x128xbf16>
    %305 = vector.extract_strided_slice %297 {offsets = [0, 0], sizes = [32, 32], strides = [1, 1]} : vector<32x256xbf16> to vector<32x32xbf16>
    %cst_96 = arith.constant dense<0.000000e+00> : vector<32x128xf32>
    %306 = tpu.matmul %305, %303, %cst_96 {dimension_numbers = #tpu.dot_dimension_numbers<[0], [0], [1], [1], [0, 1, 1, 1], [], []>} : vector<32x32xbf16>, vector<32x128xbf16>, vector<32x128xf32> -> vector<32x128xf32>
    %307 = vector.broadcast %298 : vector<32x1xf32> to vector<32x128xf32>
    %308 = arith.addf %306, %307 : vector<32x128xf32>
    %309 = vector.extract_strided_slice %297 {offsets = [0, 32], sizes = [32, 64], strides = [1, 1]} : vector<32x256xbf16> to vector<32x64xbf16>
    %cst_97 = arith.constant dense<0.000000e+00> : vector<64x128xf32>
    %310 = tpu.matmul %309, %304, %cst_97 {dimension_numbers = #tpu.dot_dimension_numbers<[0], [0], [1], [1], [0, 1, 1, 1], [], []>} : vector<32x64xbf16>, vector<32x128xbf16>, vector<64x128xf32> -> vector<64x128xf32>
    %311 = vector.broadcast %299 : vector<64x1xf32> to vector<64x128xf32>
    %312 = arith.addf %310, %311 : vector<64x128xf32>
    %313 = vector.extract_strided_slice %312 {offsets = [0, 0], sizes = [32, 128], strides = [1, 1]} : vector<64x128xf32> to vector<32x128xf32>
    %314 = vector.extract_strided_slice %312 {offsets = [32, 0], sizes = [32, 128], strides = [1, 1]} : vector<64x128xf32> to vector<32x128xf32>
    %315 = vector.extract_strided_slice %308 {offsets = [0, 0], sizes = [8, 128], strides = [1, 1]} : vector<32x128xf32> to vector<8x128xf32>
    %316 = arith.truncf %315 : vector<8x128xf32> to vector<8x128xbf16>
    %317 = vector.extract_strided_slice %313 {offsets = [0, 0], sizes = [8, 128], strides = [1, 1]} : vector<32x128xf32> to vector<8x128xf32>
    %318 = arith.truncf %317 : vector<8x128xf32> to vector<8x128xbf16>
    %319 = vector.extract_strided_slice %314 {offsets = [0, 0], sizes = [8, 128], strides = [1, 1]} : vector<32x128xf32> to vector<8x128xf32>
    %320 = arith.truncf %319 : vector<8x128xf32> to vector<8x128xbf16>
    %cst_98 = arith.constant dense<0.000000e+00> : vector<128x128xf32>
    %321 = tpu.matmul %316, %318, %cst_98 {dimension_numbers = #tpu.dot_dimension_numbers<[0], [0], [1], [1], [0, 1, 1, 1], [], []>} : vector<8x128xbf16>, vector<8x128xbf16>, vector<128x128xf32> -> vector<128x128xf32>
    %cst_99 = arith.constant dense<0xFF800000> : vector<128xf32>
    %322 = vector.multi_reduction <maximumf>, %321, %cst_99 [1] : vector<128x128xf32> to vector<128xf32>
    %323 = vector.shape_cast %322 : vector<128xf32> to vector<128x1xf32>
    %324 = vector.broadcast %323 : vector<128x1xf32> to vector<128x128xf32>
    %325 = arith.subf %321, %324 : vector<128x128xf32>
    %326 = math.exp %325 : vector<128x128xf32>
    %cst_100 = arith.constant dense<0.000000e+00> : vector<128xf32>
    %327 = vector.multi_reduction <add>, %326, %cst_100 [1] : vector<128x128xf32> to vector<128xf32>
    %328 = vector.shape_cast %327 : vector<128xf32> to vector<128x1xf32>
    %329 = tpu.reciprocal %328 {approx = true} : vector<128x1xf32> -> vector<128x1xf32>
    %330 = vector.broadcast %329 : vector<128x1xf32> to vector<128x128xf32>
    %331 = arith.mulf %326, %330 : vector<128x128xf32>
    %332 = arith.truncf %331 : vector<128x128xf32> to vector<128x128xbf16>
    %cst_101 = arith.constant dense<0.000000e+00> : vector<8x128xf32>
    %333 = tpu.matmul %320, %332, %cst_101 {dimension_numbers = #tpu.dot_dimension_numbers<[1], [1], [0], [0], [0, 0, 1, 0], [], []>} : vector<8x128xbf16>, vector<128x128xbf16>, vector<8x128xf32> -> vector<8x128xf32>
    %334 = vector.extract_strided_slice %308 {offsets = [8, 0], sizes = [8, 128], strides = [1, 1]} : vector<32x128xf32> to vector<8x128xf32>
    %335 = arith.truncf %334 : vector<8x128xf32> to vector<8x128xbf16>
    %336 = vector.extract_strided_slice %313 {offsets = [8, 0], sizes = [8, 128], strides = [1, 1]} : vector<32x128xf32> to vector<8x128xf32>
    %337 = arith.truncf %336 : vector<8x128xf32> to vector<8x128xbf16>
    %338 = vector.extract_strided_slice %314 {offsets = [8, 0], sizes = [8, 128], strides = [1, 1]} : vector<32x128xf32> to vector<8x128xf32>
    %339 = arith.truncf %338 : vector<8x128xf32> to vector<8x128xbf16>
    %cst_102 = arith.constant dense<0.000000e+00> : vector<128x128xf32>
    %340 = tpu.matmul %335, %337, %cst_102 {dimension_numbers = #tpu.dot_dimension_numbers<[0], [0], [1], [1], [0, 1, 1, 1], [], []>} : vector<8x128xbf16>, vector<8x128xbf16>, vector<128x128xf32> -> vector<128x128xf32>
    %cst_103 = arith.constant dense<0xFF800000> : vector<128xf32>
    %341 = vector.multi_reduction <maximumf>, %340, %cst_103 [1] : vector<128x128xf32> to vector<128xf32>
    %342 = vector.shape_cast %341 : vector<128xf32> to vector<128x1xf32>
    %343 = vector.broadcast %342 : vector<128x1xf32> to vector<128x128xf32>
    %344 = arith.subf %340, %343 : vector<128x128xf32>
    %345 = math.exp %344 : vector<128x128xf32>
    %cst_104 = arith.constant dense<0.000000e+00> : vector<128xf32>
    %346 = vector.multi_reduction <add>, %345, %cst_104 [1] : vector<128x128xf32> to vector<128xf32>
    %347 = vector.shape_cast %346 : vector<128xf32> to vector<128x1xf32>
    %348 = tpu.reciprocal %347 {approx = true} : vector<128x1xf32> -> vector<128x1xf32>
    %349 = vector.broadcast %348 : vector<128x1xf32> to vector<128x128xf32>
    %350 = arith.mulf %345, %349 : vector<128x128xf32>
    %351 = arith.truncf %350 : vector<128x128xf32> to vector<128x128xbf16>
    %cst_105 = arith.constant dense<0.000000e+00> : vector<8x128xf32>
    %352 = tpu.matmul %339, %351, %cst_105 {dimension_numbers = #tpu.dot_dimension_numbers<[1], [1], [0], [0], [0, 0, 1, 0], [], []>} : vector<8x128xbf16>, vector<128x128xbf16>, vector<8x128xf32> -> vector<8x128xf32>
    %353 = vector.extract_strided_slice %308 {offsets = [16, 0], sizes = [8, 128], strides = [1, 1]} : vector<32x128xf32> to vector<8x128xf32>
    %354 = arith.truncf %353 : vector<8x128xf32> to vector<8x128xbf16>
    %355 = vector.extract_strided_slice %313 {offsets = [16, 0], sizes = [8, 128], strides = [1, 1]} : vector<32x128xf32> to vector<8x128xf32>
    %356 = arith.truncf %355 : vector<8x128xf32> to vector<8x128xbf16>
    %357 = vector.extract_strided_slice %314 {offsets = [16, 0], sizes = [8, 128], strides = [1, 1]} : vector<32x128xf32> to vector<8x128xf32>
    %358 = arith.truncf %357 : vector<8x128xf32> to vector<8x128xbf16>
    %cst_106 = arith.constant dense<0.000000e+00> : vector<128x128xf32>
    %359 = tpu.matmul %354, %356, %cst_106 {dimension_numbers = #tpu.dot_dimension_numbers<[0], [0], [1], [1], [0, 1, 1, 1], [], []>} : vector<8x128xbf16>, vector<8x128xbf16>, vector<128x128xf32> -> vector<128x128xf32>
    %cst_107 = arith.constant dense<0xFF800000> : vector<128xf32>
    %360 = vector.multi_reduction <maximumf>, %359, %cst_107 [1] : vector<128x128xf32> to vector<128xf32>
    %361 = vector.shape_cast %360 : vector<128xf32> to vector<128x1xf32>
    %362 = vector.broadcast %361 : vector<128x1xf32> to vector<128x128xf32>
    %363 = arith.subf %359, %362 : vector<128x128xf32>
    %364 = math.exp %363 : vector<128x128xf32>
    %cst_108 = arith.constant dense<0.000000e+00> : vector<128xf32>
    %365 = vector.multi_reduction <add>, %364, %cst_108 [1] : vector<128x128xf32> to vector<128xf32>
    %366 = vector.shape_cast %365 : vector<128xf32> to vector<128x1xf32>
    %367 = tpu.reciprocal %366 {approx = true} : vector<128x1xf32> -> vector<128x1xf32>
    %368 = vector.broadcast %367 : vector<128x1xf32> to vector<128x128xf32>
    %369 = arith.mulf %364, %368 : vector<128x128xf32>
    %370 = arith.truncf %369 : vector<128x128xf32> to vector<128x128xbf16>
    %cst_109 = arith.constant dense<0.000000e+00> : vector<8x128xf32>
    %371 = tpu.matmul %358, %370, %cst_109 {dimension_numbers = #tpu.dot_dimension_numbers<[1], [1], [0], [0], [0, 0, 1, 0], [], []>} : vector<8x128xbf16>, vector<128x128xbf16>, vector<8x128xf32> -> vector<8x128xf32>
    %372 = vector.extract_strided_slice %308 {offsets = [24, 0], sizes = [8, 128], strides = [1, 1]} : vector<32x128xf32> to vector<8x128xf32>
    %373 = arith.truncf %372 : vector<8x128xf32> to vector<8x128xbf16>
    %374 = vector.extract_strided_slice %313 {offsets = [24, 0], sizes = [8, 128], strides = [1, 1]} : vector<32x128xf32> to vector<8x128xf32>
    %375 = arith.truncf %374 : vector<8x128xf32> to vector<8x128xbf16>
    %376 = vector.extract_strided_slice %314 {offsets = [24, 0], sizes = [8, 128], strides = [1, 1]} : vector<32x128xf32> to vector<8x128xf32>
    %377 = arith.truncf %376 : vector<8x128xf32> to vector<8x128xbf16>
    %cst_110 = arith.constant dense<0.000000e+00> : vector<128x128xf32>
    %378 = tpu.matmul %373, %375, %cst_110 {dimension_numbers = #tpu.dot_dimension_numbers<[0], [0], [1], [1], [0, 1, 1, 1], [], []>} : vector<8x128xbf16>, vector<8x128xbf16>, vector<128x128xf32> -> vector<128x128xf32>
    %cst_111 = arith.constant dense<0xFF800000> : vector<128xf32>
    %379 = vector.multi_reduction <maximumf>, %378, %cst_111 [1] : vector<128x128xf32> to vector<128xf32>
    %380 = vector.shape_cast %379 : vector<128xf32> to vector<128x1xf32>
    %381 = vector.broadcast %380 : vector<128x1xf32> to vector<128x128xf32>
    %382 = arith.subf %378, %381 : vector<128x128xf32>
    %383 = math.exp %382 : vector<128x128xf32>
    %cst_112 = arith.constant dense<0.000000e+00> : vector<128xf32>
    %384 = vector.multi_reduction <add>, %383, %cst_112 [1] : vector<128x128xf32> to vector<128xf32>
    %385 = vector.shape_cast %384 : vector<128xf32> to vector<128x1xf32>
    %386 = tpu.reciprocal %385 {approx = true} : vector<128x1xf32> -> vector<128x1xf32>
    %387 = vector.broadcast %386 : vector<128x1xf32> to vector<128x128xf32>
    %388 = arith.mulf %383, %387 : vector<128x128xf32>
    %389 = arith.truncf %388 : vector<128x128xf32> to vector<128x128xbf16>
    %cst_113 = arith.constant dense<0.000000e+00> : vector<8x128xf32>
    %390 = tpu.matmul %377, %389, %cst_113 {dimension_numbers = #tpu.dot_dimension_numbers<[1], [1], [0], [0], [0, 0, 1, 0], [], []>} : vector<8x128xbf16>, vector<128x128xbf16>, vector<8x128xf32> -> vector<8x128xf32>
    %391 = tpu.concatenate %333, %352, %371, %390 in 0 : vector<8x128xf32>, vector<8x128xf32>, vector<8x128xf32>, vector<8x128xf32> -> vector<32x128xf32>
    %392 = vector.extract_strided_slice %297 {offsets = [0, 96], sizes = [32, 32], strides = [1, 1]} : vector<32x256xbf16> to vector<32x32xbf16>
    %393 = arith.truncf %391 : vector<32x128xf32> to vector<32x128xbf16>
    %cst_114 = arith.constant dense<0.000000e+00> : vector<32x128xf32>
    %394 = tpu.matmul %392, %393, %cst_114 {dimension_numbers = #tpu.dot_dimension_numbers<[0], [0], [1], [1], [0, 1, 1, 1], [], []>} : vector<32x32xbf16>, vector<32x128xbf16>, vector<32x128xf32> -> vector<32x128xf32>
    %395 = vector.broadcast %300 : vector<32x1xf32> to vector<32x128xf32>
    %396 = arith.addf %394, %395 : vector<32x128xf32>
    %397 = vector.extract_strided_slice %297 {offsets = [0, 128], sizes = [32, 64], strides = [1, 1]} : vector<32x256xbf16> to vector<32x64xbf16>
    %cst_115 = arith.constant dense<0.000000e+00> : vector<64x128xf32>
    %398 = tpu.matmul %397, %303, %cst_115 {dimension_numbers = #tpu.dot_dimension_numbers<[0], [0], [1], [1], [0, 1, 1, 1], [], []>} : vector<32x64xbf16>, vector<32x128xbf16>, vector<64x128xf32> -> vector<64x128xf32>
    %399 = vector.extract_strided_slice %297 {offsets = [0, 192], sizes = [32, 64], strides = [1, 1]} : vector<32x256xbf16> to vector<32x64xbf16>
    %400 = arith.truncf %396 : vector<32x128xf32> to vector<32x128xbf16>
    %cst_116 = arith.constant dense<0.000000e+00> : vector<64x128xf32>
    %401 = tpu.matmul %399, %400, %cst_116 {dimension_numbers = #tpu.dot_dimension_numbers<[0], [0], [1], [1], [0, 1, 1, 1], [], []>} : vector<32x64xbf16>, vector<32x128xbf16>, vector<64x128xf32> -> vector<64x128xf32>
    %402 = arith.addf %398, %401 : vector<64x128xf32>
    %403 = vector.broadcast %301 : vector<64x1xf32> to vector<64x128xf32>
    %404 = arith.addf %402, %403 : vector<64x128xf32>
    %cst_117 = arith.constant 0.000000e+00 : f32
    %405 = vector.broadcast %cst_117 : f32 to vector<64x128xf32>
    %406 = arith.maximumf %404, %405 : vector<64x128xf32>
    %c2_118 = arith.constant 2 : index
    %c0_119 = arith.constant 0 : index
    %c0_120 = arith.constant 0 : index
    %407 = vector.load %arg4[%c2_118, %c0_119, %c0_120] : memref<3x64x32xbf16, #tpu.memory_space<vmem>>, vector<1x64x32xbf16>
    %408 = vector.shape_cast %407 : vector<1x64x32xbf16> to vector<64x32xbf16>
    %409 = arith.truncf %406 : vector<64x128xf32> to vector<64x128xbf16>
    %cst_121 = arith.constant dense<0.000000e+00> : vector<32x128xf32>
    %410 = tpu.matmul %408, %409, %cst_121 {dimension_numbers = #tpu.dot_dimension_numbers<[0], [0], [1], [1], [0, 1, 1, 1], [], []>} : vector<64x32xbf16>, vector<64x128xbf16>, vector<32x128xf32> -> vector<32x128xf32>
    %411 = vector.broadcast %302 : vector<32x1xf32> to vector<32x128xf32>
    %412 = arith.addf %410, %411 : vector<32x128xf32>
    %413 = arith.addf %3, %412 : vector<32x128xf32>
    %c0_122 = arith.constant 0 : index
    %c0_123 = arith.constant 0 : index
    %c0_124 = arith.constant 0 : index
    %414 = vector.load %arg7[%c0_122, %c0_123, %c0_124] : memref<1x32x128xf32, #tpu.memory_space<vmem>>, vector<1x32x128xf32>
    %415 = vector.shape_cast %414 : vector<1x32x128xf32> to vector<32x128xf32>
    %416 = vector.shape_cast %413 : vector<32x128xf32> to vector<1x32x128xf32>
    tpu.vector_store %arg7[%c0_122, %c0_123, %c0_124], %416 {strides = array<i32>} : memref<1x32x128xf32, #tpu.memory_space<vmem>>, vector<1x32x128xf32>,
    %417 = arith.subf %413, %3 : vector<32x128xf32>
    %c0_125 = arith.constant 0 : index
    %c0_126 = arith.constant 0 : index
    %418 = vector.load %arg6[%c0_125, %c0_126] : memref<64x85xbf16, #tpu.memory_space<vmem>>, vector<32x64xbf16>
    %419 = arith.truncf %417 : vector<32x128xf32> to vector<32x128xbf16>
    %cst_127 = arith.constant dense<0.000000e+00> : vector<64x128xf32>
    %420 = tpu.matmul %418, %419, %cst_127 {dimension_numbers = #tpu.dot_dimension_numbers<[0], [0], [1], [1], [0, 1, 1, 1], [], []>} : vector<32x64xbf16>, vector<32x128xbf16>, vector<64x128xf32> -> vector<64x128xf32>
    %c0_128 = arith.constant 0 : index
    %c15 = arith.constant 15 : index
    %421 = vector.load %arg5[%c0_128, %c15] : memref<64x25xf32, #tpu.memory_space<vmem>>, vector<64x1xf32>
    %422 = vector.broadcast %421 : vector<64x1xf32> to vector<64x128xf32>
    %423 = arith.addf %420, %422 : vector<64x128xf32>
    %c0_129 = arith.constant 0 : index
    %c16 = arith.constant 16 : index
    %424 = vector.load %arg5[%c0_129, %c16] : memref<64x25xf32, #tpu.memory_space<vmem>>, vector<64x1xf32>
    %c0_130 = arith.constant 0 : index
    %c17 = arith.constant 17 : index
    %425 = vector.load %arg5[%c0_130, %c17] : memref<64x25xf32, #tpu.memory_space<vmem>>, vector<64x1xf32>
    %cst_131 = arith.constant dense<0.000000e+00> : vector<64xf32>
    %426 = vector.multi_reduction <add>, %423, %cst_131 [1] : vector<64x128xf32> to vector<64xf32>
    %427 = vector.shape_cast %426 : vector<64xf32> to vector<64x1xf32>
    %cst_132 = arith.constant 1.280000e+02 : f32
    %428 = vector.broadcast %cst_132 : f32 to vector<64x1xf32>
    %429 = arith.divf %427, %428 : vector<64x1xf32>
    %430 = vector.broadcast %429 : vector<64x1xf32> to vector<64x128xf32>
    %431 = arith.subf %423, %430 : vector<64x128xf32>
    %432 = arith.mulf %431, %431 : vector<64x128xf32>
    %cst_133 = arith.constant dense<0.000000e+00> : vector<64xf32>
    %433 = vector.multi_reduction <add>, %432, %cst_133 [1] : vector<64x128xf32> to vector<64xf32>
    %434 = vector.shape_cast %433 : vector<64xf32> to vector<64x1xf32>
    %cst_134 = arith.constant 1.280000e+02 : f32
    %435 = vector.broadcast %cst_134 : f32 to vector<64x1xf32>
    %436 = arith.divf %434, %435 : vector<64x1xf32>
    %437 = vector.broadcast %429 : vector<64x1xf32> to vector<64x128xf32>
    %438 = arith.subf %423, %437 : vector<64x128xf32>
    %cst_135 = arith.constant 1.000000e-03 : f32
    %439 = vector.broadcast %cst_135 : f32 to vector<64x1xf32>
    %440 = arith.addf %436, %439 : vector<64x1xf32>
    %441 = math.rsqrt %440 : vector<64x1xf32>
    %442 = vector.broadcast %441 : vector<64x1xf32> to vector<64x128xf32>
    %443 = arith.mulf %438, %442 : vector<64x128xf32>
    %444 = vector.broadcast %424 : vector<64x1xf32> to vector<64x128xf32>
    %445 = arith.mulf %443, %444 : vector<64x128xf32>
    %446 = vector.broadcast %425 : vector<64x1xf32> to vector<64x128xf32>
    %447 = arith.addf %445, %446 : vector<64x128xf32>
    %cst_136 = arith.constant 0.000000e+00 : f32
    %448 = vector.broadcast %cst_136 : f32 to vector<64x128xf32>
    %449 = arith.maximumf %447, %448 : vector<64x128xf32>
    %c0_137 = arith.constant 0 : index
    %c64 = arith.constant 64 : index
    %450 = vector.load %arg6[%c0_137, %c64] : memref<64x85xbf16, #tpu.memory_space<vmem>>, vector<64x16xbf16>
    %451 = arith.truncf %449 : vector<64x128xf32> to vector<64x128xbf16>
    %cst_138 = arith.constant dense<0.000000e+00> : vector<16x128xf32>
    %452 = tpu.matmul %450, %451, %cst_138 {dimension_numbers = #tpu.dot_dimension_numbers<[0], [0], [1], [1], [0, 1, 1, 1], [], []>} : vector<64x16xbf16>, vector<64x128xbf16>, vector<16x128xf32> -> vector<16x128xf32>
    %c0_139 = arith.constant 0 : index
    %c18 = arith.constant 18 : index
    %453 = vector.load %arg5[%c0_139, %c18] : memref<64x25xf32, #tpu.memory_space<vmem>>, vector<16x1xf32>
    %454 = vector.broadcast %453 : vector<16x1xf32> to vector<16x128xf32>
    %455 = arith.addf %452, %454 : vector<16x128xf32>
    %c0_140 = arith.constant 0 : index
    %c19 = arith.constant 19 : index
    %456 = vector.load %arg5[%c0_140, %c19] : memref<64x25xf32, #tpu.memory_space<vmem>>, vector<16x1xf32>
    %c0_141 = arith.constant 0 : index
    %c20 = arith.constant 20 : index
    %457 = vector.load %arg5[%c0_141, %c20] : memref<64x25xf32, #tpu.memory_space<vmem>>, vector<16x1xf32>
    %cst_142 = arith.constant dense<0.000000e+00> : vector<16xf32>
    %458 = vector.multi_reduction <add>, %455, %cst_142 [1] : vector<16x128xf32> to vector<16xf32>
    %459 = vector.shape_cast %458 : vector<16xf32> to vector<16x1xf32>
    %cst_143 = arith.constant 1.280000e+02 : f32
    %460 = vector.broadcast %cst_143 : f32 to vector<16x1xf32>
    %461 = arith.divf %459, %460 : vector<16x1xf32>
    %462 = vector.broadcast %461 : vector<16x1xf32> to vector<16x128xf32>
    %463 = arith.subf %455, %462 : vector<16x128xf32>
    %464 = arith.mulf %463, %463 : vector<16x128xf32>
    %cst_144 = arith.constant dense<0.000000e+00> : vector<16xf32>
    %465 = vector.multi_reduction <add>, %464, %cst_144 [1] : vector<16x128xf32> to vector<16xf32>
    %466 = vector.shape_cast %465 : vector<16xf32> to vector<16x1xf32>
    %cst_145 = arith.constant 1.280000e+02 : f32
    %467 = vector.broadcast %cst_145 : f32 to vector<16x1xf32>
    %468 = arith.divf %466, %467 : vector<16x1xf32>
    %469 = vector.broadcast %461 : vector<16x1xf32> to vector<16x128xf32>
    %470 = arith.subf %455, %469 : vector<16x128xf32>
    %cst_146 = arith.constant 1.000000e-03 : f32
    %471 = vector.broadcast %cst_146 : f32 to vector<16x1xf32>
    %472 = arith.addf %468, %471 : vector<16x1xf32>
    %473 = math.rsqrt %472 : vector<16x1xf32>
    %474 = vector.broadcast %473 : vector<16x1xf32> to vector<16x128xf32>
    %475 = arith.mulf %470, %474 : vector<16x128xf32>
    %476 = vector.broadcast %456 : vector<16x1xf32> to vector<16x128xf32>
    %477 = arith.mulf %475, %476 : vector<16x128xf32>
    %478 = vector.broadcast %457 : vector<16x1xf32> to vector<16x128xf32>
    %479 = arith.addf %477, %478 : vector<16x128xf32>
    %cst_147 = arith.constant 0.000000e+00 : f32
    %480 = vector.broadcast %cst_147 : f32 to vector<16x128xf32>
    %481 = arith.maximumf %479, %480 : vector<16x128xf32>
    %c0_148 = arith.constant 0 : index
    %c80 = arith.constant 80 : index
    %482 = vector.load %arg6[%c0_148, %c80] : memref<64x85xbf16, #tpu.memory_space<vmem>>, vector<16x4xbf16>
    %483 = arith.truncf %481 : vector<16x128xf32> to vector<16x128xbf16>
    %cst_149 = arith.constant dense<0.000000e+00> : vector<4x128xf32>
    %484 = tpu.matmul %482, %483, %cst_149 {dimension_numbers = #tpu.dot_dimension_numbers<[0], [0], [1], [1], [0, 1, 1, 1], [], []>} : vector<16x4xbf16>, vector<16x128xbf16>, vector<4x128xf32> -> vector<4x128xf32>
    %c0_150 = arith.constant 0 : index
    %c21 = arith.constant 21 : index
    %485 = vector.load %arg5[%c0_150, %c21] : memref<64x25xf32, #tpu.memory_space<vmem>>, vector<4x1xf32>
    %486 = vector.broadcast %485 : vector<4x1xf32> to vector<4x128xf32>
    %487 = arith.addf %484, %486 : vector<4x128xf32>
    %c0_151 = arith.constant 0 : index
    %c22 = arith.constant 22 : index
    %488 = vector.load %arg5[%c0_151, %c22] : memref<64x25xf32, #tpu.memory_space<vmem>>, vector<4x1xf32>
    %c0_152 = arith.constant 0 : index
    %c23 = arith.constant 23 : index
    %489 = vector.load %arg5[%c0_152, %c23] : memref<64x25xf32, #tpu.memory_space<vmem>>, vector<4x1xf32>
    %cst_153 = arith.constant dense<0.000000e+00> : vector<4xf32>
    %490 = vector.multi_reduction <add>, %487, %cst_153 [1] : vector<4x128xf32> to vector<4xf32>
    %491 = vector.shape_cast %490 : vector<4xf32> to vector<4x1xf32>
    %cst_154 = arith.constant 1.280000e+02 : f32
    %492 = vector.broadcast %cst_154 : f32 to vector<4x1xf32>
    %493 = arith.divf %491, %492 : vector<4x1xf32>
    %494 = vector.broadcast %493 : vector<4x1xf32> to vector<4x128xf32>
    %495 = arith.subf %487, %494 : vector<4x128xf32>
    %496 = arith.mulf %495, %495 : vector<4x128xf32>
    %cst_155 = arith.constant dense<0.000000e+00> : vector<4xf32>
    %497 = vector.multi_reduction <add>, %496, %cst_155 [1] : vector<4x128xf32> to vector<4xf32>
    %498 = vector.shape_cast %497 : vector<4xf32> to vector<4x1xf32>
    %cst_156 = arith.constant 1.280000e+02 : f32
    %499 = vector.broadcast %cst_156 : f32 to vector<4x1xf32>
    %500 = arith.divf %498, %499 : vector<4x1xf32>
    %501 = vector.broadcast %493 : vector<4x1xf32> to vector<4x128xf32>
    %502 = arith.subf %487, %501 : vector<4x128xf32>
    %cst_157 = arith.constant 1.000000e-03 : f32
    %503 = vector.broadcast %cst_157 : f32 to vector<4x1xf32>
    %504 = arith.addf %500, %503 : vector<4x1xf32>
    %505 = math.rsqrt %504 : vector<4x1xf32>
    %506 = vector.broadcast %505 : vector<4x1xf32> to vector<4x128xf32>
    %507 = arith.mulf %502, %506 : vector<4x128xf32>
    %508 = vector.broadcast %488 : vector<4x1xf32> to vector<4x128xf32>
    %509 = arith.mulf %507, %508 : vector<4x128xf32>
    %510 = vector.broadcast %489 : vector<4x1xf32> to vector<4x128xf32>
    %511 = arith.addf %509, %510 : vector<4x128xf32>
    %cst_158 = arith.constant 0.000000e+00 : f32
    %512 = vector.broadcast %cst_158 : f32 to vector<4x128xf32>
    %513 = arith.maximumf %511, %512 : vector<4x128xf32>
    %c0_159 = arith.constant 0 : index
    %c84 = arith.constant 84 : index
    %514 = vector.load %arg6[%c0_159, %c84] : memref<64x85xbf16, #tpu.memory_space<vmem>>, vector<4x1xbf16>
    %515 = arith.truncf %513 : vector<4x128xf32> to vector<4x128xbf16>
    %cst_160 = arith.constant dense<0.000000e+00> : vector<1x128xf32>
    %516 = tpu.matmul %514, %515, %cst_160 {dimension_numbers = #tpu.dot_dimension_numbers<[0], [0], [1], [1], [0, 1, 1, 1], [], []>} : vector<4x1xbf16>, vector<4x128xbf16>, vector<1x128xf32> -> vector<1x128xf32>
    %c0_161 = arith.constant 0 : index
    %c24 = arith.constant 24 : index
    %517 = vector.load %arg5[%c0_161, %c24] : memref<64x25xf32, #tpu.memory_space<vmem>>, vector<1x1xf32>
    %518 = vector.broadcast %517 : vector<1x1xf32> to vector<1x128xf32>
    %519 = arith.addf %516, %518 : vector<1x128xf32>
    %c0_162 = arith.constant 0 : index
    %c0_163 = arith.constant 0 : index
    %c0_164 = arith.constant 0 : index
    %520 = vector.load %arg8[%c0_162, %c0_163, %c0_164] : memref<1x1x128xf32, #tpu.memory_space<vmem>>, vector<1x1x128xf32>
    %521 = vector.shape_cast %520 : vector<1x1x128xf32> to vector<1x128xf32>
    %522 = vector.shape_cast %519 : vector<1x128xf32> to vector<1x1x128xf32>
    tpu.vector_store %arg8[%c0_162, %c0_163, %c0_164], %522 {strides = array<i32>} : memref<1x1x128xf32, #tpu.memory_space<vmem>>, vector<1x1x128xf32>,
    return
  }
  func.func @transform_0(%arg0: i32) -> (i32, i32, i32) {
    %c0_i32 = arith.constant 0 : i32
    %c0_i32_0 = arith.constant 0 : i32
    %c0_i32_1 = arith.constant 0 : i32
    return %arg0, %c0_i32, %c0_i32_0 : i32, i32, i32
  }
  func.func @transform_1(%arg0: i32) -> (i32, i32, i32) {
    %c0_i32 = arith.constant 0 : i32
    %c0_i32_0 = arith.constant 0 : i32
    %c0_i32_1 = arith.constant 0 : i32
    return %arg0, %c0_i32, %c0_i32_0 : i32, i32, i32
  }
  func.func @transform_2(%arg0: i32) -> (i32, i32, i32) {
    %c0_i32 = arith.constant 0 : i32
    %c0_i32_0 = arith.constant 0 : i32
    %c0_i32_1 = arith.constant 0 : i32
    %c0_i32_2 = arith.constant 0 : i32
    return %c0_i32, %c0_i32_0, %c0_i32_1 : i32, i32, i32
  }
  func.func @transform_3(%arg0: i32) -> (i32, i32, i32) {
    %c0_i32 = arith.constant 0 : i32
    %c0_i32_0 = arith.constant 0 : i32
    %c0_i32_1 = arith.constant 0 : i32
    %c0_i32_2 = arith.constant 0 : i32
    return %c0_i32, %c0_i32_0, %c0_i32_1 : i32, i32, i32
  }
  func.func @transform_4(%arg0: i32) -> (i32, i32) {
    %c0_i32 = arith.constant 0 : i32
    %c0_i32_0 = arith.constant 0 : i32
    %c0_i32_1 = arith.constant 0 : i32
    return %c0_i32, %c0_i32_0 : i32, i32
  }
  func.func @transform_5(%arg0: i32) -> (i32, i32) {
    %c0_i32 = arith.constant 0 : i32
    %c0_i32_0 = arith.constant 0 : i32
    %c0_i32_1 = arith.constant 0 : i32
    return %c0_i32, %c0_i32_0 : i32, i32
  }
  func.func @transform_6(%arg0: i32) -> (i32, i32, i32) {
    %c0_i32 = arith.constant 0 : i32
    %c0_i32_0 = arith.constant 0 : i32
    %c0_i32_1 = arith.constant 0 : i32
    return %arg0, %c0_i32, %c0_i32_0 : i32, i32, i32
  }
  func.func @transform_7(%arg0: i32) -> (i32, i32, i32) {
    %c0_i32 = arith.constant 0 : i32
    %c0_i32_0 = arith.constant 0 : i32
    %c0_i32_1 = arith.constant 0 : i32
    return %arg0, %c0_i32, %c0_i32_0 : i32, i32, i32
  }
  func.func @transform_8(%arg0: i32) -> (i32, i32, i32) {
    %c0_i32 = arith.constant 0 : i32
    %c0_i32_0 = arith.constant 0 : i32
    %c0_i32_1 = arith.constant 0 : i32
    return %arg0, %c0_i32, %c0_i32_0 : i32, i32, i32
  }
  func.func @transform_9(%arg0: i32) -> (i32, i32, i32) {
    %c0_i32 = arith.constant 0 : i32
    %c0_i32_0 = arith.constant 0 : i32
    %c0_i32_1 = arith.constant 0 : i32
    return %arg0, %c0_i32, %c0_i32_0 : i32, i32, i32
  }
}

</mosaic_0001>

<llo_original>
// kernel: layer_block_forward.1
$region0: #{layer_block_forward.1}
  #allocation0 [shape = 'u32[]', space=smem, size = 0x4, offset = 0x4, fixed_abs, tag = 'smem constant byte address 0x4 - core index']
  #allocation1 [shape = 'u32[144,128]{1,0:T(1,128)}', space=vmem, size = 0x12000, scoped, tag = 'internal scratch']
  %s0 = inlined_call_operand.vmem [shape: f32[2,32,128], index: 0, kind: input, shape index: {}]
  %s1 = inlined_call_operand.hbm [shape: f32[2,32,128], index: 1, kind: input, shape index: {}]
  %s2 = inlined_call_operand.vmem [shape: bf16[3,32,256], index: 2, kind: input, shape index: {}]
  %s3 = inlined_call_operand.vmem [shape: bf16[3,64,32], index: 3, kind: input, shape index: {}]
  %s4 = inlined_call_operand.vmem [shape: f32[64,25], index: 4, kind: input, shape index: {}]
  %s5 = inlined_call_operand.vmem [shape: bf16[64,85], index: 5, kind: input, shape index: {}]
  %s6 = inlined_call_operand.hbm [shape: f32[2,32,128], index: 6, kind: output, shape index: {0}]
  %s7 = inlined_call_operand.hbm [shape: f32[2,1,128], index: 7, kind: output, shape index: {1}]
  %s8 = inlined_call_operand.hbm [shape: f32[2,128,128], index: 8, kind: output, shape index: {2}]
  %s9 = inlined_call_operand.hbm [shape: f32[2,128,128], index: 9, kind: output, shape index: {3}]
  %10 = xla_tuple %s6, %s7, %s8, %s9
  %s11 = sld [smem:[#allocation0]]
  $region85: #{layer_block_forward.1} parent=0
    _
  %s13 = ssub.s32 1, %s11
  %s14 = scalar_select 0, %s13, %s11
  $region1: #{layer_block_forward.1} parent=0
    #allocation2 [shape = 'u8[32768]{0}', space=vmem, size = 0x8000, scoped, tag = 'input window, operand 1']
    #allocation3 [shape = 's32[2]{0}', space=sflag, size = 0x8, scoped, tag = 'scoped memory for layer_block_forward.1']
    #allocation4 [shape = 's32[2]{0}', space=sflag, size = 0x8, scoped, tag = 'scoped memory for layer_block_forward.1']
    #allocation5 [shape = 'u8[32768]{0}', space=vmem, size = 0x8000, scoped, tag = 'output window, operand 0']
    #allocation6 [shape = 'u8[1024]{0}', space=vmem, size = 0x400, scoped, tag = 'output window, operand 1']
    #allocation7 [shape = 's32[2]{0}', space=sflag, size = 0x8, scoped, tag = 'scoped memory for layer_block_forward.1']
    #allocation8 [shape = 'u8[131072]{0}', space=vmem, size = 0x20000, scoped, tag = 'output window, operand 2']
    #allocation9 [shape = 'u8[131072]{0}', space=vmem, size = 0x20000, scoped, tag = 'output window, operand 3']
    #allocation10 [shape = 's32[2]{0}', space=sflag, size = 0x8, scoped, tag = 'scoped memory for layer_block_forward.1']
    %15 = vsyncpa [#allocation3], 0
    %s16 = scalar_lea.sflag [#allocation3], 1
    %17 = vsyncpa %s16, 0
    %18 = vsyncpa [#allocation4], 0
    %s19 = scalar_lea.sflag [#allocation4], 1
    %20 = vsyncpa %s19, 0
    %21 = vsyncpa [#allocation7], 0
    %s22 = scalar_lea.sflag [#allocation7], 1
    %23 = vsyncpa %s22, 0
    %24 = vsyncpa [#allocation10], 0
    %s25 = scalar_lea.sflag [#allocation10], 1
    %26 = vsyncpa %s25, 0
    loop: start=0, step=1, limit=4
    $region2: #{layer_block_forward.1} parent=1 // loop_pre_header
      _
    $region3: #{layer_block_forward.1} parent=1 // loop_header
      %s28 = sphi 0, %s32
      %p29 = scmp.ge.s32.totalorder %s28, 4
      %s38 = sphi 0, %s40
      %s41 = sphi 0, %s38
      %s42 = sphi 0, %s41
      %s58 = sphi 0, %s42
      %s64 = sphi 0, %s66
      %s67 = sphi 0, %s64
      %s68 = sphi 0, %s67
      %s84 = sphi 0, %s68
      %s88 = sphi 0, %s88
      %s90 = sphi 0, %s88
      %s91 = sphi 0, %s90
      %s105 = sphi 0, %s91
      %s109 = sphi 0, %s109
      %s111 = sphi 0, %s109
      %s112 = sphi 0, %s111
      %s126 = sphi 0, %s112
      %s130 = sphi 0, %s130
      %s132 = sphi 0, %s130
      %s133 = sphi 0, %s132
      %s147 = sphi 0, %s133
      %s151 = sphi 0, %s151
      %s153 = sphi 0, %s151
      %s154 = sphi 0, %s153
      %s168 = sphi 0, %s154
      %s174 = sphi 0, %s176
      %s177 = sphi 0, %s174
      %s178 = sphi 0, %s177
      %s194 = sphi 0, %s178
      %s200 = sphi 0, %s202
      %s203 = sphi 0, %s200
      %s204 = sphi 0, %s203
      %s220 = sphi 0, %s204
      %s226 = sphi 0, %s228
      %s229 = sphi 0, %s226
      %s230 = sphi 0, %s229
      %s246 = sphi 0, %s230
      %s252 = sphi 0, %s254
      %s255 = sphi 0, %s252
      %s256 = sphi 0, %s255
      %s272 = sphi 0, %s256
    $region4: #{layer_block_forward.1} parent=1 // loop_header_branch
      %31 = sbr.rel (%p29) target = $region8
    $region5: #{layer_block_forward.1} parent=1 // loop_body
      %s33 = ssub.s32 %s28, 1
      %s34 = ssub.s32 %s28, 2
      %s35 = sadd.s32 %s28, 1
      %s36 = ssub.s32 %s28, %s35
      %p37 = scmp.eq.s32.totalorder %s36, 0
      %s39 = sadd.s32 %s38, 1
      %s40 = scalar_select %p37, %s38, %s39
      %p43 = pneg %p37
      %p44 = scmp.eq.s32.totalorder %s28, 1
      %p45 = por %p43, %p44
      %p46 = scmp.ne.s32.totalorder %s38, %s41
      %p47 = scmp.eq.s32.totalorder %s28, 0
      %p48 = por %p46, %p47
      %p49 = scmp.ne.s32.totalorder %s38, %s41
      %p50 = scmp.eq.s32.totalorder %s33, 1
      %p51 = por %p49, %p50
      %p52 = scmp.ne.s32.totalorder %s41, %s42
      %p53 = scmp.eq.s32.totalorder %s33, 0
      %p54 = por %p52, %p53
      %p55 = scmp.ne.s32.totalorder %s41, %s42
      %p56 = scmp.eq.s32.totalorder %s34, 1
      %p57 = por %p55, %p56
      %p59 = scmp.ne.s32.totalorder %s42, %s58
      %p60 = scmp.eq.s32.totalorder %s34, 0
      %p61 = por %p59, %p60
      %s62 = ssub.s32 %s28, %s35
      %p63 = scmp.eq.s32.totalorder %s62, 0
      %s65 = sadd.s32 %s64, 1
      %s66 = scalar_select %p63, %s64, %s65
      %p69 = pneg %p63
      %p70 = scmp.eq.s32.totalorder %s28, 1
      %p71 = por %p69, %p70
      %p72 = scmp.ne.s32.totalorder %s64, %s67
      %p73 = scmp.eq.s32.totalorder %s28, 0
      %p74 = por %p72, %p73
      %p75 = scmp.ne.s32.totalorder %s64, %s67
      %p76 = scmp.eq.s32.totalorder %s33, 1
      %p77 = por %p75, %p76
      %p78 = scmp.ne.s32.totalorder %s67, %s68
      %p79 = scmp.eq.s32.totalorder %s33, 0
      %p80 = por %p78, %p79
      %p81 = scmp.ne.s32.totalorder %s67, %s68
      %p82 = scmp.eq.s32.totalorder %s34, 1
      %p83 = por %p81, %p82
      %p85 = scmp.ne.s32.totalorder %s68, %s84
      %p86 = scmp.eq.s32.totalorder %s34, 0
      %p87 = por %p85, %p86
      %s89 = sadd.s32 %s88, 1
      %p92 = scmp.eq.s32.totalorder %s28, 1
      %p93 = scmp.ne.s32.totalorder %s88, %s90
      %p94 = scmp.eq.s32.totalorder %s28, 0
      %p95 = por %p93, %p94
      %p96 = scmp.ne.s32.totalorder %s88, %s90
      %p97 = scmp.eq.s32.totalorder %s33, 1
      %p98 = por %p96, %p97
      %p99 = scmp.ne.s32.totalorder %s90, %s91
      %p100 = scmp.eq.s32.totalorder %s33, 0
      %p101 = por %p99, %p100
      %p102 = scmp.ne.s32.totalorder %s90, %s91
      %p103 = scmp.eq.s32.totalorder %s34, 1
      %p104 = por %p102, %p103
      %p106 = scmp.ne.s32.totalorder %s91, %s105
      %p107 = scmp.eq.s32.totalorder %s34, 0
      %p108 = por %p106, %p107
      %s110 = sadd.s32 %s109, 1
      %p113 = scmp.eq.s32.totalorder %s28, 1
      %p114 = scmp.ne.s32.totalorder %s109, %s111
      %p115 = scmp.eq.s32.totalorder %s28, 0
      %p116 = por %p114, %p115
      %p117 = scmp.ne.s32.totalorder %s109, %s111
      %p118 = scmp.eq.s32.totalorder %s33, 1
      %p119 = por %p117, %p118
      %p120 = scmp.ne.s32.totalorder %s111, %s112
      %p121 = scmp.eq.s32.totalorder %s33, 0
      %p122 = por %p120, %p121
      %p123 = scmp.ne.s32.totalorder %s111, %s112
      %p124 = scmp.eq.s32.totalorder %s34, 1
      %p125 = por %p123, %p124
      %p127 = scmp.ne.s32.totalorder %s112, %s126
      %p128 = scmp.eq.s32.totalorder %s34, 0
      %p129 = por %p127, %p128
      %s131 = sadd.s32 %s130, 1
      %p134 = scmp.eq.s32.totalorder %s28, 1
      %p135 = scmp.ne.s32.totalorder %s130, %s132
      %p136 = scmp.eq.s32.totalorder %s28, 0
      %p137 = por %p135, %p136
      %p138 = scmp.ne.s32.totalorder %s130, %s132
      %p139 = scmp.eq.s32.totalorder %s33, 1
      %p140 = por %p138, %p139
      %p141 = scmp.ne.s32.totalorder %s132, %s133
      %p142 = scmp.eq.s32.totalorder %s33, 0
      %p143 = por %p141, %p142
      %p144 = scmp.ne.s32.totalorder %s132, %s133
      %p145 = scmp.eq.s32.totalorder %s34, 1
      %p146 = por %p144, %p145
      %p148 = scmp.ne.s32.totalorder %s133, %s147
      %p149 = scmp.eq.s32.totalorder %s34, 0
      %p150 = por %p148, %p149
      %s152 = sadd.s32 %s151, 1
      %p155 = scmp.eq.s32.totalorder %s28, 1
      %p156 = scmp.ne.s32.totalorder %s151, %s153
      %p157 = scmp.eq.s32.totalorder %s28, 0
      %p158 = por %p156, %p157
      %p159 = scmp.ne.s32.totalorder %s151, %s153
      %p160 = scmp.eq.s32.totalorder %s33, 1
      %p161 = por %p159, %p160
      %p162 = scmp.ne.s32.totalorder %s153, %s154
      %p163 = scmp.eq.s32.totalorder %s33, 0
      %p164 = por %p162, %p163
      %p165 = scmp.ne.s32.totalorder %s153, %s154
      %p166 = scmp.eq.s32.totalorder %s34, 1
      %p167 = por %p165, %p166
      %p169 = scmp.ne.s32.totalorder %s154, %s168
      %p170 = scmp.eq.s32.totalorder %s34, 0
      %p171 = por %p169, %p170
      %s172 = ssub.s32 %s28, %s35
      %p173 = scmp.eq.s32.totalorder %s172, 0
      %s175 = sadd.s32 %s174, 1
      %s176 = scalar_select %p173, %s174, %s175
      %p179 = pneg %p173
      %p180 = scmp.eq.s32.totalorder %s28, 1
      %p181 = por %p179, %p180
      %p182 = scmp.ne.s32.totalorder %s174, %s177
      %p183 = scmp.eq.s32.totalorder %s28, 0
      %p184 = por %p182, %p183
      %p185 = scmp.ne.s32.totalorder %s174, %s177
      %p186 = scmp.eq.s32.totalorder %s33, 1
      %p187 = por %p185, %p186
      %p188 = scmp.ne.s32.totalorder %s177, %s178
      %p189 = scmp.eq.s32.totalorder %s33, 0
      %p190 = por %p188, %p189
      %p191 = scmp.ne.s32.totalorder %s177, %s178
      %p192 = scmp.eq.s32.totalorder %s34, 1
      %p193 = por %p191, %p192
      %p195 = scmp.ne.s32.totalorder %s178, %s194
      %p196 = scmp.eq.s32.totalorder %s34, 0
      %p197 = por %p195, %p196
      %s198 = ssub.s32 %s28, %s35
      %p199 = scmp.eq.s32.totalorder %s198, 0
      %s201 = sadd.s32 %s200, 1
      %s202 = scalar_select %p199, %s200, %s201
      %p205 = pneg %p199
      %p206 = scmp.eq.s32.totalorder %s28, 1
      %p207 = por %p205, %p206
      %p208 = scmp.ne.s32.totalorder %s200, %s203
      %p209 = scmp.eq.s32.totalorder %s28, 0
      %p210 = por %p208, %p209
      %p211 = scmp.ne.s32.totalorder %s200, %s203
      %p212 = scmp.eq.s32.totalorder %s33, 1
      %p213 = por %p211, %p212
      %p214 = scmp.ne.s32.totalorder %s203, %s204
      %p215 = scmp.eq.s32.totalorder %s33, 0
      %p216 = por %p214, %p215
      %p217 = scmp.ne.s32.totalorder %s203, %s204
      %p218 = scmp.eq.s32.totalorder %s34, 1
      %p219 = por %p217, %p218
      %p221 = scmp.ne.s32.totalorder %s204, %s220
      %p222 = scmp.eq.s32.totalorder %s34, 0
      %p223 = por %p221, %p222
      %s224 = ssub.s32 %s28, %s35
      %p225 = scmp.eq.s32.totalorder %s224, 0
      %s227 = sadd.s32 %s226, 1
      %s228 = scalar_select %p225, %s226, %s227
      %p231 = pneg %p225
      %p232 = scmp.eq.s32.totalorder %s28, 1
      %p233 = por %p231, %p232
      %p234 = scmp.ne.s32.totalorder %s226, %s229
      %p235 = scmp.eq.s32.totalorder %s28, 0
      %p236 = por %p234, %p235
      %p237 = scmp.ne.s32.totalorder %s226, %s229
      %p238 = scmp.eq.s32.totalorder %s33, 1
      %p239 = por %p237, %p238
      %p240 = scmp.ne.s32.totalorder %s229, %s230
      %p241 = scmp.eq.s32.totalorder %s33, 0
      %p242 = por %p240, %p241
      %p243 = scmp.ne.s32.totalorder %s229, %s230
      %p244 = scmp.eq.s32.totalorder %s34, 1
      %p245 = por %p243, %p244
      %p247 = scmp.ne.s32.totalorder %s230, %s246
      %p248 = scmp.eq.s32.totalorder %s34, 0
      %p249 = por %p247, %p248
      %s250 = ssub.s32 %s28, %s35
      %p251 = scmp.eq.s32.totalorder %s250, 0
      %s253 = sadd.s32 %s252, 1
      %s254 = scalar_select %p251, %s252, %s253
      %p257 = pneg %p251
      %p258 = scmp.eq.s32.totalorder %s28, 1
      %p259 = por %p257, %p258
      %p260 = scmp.ne.s32.totalorder %s252, %s255
      %p261 = scmp.eq.s32.totalorder %s28, 0
      %p262 = por %p260, %p261
      %p263 = scmp.ne.s32.totalorder %s252, %s255
      %p264 = scmp.eq.s32.totalorder %s33, 1
      %p265 = por %p263, %p264
      %p266 = scmp.ne.s32.totalorder %s255, %s256
      %p267 = scmp.eq.s32.totalorder %s33, 0
      %p268 = por %p266, %p267
      %p269 = scmp.ne.s32.totalorder %s255, %s256
      %p270 = scmp.eq.s32.totalorder %s34, 1
      %p271 = por %p269, %p270
      %p273 = scmp.ne.s32.totalorder %s256, %s272
      %p274 = scmp.eq.s32.totalorder %s34, 0
      %p275 = por %p273, %p274
      %p276 = scmp.le.s32.totalorder 1, %s28
      %p277 = scmp.lt.s32.totalorder %s28, 3
      %p278 = pnand %p276, %p277
      %p279 = pneg %p278
      // Predicated region
      $region9: #{layer_block_forward.1} parent=5 // pred_check
        _
      $region10: #{layer_block_forward.1} parent=5 // pred_check_branch
        %281 = sbr.rel (%p278) target = $region12
      $region11: #{layer_block_forward.1} parent=5 // pred_region
        %s282 = ssub.s32 %s28, 1
        // Predicated region
        $region13: #{layer_block_forward.1} parent=11 // pred_check
          %p283 = pneg %p101
        $region14: #{layer_block_forward.1} parent=11 // pred_check_branch
          %285 = sbr.rel (%p283) target = $region16
        $region15: #{layer_block_forward.1} parent=11 // pred_region
          _
        $region16: #{layer_block_forward.1} parent=11 // pred_fallthru
          _
        // Predicated region
        $region17: #{layer_block_forward.1} parent=11 // pred_check
          %p286 = pneg %p122
        $region18: #{layer_block_forward.1} parent=11 // pred_check_branch
          %288 = sbr.rel (%p286) target = $region20
        $region19: #{layer_block_forward.1} parent=11 // pred_region
          _
        $region20: #{layer_block_forward.1} parent=11 // pred_fallthru
          _
        // Predicated region
        $region21: #{layer_block_forward.1} parent=11 // pred_check
          %p289 = pneg %p143
        $region22: #{layer_block_forward.1} parent=11 // pred_check_branch
          %291 = sbr.rel (%p289) target = $region24
        $region23: #{layer_block_forward.1} parent=11 // pred_region
          _
        $region24: #{layer_block_forward.1} parent=11 // pred_fallthru
          _
        // Predicated region
        $region25: #{layer_block_forward.1} parent=11 // pred_check
          %p292 = pneg %p164
        $region26: #{layer_block_forward.1} parent=11 // pred_check_branch
          %294 = sbr.rel (%p292) target = $region28
        $region27: #{layer_block_forward.1} parent=11 // pred_region
          _
        $region28: #{layer_block_forward.1} parent=11 // pred_fallthru
          _
      $region12: #{layer_block_forward.1} parent=5 // pred_fallthru
        _
      %p295 = scmp.lt.s32.totalorder %s28, 2
      // Predicated region
      $region29: #{layer_block_forward.1} parent=5 // pred_check
        %p296 = pneg %p295
      $region30: #{layer_block_forward.1} parent=5 // pred_check_branch
        %298 = sbr.rel (%p296) target = $region32
      $region31: #{layer_block_forward.1} parent=5 // pred_region
        // Predicated region
        $region33: #{layer_block_forward.1} parent=31 // pred_check
          %p299 = pneg %p48
        $region34: #{layer_block_forward.1} parent=31 // pred_check_branch
          %301 = sbr.rel (%p299) target = $region36
        $region35: #{layer_block_forward.1} parent=31 // pred_region
          %p302 = scmp.lt.s32.totalorder %s28, 1
          %s303 = scalar_select %p302, %s28, 1
          %s304 = smul.addr %s303, 4
          %s305 = smul.addr %s304, 8
          %s306 = scalar_lea.vmem %s0, %s305
        $region36: #{layer_block_forward.1} parent=31 // pred_fallthru
          _
        // Predicated region
        $region37: #{layer_block_forward.1} parent=31 // pred_check
          %p307 = pneg %p74
        $region38: #{layer_block_forward.1} parent=31 // pred_check_branch
          %309 = sbr.rel (%p307) target = $region40
        $region39: #{layer_block_forward.1} parent=31 // pred_region
          %s310 = sand.u32 %s64, 1
          %s311 = scalar_lea.sflag [#allocation3], %s310
          %s312 = sand.u32 %s64, 1
          %s313 = smul.addr %s312, 32
          %s314 = scalar_lea.vmem [#allocation2], %s313
          %s316 = ssub.s32 512, 512
          %317 = vsyncadd %s311, %s316
          %s318 = smul.addr %s28, 4
          %s319 = smul.addr %s318, 128
          %s320 = scalar_lea.hbm %s1, %s319
          %s321 = sshll.u32 %s314, 4
          %s322 = int_to_ptr.vmem [resolvable:$true] %s321
          %327 = dma.hbm_to_vmem [thread:$0]  %s320, 512, %s322, %s311, 128, 128, 8
        $region40: #{layer_block_forward.1} parent=31 // pred_fallthru
          _
      $region32: #{layer_block_forward.1} parent=5 // pred_fallthru
        _
      %p328 = scmp.le.s32.totalorder 1, %s28
      %p329 = scmp.lt.s32.totalorder %s28, 3
      %p330 = pnand %p328, %p329
      %p331 = pneg %p330
      // Predicated region
      $region41: #{layer_block_forward.1} parent=5 // pred_check
        _
      $region42: #{layer_block_forward.1} parent=5 // pred_check_branch
        %333 = sbr.rel (%p330) target = $region44
      $region43: #{layer_block_forward.1} parent=5 // pred_region
        %s334 = ssub.s32 %s28, 1
        %s335 = sand.u32 %s67, 1
        %s336 = scalar_lea.sflag [#allocation3], %s335
        %s337 = sand.u32 %s67, 1
        %s338 = smul.addr %s337, 32
        %s339 = scalar_lea.vmem [#allocation2], %s338
        // Predicated region
        $region45: #{layer_block_forward.1} parent=43 // pred_check
          %p340 = pneg %p80
        $region46: #{layer_block_forward.1} parent=43 // pred_check_branch
          %342 = sbr.rel (%p340) target = $region48
        $region47: #{layer_block_forward.1} parent=43 // pred_region
          %343 = dma.done %s336, 512
        $region48: #{layer_block_forward.1} parent=43 // pred_fallthru
          _
        %p344 = scmp.lt.s32.totalorder %s33, 1
        %s345 = scalar_select %p344, %s33, 1
        %s346 = smul.addr %s345, 4
        %s347 = smul.addr %s346, 8
        %s348 = scalar_lea.vmem %s0, %s347
        %p349 = pneg %p54
        %p350 = pneg %p51
        %s351 = sand.u32 %s67, 1
        %s352 = scalar_lea.sflag [#allocation3], %s351
        %s353 = sand.u32 %s67, 1
        %s354 = smul.addr %s353, 32
        %s355 = scalar_lea.vmem [#allocation2], %s354
        %p356 = pneg %p80
        %p357 = pneg %p77
        %p358 = pneg %p101
        %p359 = pneg %p98
        %p360 = pneg %p122
        %p361 = pneg %p119
        %p362 = pneg %p143
        %p363 = pneg %p140
        %p364 = pneg %p164
        %p365 = pneg %p161
        %p366 = pneg %p190
        %p367 = pneg %p187
        %s368 = sand.u32 %s177, 1
        %s369 = scalar_lea.sflag [#allocation4], %s368
        %s370 = sand.u32 %s177, 1
        %s371 = smul.addr %s370, 32
        %s372 = scalar_lea.vmem [#allocation5], %s371
        %p373 = pneg %p216
        %p374 = pneg %p213
        %s375 = sand.u32 %s33, 1
        %s376 = scalar_lea.sflag [#allocation7], %s375
        %s377 = sand.u32 %s203, 1
        %s378 = scalar_lea.vmem [#allocation6], %s377
        %p379 = pneg %p242
        %p380 = pneg %p239
        %s381 = sand.u32 %s33, 1
        %s382 = scalar_lea.sflag [#allocation7], %s381
        %s383 = sand.u32 %s229, 1
        %s384 = smul.addr %s383, 128
        %s385 = scalar_lea.vmem [#allocation8], %s384
        %p386 = pneg %p268
        %p387 = pneg %p265
        %s388 = sand.u32 %s255, 1
        %s389 = scalar_lea.sflag [#allocation10], %s388
        %s390 = sand.u32 %s255, 1
        %s391 = smul.addr %s390, 128
        %s392 = scalar_lea.vmem [#allocation9], %s391
        %p393 = scmp.lt.s32.totalorder %s33, 1
        %s394 = scalar_select %p393, %s33, 1
        %s395 = smul.addr %s394, 4
        %s396 = smul.addr %s395, 8
        %s397 = scalar_lea.vmem %s0, %s396
        %v399 = vld [vmem:[%s397] sm:$0xff]
        %v400 = vld [vmem:[%s397 + $0x8] sm:$0xff]
        %v401 = vld [vmem:[%s397 + $0x10] sm:$0xff]
        %v402 = vld [vmem:[%s397 + $0x18] sm:$0xff]
        %v403 = vld [vmem:[%s339] sm:$0xff]
        %v404 = vld [vmem:[%s339 + $0x8] sm:$0xff]
        %v405 = vld [vmem:[%s339 + $0x10] sm:$0xff]
        %v406 = vld [vmem:[%s339 + $0x18] sm:$0xff]
        %v407 = vld [vmem:[%s2] sm:$0xff]
        %v408 = vld [vmem:[%s2 + $0x8] sm:$0xff]
        %v409 = vld [vmem:[%s2 + $0x10] sm:$0xff]
        %v410 = vld [vmem:[%s2 + $0x18] sm:$0xff]
        %v411 = vld [vmem:[%s4] sm:$0xff]
        %v412 = vld [vmem:[%s4 + $0x8] sm:$0xff]
        %v413 = vld [vmem:[%s4 + $0x10] sm:$0xff]
        %v414 = vld [vmem:[%s4 + $0x18] sm:$0xff]
        %v415 = vld [vmem:[%s4 + $0x20] sm:$0xff]
        %v416 = vld [vmem:[%s4 + $0x28] sm:$0xff]
        %v417 = vld [vmem:[%s4 + $0x30] sm:$0xff]
        %v418 = vld [vmem:[%s4 + $0x38] sm:$0xff]
        %v419 = vpack.c.bf16 %v400, %v399
        %v420 = vpack.c.bf16 %v402, %v401
        %v421 = vpack.c.bf16 %v404, %v403
        %v422 = vpack.c.bf16 %v406, %v405
        %424 = vset.pattern.permute.xlu0 0
        %425 = vperm.xlu0 %424, %v411
        %v426 = vpop.permute.xlu0 %425
        %429 = vset.pattern.permute.xlu0 0
        %430 = vperm.xlu0 %429, %v412
        %v431 = vpop.permute.xlu0 %430
        %434 = vset.pattern.permute.xlu0 0
        %435 = vperm.xlu0 %434, %v413
        %v436 = vpop.permute.xlu0 %435
        %439 = vset.pattern.permute.xlu0 0
        %440 = vperm.xlu0 %439, %v414
        %v441 = vpop.permute.xlu0 %440
        %v447 = vunpack.c.l.b16 %v407
        %v448 = vunpack.c.l.b16 %v408
        %v449 = vunpack.c.l.b16 %v409
        %v450 = vunpack.c.l.b16 %v410
        %v451 = vpack.c.b16 %v448, %v447
        %v452 = vpack.c.b16 %v450, %v449
        %455 = vxpose.xlu0.c.b16.start [1/8] %v451, 128
        %456 = vxpose.xlu0.c.b16.cont [2/8] %v452, 128
        %457 = vxpose.xlu0.c.b16.cont [3/8] 0, 128
        %458 = vxpose.xlu0.c.b16.cont [4/8] 0, 128
        %459 = vxpose.xlu0.c.b16.cont [5/8] 0, 128
        %460 = vxpose.xlu0.c.b16.cont [6/8] 0, 128
        %461 = vxpose.xlu0.c.b16.cont [7/8] 0, 128
        %462 = vxpose.xlu0.c.b16.end [8/8] 0, 128
        %v463 = vpop.trf.xlu0
        %v464 = vpop.trf.xlu0
        %v465 = vpop.trf.xlu0
        %v466 = vpop.trf.xlu0
        %v467 = vpop.trf.xlu0
        %v468 = vpop.trf.xlu0
        %v469 = vpop.trf.xlu0
        %v470 = vpop.trf.xlu0
        %vm471 = vcmask 261120
        %v473 = vsel %vm471, %v463, 0
        %v476 = vsel %vm471, %v464, 0
        %478 = vmatprep.subr.bf16.mxu0 0
        %479 = vmatpush1.bf16.msra.mxu0 0
        %480 = vmatprep.subr.bf16.mxu0 0
        %481 = vmatpush1.bf16.msra.mxu0 0
        %482 = vmatprep.subr.bf16.mxu0 0
        %483 = vmatpush1.bf16.msra.mxu0 0
        %484 = vmatprep.subr.bf16.mxu0 0
        %485 = vmatpush1.bf16.msra.mxu0 0
        %486 = vmatprep.subr.bf16.mxu0 0
        %487 = vmatpush1.bf16.msra.mxu0 0
        %488 = vmatprep.subr.bf16.mxu0 0
        %489 = vmatpush1.bf16.msra.mxu0 0
        %490 = vmatprep.subr.bf16.mxu0 0
        %491 = vmatpush1.bf16.msra.mxu0 %v420
        %492 = vmatprep.subr.bf16.mxu0 0
        %493 = vmatpush1.bf16.msra.mxu0 %v419
        %494 = vmatprep.subr.bf16.mxu0 0
        %495 = vmatpush2.bf16.msra.mxu0 0
        %496 = vmatprep.subr.bf16.mxu0 0
        %497 = vmatpush2.bf16.msra.mxu0 0
        %498 = vmatprep.subr.bf16.mxu0 0
        %499 = vmatpush2.bf16.msra.mxu0 0
        %500 = vmatprep.subr.bf16.mxu0 0
        %501 = vmatpush2.bf16.msra.mxu0 0
        %502 = vmatprep.subr.bf16.mxu0 0
        %503 = vmatpush2.bf16.msra.mxu0 0
        %504 = vmatprep.subr.bf16.mxu0 0
        %505 = vmatpush2.bf16.msra.mxu0 0
        %506 = vmatprep.subr.bf16.mxu0 0
        %507 = vmatpush2.bf16.msra.mxu0 0
        %508 = vmatprep.subr.bf16.mxu0 0
        %509 = vmatpush2.bf16.msra.mxu0 0
        %510 = vmatprep.mubr.bf16.mxu0 0
        %511 = vmatmul.mubr.bf16.gmra.mxu0 %v473
        %v512 = vpop.f32.mrf.mxu0
        %v513 = vadd.f32 %v426, %v512
        %v514 = vpop.f32.mrf.mxu0
        %v515 = vpop.f32.mrf.mxu0
        %v516 = vadd.f32 %v431, %v515
        %v517 = vpop.f32.mrf.mxu0
        %518 = vmatprep.mubr.bf16.mxu0 0
        %519 = vmatmul.mubr.bf16.gmra.mxu0 %v476
        %v520 = vpop.f32.mrf.mxu0
        %v521 = vadd.f32 %v436, %v520
        %v522 = vpop.f32.mrf.mxu0
        %v523 = vpop.f32.mrf.mxu0
        %v524 = vadd.f32 %v441, %v523
        %v525 = vpop.f32.mrf.mxu0
        %526 = vdwg.mxu0
        %527 = vset.pattern.permute.xlu0 1
        %528 = vperm.xlu0 %527, %v411
        %v529 = vpop.permute.xlu0 %528
        %531 = vset.pattern.permute.xlu0 1
        %532 = vperm.xlu0 %531, %v412
        %v533 = vpop.permute.xlu0 %532
        %535 = vset.pattern.permute.xlu0 1
        %536 = vperm.xlu0 %535, %v413
        %v537 = vpop.permute.xlu0 %536
        %539 = vset.pattern.permute.xlu0 1
        %540 = vperm.xlu0 %539, %v414
        %v541 = vpop.permute.xlu0 %540
        %544 = vset.pattern.permute.xlu0 1
        %545 = vperm.xlu0 %544, %v415
        %v546 = vpop.permute.xlu0 %545
        %549 = vset.pattern.permute.xlu0 1
        %550 = vperm.xlu0 %549, %v416
        %v551 = vpop.permute.xlu0 %550
        %554 = vset.pattern.permute.xlu0 1
        %555 = vperm.xlu0 %554, %v417
        %v556 = vpop.permute.xlu0 %555
        %559 = vset.pattern.permute.xlu0 1
        %560 = vperm.xlu0 %559, %v418
        %v561 = vpop.permute.xlu0 %560
        %563 = vrot.lane.b32.xlu0 %v451, 96
        %v564 = vpop.permute.xlu0 %563
        %565 = vrot.lane.b32.xlu0 %v452, 96
        %v566 = vpop.permute.xlu0 %565
        %569 = vxpose.xlu0.c.b16.start [1/8] %v564, 128
        %570 = vxpose.xlu0.c.b16.cont [2/8] %v566, 128
        %571 = vxpose.xlu0.c.b16.cont [3/8] 0, 128
        %572 = vxpose.xlu0.c.b16.cont [4/8] 0, 128
        %573 = vxpose.xlu0.c.b16.cont [5/8] 0, 128
        %574 = vxpose.xlu0.c.b16.cont [6/8] 0, 128
        %575 = vxpose.xlu0.c.b16.cont [7/8] 0, 128
        %576 = vxpose.xlu0.c.b16.end [8/8] 0, 128
        %v577 = vpop.trf.xlu0
        %v578 = vpop.trf.xlu0
        %v579 = vpop.trf.xlu0
        %v580 = vpop.trf.xlu0
        %v581 = vpop.trf.xlu0
        %v582 = vpop.trf.xlu0
        %v583 = vpop.trf.xlu0
        %v584 = vpop.trf.xlu0
        %v586 = vsel %vm471, %v577, 0
        %v589 = vsel %vm471, %v578, 0
        %v592 = vsel %vm471, %v579, 0
        %v595 = vsel %vm471, %v580, 0
        %597 = vmatprep.subr.bf16.mxu0 0
        %598 = vmatpush1.bf16.msra.mxu0 0
        %599 = vmatprep.subr.bf16.mxu0 0
        %600 = vmatpush1.bf16.msra.mxu0 0
        %601 = vmatprep.subr.bf16.mxu0 0
        %602 = vmatpush1.bf16.msra.mxu0 0
        %603 = vmatprep.subr.bf16.mxu0 0
        %604 = vmatpush1.bf16.msra.mxu0 0
        %605 = vmatprep.subr.bf16.mxu0 0
        %606 = vmatpush1.bf16.msra.mxu0 0
        %607 = vmatprep.subr.bf16.mxu0 0
        %608 = vmatpush1.bf16.msra.mxu0 0
        %609 = vmatprep.subr.bf16.mxu0 0
        %610 = vmatpush1.bf16.msra.mxu0 %v422
        %611 = vmatprep.subr.bf16.mxu0 0
        %612 = vmatpush1.bf16.msra.mxu0 %v421
        %613 = vmatprep.subr.bf16.mxu0 0
        %614 = vmatpush2.bf16.msra.mxu0 0
        %615 = vmatprep.subr.bf16.mxu0 0
        %616 = vmatpush2.bf16.msra.mxu0 0
        %617 = vmatprep.subr.bf16.mxu0 0
        %618 = vmatpush2.bf16.msra.mxu0 0
        %619 = vmatprep.subr.bf16.mxu0 0
        %620 = vmatpush2.bf16.msra.mxu0 0
        %621 = vmatprep.subr.bf16.mxu0 0
        %622 = vmatpush2.bf16.msra.mxu0 0
        %623 = vmatprep.subr.bf16.mxu0 0
        %624 = vmatpush2.bf16.msra.mxu0 0
        %625 = vmatprep.subr.bf16.mxu0 0
        %626 = vmatpush2.bf16.msra.mxu0 0
        %627 = vmatprep.subr.bf16.mxu0 0
        %628 = vmatpush2.bf16.msra.mxu0 0
        %629 = vmatprep.mubr.bf16.mxu0 0
        %630 = vmatmul.mubr.bf16.gmra.mxu0 %v586
        %v631 = vpop.f32.mrf.mxu0
        %v632 = vadd.f32 %v529, %v631
        %v633 = vpop.f32.mrf.mxu0
        %v634 = vpop.f32.mrf.mxu0
        %v635 = vadd.f32 %v533, %v634
        %v636 = vpop.f32.mrf.mxu0
        %637 = vmatprep.mubr.bf16.mxu0 0
        %638 = vmatmul.mubr.bf16.gmra.mxu0 %v589
        %v639 = vpop.f32.mrf.mxu0
        %v640 = vadd.f32 %v537, %v639
        %v641 = vpop.f32.mrf.mxu0
        %v642 = vpop.f32.mrf.mxu0
        %v643 = vadd.f32 %v541, %v642
        %v644 = vpop.f32.mrf.mxu0
        %645 = vmatprep.mubr.bf16.mxu0 0
        %646 = vmatmul.mubr.bf16.gmra.mxu0 %v592
        %v647 = vpop.f32.mrf.mxu0
        %v648 = vadd.f32 %v546, %v647
        %v649 = vpop.f32.mrf.mxu0
        %v650 = vpop.f32.mrf.mxu0
        %v651 = vadd.f32 %v551, %v650
        %v652 = vpop.f32.mrf.mxu0
        %653 = vmatprep.mubr.bf16.mxu0 0
        %654 = vmatmul.mubr.bf16.gmra.mxu0 %v595
        %v655 = vpop.f32.mrf.mxu0
        %v656 = vadd.f32 %v556, %v655
        %v657 = vpop.f32.mrf.mxu0
        %v658 = vpop.f32.mrf.mxu0
        %v659 = vadd.f32 %v561, %v658
        %v660 = vpop.f32.mrf.mxu0
        %661 = vdwg.mxu0
        %v662 = vpack.c.bf16 %v513, %v513
        %v663 = vpack.c.bf16 %v632, %v632
        %v664 = vpack.c.bf16 %v648, %v648
        %665 = vxpose.xlu0.c.b16.start [1/8] %v662, 128
        %666 = vxpose.xlu0.c.b16.cont [2/8] 0, 128
        %667 = vxpose.xlu0.c.b16.cont [3/8] 0, 128
        %668 = vxpose.xlu0.c.b16.cont [4/8] 0, 128
        %669 = vxpose.xlu0.c.b16.cont [5/8] 0, 128
        %670 = vxpose.xlu0.c.b16.cont [6/8] 0, 128
        %671 = vxpose.xlu0.c.b16.cont [7/8] 0, 128
        %672 = vxpose.xlu0.c.b16.end [8/8] 0, 128
        %v673 = vpop.trf.xlu0
        %v674 = vpop.trf.xlu0
        %v675 = vpop.trf.xlu0
        %v676 = vpop.trf.xlu0
        %v677 = vpop.trf.xlu0
        %v678 = vpop.trf.xlu0
        %v679 = vpop.trf.xlu0
        %v680 = vpop.trf.xlu0
        %vm681 = vcmask 64512
        %v683 = vsel %vm681, %v673, 0
        %v686 = vsel %vm681, %v674, 0
        %v689 = vsel %vm681, %v675, 0
        %v692 = vsel %vm681, %v676, 0
        %v695 = vsel %vm681, %v677, 0
        %v698 = vsel %vm681, %v678, 0
        %v701 = vsel %vm681, %v679, 0
        %v704 = vsel %vm681, %v680, 0
        %vm706 = vcmask 1043456
        %v708 = vsel %vm706, %v663, 0
        %710 = vmatprep.subr.bf16.mxu0 0
        %711 = vmatpush1.bf16.msra.mxu0 0
        %712 = vmatprep.subr.bf16.mxu0 0
        %713 = vmatpush1.bf16.msra.mxu0 0
        %714 = vmatprep.subr.bf16.mxu0 0
        %715 = vmatpush1.bf16.msra.mxu0 0
        %716 = vmatprep.subr.bf16.mxu0 0
        %717 = vmatpush1.bf16.msra.mxu0 0
        %718 = vmatprep.subr.bf16.mxu0 0
        %719 = vmatpush1.bf16.msra.mxu0 0
        %720 = vmatprep.subr.bf16.mxu0 0
        %721 = vmatpush1.bf16.msra.mxu0 0
        %722 = vmatprep.subr.bf16.mxu0 0
        %723 = vmatpush1.bf16.msra.mxu0 0
        %724 = vmatprep.subr.bf16.mxu0 0
        %725 = vmatpush1.bf16.msra.mxu0 %v708
        %726 = vmatprep.subr.bf16.mxu0 0
        %727 = vmatpush2.bf16.msra.mxu0 0
        %728 = vmatprep.subr.bf16.mxu0 0
        %729 = vmatpush2.bf16.msra.mxu0 0
        %730 = vmatprep.subr.bf16.mxu0 0
        %731 = vmatpush2.bf16.msra.mxu0 0
        %732 = vmatprep.subr.bf16.mxu0 0
        %733 = vmatpush2.bf16.msra.mxu0 0
        %734 = vmatprep.subr.bf16.mxu0 0
        %735 = vmatpush2.bf16.msra.mxu0 0
        %736 = vmatprep.subr.bf16.mxu0 0
        %737 = vmatpush2.bf16.msra.mxu0 0
        %738 = vmatprep.subr.bf16.mxu0 0
        %739 = vmatpush2.bf16.msra.mxu0 0
        %740 = vmatprep.subr.bf16.mxu0 0
        %741 = vmatpush2.bf16.msra.mxu0 0
        %742 = vmatprep.mubr.bf16.mxu0 0
        %743 = vmatmul.mubr.bf16.gmra.mxu0 %v683
        %v744 = vpop.f32.mrf.mxu0
        %v745 = vadd.f32 0.0, %v744
        %v746 = vpop.f32.mrf.mxu0
        %v747 = vpop.f32.mrf.mxu0
        %v748 = vadd.f32 0.0, %v747
        %v749 = vpop.f32.mrf.mxu0
        %750 = vmatprep.mubr.bf16.mxu0 0
        %751 = vmatmul.mubr.bf16.gmra.mxu0 %v686
        %v752 = vpop.f32.mrf.mxu0
        %v753 = vadd.f32 0.0, %v752
        %v754 = vpop.f32.mrf.mxu0
        %v755 = vpop.f32.mrf.mxu0
        %v756 = vadd.f32 0.0, %v755
        %v757 = vpop.f32.mrf.mxu0
        %758 = vmatprep.mubr.bf16.mxu0 0
        %759 = vmatmul.mubr.bf16.gmra.mxu0 %v689
        %v760 = vpop.f32.mrf.mxu0
        %v761 = vadd.f32 0.0, %v760
        %v762 = vpop.f32.mrf.mxu0
        %v763 = vpop.f32.mrf.mxu0
        %v764 = vadd.f32 0.0, %v763
        %v765 = vpop.f32.mrf.mxu0
        %766 = vmatprep.mubr.bf16.mxu0 0
        %767 = vmatmul.mubr.bf16.gmra.mxu0 %v692
        %v768 = vpop.f32.mrf.mxu0
        %v769 = vadd.f32 0.0, %v768
        %v770 = vpop.f32.mrf.mxu0
        %v771 = vpop.f32.mrf.mxu0
        %v772 = vadd.f32 0.0, %v771
        %v773 = vpop.f32.mrf.mxu0
        %774 = vmatprep.mubr.bf16.mxu0 0
        %775 = vmatmul.mubr.bf16.gmra.mxu0 %v695
        %v776 = vpop.f32.mrf.mxu0
        %v777 = vadd.f32 0.0, %v776
        %v778 = vpop.f32.mrf.mxu0
        %v779 = vpop.f32.mrf.mxu0
        %v780 = vadd.f32 0.0, %v779
        %v781 = vpop.f32.mrf.mxu0
        %782 = vmatprep.mubr.bf16.mxu0 0
        %783 = vmatmul.mubr.bf16.gmra.mxu0 %v698
        %v784 = vpop.f32.mrf.mxu0
        %v785 = vadd.f32 0.0, %v784
        %v786 = vpop.f32.mrf.mxu0
        %v787 = vpop.f32.mrf.mxu0
        %v788 = vadd.f32 0.0, %v787
        %v789 = vpop.f32.mrf.mxu0
        %790 = vmatprep.mubr.bf16.mxu0 0
        %791 = vmatmul.mubr.bf16.gmra.mxu0 %v701
        %v792 = vpop.f32.mrf.mxu0
        %v793 = vadd.f32 0.0, %v792
        %v794 = vpop.f32.mrf.mxu0
        %v795 = vpop.f32.mrf.mxu0
        %v796 = vadd.f32 0.0, %v795
        %v797 = vpop.f32.mrf.mxu0
        %798 = vmatprep.mubr.bf16.mxu0 0
        %799 = vmatmul.mubr.bf16.gmra.mxu0 %v704
        %v800 = vpop.f32.mrf.mxu0
        %v801 = vadd.f32 0.0, %v800
        %v802 = vpop.f32.mrf.mxu0
        %v803 = vpop.f32.mrf.mxu0
        %v804 = vadd.f32 0.0, %v803
        %v805 = vpop.f32.mrf.mxu0
        %806 = vdwg.mxu0
        %807 = vmax.xlane.f32.xlu0 %v745
        %v808 = vpop.xlane.xlu0 %807
        %809 = vmax.xlane.f32.xlu0 %v748
        %v810 = vpop.xlane.xlu0 %809
        %811 = vmax.xlane.f32.xlu0 %v753
        %v812 = vpop.xlane.xlu0 %811
        %813 = vmax.xlane.f32.xlu0 %v756
        %v814 = vpop.xlane.xlu0 %813
        %815 = vmax.xlane.f32.xlu0 %v761
        %v816 = vpop.xlane.xlu0 %815
        %817 = vmax.xlane.f32.xlu0 %v764
        %v818 = vpop.xlane.xlu0 %817
        %819 = vmax.xlane.f32.xlu0 %v769
        %v820 = vpop.xlane.xlu0 %819
        %821 = vmax.xlane.f32.xlu0 %v772
        %v822 = vpop.xlane.xlu0 %821
        %823 = vmax.xlane.f32.xlu0 %v777
        %v824 = vpop.xlane.xlu0 %823
        %825 = vmax.xlane.f32.xlu0 %v780
        %v826 = vpop.xlane.xlu0 %825
        %827 = vmax.xlane.f32.xlu0 %v785
        %v828 = vpop.xlane.xlu0 %827
        %829 = vmax.xlane.f32.xlu0 %v788
        %v830 = vpop.xlane.xlu0 %829
        %831 = vmax.xlane.f32.xlu0 %v793
        %v832 = vpop.xlane.xlu0 %831
        %833 = vmax.xlane.f32.xlu0 %v796
        %v834 = vpop.xlane.xlu0 %833
        %835 = vmax.xlane.f32.xlu0 %v801
        %v836 = vpop.xlane.xlu0 %835
        %837 = vmax.xlane.f32.xlu0 %v804
        %v838 = vpop.xlane.xlu0 %837
        %v839 = vsub.f32 %v745, %v808
        %v840 = vsub.f32 %v748, %v810
        %v841 = vsub.f32 %v753, %v812
        %v842 = vsub.f32 %v756, %v814
        %v843 = vsub.f32 %v761, %v816
        %v844 = vsub.f32 %v764, %v818
        %v845 = vsub.f32 %v769, %v820
        %v846 = vsub.f32 %v772, %v822
        %v847 = vsub.f32 %v777, %v824
        %v848 = vsub.f32 %v780, %v826
        %v849 = vsub.f32 %v785, %v828
        %v850 = vsub.f32 %v788, %v830
        %v851 = vsub.f32 %v793, %v832
        %v852 = vsub.f32 %v796, %v834
        %v853 = vsub.f32 %v801, %v836
        %v854 = vsub.f32 %v804, %v838
        %v855 = vmul.f32 %v839, 1.442695
        %v856 = vpow.pop %v855
        %v857 = vmul.f32 %v840, 1.442695
        %v858 = vpow.pop %v857
        %v859 = vmul.f32 %v841, 1.442695
        %v860 = vpow.pop %v859
        %v861 = vmul.f32 %v842, 1.442695
        %v862 = vpow.pop %v861
        %v863 = vmul.f32 %v843, 1.442695
        %v864 = vpow.pop %v863
        %v865 = vmul.f32 %v844, 1.442695
        %v866 = vpow.pop %v865
        %v867 = vmul.f32 %v845, 1.442695
        %v868 = vpow.pop %v867
        %v869 = vmul.f32 %v846, 1.442695
        %v870 = vpow.pop %v869
        %v871 = vmul.f32 %v847, 1.442695
        %v872 = vpow.pop %v871
        %v873 = vmul.f32 %v848, 1.442695
        %v874 = vpow.pop %v873
        %v875 = vmul.f32 %v849, 1.442695
        %v876 = vpow.pop %v875
        %v877 = vmul.f32 %v850, 1.442695
        %v878 = vpow.pop %v877
        %v879 = vmul.f32 %v851, 1.442695
        %v880 = vpow.pop %v879
        %v881 = vmul.f32 %v852, 1.442695
        %v882 = vpow.pop %v881
        %v883 = vmul.f32 %v853, 1.442695
        %v884 = vpow.pop %v883
        %v885 = vmul.f32 %v854, 1.442695
        %v886 = vpow.pop %v885
        %887 = vadd.xlane.f32.xlu0 %v856
        %v888 = vpop.xlane.xlu0 %887
        %889 = vadd.xlane.f32.xlu0 %v858
        %v890 = vpop.xlane.xlu0 %889
        %891 = vadd.xlane.f32.xlu0 %v860
        %v892 = vpop.xlane.xlu0 %891
        %893 = vadd.xlane.f32.xlu0 %v862
        %v894 = vpop.xlane.xlu0 %893
        %895 = vadd.xlane.f32.xlu0 %v864
        %v896 = vpop.xlane.xlu0 %895
        %897 = vadd.xlane.f32.xlu0 %v866
        %v898 = vpop.xlane.xlu0 %897
        %899 = vadd.xlane.f32.xlu0 %v868
        %v900 = vpop.xlane.xlu0 %899
        %901 = vadd.xlane.f32.xlu0 %v870
        %v902 = vpop.xlane.xlu0 %901
        %903 = vadd.xlane.f32.xlu0 %v872
        %v904 = vpop.xlane.xlu0 %903
        %905 = vadd.xlane.f32.xlu0 %v874
        %v906 = vpop.xlane.xlu0 %905
        %907 = vadd.xlane.f32.xlu0 %v876
        %v908 = vpop.xlane.xlu0 %907
        %909 = vadd.xlane.f32.xlu0 %v878
        %v910 = vpop.xlane.xlu0 %909
        %911 = vadd.xlane.f32.xlu0 %v880
        %v912 = vpop.xlane.xlu0 %911
        %913 = vadd.xlane.f32.xlu0 %v882
        %v914 = vpop.xlane.xlu0 %913
        %915 = vadd.xlane.f32.xlu0 %v884
        %v916 = vpop.xlane.xlu0 %915
        %917 = vadd.xlane.f32.xlu0 %v886
        %v918 = vpop.xlane.xlu0 %917
        %v919 = vrcp.pop %v888
        %v920 = vrcp.pop %v890
        %v921 = vrcp.pop %v892
        %v922 = vrcp.pop %v894
        %v923 = vrcp.pop %v896
        %v924 = vrcp.pop %v898
        %v925 = vrcp.pop %v900
        %v926 = vrcp.pop %v902
        %v927 = vrcp.pop %v904
        %v928 = vrcp.pop %v906
        %v929 = vrcp.pop %v908
        %v930 = vrcp.pop %v910
        %v931 = vrcp.pop %v912
        %v932 = vrcp.pop %v914
        %v933 = vrcp.pop %v916
        %v934 = vrcp.pop %v918
        %v935 = vmul.f32 %v856, %v919
        %v936 = vmul.f32 %v858, %v920
        %v937 = vmul.f32 %v860, %v921
        %v938 = vmul.f32 %v862, %v922
        %v939 = vmul.f32 %v864, %v923
        %v940 = vmul.f32 %v866, %v924
        %v941 = vmul.f32 %v868, %v925
        %v942 = vmul.f32 %v870, %v926
        %v943 = vmul.f32 %v872, %v927
        %v944 = vmul.f32 %v874, %v928
        %v945 = vmul.f32 %v876, %v929
        %v946 = vmul.f32 %v878, %v930
        %v947 = vmul.f32 %v880, %v931
        %v948 = vmul.f32 %v882, %v932
        %v949 = vmul.f32 %v884, %v933
        %v950 = vmul.f32 %v886, %v934
        %v951 = vpack.c.bf16 %v936, %v935
        %v952 = vpack.c.bf16 %v938, %v937
        %v953 = vpack.c.bf16 %v940, %v939
        %v954 = vpack.c.bf16 %v942, %v941
        %v955 = vpack.c.bf16 %v944, %v943
        %v956 = vpack.c.bf16 %v946, %v945
        %v957 = vpack.c.bf16 %v948, %v947
        %v958 = vpack.c.bf16 %v950, %v949
        %959 = vmatprep.subr.bf16.mxu0 0
        %960 = vmatpush1.bf16.xpose.msra.mxu0 %v958
        %961 = vmatprep.subr.bf16.mxu0 0
        %962 = vmatpush1.bf16.xpose.msra.mxu0 %v957
        %963 = vmatprep.subr.bf16.mxu0 0
        %964 = vmatpush1.bf16.xpose.msra.mxu0 %v956
        %965 = vmatprep.subr.bf16.mxu0 0
        %966 = vmatpush1.bf16.xpose.msra.mxu0 %v955
        %967 = vmatprep.subr.bf16.mxu0 0
        %968 = vmatpush1.bf16.xpose.msra.mxu0 %v954
        %969 = vmatprep.subr.bf16.mxu0 0
        %970 = vmatpush1.bf16.xpose.msra.mxu0 %v953
        %971 = vmatprep.subr.bf16.mxu0 0
        %972 = vmatpush1.bf16.xpose.msra.mxu0 %v952
        %973 = vmatprep.subr.bf16.mxu0 0
        %974 = vmatpush1.bf16.xpose.msra.mxu0 %v951
        %975 = vmatprep.subr.bf16.mxu0 0
        %976 = vmatpush2.bf16.xpose.msra.mxu0 0
        %977 = vmatprep.subr.bf16.mxu0 0
        %978 = vmatpush2.bf16.xpose.msra.mxu0 0
        %979 = vmatprep.subr.bf16.mxu0 0
        %980 = vmatpush2.bf16.xpose.msra.mxu0 0
        %981 = vmatprep.subr.bf16.mxu0 0
        %982 = vmatpush2.bf16.xpose.msra.mxu0 0
        %983 = vmatprep.subr.bf16.mxu0 0
        %984 = vmatpush2.bf16.xpose.msra.mxu0 0
        %985 = vmatprep.subr.bf16.mxu0 0
        %986 = vmatpush2.bf16.xpose.msra.mxu0 0
        %987 = vmatprep.subr.bf16.mxu0 0
        %988 = vmatpush2.bf16.xpose.msra.mxu0 0
        %989 = vmatprep.subr.bf16.mxu0 0
        %990 = vmatpush2.bf16.xpose.msra.mxu0 0
        %991 = vmatprep.mubr.bf16.mxu0 0
        %992 = vmatmul.mubr.bf16.gmra.mxu0 %v664
        %v993 = vpop.f32.mrf.mxu0
        %v994 = vadd.f32 0.0, %v993
        %v995 = vpop.f32.mrf.mxu0
        %v996 = vpop.f32.mrf.mxu0
        %v997 = vpop.f32.mrf.mxu0
        %998 = vdwg.mxu0
        %v999 = vmax.f32 %v745, %v761
        %v1000 = vmax.f32 %v748, %v764
        %v1001 = vmax.f32 %v753, %v769
        %v1002 = vmax.f32 %v756, %v772
        %v1003 = vmax.f32 %v999, %v777
        %v1004 = vmax.f32 %v1000, %v780
        %v1005 = vmax.f32 %v1001, %v785
        %v1006 = vmax.f32 %v1002, %v788
        %v1007 = vmax.f32 %v1003, %v793
        %v1008 = vmax.f32 %v1004, %v796
        %v1009 = vmax.f32 %v1005, %v801
        %v1010 = vmax.f32 %v1006, %v804
        %v1011 = vmax.f32 %v1007, %v1008
        %v1012 = vmax.f32 %v1009, %v1010
        %v1013 = vmax.f32 %v1011, %v1012
        %v1014 = vrot.slane %v1013, 4
        %v1015 = vmax.f32 %v1013, %v1014
        %v1016 = vrot.slane %v1015, 2
        %v1017 = vmax.f32 %v1015, %v1016
        %v1018 = vrot.slane %v1017, 1
        %v1019 = vmax.f32 %v1017, %v1018
        %v1020 = vsub.f32 %v745, %v1019
        %v1021 = vsub.f32 %v748, %v1019
        %v1022 = vsub.f32 %v753, %v1019
        %v1023 = vsub.f32 %v756, %v1019
        %v1024 = vsub.f32 %v761, %v1019
        %v1025 = vsub.f32 %v764, %v1019
        %v1026 = vsub.f32 %v769, %v1019
        %v1027 = vsub.f32 %v772, %v1019
        %v1028 = vsub.f32 %v777, %v1019
        %v1029 = vsub.f32 %v780, %v1019
        %v1030 = vsub.f32 %v785, %v1019
        %v1031 = vsub.f32 %v788, %v1019
        %v1032 = vsub.f32 %v793, %v1019
        %v1033 = vsub.f32 %v796, %v1019
        %v1034 = vsub.f32 %v801, %v1019
        %v1035 = vsub.f32 %v804, %v1019
        %v1036 = vmul.f32 %v1020, 1.442695
        %v1037 = vpow.pop %v1036
        %v1038 = vmul.f32 %v1021, 1.442695
        %v1039 = vpow.pop %v1038
        %v1040 = vmul.f32 %v1022, 1.442695
        %v1041 = vpow.pop %v1040
        %v1042 = vmul.f32 %v1023, 1.442695
        %v1043 = vpow.pop %v1042
        %v1044 = vmul.f32 %v1024, 1.442695
        %v1045 = vpow.pop %v1044
        %v1046 = vmul.f32 %v1025, 1.442695
        %v1047 = vpow.pop %v1046
        %v1048 = vmul.f32 %v1026, 1.442695
        %v1049 = vpow.pop %v1048
        %v1050 = vmul.f32 %v1027, 1.442695
        %v1051 = vpow.pop %v1050
        %v1052 = vmul.f32 %v1028, 1.442695
        %v1053 = vpow.pop %v1052
        %v1054 = vmul.f32 %v1029, 1.442695
        %v1055 = vpow.pop %v1054
        %v1056 = vmul.f32 %v1030, 1.442695
        %v1057 = vpow.pop %v1056
        %v1058 = vmul.f32 %v1031, 1.442695
        %v1059 = vpow.pop %v1058
        %v1060 = vmul.f32 %v1032, 1.442695
        %v1061 = vpow.pop %v1060
        %v1062 = vmul.f32 %v1033, 1.442695
        %v1063 = vpow.pop %v1062
        %v1064 = vmul.f32 %v1034, 1.442695
        %v1065 = vpow.pop %v1064
        %v1066 = vmul.f32 %v1035, 1.442695
        %v1067 = vpow.pop %v1066
        %v1068 = vadd.f32 %v1037, %v1039
        %v1069 = vadd.f32 %v1068, %v1041
        %v1070 = vadd.f32 %v1069, %v1043
        %v1071 = vadd.f32 %v1070, %v1045
        %v1072 = vadd.f32 %v1071, %v1047
        %v1073 = vadd.f32 %v1072, %v1049
        %v1074 = vadd.f32 %v1073, %v1051
        %v1075 = vadd.f32 %v1074, %v1053
        %v1076 = vadd.f32 %v1075, %v1055
        %v1077 = vadd.f32 %v1076, %v1057
        %v1078 = vadd.f32 %v1077, %v1059
        %v1079 = vadd.f32 %v1078, %v1061
        %v1080 = vadd.f32 %v1079, %v1063
        %v1081 = vadd.f32 %v1080, %v1065
        %v1082 = vadd.f32 %v1081, %v1067
        %v1083 = vrot.slane %v1082, 4
        %v1084 = vadd.f32 %v1082, %v1083
        %v1085 = vrot.slane %v1084, 2
        %v1086 = vadd.f32 %v1084, %v1085
        %v1087 = vrot.slane %v1086, 1
        %v1088 = vadd.f32 %v1086, %v1087
        %v1089 = vrcp.pop %v1088
        %v1090 = vmul.f32 %v1037, %v1089
        %v1091 = vmul.f32 %v1039, %v1089
        %v1092 = vmul.f32 %v1041, %v1089
        %v1093 = vmul.f32 %v1043, %v1089
        %v1094 = vmul.f32 %v1045, %v1089
        %v1095 = vmul.f32 %v1047, %v1089
        %v1096 = vmul.f32 %v1049, %v1089
        %v1097 = vmul.f32 %v1051, %v1089
        %v1098 = vmul.f32 %v1053, %v1089
        %v1099 = vmul.f32 %v1055, %v1089
        %v1100 = vmul.f32 %v1057, %v1089
        %v1101 = vmul.f32 %v1059, %v1089
        %v1102 = vmul.f32 %v1061, %v1089
        %v1103 = vmul.f32 %v1063, %v1089
        %v1104 = vmul.f32 %v1065, %v1089
        %v1105 = vmul.f32 %v1067, %v1089
        %v1106 = vpack.c.bf16 %v516, %v516
        %v1107 = vpack.c.bf16 %v635, %v635
        %v1108 = vpack.c.bf16 %v651, %v651
        %1109 = vxpose.xlu0.c.b16.start [1/8] %v1106, 128
        %1110 = vxpose.xlu0.c.b16.cont [2/8] 0, 128
        %1111 = vxpose.xlu0.c.b16.cont [3/8] 0, 128
        %1112 = vxpose.xlu0.c.b16.cont [4/8] 0, 128
        %1113 = vxpose.xlu0.c.b16.cont [5/8] 0, 128
        %1114 = vxpose.xlu0.c.b16.cont [6/8] 0, 128
        %1115 = vxpose.xlu0.c.b16.cont [7/8] 0, 128
        %1116 = vxpose.xlu0.c.b16.end [8/8] 0, 128
        %v1117 = vpop.trf.xlu0
        %v1118 = vpop.trf.xlu0
        %v1119 = vpop.trf.xlu0
        %v1120 = vpop.trf.xlu0
        %v1121 = vpop.trf.xlu0
        %v1122 = vpop.trf.xlu0
        %v1123 = vpop.trf.xlu0
        %v1124 = vpop.trf.xlu0
        %v1126 = vsel %vm681, %v1117, 0
        %v1129 = vsel %vm681, %v1118, 0
        %v1132 = vsel %vm681, %v1119, 0
        %v1135 = vsel %vm681, %v1120, 0
        %v1138 = vsel %vm681, %v1121, 0
        %v1141 = vsel %vm681, %v1122, 0
        %v1144 = vsel %vm681, %v1123, 0
        %v1147 = vsel %vm681, %v1124, 0
        %v1150 = vsel %vm706, %v1107, 0
        %1152 = vmatprep.subr.bf16.mxu0 0
        %1153 = vmatpush1.bf16.msra.mxu0 0
        %1154 = vmatprep.subr.bf16.mxu0 0
        %1155 = vmatpush1.bf16.msra.mxu0 0
        %1156 = vmatprep.subr.bf16.mxu0 0
        %1157 = vmatpush1.bf16.msra.mxu0 0
        %1158 = vmatprep.subr.bf16.mxu0 0
        %1159 = vmatpush1.bf16.msra.mxu0 0
        %1160 = vmatprep.subr.bf16.mxu0 0
        %1161 = vmatpush1.bf16.msra.mxu0 0
        %1162 = vmatprep.subr.bf16.mxu0 0
        %1163 = vmatpush1.bf16.msra.mxu0 0
        %1164 = vmatprep.subr.bf16.mxu0 0
        %1165 = vmatpush1.bf16.msra.mxu0 0
        %1166 = vmatprep.subr.bf16.mxu0 0
        %1167 = vmatpush1.bf16.msra.mxu0 %v1150
        %1168 = vmatprep.subr.bf16.mxu0 0
        %1169 = vmatpush2.bf16.msra.mxu0 0
        %1170 = vmatprep.subr.bf16.mxu0 0
        %1171 = vmatpush2.bf16.msra.mxu0 0
        %1172 = vmatprep.subr.bf16.mxu0 0
        %1173 = vmatpush2.bf16.msra.mxu0 0
        %1174 = vmatprep.subr.bf16.mxu0 0
        %1175 = vmatpush2.bf16.msra.mxu0 0
        %1176 = vmatprep.subr.bf16.mxu0 0
        %1177 = vmatpush2.bf16.msra.mxu0 0
        %1178 = vmatprep.subr.bf16.mxu0 0
        %1179 = vmatpush2.bf16.msra.mxu0 0
        %1180 = vmatprep.subr.bf16.mxu0 0
        %1181 = vmatpush2.bf16.msra.mxu0 0
        %1182 = vmatprep.subr.bf16.mxu0 0
        %1183 = vmatpush2.bf16.msra.mxu0 0
        %1184 = vmatprep.mubr.bf16.mxu0 0
        %1185 = vmatmul.mubr.bf16.gmra.mxu0 %v1126
        %v1186 = vpop.f32.mrf.mxu0
        %v1187 = vadd.f32 0.0, %v1186
        %v1188 = vpop.f32.mrf.mxu0
        %v1189 = vpop.f32.mrf.mxu0
        %v1190 = vadd.f32 0.0, %v1189
        %v1191 = vpop.f32.mrf.mxu0
        %1192 = vmatprep.mubr.bf16.mxu0 0
        %1193 = vmatmul.mubr.bf16.gmra.mxu0 %v1129
        %v1194 = vpop.f32.mrf.mxu0
        %v1195 = vadd.f32 0.0, %v1194
        %v1196 = vpop.f32.mrf.mxu0
        %v1197 = vpop.f32.mrf.mxu0
        %v1198 = vadd.f32 0.0, %v1197
        %v1199 = vpop.f32.mrf.mxu0
        %1200 = vmatprep.mubr.bf16.mxu0 0
        %1201 = vmatmul.mubr.bf16.gmra.mxu0 %v1132
        %v1202 = vpop.f32.mrf.mxu0
        %v1203 = vadd.f32 0.0, %v1202
        %v1204 = vpop.f32.mrf.mxu0
        %v1205 = vpop.f32.mrf.mxu0
        %v1206 = vadd.f32 0.0, %v1205
        %v1207 = vpop.f32.mrf.mxu0
        %1208 = vmatprep.mubr.bf16.mxu0 0
        %1209 = vmatmul.mubr.bf16.gmra.mxu0 %v1135
        %v1210 = vpop.f32.mrf.mxu0
        %v1211 = vadd.f32 0.0, %v1210
        %v1212 = vpop.f32.mrf.mxu0
        %v1213 = vpop.f32.mrf.mxu0
        %v1214 = vadd.f32 0.0, %v1213
        %v1215 = vpop.f32.mrf.mxu0
        %1216 = vmatprep.mubr.bf16.mxu0 0
        %1217 = vmatmul.mubr.bf16.gmra.mxu0 %v1138
        %v1218 = vpop.f32.mrf.mxu0
        %v1219 = vadd.f32 0.0, %v1218
        %v1220 = vpop.f32.mrf.mxu0
        %v1221 = vpop.f32.mrf.mxu0
        %v1222 = vadd.f32 0.0, %v1221
        %v1223 = vpop.f32.mrf.mxu0
        %1224 = vmatprep.mubr.bf16.mxu0 0
        %1225 = vmatmul.mubr.bf16.gmra.mxu0 %v1141
        %v1226 = vpop.f32.mrf.mxu0
        %v1227 = vadd.f32 0.0, %v1226
        %v1228 = vpop.f32.mrf.mxu0
        %v1229 = vpop.f32.mrf.mxu0
        %v1230 = vadd.f32 0.0, %v1229
        %v1231 = vpop.f32.mrf.mxu0
        %1232 = vmatprep.mubr.bf16.mxu0 0
        %1233 = vmatmul.mubr.bf16.gmra.mxu0 %v1144
        %v1234 = vpop.f32.mrf.mxu0
        %v1235 = vadd.f32 0.0, %v1234
        %v1236 = vpop.f32.mrf.mxu0
        %v1237 = vpop.f32.mrf.mxu0
        %v1238 = vadd.f32 0.0, %v1237
        %v1239 = vpop.f32.mrf.mxu0
        %1240 = vmatprep.mubr.bf16.mxu0 0
        %1241 = vmatmul.mubr.bf16.gmra.mxu0 %v1147
        %v1242 = vpop.f32.mrf.mxu0
        %v1243 = vadd.f32 0.0, %v1242
        %v1244 = vpop.f32.mrf.mxu0
        %v1245 = vpop.f32.mrf.mxu0
        %v1246 = vadd.f32 0.0, %v1245
        %v1247 = vpop.f32.mrf.mxu0
        %1248 = vdwg.mxu0
        %1249 = vmax.xlane.f32.xlu0 %v1187
        %v1250 = vpop.xlane.xlu0 %1249
        %1251 = vmax.xlane.f32.xlu0 %v1190
        %v1252 = vpop.xlane.xlu0 %1251
        %1253 = vmax.xlane.f32.xlu0 %v1195
        %v1254 = vpop.xlane.xlu0 %1253
        %1255 = vmax.xlane.f32.xlu0 %v1198
        %v1256 = vpop.xlane.xlu0 %1255
        %1257 = vmax.xlane.f32.xlu0 %v1203
        %v1258 = vpop.xlane.xlu0 %1257
        %1259 = vmax.xlane.f32.xlu0 %v1206
        %v1260 = vpop.xlane.xlu0 %1259
        %1261 = vmax.xlane.f32.xlu0 %v1211
        %v1262 = vpop.xlane.xlu0 %1261
        %1263 = vmax.xlane.f32.xlu0 %v1214
        %v1264 = vpop.xlane.xlu0 %1263
        %1265 = vmax.xlane.f32.xlu0 %v1219
        %v1266 = vpop.xlane.xlu0 %1265
        %1267 = vmax.xlane.f32.xlu0 %v1222
        %v1268 = vpop.xlane.xlu0 %1267
        %1269 = vmax.xlane.f32.xlu0 %v1227
        %v1270 = vpop.xlane.xlu0 %1269
        %1271 = vmax.xlane.f32.xlu0 %v1230
        %v1272 = vpop.xlane.xlu0 %1271
        %1273 = vmax.xlane.f32.xlu0 %v1235
        %v1274 = vpop.xlane.xlu0 %1273
        %1275 = vmax.xlane.f32.xlu0 %v1238
        %v1276 = vpop.xlane.xlu0 %1275
        %1277 = vmax.xlane.f32.xlu0 %v1243
        %v1278 = vpop.xlane.xlu0 %1277
        %1279 = vmax.xlane.f32.xlu0 %v1246
        %v1280 = vpop.xlane.xlu0 %1279
        %v1281 = vsub.f32 %v1187, %v1250
        %v1282 = vsub.f32 %v1190, %v1252
        %v1283 = vsub.f32 %v1195, %v1254
        %v1284 = vsub.f32 %v1198, %v1256
        %v1285 = vsub.f32 %v1203, %v1258
        %v1286 = vsub.f32 %v1206, %v1260
        %v1287 = vsub.f32 %v1211, %v1262
        %v1288 = vsub.f32 %v1214, %v1264
        %v1289 = vsub.f32 %v1219, %v1266
        %v1290 = vsub.f32 %v1222, %v1268
        %v1291 = vsub.f32 %v1227, %v1270
        %v1292 = vsub.f32 %v1230, %v1272
        %v1293 = vsub.f32 %v1235, %v1274
        %v1294 = vsub.f32 %v1238, %v1276
        %v1295 = vsub.f32 %v1243, %v1278
        %v1296 = vsub.f32 %v1246, %v1280
        %v1297 = vmul.f32 %v1281, 1.442695
        %v1298 = vpow.pop %v1297
        %v1299 = vmul.f32 %v1282, 1.442695
        %v1300 = vpow.pop %v1299
        %v1301 = vmul.f32 %v1283, 1.442695
        %v1302 = vpow.pop %v1301
        %v1303 = vmul.f32 %v1284, 1.442695
        %v1304 = vpow.pop %v1303
        %v1305 = vmul.f32 %v1285, 1.442695
        %v1306 = vpow.pop %v1305
        %v1307 = vmul.f32 %v1286, 1.442695
        %v1308 = vpow.pop %v1307
        %v1309 = vmul.f32 %v1287, 1.442695
        %v1310 = vpow.pop %v1309
        %v1311 = vmul.f32 %v1288, 1.442695
        %v1312 = vpow.pop %v1311
        %v1313 = vmul.f32 %v1289, 1.442695
        %v1314 = vpow.pop %v1313
        %v1315 = vmul.f32 %v1290, 1.442695
        %v1316 = vpow.pop %v1315
        %v1317 = vmul.f32 %v1291, 1.442695
        %v1318 = vpow.pop %v1317
        %v1319 = vmul.f32 %v1292, 1.442695
        %v1320 = vpow.pop %v1319
        %v1321 = vmul.f32 %v1293, 1.442695
        %v1322 = vpow.pop %v1321
        %v1323 = vmul.f32 %v1294, 1.442695
        %v1324 = vpow.pop %v1323
        %v1325 = vmul.f32 %v1295, 1.442695
        %v1326 = vpow.pop %v1325
        %v1327 = vmul.f32 %v1296, 1.442695
        %v1328 = vpow.pop %v1327
        %1329 = vadd.xlane.f32.xlu0 %v1298
        %v1330 = vpop.xlane.xlu0 %1329
        %1331 = vadd.xlane.f32.xlu0 %v1300
        %v1332 = vpop.xlane.xlu0 %1331
        %1333 = vadd.xlane.f32.xlu0 %v1302
        %v1334 = vpop.xlane.xlu0 %1333
        %1335 = vadd.xlane.f32.xlu0 %v1304
        %v1336 = vpop.xlane.xlu0 %1335
        %1337 = vadd.xlane.f32.xlu0 %v1306
        %v1338 = vpop.xlane.xlu0 %1337
        %1339 = vadd.xlane.f32.xlu0 %v1308
        %v1340 = vpop.xlane.xlu0 %1339
        %1341 = vadd.xlane.f32.xlu0 %v1310
        %v1342 = vpop.xlane.xlu0 %1341
        %1343 = vadd.xlane.f32.xlu0 %v1312
        %v1344 = vpop.xlane.xlu0 %1343
        %1345 = vadd.xlane.f32.xlu0 %v1314
        %v1346 = vpop.xlane.xlu0 %1345
        %1347 = vadd.xlane.f32.xlu0 %v1316
        %v1348 = vpop.xlane.xlu0 %1347
        %1349 = vadd.xlane.f32.xlu0 %v1318
        %v1350 = vpop.xlane.xlu0 %1349
        %1351 = vadd.xlane.f32.xlu0 %v1320
        %v1352 = vpop.xlane.xlu0 %1351
        %1353 = vadd.xlane.f32.xlu0 %v1322
        %v1354 = vpop.xlane.xlu0 %1353
        %1355 = vadd.xlane.f32.xlu0 %v1324
        %v1356 = vpop.xlane.xlu0 %1355
        %1357 = vadd.xlane.f32.xlu0 %v1326
        %v1358 = vpop.xlane.xlu0 %1357
        %1359 = vadd.xlane.f32.xlu0 %v1328
        %v1360 = vpop.xlane.xlu0 %1359
        %v1361 = vrcp.pop %v1330
        %v1362 = vrcp.pop %v1332
        %v1363 = vrcp.pop %v1334
        %v1364 = vrcp.pop %v1336
        %v1365 = vrcp.pop %v1338
        %v1366 = vrcp.pop %v1340
        %v1367 = vrcp.pop %v1342
        %v1368 = vrcp.pop %v1344
        %v1369 = vrcp.pop %v1346
        %v1370 = vrcp.pop %v1348
        %v1371 = vrcp.pop %v1350
        %v1372 = vrcp.pop %v1352
        %v1373 = vrcp.pop %v1354
        %v1374 = vrcp.pop %v1356
        %v1375 = vrcp.pop %v1358
        %v1376 = vrcp.pop %v1360
        %v1377 = vmul.f32 %v1298, %v1361
        %v1378 = vmul.f32 %v1300, %v1362
        %v1379 = vmul.f32 %v1302, %v1363
        %v1380 = vmul.f32 %v1304, %v1364
        %v1381 = vmul.f32 %v1306, %v1365
        %v1382 = vmul.f32 %v1308, %v1366
        %v1383 = vmul.f32 %v1310, %v1367
        %v1384 = vmul.f32 %v1312, %v1368
        %v1385 = vmul.f32 %v1314, %v1369
        %v1386 = vmul.f32 %v1316, %v1370
        %v1387 = vmul.f32 %v1318, %v1371
        %v1388 = vmul.f32 %v1320, %v1372
        %v1389 = vmul.f32 %v1322, %v1373
        %v1390 = vmul.f32 %v1324, %v1374
        %v1391 = vmul.f32 %v1326, %v1375
        %v1392 = vmul.f32 %v1328, %v1376
        %v1393 = vpack.c.bf16 %v1378, %v1377
        %v1394 = vpack.c.bf16 %v1380, %v1379
        %v1395 = vpack.c.bf16 %v1382, %v1381
        %v1396 = vpack.c.bf16 %v1384, %v1383
        %v1397 = vpack.c.bf16 %v1386, %v1385
        %v1398 = vpack.c.bf16 %v1388, %v1387
        %v1399 = vpack.c.bf16 %v1390, %v1389
        %v1400 = vpack.c.bf16 %v1392, %v1391
        %1401 = vmatprep.subr.bf16.mxu0 0
        %1402 = vmatpush1.bf16.xpose.msra.mxu0 %v1400
        %1403 = vmatprep.subr.bf16.mxu0 0
        %1404 = vmatpush1.bf16.xpose.msra.mxu0 %v1399
        %1405 = vmatprep.subr.bf16.mxu0 0
        %1406 = vmatpush1.bf16.xpose.msra.mxu0 %v1398
        %1407 = vmatprep.subr.bf16.mxu0 0
        %1408 = vmatpush1.bf16.xpose.msra.mxu0 %v1397
        %1409 = vmatprep.subr.bf16.mxu0 0
        %1410 = vmatpush1.bf16.xpose.msra.mxu0 %v1396
        %1411 = vmatprep.subr.bf16.mxu0 0
        %1412 = vmatpush1.bf16.xpose.msra.mxu0 %v1395
        %1413 = vmatprep.subr.bf16.mxu0 0
        %1414 = vmatpush1.bf16.xpose.msra.mxu0 %v1394
        %1415 = vmatprep.subr.bf16.mxu0 0
        %1416 = vmatpush1.bf16.xpose.msra.mxu0 %v1393
        %1417 = vmatprep.subr.bf16.mxu0 0
        %1418 = vmatpush2.bf16.xpose.msra.mxu0 0
        %1419 = vmatprep.subr.bf16.mxu0 0
        %1420 = vmatpush2.bf16.xpose.msra.mxu0 0
        %1421 = vmatprep.subr.bf16.mxu0 0
        %1422 = vmatpush2.bf16.xpose.msra.mxu0 0
        %1423 = vmatprep.subr.bf16.mxu0 0
        %1424 = vmatpush2.bf16.xpose.msra.mxu0 0
        %1425 = vmatprep.subr.bf16.mxu0 0
        %1426 = vmatpush2.bf16.xpose.msra.mxu0 0
        %1427 = vmatprep.subr.bf16.mxu0 0
        %1428 = vmatpush2.bf16.xpose.msra.mxu0 0
        %1429 = vmatprep.subr.bf16.mxu0 0
        %1430 = vmatpush2.bf16.xpose.msra.mxu0 0
        %1431 = vmatprep.subr.bf16.mxu0 0
        %1432 = vmatpush2.bf16.xpose.msra.mxu0 0
        %1433 = vmatprep.mubr.bf16.mxu0 0
        %1434 = vmatmul.mubr.bf16.gmra.mxu0 %v1108
        %v1435 = vpop.f32.mrf.mxu0
        %v1436 = vadd.f32 0.0, %v1435
        %v1437 = vpop.f32.mrf.mxu0
        %v1438 = vpop.f32.mrf.mxu0
        %v1439 = vpop.f32.mrf.mxu0
        %1440 = vdwg.mxu0
        %v1441 = vmax.f32 %v1187, %v1203
        %v1442 = vmax.f32 %v1190, %v1206
        %v1443 = vmax.f32 %v1195, %v1211
        %v1444 = vmax.f32 %v1198, %v1214
        %v1445 = vmax.f32 %v1441, %v1219
        %v1446 = vmax.f32 %v1442, %v1222
        %v1447 = vmax.f32 %v1443, %v1227
        %v1448 = vmax.f32 %v1444, %v1230
        %v1449 = vmax.f32 %v1445, %v1235
        %v1450 = vmax.f32 %v1446, %v1238
        %v1451 = vmax.f32 %v1447, %v1243
        %v1452 = vmax.f32 %v1448, %v1246
        %v1453 = vmax.f32 %v1449, %v1450
        %v1454 = vmax.f32 %v1451, %v1452
        %v1455 = vmax.f32 %v1453, %v1454
        %v1456 = vrot.slane %v1455, 4
        %v1457 = vmax.f32 %v1455, %v1456
        %v1458 = vrot.slane %v1457, 2
        %v1459 = vmax.f32 %v1457, %v1458
        %v1460 = vrot.slane %v1459, 1
        %v1461 = vmax.f32 %v1459, %v1460
        %v1462 = vsub.f32 %v1187, %v1461
        %v1463 = vsub.f32 %v1190, %v1461
        %v1464 = vsub.f32 %v1195, %v1461
        %v1465 = vsub.f32 %v1198, %v1461
        %v1466 = vsub.f32 %v1203, %v1461
        %v1467 = vsub.f32 %v1206, %v1461
        %v1468 = vsub.f32 %v1211, %v1461
        %v1469 = vsub.f32 %v1214, %v1461
        %v1470 = vsub.f32 %v1219, %v1461
        %v1471 = vsub.f32 %v1222, %v1461
        %v1472 = vsub.f32 %v1227, %v1461
        %v1473 = vsub.f32 %v1230, %v1461
        %v1474 = vsub.f32 %v1235, %v1461
        %v1475 = vsub.f32 %v1238, %v1461
        %v1476 = vsub.f32 %v1243, %v1461
        %v1477 = vsub.f32 %v1246, %v1461
        %v1478 = vmul.f32 %v1462, 1.442695
        %v1479 = vpow.pop %v1478
        %v1480 = vmul.f32 %v1463, 1.442695
        %v1481 = vpow.pop %v1480
        %v1482 = vmul.f32 %v1464, 1.442695
        %v1483 = vpow.pop %v1482
        %v1484 = vmul.f32 %v1465, 1.442695
        %v1485 = vpow.pop %v1484
        %v1486 = vmul.f32 %v1466, 1.442695
        %v1487 = vpow.pop %v1486
        %v1488 = vmul.f32 %v1467, 1.442695
        %v1489 = vpow.pop %v1488
        %v1490 = vmul.f32 %v1468, 1.442695
        %v1491 = vpow.pop %v1490
        %v1492 = vmul.f32 %v1469, 1.442695
        %v1493 = vpow.pop %v1492
        %v1494 = vmul.f32 %v1470, 1.442695
        %v1495 = vpow.pop %v1494
        %v1496 = vmul.f32 %v1471, 1.442695
        %v1497 = vpow.pop %v1496
        %v1498 = vmul.f32 %v1472, 1.442695
        %v1499 = vpow.pop %v1498
        %v1500 = vmul.f32 %v1473, 1.442695
        %v1501 = vpow.pop %v1500
        %v1502 = vmul.f32 %v1474, 1.442695
        %v1503 = vpow.pop %v1502
        %v1504 = vmul.f32 %v1475, 1.442695
        %v1505 = vpow.pop %v1504
        %v1506 = vmul.f32 %v1476, 1.442695
        %v1507 = vpow.pop %v1506
        %v1508 = vmul.f32 %v1477, 1.442695
        %v1509 = vpow.pop %v1508
        %v1510 = vadd.f32 %v1479, %v1481
        %v1511 = vadd.f32 %v1510, %v1483
        %v1512 = vadd.f32 %v1511, %v1485
        %v1513 = vadd.f32 %v1512, %v1487
        %v1514 = vadd.f32 %v1513, %v1489
        %v1515 = vadd.f32 %v1514, %v1491
        %v1516 = vadd.f32 %v1515, %v1493
        %v1517 = vadd.f32 %v1516, %v1495
        %v1518 = vadd.f32 %v1517, %v1497
        %v1519 = vadd.f32 %v1518, %v1499
        %v1520 = vadd.f32 %v1519, %v1501
        %v1521 = vadd.f32 %v1520, %v1503
        %v1522 = vadd.f32 %v1521, %v1505
        %v1523 = vadd.f32 %v1522, %v1507
        %v1524 = vadd.f32 %v1523, %v1509
        %v1525 = vrot.slane %v1524, 4
        %v1526 = vadd.f32 %v1524, %v1525
        %v1527 = vrot.slane %v1526, 2
        %v1528 = vadd.f32 %v1526, %v1527
        %v1529 = vrot.slane %v1528, 1
        %v1530 = vadd.f32 %v1528, %v1529
        %v1531 = vrcp.pop %v1530
        %v1532 = vmul.f32 %v1479, %v1531
        %v1533 = vmul.f32 %v1481, %v1531
        %v1534 = vmul.f32 %v1483, %v1531
        %v1535 = vmul.f32 %v1485, %v1531
        %v1536 = vmul.f32 %v1487, %v1531
        %v1537 = vmul.f32 %v1489, %v1531
        %v1538 = vmul.f32 %v1491, %v1531
        %v1539 = vmul.f32 %v1493, %v1531
        %v1540 = vmul.f32 %v1495, %v1531
        %v1541 = vmul.f32 %v1497, %v1531
        %v1542 = vmul.f32 %v1499, %v1531
        %v1543 = vmul.f32 %v1501, %v1531
        %v1544 = vmul.f32 %v1503, %v1531
        %v1545 = vmul.f32 %v1505, %v1531
        %v1546 = vmul.f32 %v1507, %v1531
        %v1547 = vmul.f32 %v1509, %v1531
        %v1548 = vadd.f32 %v935, %v1377
        %v1549 = vadd.f32 %v936, %v1378
        %v1550 = vadd.f32 %v937, %v1379
        %v1551 = vadd.f32 %v938, %v1380
        %v1552 = vadd.f32 %v939, %v1381
        %v1553 = vadd.f32 %v940, %v1382
        %v1554 = vadd.f32 %v941, %v1383
        %v1555 = vadd.f32 %v942, %v1384
        %v1556 = vadd.f32 %v943, %v1385
        %v1557 = vadd.f32 %v944, %v1386
        %v1558 = vadd.f32 %v945, %v1387
        %v1559 = vadd.f32 %v946, %v1388
        %v1560 = vadd.f32 %v947, %v1389
        %v1561 = vadd.f32 %v948, %v1390
        %v1562 = vadd.f32 %v949, %v1391
        %v1563 = vadd.f32 %v950, %v1392
        %v1564 = vadd.f32 %v1090, %v1532
        %v1565 = vadd.f32 %v1091, %v1533
        %v1566 = vadd.f32 %v1092, %v1534
        %v1567 = vadd.f32 %v1093, %v1535
        %v1568 = vadd.f32 %v1094, %v1536
        %v1569 = vadd.f32 %v1095, %v1537
        %v1570 = vadd.f32 %v1096, %v1538
        %v1571 = vadd.f32 %v1097, %v1539
        %v1572 = vadd.f32 %v1098, %v1540
        %v1573 = vadd.f32 %v1099, %v1541
        %v1574 = vadd.f32 %v1100, %v1542
        %v1575 = vadd.f32 %v1101, %v1543
        %v1576 = vadd.f32 %v1102, %v1544
        %v1577 = vadd.f32 %v1103, %v1545
        %v1578 = vadd.f32 %v1104, %v1546
        %v1579 = vadd.f32 %v1105, %v1547
        %v1580 = vpack.c.bf16 %v521, %v521
        %v1581 = vpack.c.bf16 %v640, %v640
        %v1582 = vpack.c.bf16 %v656, %v656
        %1583 = vxpose.xlu0.c.b16.start [1/8] %v1580, 128
        %1584 = vxpose.xlu0.c.b16.cont [2/8] 0, 128
        %1585 = vxpose.xlu0.c.b16.cont [3/8] 0, 128
        %1586 = vxpose.xlu0.c.b16.cont [4/8] 0, 128
        %1587 = vxpose.xlu0.c.b16.cont [5/8] 0, 128
        %1588 = vxpose.xlu0.c.b16.cont [6/8] 0, 128
        %1589 = vxpose.xlu0.c.b16.cont [7/8] 0, 128
        %1590 = vxpose.xlu0.c.b16.end [8/8] 0, 128
        %v1591 = vpop.trf.xlu0
        %v1592 = vpop.trf.xlu0
        %v1593 = vpop.trf.xlu0
        %v1594 = vpop.trf.xlu0
        %v1595 = vpop.trf.xlu0
        %v1596 = vpop.trf.xlu0
        %v1597 = vpop.trf.xlu0
        %v1598 = vpop.trf.xlu0
        %v1600 = vsel %vm681, %v1591, 0
        %v1603 = vsel %vm681, %v1592, 0
        %v1606 = vsel %vm681, %v1593, 0
        %v1609 = vsel %vm681, %v1594, 0
        %v1612 = vsel %vm681, %v1595, 0
        %v1615 = vsel %vm681, %v1596, 0
        %v1618 = vsel %vm681, %v1597, 0
        %v1621 = vsel %vm681, %v1598, 0
        %v1624 = vsel %vm706, %v1581, 0
        %1626 = vmatprep.subr.bf16.mxu0 0
        %1627 = vmatpush1.bf16.msra.mxu0 0
        %1628 = vmatprep.subr.bf16.mxu0 0
        %1629 = vmatpush1.bf16.msra.mxu0 0
        %1630 = vmatprep.subr.bf16.mxu0 0
        %1631 = vmatpush1.bf16.msra.mxu0 0
        %1632 = vmatprep.subr.bf16.mxu0 0
        %1633 = vmatpush1.bf16.msra.mxu0 0
        %1634 = vmatprep.subr.bf16.mxu0 0
        %1635 = vmatpush1.bf16.msra.mxu0 0
        %1636 = vmatprep.subr.bf16.mxu0 0
        %1637 = vmatpush1.bf16.msra.mxu0 0
        %1638 = vmatprep.subr.bf16.mxu0 0
        %1639 = vmatpush1.bf16.msra.mxu0 0
        %1640 = vmatprep.subr.bf16.mxu0 0
        %1641 = vmatpush1.bf16.msra.mxu0 %v1624
        %1642 = vmatprep.subr.bf16.mxu0 0
        %1643 = vmatpush2.bf16.msra.mxu0 0
        %1644 = vmatprep.subr.bf16.mxu0 0
        %1645 = vmatpush2.bf16.msra.mxu0 0
        %1646 = vmatprep.subr.bf16.mxu0 0
        %1647 = vmatpush2.bf16.msra.mxu0 0
        %1648 = vmatprep.subr.bf16.mxu0 0
        %1649 = vmatpush2.bf16.msra.mxu0 0
        %1650 = vmatprep.subr.bf16.mxu0 0
        %1651 = vmatpush2.bf16.msra.mxu0 0
        %1652 = vmatprep.subr.bf16.mxu0 0
        %1653 = vmatpush2.bf16.msra.mxu0 0
        %1654 = vmatprep.subr.bf16.mxu0 0
        %1655 = vmatpush2.bf16.msra.mxu0 0
        %1656 = vmatprep.subr.bf16.mxu0 0
        %1657 = vmatpush2.bf16.msra.mxu0 0
        %1658 = vmatprep.mubr.bf16.mxu0 0
        %1659 = vmatmul.mubr.bf16.gmra.mxu0 %v1600
        %v1660 = vpop.f32.mrf.mxu0
        %v1661 = vadd.f32 0.0, %v1660
        %v1662 = vpop.f32.mrf.mxu0
        %v1663 = vpop.f32.mrf.mxu0
        %v1664 = vadd.f32 0.0, %v1663
        %v1665 = vpop.f32.mrf.mxu0
        %1666 = vmatprep.mubr.bf16.mxu0 0
        %1667 = vmatmul.mubr.bf16.gmra.mxu0 %v1603
        %v1668 = vpop.f32.mrf.mxu0
        %v1669 = vadd.f32 0.0, %v1668
        %v1670 = vpop.f32.mrf.mxu0
        %v1671 = vpop.f32.mrf.mxu0
        %v1672 = vadd.f32 0.0, %v1671
        %v1673 = vpop.f32.mrf.mxu0
        %1674 = vmatprep.mubr.bf16.mxu0 0
        %1675 = vmatmul.mubr.bf16.gmra.mxu0 %v1606
        %v1676 = vpop.f32.mrf.mxu0
        %v1677 = vadd.f32 0.0, %v1676
        %v1678 = vpop.f32.mrf.mxu0
        %v1679 = vpop.f32.mrf.mxu0
        %v1680 = vadd.f32 0.0, %v1679
        %v1681 = vpop.f32.mrf.mxu0
        %1682 = vmatprep.mubr.bf16.mxu0 0
        %1683 = vmatmul.mubr.bf16.gmra.mxu0 %v1609
        %v1684 = vpop.f32.mrf.mxu0
        %v1685 = vadd.f32 0.0, %v1684
        %v1686 = vpop.f32.mrf.mxu0
        %v1687 = vpop.f32.mrf.mxu0
        %v1688 = vadd.f32 0.0, %v1687
        %v1689 = vpop.f32.mrf.mxu0
        %1690 = vmatprep.mubr.bf16.mxu0 0
        %1691 = vmatmul.mubr.bf16.gmra.mxu0 %v1612
        %v1692 = vpop.f32.mrf.mxu0
        %v1693 = vadd.f32 0.0, %v1692
        %v1694 = vpop.f32.mrf.mxu0
        %v1695 = vpop.f32.mrf.mxu0
        %v1696 = vadd.f32 0.0, %v1695
        %v1697 = vpop.f32.mrf.mxu0
        %1698 = vmatprep.mubr.bf16.mxu0 0
        %1699 = vmatmul.mubr.bf16.gmra.mxu0 %v1615
        %v1700 = vpop.f32.mrf.mxu0
        %v1701 = vadd.f32 0.0, %v1700
        %v1702 = vpop.f32.mrf.mxu0
        %v1703 = vpop.f32.mrf.mxu0
        %v1704 = vadd.f32 0.0, %v1703
        %v1705 = vpop.f32.mrf.mxu0
        %1706 = vmatprep.mubr.bf16.mxu0 0
        %1707 = vmatmul.mubr.bf16.gmra.mxu0 %v1618
        %v1708 = vpop.f32.mrf.mxu0
        %v1709 = vadd.f32 0.0, %v1708
        %v1710 = vpop.f32.mrf.mxu0
        %v1711 = vpop.f32.mrf.mxu0
        %v1712 = vadd.f32 0.0, %v1711
        %v1713 = vpop.f32.mrf.mxu0
        %1714 = vmatprep.mubr.bf16.mxu0 0
        %1715 = vmatmul.mubr.bf16.gmra.mxu0 %v1621
        %v1716 = vpop.f32.mrf.mxu0
        %v1717 = vadd.f32 0.0, %v1716
        %v1718 = vpop.f32.mrf.mxu0
        %v1719 = vpop.f32.mrf.mxu0
        %v1720 = vadd.f32 0.0, %v1719
        %v1721 = vpop.f32.mrf.mxu0
        %1722 = vdwg.mxu0
        %1723 = vmax.xlane.f32.xlu0 %v1661
        %v1724 = vpop.xlane.xlu0 %1723
        %1725 = vmax.xlane.f32.xlu0 %v1664
        %v1726 = vpop.xlane.xlu0 %1725
        %1727 = vmax.xlane.f32.xlu0 %v1669
        %v1728 = vpop.xlane.xlu0 %1727
        %1729 = vmax.xlane.f32.xlu0 %v1672
        %v1730 = vpop.xlane.xlu0 %1729
        %1731 = vmax.xlane.f32.xlu0 %v1677
        %v1732 = vpop.xlane.xlu0 %1731
        %1733 = vmax.xlane.f32.xlu0 %v1680
        %v1734 = vpop.xlane.xlu0 %1733
        %1735 = vmax.xlane.f32.xlu0 %v1685
        %v1736 = vpop.xlane.xlu0 %1735
        %1737 = vmax.xlane.f32.xlu0 %v1688
        %v1738 = vpop.xlane.xlu0 %1737
        %1739 = vmax.xlane.f32.xlu0 %v1693
        %v1740 = vpop.xlane.xlu0 %1739
        %1741 = vmax.xlane.f32.xlu0 %v1696
        %v1742 = vpop.xlane.xlu0 %1741
        %1743 = vmax.xlane.f32.xlu0 %v1701
        %v1744 = vpop.xlane.xlu0 %1743
        %1745 = vmax.xlane.f32.xlu0 %v1704
        %v1746 = vpop.xlane.xlu0 %1745
        %1747 = vmax.xlane.f32.xlu0 %v1709
        %v1748 = vpop.xlane.xlu0 %1747
        %1749 = vmax.xlane.f32.xlu0 %v1712
        %v1750 = vpop.xlane.xlu0 %1749
        %1751 = vmax.xlane.f32.xlu0 %v1717
        %v1752 = vpop.xlane.xlu0 %1751
        %1753 = vmax.xlane.f32.xlu0 %v1720
        %v1754 = vpop.xlane.xlu0 %1753
        %v1755 = vsub.f32 %v1661, %v1724
        %v1756 = vsub.f32 %v1664, %v1726
        %v1757 = vsub.f32 %v1669, %v1728
        %v1758 = vsub.f32 %v1672, %v1730
        %v1759 = vsub.f32 %v1677, %v1732
        %v1760 = vsub.f32 %v1680, %v1734
        %v1761 = vsub.f32 %v1685, %v1736
        %v1762 = vsub.f32 %v1688, %v1738
        %v1763 = vsub.f32 %v1693, %v1740
        %v1764 = vsub.f32 %v1696, %v1742
        %v1765 = vsub.f32 %v1701, %v1744
        %v1766 = vsub.f32 %v1704, %v1746
        %v1767 = vsub.f32 %v1709, %v1748
        %v1768 = vsub.f32 %v1712, %v1750
        %v1769 = vsub.f32 %v1717, %v1752
        %v1770 = vsub.f32 %v1720, %v1754
        %v1771 = vmul.f32 %v1755, 1.442695
        %v1772 = vpow.pop %v1771
        %v1773 = vmul.f32 %v1756, 1.442695
        %v1774 = vpow.pop %v1773
        %v1775 = vmul.f32 %v1757, 1.442695
        %v1776 = vpow.pop %v1775
        %v1777 = vmul.f32 %v1758, 1.442695
        %v1778 = vpow.pop %v1777
        %v1779 = vmul.f32 %v1759, 1.442695
        %v1780 = vpow.pop %v1779
        %v1781 = vmul.f32 %v1760, 1.442695
        %v1782 = vpow.pop %v1781
        %v1783 = vmul.f32 %v1761, 1.442695
        %v1784 = vpow.pop %v1783
        %v1785 = vmul.f32 %v1762, 1.442695
        %v1786 = vpow.pop %v1785
        %v1787 = vmul.f32 %v1763, 1.442695
        %v1788 = vpow.pop %v1787
        %v1789 = vmul.f32 %v1764, 1.442695
        %v1790 = vpow.pop %v1789
        %v1791 = vmul.f32 %v1765, 1.442695
        %v1792 = vpow.pop %v1791
        %v1793 = vmul.f32 %v1766, 1.442695
        %v1794 = vpow.pop %v1793
        %v1795 = vmul.f32 %v1767, 1.442695
        %v1796 = vpow.pop %v1795
        %v1797 = vmul.f32 %v1768, 1.442695
        %v1798 = vpow.pop %v1797
        %v1799 = vmul.f32 %v1769, 1.442695
        %v1800 = vpow.pop %v1799
        %v1801 = vmul.f32 %v1770, 1.442695
        %v1802 = vpow.pop %v1801
        %1803 = vadd.xlane.f32.xlu0 %v1772
        %v1804 = vpop.xlane.xlu0 %1803
        %1805 = vadd.xlane.f32.xlu0 %v1774
        %v1806 = vpop.xlane.xlu0 %1805
        %1807 = vadd.xlane.f32.xlu0 %v1776
        %v1808 = vpop.xlane.xlu0 %1807
        %1809 = vadd.xlane.f32.xlu0 %v1778
        %v1810 = vpop.xlane.xlu0 %1809
        %1811 = vadd.xlane.f32.xlu0 %v1780
        %v1812 = vpop.xlane.xlu0 %1811
        %1813 = vadd.xlane.f32.xlu0 %v1782
        %v1814 = vpop.xlane.xlu0 %1813
        %1815 = vadd.xlane.f32.xlu0 %v1784
        %v1816 = vpop.xlane.xlu0 %1815
        %1817 = vadd.xlane.f32.xlu0 %v1786
        %v1818 = vpop.xlane.xlu0 %1817
        %1819 = vadd.xlane.f32.xlu0 %v1788
        %v1820 = vpop.xlane.xlu0 %1819
        %1821 = vadd.xlane.f32.xlu0 %v1790
        %v1822 = vpop.xlane.xlu0 %1821
        %1823 = vadd.xlane.f32.xlu0 %v1792
        %v1824 = vpop.xlane.xlu0 %1823
        %1825 = vadd.xlane.f32.xlu0 %v1794
        %v1826 = vpop.xlane.xlu0 %1825
        %1827 = vadd.xlane.f32.xlu0 %v1796
        %v1828 = vpop.xlane.xlu0 %1827
        %1829 = vadd.xlane.f32.xlu0 %v1798
        %v1830 = vpop.xlane.xlu0 %1829
        %1831 = vadd.xlane.f32.xlu0 %v1800
        %v1832 = vpop.xlane.xlu0 %1831
        %1833 = vadd.xlane.f32.xlu0 %v1802
        %v1834 = vpop.xlane.xlu0 %1833
        %v1835 = vrcp.pop %v1804
        %v1836 = vrcp.pop %v1806
        %v1837 = vrcp.pop %v1808
        %v1838 = vrcp.pop %v1810
        %v1839 = vrcp.pop %v1812
        %v1840 = vrcp.pop %v1814
        %v1841 = vrcp.pop %v1816
        %v1842 = vrcp.pop %v1818
        %v1843 = vrcp.pop %v1820
        %v1844 = vrcp.pop %v1822
        %v1845 = vrcp.pop %v1824
        %v1846 = vrcp.pop %v1826
        %v1847 = vrcp.pop %v1828
        %v1848 = vrcp.pop %v1830
        %v1849 = vrcp.pop %v1832
        %v1850 = vrcp.pop %v1834
        %v1851 = vmul.f32 %v1772, %v1835
        %v1852 = vmul.f32 %v1774, %v1836
        %v1853 = vmul.f32 %v1776, %v1837
        %v1854 = vmul.f32 %v1778, %v1838
        %v1855 = vmul.f32 %v1780, %v1839
        %v1856 = vmul.f32 %v1782, %v1840
        %v1857 = vmul.f32 %v1784, %v1841
        %v1858 = vmul.f32 %v1786, %v1842
        %v1859 = vmul.f32 %v1788, %v1843
        %v1860 = vmul.f32 %v1790, %v1844
        %v1861 = vmul.f32 %v1792, %v1845
        %v1862 = vmul.f32 %v1794, %v1846
        %v1863 = vmul.f32 %v1796, %v1847
        %v1864 = vmul.f32 %v1798, %v1848
        %v1865 = vmul.f32 %v1800, %v1849
        %v1866 = vmul.f32 %v1802, %v1850
        %v1867 = vpack.c.bf16 %v1852, %v1851
        %v1868 = vpack.c.bf16 %v1854, %v1853
        %v1869 = vpack.c.bf16 %v1856, %v1855
        %v1870 = vpack.c.bf16 %v1858, %v1857
        %v1871 = vpack.c.bf16 %v1860, %v1859
        %v1872 = vpack.c.bf16 %v1862, %v1861
        %v1873 = vpack.c.bf16 %v1864, %v1863
        %v1874 = vpack.c.bf16 %v1866, %v1865
        %1875 = vmatprep.subr.bf16.mxu0 0
        %1876 = vmatpush1.bf16.xpose.msra.mxu0 %v1874
        %1877 = vmatprep.subr.bf16.mxu0 0
        %1878 = vmatpush1.bf16.xpose.msra.mxu0 %v1873
        %1879 = vmatprep.subr.bf16.mxu0 0
        %1880 = vmatpush1.bf16.xpose.msra.mxu0 %v1872
        %1881 = vmatprep.subr.bf16.mxu0 0
        %1882 = vmatpush1.bf16.xpose.msra.mxu0 %v1871
        %1883 = vmatprep.subr.bf16.mxu0 0
        %1884 = vmatpush1.bf16.xpose.msra.mxu0 %v1870
        %1885 = vmatprep.subr.bf16.mxu0 0
        %1886 = vmatpush1.bf16.xpose.msra.mxu0 %v1869
        %1887 = vmatprep.subr.bf16.mxu0 0
        %1888 = vmatpush1.bf16.xpose.msra.mxu0 %v1868
        %1889 = vmatprep.subr.bf16.mxu0 0
        %1890 = vmatpush1.bf16.xpose.msra.mxu0 %v1867
        %1891 = vmatprep.subr.bf16.mxu0 0
        %1892 = vmatpush2.bf16.xpose.msra.mxu0 0
        %1893 = vmatprep.subr.bf16.mxu0 0
        %1894 = vmatpush2.bf16.xpose.msra.mxu0 0
        %1895 = vmatprep.subr.bf16.mxu0 0
        %1896 = vmatpush2.bf16.xpose.msra.mxu0 0
        %1897 = vmatprep.subr.bf16.mxu0 0
        %1898 = vmatpush2.bf16.xpose.msra.mxu0 0
        %1899 = vmatprep.subr.bf16.mxu0 0
        %1900 = vmatpush2.bf16.xpose.msra.mxu0 0
        %1901 = vmatprep.subr.bf16.mxu0 0
        %1902 = vmatpush2.bf16.xpose.msra.mxu0 0
        %1903 = vmatprep.subr.bf16.mxu0 0
        %1904 = vmatpush2.bf16.xpose.msra.mxu0 0
        %1905 = vmatprep.subr.bf16.mxu0 0
        %1906 = vmatpush2.bf16.xpose.msra.mxu0 0
        %1907 = vmatprep.mubr.bf16.mxu0 0
        %1908 = vmatmul.mubr.bf16.gmra.mxu0 %v1582
        %v1909 = vpop.f32.mrf.mxu0
        %v1910 = vadd.f32 0.0, %v1909
        %v1911 = vpop.f32.mrf.mxu0
        %v1912 = vpop.f32.mrf.mxu0
        %v1913 = vpop.f32.mrf.mxu0
        %1914 = vdwg.mxu0
        %v1915 = vmax.f32 %v1661, %v1677
        %v1916 = vmax.f32 %v1664, %v1680
        %v1917 = vmax.f32 %v1669, %v1685
        %v1918 = vmax.f32 %v1672, %v1688
        %v1919 = vmax.f32 %v1915, %v1693
        %v1920 = vmax.f32 %v1916, %v1696
        %v1921 = vmax.f32 %v1917, %v1701
        %v1922 = vmax.f32 %v1918, %v1704
        %v1923 = vmax.f32 %v1919, %v1709
        %v1924 = vmax.f32 %v1920, %v1712
        %v1925 = vmax.f32 %v1921, %v1717
        %v1926 = vmax.f32 %v1922, %v1720
        %v1927 = vmax.f32 %v1923, %v1924
        %v1928 = vmax.f32 %v1925, %v1926
        %v1929 = vmax.f32 %v1927, %v1928
        %v1930 = vrot.slane %v1929, 4
        %v1931 = vmax.f32 %v1929, %v1930
        %v1932 = vrot.slane %v1931, 2
        %v1933 = vmax.f32 %v1931, %v1932
        %v1934 = vrot.slane %v1933, 1
        %v1935 = vmax.f32 %v1933, %v1934
        %v1936 = vsub.f32 %v1661, %v1935
        %v1937 = vsub.f32 %v1664, %v1935
        %v1938 = vsub.f32 %v1669, %v1935
        %v1939 = vsub.f32 %v1672, %v1935
        %v1940 = vsub.f32 %v1677, %v1935
        %v1941 = vsub.f32 %v1680, %v1935
        %v1942 = vsub.f32 %v1685, %v1935
        %v1943 = vsub.f32 %v1688, %v1935
        %v1944 = vsub.f32 %v1693, %v1935
        %v1945 = vsub.f32 %v1696, %v1935
        %v1946 = vsub.f32 %v1701, %v1935
        %v1947 = vsub.f32 %v1704, %v1935
        %v1948 = vsub.f32 %v1709, %v1935
        %v1949 = vsub.f32 %v1712, %v1935
        %v1950 = vsub.f32 %v1717, %v1935
        %v1951 = vsub.f32 %v1720, %v1935
        %v1952 = vmul.f32 %v1936, 1.442695
        %v1953 = vpow.pop %v1952
        %v1954 = vmul.f32 %v1937, 1.442695
        %v1955 = vpow.pop %v1954
        %v1956 = vmul.f32 %v1938, 1.442695
        %v1957 = vpow.pop %v1956
        %v1958 = vmul.f32 %v1939, 1.442695
        %v1959 = vpow.pop %v1958
        %v1960 = vmul.f32 %v1940, 1.442695
        %v1961 = vpow.pop %v1960
        %v1962 = vmul.f32 %v1941, 1.442695
        %v1963 = vpow.pop %v1962
        %v1964 = vmul.f32 %v1942, 1.442695
        %v1965 = vpow.pop %v1964
        %v1966 = vmul.f32 %v1943, 1.442695
        %v1967 = vpow.pop %v1966
        %v1968 = vmul.f32 %v1944, 1.442695
        %v1969 = vpow.pop %v1968
        %v1970 = vmul.f32 %v1945, 1.442695
        %v1971 = vpow.pop %v1970
        %v1972 = vmul.f32 %v1946, 1.442695
        %v1973 = vpow.pop %v1972
        %v1974 = vmul.f32 %v1947, 1.442695
        %v1975 = vpow.pop %v1974
        %v1976 = vmul.f32 %v1948, 1.442695
        %v1977 = vpow.pop %v1976
        %v1978 = vmul.f32 %v1949, 1.442695
        %v1979 = vpow.pop %v1978
        %v1980 = vmul.f32 %v1950, 1.442695
        %v1981 = vpow.pop %v1980
        %v1982 = vmul.f32 %v1951, 1.442695
        %v1983 = vpow.pop %v1982
        %v1984 = vadd.f32 %v1953, %v1955
        %v1985 = vadd.f32 %v1984, %v1957
        %v1986 = vadd.f32 %v1985, %v1959
        %v1987 = vadd.f32 %v1986, %v1961
        %v1988 = vadd.f32 %v1987, %v1963
        %v1989 = vadd.f32 %v1988, %v1965
        %v1990 = vadd.f32 %v1989, %v1967
        %v1991 = vadd.f32 %v1990, %v1969
        %v1992 = vadd.f32 %v1991, %v1971
        %v1993 = vadd.f32 %v1992, %v1973
        %v1994 = vadd.f32 %v1993, %v1975
        %v1995 = vadd.f32 %v1994, %v1977
        %v1996 = vadd.f32 %v1995, %v1979
        %v1997 = vadd.f32 %v1996, %v1981
        %v1998 = vadd.f32 %v1997, %v1983
        %v1999 = vrot.slane %v1998, 4
        %v2000 = vadd.f32 %v1998, %v1999
        %v2001 = vrot.slane %v2000, 2
        %v2002 = vadd.f32 %v2000, %v2001
        %v2003 = vrot.slane %v2002, 1
        %v2004 = vadd.f32 %v2002, %v2003
        %v2005 = vrcp.pop %v2004
        %v2006 = vmul.f32 %v1953, %v2005
        %v2007 = vmul.f32 %v1955, %v2005
        %v2008 = vmul.f32 %v1957, %v2005
        %v2009 = vmul.f32 %v1959, %v2005
        %v2010 = vmul.f32 %v1961, %v2005
        %v2011 = vmul.f32 %v1963, %v2005
        %v2012 = vmul.f32 %v1965, %v2005
        %v2013 = vmul.f32 %v1967, %v2005
        %v2014 = vmul.f32 %v1969, %v2005
        %v2015 = vmul.f32 %v1971, %v2005
        %v2016 = vmul.f32 %v1973, %v2005
        %v2017 = vmul.f32 %v1975, %v2005
        %v2018 = vmul.f32 %v1977, %v2005
        %v2019 = vmul.f32 %v1979, %v2005
        %v2020 = vmul.f32 %v1981, %v2005
        %v2021 = vmul.f32 %v1983, %v2005
        %v2022 = vadd.f32 %v1548, %v1851
        %v2023 = vadd.f32 %v1549, %v1852
        %v2024 = vadd.f32 %v1550, %v1853
        %v2025 = vadd.f32 %v1551, %v1854
        %v2026 = vadd.f32 %v1552, %v1855
        %v2027 = vadd.f32 %v1553, %v1856
        %v2028 = vadd.f32 %v1554, %v1857
        %v2029 = vadd.f32 %v1555, %v1858
        %v2030 = vadd.f32 %v1556, %v1859
        %v2031 = vadd.f32 %v1557, %v1860
        %v2032 = vadd.f32 %v1558, %v1861
        %v2033 = vadd.f32 %v1559, %v1862
        %v2034 = vadd.f32 %v1560, %v1863
        %v2035 = vadd.f32 %v1561, %v1864
        %v2036 = vadd.f32 %v1562, %v1865
        %v2037 = vadd.f32 %v1563, %v1866
        %v2038 = vadd.f32 %v1564, %v2006
        %v2039 = vadd.f32 %v1565, %v2007
        %v2040 = vadd.f32 %v1566, %v2008
        %v2041 = vadd.f32 %v1567, %v2009
        %v2042 = vadd.f32 %v1568, %v2010
        %v2043 = vadd.f32 %v1569, %v2011
        %v2044 = vadd.f32 %v1570, %v2012
        %v2045 = vadd.f32 %v1571, %v2013
        %v2046 = vadd.f32 %v1572, %v2014
        %v2047 = vadd.f32 %v1573, %v2015
        %v2048 = vadd.f32 %v1574, %v2016
        %v2049 = vadd.f32 %v1575, %v2017
        %v2050 = vadd.f32 %v1576, %v2018
        %v2051 = vadd.f32 %v1577, %v2019
        %v2052 = vadd.f32 %v1578, %v2020
        %v2053 = vadd.f32 %v1579, %v2021
        %v2054 = vpack.c.bf16 %v524, %v524
        %v2055 = vpack.c.bf16 %v643, %v643
        %v2056 = vpack.c.bf16 %v659, %v659
        %2057 = vxpose.xlu0.c.b16.start [1/8] %v2054, 128
        %2058 = vxpose.xlu0.c.b16.cont [2/8] 0, 128
        %2059 = vxpose.xlu0.c.b16.cont [3/8] 0, 128
        %2060 = vxpose.xlu0.c.b16.cont [4/8] 0, 128
        %2061 = vxpose.xlu0.c.b16.cont [5/8] 0, 128
        %2062 = vxpose.xlu0.c.b16.cont [6/8] 0, 128
        %2063 = vxpose.xlu0.c.b16.cont [7/8] 0, 128
        %2064 = vxpose.xlu0.c.b16.end [8/8] 0, 128
        %v2065 = vpop.trf.xlu0
        %v2066 = vpop.trf.xlu0
        %v2067 = vpop.trf.xlu0
        %v2068 = vpop.trf.xlu0
        %v2069 = vpop.trf.xlu0
        %v2070 = vpop.trf.xlu0
        %v2071 = vpop.trf.xlu0
        %v2072 = vpop.trf.xlu0
        %v2074 = vsel %vm681, %v2065, 0
        %v2077 = vsel %vm681, %v2066, 0
        %v2080 = vsel %vm681, %v2067, 0
        %v2083 = vsel %vm681, %v2068, 0
        %v2086 = vsel %vm681, %v2069, 0
        %v2089 = vsel %vm681, %v2070, 0
        %v2092 = vsel %vm681, %v2071, 0
        %v2095 = vsel %vm681, %v2072, 0
        %v2098 = vsel %vm706, %v2055, 0
        %2100 = vmatprep.subr.bf16.mxu0 0
        %2101 = vmatpush1.bf16.msra.mxu0 0
        %2102 = vmatprep.subr.bf16.mxu0 0
        %2103 = vmatpush1.bf16.msra.mxu0 0
        %2104 = vmatprep.subr.bf16.mxu0 0
        %2105 = vmatpush1.bf16.msra.mxu0 0
        %2106 = vmatprep.subr.bf16.mxu0 0
        %2107 = vmatpush1.bf16.msra.mxu0 0
        %2108 = vmatprep.subr.bf16.mxu0 0
        %2109 = vmatpush1.bf16.msra.mxu0 0
        %2110 = vmatprep.subr.bf16.mxu0 0
        %2111 = vmatpush1.bf16.msra.mxu0 0
        %2112 = vmatprep.subr.bf16.mxu0 0
        %2113 = vmatpush1.bf16.msra.mxu0 0
        %2114 = vmatprep.subr.bf16.mxu0 0
        %2115 = vmatpush1.bf16.msra.mxu0 %v2098
        %2116 = vmatprep.subr.bf16.mxu0 0
        %2117 = vmatpush2.bf16.msra.mxu0 0
        %2118 = vmatprep.subr.bf16.mxu0 0
        %2119 = vmatpush2.bf16.msra.mxu0 0
        %2120 = vmatprep.subr.bf16.mxu0 0
        %2121 = vmatpush2.bf16.msra.mxu0 0
        %2122 = vmatprep.subr.bf16.mxu0 0
        %2123 = vmatpush2.bf16.msra.mxu0 0
        %2124 = vmatprep.subr.bf16.mxu0 0
        %2125 = vmatpush2.bf16.msra.mxu0 0
        %2126 = vmatprep.subr.bf16.mxu0 0
        %2127 = vmatpush2.bf16.msra.mxu0 0
        %2128 = vmatprep.subr.bf16.mxu0 0
        %2129 = vmatpush2.bf16.msra.mxu0 0
        %2130 = vmatprep.subr.bf16.mxu0 0
        %2131 = vmatpush2.bf16.msra.mxu0 0
        %2132 = vmatprep.mubr.bf16.mxu0 0
        %2133 = vmatmul.mubr.bf16.gmra.mxu0 %v2074
        %v2134 = vpop.f32.mrf.mxu0
        %v2135 = vadd.f32 0.0, %v2134
        %v2136 = vpop.f32.mrf.mxu0
        %v2137 = vpop.f32.mrf.mxu0
        %v2138 = vadd.f32 0.0, %v2137
        %v2139 = vpop.f32.mrf.mxu0
        %2140 = vmatprep.mubr.bf16.mxu0 0
        %2141 = vmatmul.mubr.bf16.gmra.mxu0 %v2077
        %v2142 = vpop.f32.mrf.mxu0
        %v2143 = vadd.f32 0.0, %v2142
        %v2144 = vpop.f32.mrf.mxu0
        %v2145 = vpop.f32.mrf.mxu0
        %v2146 = vadd.f32 0.0, %v2145
        %v2147 = vpop.f32.mrf.mxu0
        %2148 = vmatprep.mubr.bf16.mxu0 0
        %2149 = vmatmul.mubr.bf16.gmra.mxu0 %v2080
        %v2150 = vpop.f32.mrf.mxu0
        %v2151 = vadd.f32 0.0, %v2150
        %v2152 = vpop.f32.mrf.mxu0
        %v2153 = vpop.f32.mrf.mxu0
        %v2154 = vadd.f32 0.0, %v2153
        %v2155 = vpop.f32.mrf.mxu0
        %2156 = vmatprep.mubr.bf16.mxu0 0
        %2157 = vmatmul.mubr.bf16.gmra.mxu0 %v2083
        %v2158 = vpop.f32.mrf.mxu0
        %v2159 = vadd.f32 0.0, %v2158
        %v2160 = vpop.f32.mrf.mxu0
        %v2161 = vpop.f32.mrf.mxu0
        %v2162 = vadd.f32 0.0, %v2161
        %v2163 = vpop.f32.mrf.mxu0
        %2164 = vmatprep.mubr.bf16.mxu0 0
        %2165 = vmatmul.mubr.bf16.gmra.mxu0 %v2086
        %v2166 = vpop.f32.mrf.mxu0
        %v2167 = vadd.f32 0.0, %v2166
        %v2168 = vpop.f32.mrf.mxu0
        %v2169 = vpop.f32.mrf.mxu0
        %v2170 = vadd.f32 0.0, %v2169
        %v2171 = vpop.f32.mrf.mxu0
        %2172 = vmatprep.mubr.bf16.mxu0 0
        %2173 = vmatmul.mubr.bf16.gmra.mxu0 %v2089
        %v2174 = vpop.f32.mrf.mxu0
        %v2175 = vadd.f32 0.0, %v2174
        %v2176 = vpop.f32.mrf.mxu0
        %v2177 = vpop.f32.mrf.mxu0
        %v2178 = vadd.f32 0.0, %v2177
        %v2179 = vpop.f32.mrf.mxu0
        %2180 = vmatprep.mubr.bf16.mxu0 0
        %2181 = vmatmul.mubr.bf16.gmra.mxu0 %v2092
        %v2182 = vpop.f32.mrf.mxu0
        %v2183 = vadd.f32 0.0, %v2182
        %v2184 = vpop.f32.mrf.mxu0
        %v2185 = vpop.f32.mrf.mxu0
        %v2186 = vadd.f32 0.0, %v2185
        %v2187 = vpop.f32.mrf.mxu0
        %2188 = vmatprep.mubr.bf16.mxu0 0
        %2189 = vmatmul.mubr.bf16.gmra.mxu0 %v2095
        %v2190 = vpop.f32.mrf.mxu0
        %v2191 = vadd.f32 0.0, %v2190
        %v2192 = vpop.f32.mrf.mxu0
        %v2193 = vpop.f32.mrf.mxu0
        %v2194 = vadd.f32 0.0, %v2193
        %v2195 = vpop.f32.mrf.mxu0
        %2196 = vdwg.mxu0
        %2197 = vmax.xlane.f32.xlu0 %v2135
        %v2198 = vpop.xlane.xlu0 %2197
        %2199 = vmax.xlane.f32.xlu0 %v2138
        %v2200 = vpop.xlane.xlu0 %2199
        %2201 = vmax.xlane.f32.xlu0 %v2143
        %v2202 = vpop.xlane.xlu0 %2201
        %2203 = vmax.xlane.f32.xlu0 %v2146
        %v2204 = vpop.xlane.xlu0 %2203
        %2205 = vmax.xlane.f32.xlu0 %v2151
        %v2206 = vpop.xlane.xlu0 %2205
        %2207 = vmax.xlane.f32.xlu0 %v2154
        %v2208 = vpop.xlane.xlu0 %2207
        %2209 = vmax.xlane.f32.xlu0 %v2159
        %v2210 = vpop.xlane.xlu0 %2209
        %2211 = vmax.xlane.f32.xlu0 %v2162
        %v2212 = vpop.xlane.xlu0 %2211
        %2213 = vmax.xlane.f32.xlu0 %v2167
        %v2214 = vpop.xlane.xlu0 %2213
        %2215 = vmax.xlane.f32.xlu0 %v2170
        %v2216 = vpop.xlane.xlu0 %2215
        %2217 = vmax.xlane.f32.xlu0 %v2175
        %v2218 = vpop.xlane.xlu0 %2217
        %2219 = vmax.xlane.f32.xlu0 %v2178
        %v2220 = vpop.xlane.xlu0 %2219
        %2221 = vmax.xlane.f32.xlu0 %v2183
        %v2222 = vpop.xlane.xlu0 %2221
        %2223 = vmax.xlane.f32.xlu0 %v2186
        %v2224 = vpop.xlane.xlu0 %2223
        %2225 = vmax.xlane.f32.xlu0 %v2191
        %v2226 = vpop.xlane.xlu0 %2225
        %2227 = vmax.xlane.f32.xlu0 %v2194
        %v2228 = vpop.xlane.xlu0 %2227
        %v2229 = vsub.f32 %v2135, %v2198
        %v2230 = vsub.f32 %v2138, %v2200
        %v2231 = vsub.f32 %v2143, %v2202
        %v2232 = vsub.f32 %v2146, %v2204
        %v2233 = vsub.f32 %v2151, %v2206
        %v2234 = vsub.f32 %v2154, %v2208
        %v2235 = vsub.f32 %v2159, %v2210
        %v2236 = vsub.f32 %v2162, %v2212
        %v2237 = vsub.f32 %v2167, %v2214
        %v2238 = vsub.f32 %v2170, %v2216
        %v2239 = vsub.f32 %v2175, %v2218
        %v2240 = vsub.f32 %v2178, %v2220
        %v2241 = vsub.f32 %v2183, %v2222
        %v2242 = vsub.f32 %v2186, %v2224
        %v2243 = vsub.f32 %v2191, %v2226
        %v2244 = vsub.f32 %v2194, %v2228
        %v2245 = vmul.f32 %v2229, 1.442695
        %v2246 = vpow.pop %v2245
        %v2247 = vmul.f32 %v2230, 1.442695
        %v2248 = vpow.pop %v2247
        %v2249 = vmul.f32 %v2231, 1.442695
        %v2250 = vpow.pop %v2249
        %v2251 = vmul.f32 %v2232, 1.442695
        %v2252 = vpow.pop %v2251
        %v2253 = vmul.f32 %v2233, 1.442695
        %v2254 = vpow.pop %v2253
        %v2255 = vmul.f32 %v2234, 1.442695
        %v2256 = vpow.pop %v2255
        %v2257 = vmul.f32 %v2235, 1.442695
        %v2258 = vpow.pop %v2257
        %v2259 = vmul.f32 %v2236, 1.442695
        %v2260 = vpow.pop %v2259
        %v2261 = vmul.f32 %v2237, 1.442695
        %v2262 = vpow.pop %v2261
        %v2263 = vmul.f32 %v2238, 1.442695
        %v2264 = vpow.pop %v2263
        %v2265 = vmul.f32 %v2239, 1.442695
        %v2266 = vpow.pop %v2265
        %v2267 = vmul.f32 %v2240, 1.442695
        %v2268 = vpow.pop %v2267
        %v2269 = vmul.f32 %v2241, 1.442695
        %v2270 = vpow.pop %v2269
        %v2271 = vmul.f32 %v2242, 1.442695
        %v2272 = vpow.pop %v2271
        %v2273 = vmul.f32 %v2243, 1.442695
        %v2274 = vpow.pop %v2273
        %v2275 = vmul.f32 %v2244, 1.442695
        %v2276 = vpow.pop %v2275
        %2277 = vadd.xlane.f32.xlu0 %v2246
        %v2278 = vpop.xlane.xlu0 %2277
        %2279 = vadd.xlane.f32.xlu0 %v2248
        %v2280 = vpop.xlane.xlu0 %2279
        %2281 = vadd.xlane.f32.xlu0 %v2250
        %v2282 = vpop.xlane.xlu0 %2281
        %2283 = vadd.xlane.f32.xlu0 %v2252
        %v2284 = vpop.xlane.xlu0 %2283
        %2285 = vadd.xlane.f32.xlu0 %v2254
        %v2286 = vpop.xlane.xlu0 %2285
        %2287 = vadd.xlane.f32.xlu0 %v2256
        %v2288 = vpop.xlane.xlu0 %2287
        %2289 = vadd.xlane.f32.xlu0 %v2258
        %v2290 = vpop.xlane.xlu0 %2289
        %2291 = vadd.xlane.f32.xlu0 %v2260
        %v2292 = vpop.xlane.xlu0 %2291
        %2293 = vadd.xlane.f32.xlu0 %v2262
        %v2294 = vpop.xlane.xlu0 %2293
        %2295 = vadd.xlane.f32.xlu0 %v2264
        %v2296 = vpop.xlane.xlu0 %2295
        %2297 = vadd.xlane.f32.xlu0 %v2266
        %v2298 = vpop.xlane.xlu0 %2297
        %2299 = vadd.xlane.f32.xlu0 %v2268
        %v2300 = vpop.xlane.xlu0 %2299
        %2301 = vadd.xlane.f32.xlu0 %v2270
        %v2302 = vpop.xlane.xlu0 %2301
        %2303 = vadd.xlane.f32.xlu0 %v2272
        %v2304 = vpop.xlane.xlu0 %2303
        %2305 = vadd.xlane.f32.xlu0 %v2274
        %v2306 = vpop.xlane.xlu0 %2305
        %2307 = vadd.xlane.f32.xlu0 %v2276
        %v2308 = vpop.xlane.xlu0 %2307
        %v2309 = vrcp.pop %v2278
        %v2310 = vrcp.pop %v2280
        %v2311 = vrcp.pop %v2282
        %v2312 = vrcp.pop %v2284
        %v2313 = vrcp.pop %v2286
        %v2314 = vrcp.pop %v2288
        %v2315 = vrcp.pop %v2290
        %v2316 = vrcp.pop %v2292
        %v2317 = vrcp.pop %v2294
        %v2318 = vrcp.pop %v2296
        %v2319 = vrcp.pop %v2298
        %v2320 = vrcp.pop %v2300
        %v2321 = vrcp.pop %v2302
        %v2322 = vrcp.pop %v2304
        %v2323 = vrcp.pop %v2306
        %v2324 = vrcp.pop %v2308
        %v2325 = vmul.f32 %v2246, %v2309
        %v2326 = vmul.f32 %v2248, %v2310
        %v2327 = vmul.f32 %v2250, %v2311
        %v2328 = vmul.f32 %v2252, %v2312
        %v2329 = vmul.f32 %v2254, %v2313
        %v2330 = vmul.f32 %v2256, %v2314
        %v2331 = vmul.f32 %v2258, %v2315
        %v2332 = vmul.f32 %v2260, %v2316
        %v2333 = vmul.f32 %v2262, %v2317
        %v2334 = vmul.f32 %v2264, %v2318
        %v2335 = vmul.f32 %v2266, %v2319
        %v2336 = vmul.f32 %v2268, %v2320
        %v2337 = vmul.f32 %v2270, %v2321
        %v2338 = vmul.f32 %v2272, %v2322
        %v2339 = vmul.f32 %v2274, %v2323
        %v2340 = vmul.f32 %v2276, %v2324
        %v2341 = vpack.c.bf16 %v2326, %v2325
        %v2342 = vpack.c.bf16 %v2328, %v2327
        %v2343 = vpack.c.bf16 %v2330, %v2329
        %v2344 = vpack.c.bf16 %v2332, %v2331
        %v2345 = vpack.c.bf16 %v2334, %v2333
        %v2346 = vpack.c.bf16 %v2336, %v2335
        %v2347 = vpack.c.bf16 %v2338, %v2337
        %v2348 = vpack.c.bf16 %v2340, %v2339
        %2349 = vmatprep.subr.bf16.mxu0 0
        %2350 = vmatpush1.bf16.xpose.msra.mxu0 %v2348
        %2351 = vmatprep.subr.bf16.mxu0 0
        %2352 = vmatpush1.bf16.xpose.msra.mxu0 %v2347
        %2353 = vmatprep.subr.bf16.mxu0 0
        %2354 = vmatpush1.bf16.xpose.msra.mxu0 %v2346
        %2355 = vmatprep.subr.bf16.mxu0 0
        %2356 = vmatpush1.bf16.xpose.msra.mxu0 %v2345
        %2357 = vmatprep.subr.bf16.mxu0 0
        %2358 = vmatpush1.bf16.xpose.msra.mxu0 %v2344
        %2359 = vmatprep.subr.bf16.mxu0 0
        %2360 = vmatpush1.bf16.xpose.msra.mxu0 %v2343
        %2361 = vmatprep.subr.bf16.mxu0 0
        %2362 = vmatpush1.bf16.xpose.msra.mxu0 %v2342
        %2363 = vmatprep.subr.bf16.mxu0 0
        %2364 = vmatpush1.bf16.xpose.msra.mxu0 %v2341
        %2365 = vmatprep.subr.bf16.mxu0 0
        %2366 = vmatpush2.bf16.xpose.msra.mxu0 0
        %2367 = vmatprep.subr.bf16.mxu0 0
        %2368 = vmatpush2.bf16.xpose.msra.mxu0 0
        %2369 = vmatprep.subr.bf16.mxu0 0
        %2370 = vmatpush2.bf16.xpose.msra.mxu0 0
        %2371 = vmatprep.subr.bf16.mxu0 0
        %2372 = vmatpush2.bf16.xpose.msra.mxu0 0
        %2373 = vmatprep.subr.bf16.mxu0 0
        %2374 = vmatpush2.bf16.xpose.msra.mxu0 0
        %2375 = vmatprep.subr.bf16.mxu0 0
        %2376 = vmatpush2.bf16.xpose.msra.mxu0 0
        %2377 = vmatprep.subr.bf16.mxu0 0
        %2378 = vmatpush2.bf16.xpose.msra.mxu0 0
        %2379 = vmatprep.subr.bf16.mxu0 0
        %2380 = vmatpush2.bf16.xpose.msra.mxu0 0
        %2381 = vmatprep.mubr.bf16.mxu0 0
        %2382 = vmatmul.mubr.bf16.gmra.mxu0 %v2056
        %v2383 = vpop.f32.mrf.mxu0
        %v2384 = vadd.f32 0.0, %v2383
        %v2385 = vpop.f32.mrf.mxu0
        %v2386 = vpop.f32.mrf.mxu0
        %v2387 = vpop.f32.mrf.mxu0
        %2388 = vdwg.mxu0
        %v2389 = vmax.f32 %v2135, %v2151
        %v2390 = vmax.f32 %v2138, %v2154
        %v2391 = vmax.f32 %v2143, %v2159
        %v2392 = vmax.f32 %v2146, %v2162
        %v2393 = vmax.f32 %v2389, %v2167
        %v2394 = vmax.f32 %v2390, %v2170
        %v2395 = vmax.f32 %v2391, %v2175
        %v2396 = vmax.f32 %v2392, %v2178
        %v2397 = vmax.f32 %v2393, %v2183
        %v2398 = vmax.f32 %v2394, %v2186
        %v2399 = vmax.f32 %v2395, %v2191
        %v2400 = vmax.f32 %v2396, %v2194
        %v2401 = vmax.f32 %v2397, %v2398
        %v2402 = vmax.f32 %v2399, %v2400
        %v2403 = vmax.f32 %v2401, %v2402
        %v2404 = vrot.slane %v2403, 4
        %v2405 = vmax.f32 %v2403, %v2404
        %v2406 = vrot.slane %v2405, 2
        %v2407 = vmax.f32 %v2405, %v2406
        %v2408 = vrot.slane %v2407, 1
        %v2409 = vmax.f32 %v2407, %v2408
        %v2410 = vsub.f32 %v2135, %v2409
        %v2411 = vsub.f32 %v2138, %v2409
        %v2412 = vsub.f32 %v2143, %v2409
        %v2413 = vsub.f32 %v2146, %v2409
        %v2414 = vsub.f32 %v2151, %v2409
        %v2415 = vsub.f32 %v2154, %v2409
        %v2416 = vsub.f32 %v2159, %v2409
        %v2417 = vsub.f32 %v2162, %v2409
        %v2418 = vsub.f32 %v2167, %v2409
        %v2419 = vsub.f32 %v2170, %v2409
        %v2420 = vsub.f32 %v2175, %v2409
        %v2421 = vsub.f32 %v2178, %v2409
        %v2422 = vsub.f32 %v2183, %v2409
        %v2423 = vsub.f32 %v2186, %v2409
        %v2424 = vsub.f32 %v2191, %v2409
        %v2425 = vsub.f32 %v2194, %v2409
        %v2426 = vmul.f32 %v2410, 1.442695
        %v2427 = vpow.pop %v2426
        %v2428 = vmul.f32 %v2411, 1.442695
        %v2429 = vpow.pop %v2428
        %v2430 = vmul.f32 %v2412, 1.442695
        %v2431 = vpow.pop %v2430
        %v2432 = vmul.f32 %v2413, 1.442695
        %v2433 = vpow.pop %v2432
        %v2434 = vmul.f32 %v2414, 1.442695
        %v2435 = vpow.pop %v2434
        %v2436 = vmul.f32 %v2415, 1.442695
        %v2437 = vpow.pop %v2436
        %v2438 = vmul.f32 %v2416, 1.442695
        %v2439 = vpow.pop %v2438
        %v2440 = vmul.f32 %v2417, 1.442695
        %v2441 = vpow.pop %v2440
        %v2442 = vmul.f32 %v2418, 1.442695
        %v2443 = vpow.pop %v2442
        %v2444 = vmul.f32 %v2419, 1.442695
        %v2445 = vpow.pop %v2444
        %v2446 = vmul.f32 %v2420, 1.442695
        %v2447 = vpow.pop %v2446
        %v2448 = vmul.f32 %v2421, 1.442695
        %v2449 = vpow.pop %v2448
        %v2450 = vmul.f32 %v2422, 1.442695
        %v2451 = vpow.pop %v2450
        %v2452 = vmul.f32 %v2423, 1.442695
        %v2453 = vpow.pop %v2452
        %v2454 = vmul.f32 %v2424, 1.442695
        %v2455 = vpow.pop %v2454
        %v2456 = vmul.f32 %v2425, 1.442695
        %v2457 = vpow.pop %v2456
        %v2458 = vadd.f32 %v2427, %v2429
        %v2459 = vadd.f32 %v2458, %v2431
        %v2460 = vadd.f32 %v2459, %v2433
        %v2461 = vadd.f32 %v2460, %v2435
        %v2462 = vadd.f32 %v2461, %v2437
        %v2463 = vadd.f32 %v2462, %v2439
        %v2464 = vadd.f32 %v2463, %v2441
        %v2465 = vadd.f32 %v2464, %v2443
        %v2466 = vadd.f32 %v2465, %v2445
        %v2467 = vadd.f32 %v2466, %v2447
        %v2468 = vadd.f32 %v2467, %v2449
        %v2469 = vadd.f32 %v2468, %v2451
        %v2470 = vadd.f32 %v2469, %v2453
        %v2471 = vadd.f32 %v2470, %v2455
        %v2472 = vadd.f32 %v2471, %v2457
        %v2473 = vrot.slane %v2472, 4
        %v2474 = vadd.f32 %v2472, %v2473
        %v2475 = vrot.slane %v2474, 2
        %v2476 = vadd.f32 %v2474, %v2475
        %v2477 = vrot.slane %v2476, 1
        %v2478 = vadd.f32 %v2476, %v2477
        %v2479 = vrcp.pop %v2478
        %v2480 = vmul.f32 %v2427, %v2479
        %v2481 = vmul.f32 %v2429, %v2479
        %v2482 = vmul.f32 %v2431, %v2479
        %v2483 = vmul.f32 %v2433, %v2479
        %v2484 = vmul.f32 %v2435, %v2479
        %v2485 = vmul.f32 %v2437, %v2479
        %v2486 = vmul.f32 %v2439, %v2479
        %v2487 = vmul.f32 %v2441, %v2479
        %v2488 = vmul.f32 %v2443, %v2479
        %v2489 = vmul.f32 %v2445, %v2479
        %v2490 = vmul.f32 %v2447, %v2479
        %v2491 = vmul.f32 %v2449, %v2479
        %v2492 = vmul.f32 %v2451, %v2479
        %v2493 = vmul.f32 %v2453, %v2479
        %v2494 = vmul.f32 %v2455, %v2479
        %v2495 = vmul.f32 %v2457, %v2479
        %v2496 = vadd.f32 %v2022, %v2325
        %v2497 = vadd.f32 %v2023, %v2326
        %v2498 = vadd.f32 %v2024, %v2327
        %v2499 = vadd.f32 %v2025, %v2328
        %v2500 = vadd.f32 %v2026, %v2329
        %v2501 = vadd.f32 %v2027, %v2330
        %v2502 = vadd.f32 %v2028, %v2331
        %v2503 = vadd.f32 %v2029, %v2332
        %v2504 = vadd.f32 %v2030, %v2333
        %v2505 = vadd.f32 %v2031, %v2334
        %v2506 = vadd.f32 %v2032, %v2335
        %v2507 = vadd.f32 %v2033, %v2336
        %v2508 = vadd.f32 %v2034, %v2337
        %v2509 = vadd.f32 %v2035, %v2338
        %v2510 = vadd.f32 %v2036, %v2339
        %v2511 = vadd.f32 %v2037, %v2340
        %v2512 = vadd.f32 %v2038, %v2480
        %v2513 = vadd.f32 %v2039, %v2481
        %v2514 = vadd.f32 %v2040, %v2482
        %v2515 = vadd.f32 %v2041, %v2483
        %v2516 = vadd.f32 %v2042, %v2484
        %v2517 = vadd.f32 %v2043, %v2485
        %v2518 = vadd.f32 %v2044, %v2486
        %v2519 = vadd.f32 %v2045, %v2487
        %v2520 = vadd.f32 %v2046, %v2488
        %v2521 = vadd.f32 %v2047, %v2489
        %v2522 = vadd.f32 %v2048, %v2490
        %v2523 = vadd.f32 %v2049, %v2491
        %v2524 = vadd.f32 %v2050, %v2492
        %v2525 = vadd.f32 %v2051, %v2493
        %v2526 = vadd.f32 %v2052, %v2494
        %v2527 = vadd.f32 %v2053, %v2495
        %v2528 = vpack.c.bf16 %v1436, %v994
        %v2529 = vpack.c.bf16 %v2384, %v1910
        %2530 = vset.pattern.permute.xlu0 2
        %2531 = vperm.xlu0 %2530, %v411
        %v2532 = vpop.permute.xlu0 %2531
        %2534 = vset.pattern.permute.xlu0 2
        %2535 = vperm.xlu0 %2534, %v412
        %v2536 = vpop.permute.xlu0 %2535
        %2538 = vset.pattern.permute.xlu0 2
        %2539 = vperm.xlu0 %2538, %v413
        %v2540 = vpop.permute.xlu0 %2539
        %2542 = vset.pattern.permute.xlu0 2
        %2543 = vperm.xlu0 %2542, %v414
        %v2544 = vpop.permute.xlu0 %2543
        %2546 = vrot.lane.b32.xlu0 %v451, 32
        %v2547 = vpop.permute.xlu0 %2546
        %2548 = vrot.lane.b32.xlu0 %v452, 32
        %v2549 = vpop.permute.xlu0 %2548
        %2552 = vxpose.xlu0.c.b16.start [1/8] %v2547, 128
        %2553 = vxpose.xlu0.c.b16.cont [2/8] %v2549, 128
        %2554 = vxpose.xlu0.c.b16.cont [3/8] 0, 128
        %2555 = vxpose.xlu0.c.b16.cont [4/8] 0, 128
        %2556 = vxpose.xlu0.c.b16.cont [5/8] 0, 128
        %2557 = vxpose.xlu0.c.b16.cont [6/8] 0, 128
        %2558 = vxpose.xlu0.c.b16.cont [7/8] 0, 128
        %2559 = vxpose.xlu0.c.b16.end [8/8] 0, 128
        %v2560 = vpop.trf.xlu0
        %v2561 = vpop.trf.xlu0
        %v2562 = vpop.trf.xlu0
        %v2563 = vpop.trf.xlu0
        %v2564 = vpop.trf.xlu0
        %v2565 = vpop.trf.xlu0
        %v2566 = vpop.trf.xlu0
        %v2567 = vpop.trf.xlu0
        %v2569 = vsel %vm471, %v2560, 0
        %v2572 = vsel %vm471, %v2561, 0
        %2574 = vmatprep.subr.bf16.mxu0 0
        %2575 = vmatpush1.bf16.msra.mxu0 0
        %2576 = vmatprep.subr.bf16.mxu0 0
        %2577 = vmatpush1.bf16.msra.mxu0 0
        %2578 = vmatprep.subr.bf16.mxu0 0
        %2579 = vmatpush1.bf16.msra.mxu0 0
        %2580 = vmatprep.subr.bf16.mxu0 0
        %2581 = vmatpush1.bf16.msra.mxu0 0
        %2582 = vmatprep.subr.bf16.mxu0 0
        %2583 = vmatpush1.bf16.msra.mxu0 0
        %2584 = vmatprep.subr.bf16.mxu0 0
        %2585 = vmatpush1.bf16.msra.mxu0 0
        %2586 = vmatprep.subr.bf16.mxu0 0
        %2587 = vmatpush1.bf16.msra.mxu0 %v2529
        %2588 = vmatprep.subr.bf16.mxu0 0
        %2589 = vmatpush1.bf16.msra.mxu0 %v2528
        %2590 = vmatprep.subr.bf16.mxu0 0
        %2591 = vmatpush2.bf16.msra.mxu0 0
        %2592 = vmatprep.subr.bf16.mxu0 0
        %2593 = vmatpush2.bf16.msra.mxu0 0
        %2594 = vmatprep.subr.bf16.mxu0 0
        %2595 = vmatpush2.bf16.msra.mxu0 0
        %2596 = vmatprep.subr.bf16.mxu0 0
        %2597 = vmatpush2.bf16.msra.mxu0 0
        %2598 = vmatprep.subr.bf16.mxu0 0
        %2599 = vmatpush2.bf16.msra.mxu0 0
        %2600 = vmatprep.subr.bf16.mxu0 0
        %2601 = vmatpush2.bf16.msra.mxu0 0
        %2602 = vmatprep.subr.bf16.mxu0 0
        %2603 = vmatpush2.bf16.msra.mxu0 0
        %2604 = vmatprep.subr.bf16.mxu0 0
        %2605 = vmatpush2.bf16.msra.mxu0 0
        %2606 = vmatprep.mubr.bf16.mxu0 0
        %2607 = vmatmul.mubr.bf16.gmra.mxu0 %v2569
        %v2608 = vpop.f32.mrf.mxu0
        %v2609 = vadd.f32 %v2532, %v2608
        %v2610 = vpop.f32.mrf.mxu0
        %v2611 = vpop.f32.mrf.mxu0
        %v2612 = vadd.f32 %v2536, %v2611
        %v2613 = vpop.f32.mrf.mxu0
        %2614 = vmatprep.mubr.bf16.mxu0 0
        %2615 = vmatmul.mubr.bf16.gmra.mxu0 %v2572
        %v2616 = vpop.f32.mrf.mxu0
        %v2617 = vadd.f32 %v2540, %v2616
        %v2618 = vpop.f32.mrf.mxu0
        %v2619 = vpop.f32.mrf.mxu0
        %v2620 = vadd.f32 %v2544, %v2619
        %v2621 = vpop.f32.mrf.mxu0
        %2622 = vdwg.mxu0
        %v2623 = vpack.c.bf16 %v2612, %v2609
        %v2624 = vpack.c.bf16 %v2620, %v2617
        %v2625 = vunpack.c.h.b16 %v407
        %v2626 = vunpack.c.h.b16 %v408
        %v2627 = vunpack.c.h.b16 %v409
        %v2628 = vunpack.c.h.b16 %v410
        %v2629 = vpack.c.b16 %v2626, %v2625
        %v2630 = vpack.c.b16 %v2628, %v2627
        %2631 = vrot.lane.b32.xlu0 %v2629, 64
        %v2632 = vpop.permute.xlu0 %2631
        %2633 = vrot.lane.b32.xlu0 %v2630, 64
        %v2634 = vpop.permute.xlu0 %2633
        %2637 = vxpose.xlu0.c.b16.start [1/8] %v2632, 128
        %2638 = vxpose.xlu0.c.b16.cont [2/8] %v2634, 128
        %2639 = vxpose.xlu0.c.b16.cont [3/8] 0, 128
        %2640 = vxpose.xlu0.c.b16.cont [4/8] 0, 128
        %2641 = vxpose.xlu0.c.b16.cont [5/8] 0, 128
        %2642 = vxpose.xlu0.c.b16.cont [6/8] 0, 128
        %2643 = vxpose.xlu0.c.b16.cont [7/8] 0, 128
        %2644 = vxpose.xlu0.c.b16.end [8/8] 0, 128
        %v2645 = vpop.trf.xlu0
        %v2646 = vpop.trf.xlu0
        %v2647 = vpop.trf.xlu0
        %v2648 = vpop.trf.xlu0
        %v2649 = vpop.trf.xlu0
        %v2650 = vpop.trf.xlu0
        %v2651 = vpop.trf.xlu0
        %v2652 = vpop.trf.xlu0
        %v2654 = vsel %vm471, %v2645, 0
        %v2657 = vsel %vm471, %v2646, 0
        %v2660 = vsel %vm471, %v2647, 0
        %v2663 = vsel %vm471, %v2648, 0
        %2665 = vmatprep.subr.bf16.mxu0 0
        %2666 = vmatpush1.bf16.msra.mxu0 0
        %2667 = vmatprep.subr.bf16.mxu0 0
        %2668 = vmatpush1.bf16.msra.mxu0 0
        %2669 = vmatprep.subr.bf16.mxu0 0
        %2670 = vmatpush1.bf16.msra.mxu0 0
        %2671 = vmatprep.subr.bf16.mxu0 0
        %2672 = vmatpush1.bf16.msra.mxu0 0
        %2673 = vmatprep.subr.bf16.mxu0 0
        %2674 = vmatpush1.bf16.msra.mxu0 0
        %2675 = vmatprep.subr.bf16.mxu0 0
        %2676 = vmatpush1.bf16.msra.mxu0 0
        %2677 = vmatprep.subr.bf16.mxu0 0
        %2678 = vmatpush1.bf16.msra.mxu0 %v2624
        %2679 = vmatprep.subr.bf16.mxu0 0
        %2680 = vmatpush1.bf16.msra.mxu0 %v2623
        %2681 = vmatprep.subr.bf16.mxu0 0
        %2682 = vmatpush2.bf16.msra.mxu0 0
        %2683 = vmatprep.subr.bf16.mxu0 0
        %2684 = vmatpush2.bf16.msra.mxu0 0
        %2685 = vmatprep.subr.bf16.mxu0 0
        %2686 = vmatpush2.bf16.msra.mxu0 0
        %2687 = vmatprep.subr.bf16.mxu0 0
        %2688 = vmatpush2.bf16.msra.mxu0 0
        %2689 = vmatprep.subr.bf16.mxu0 0
        %2690 = vmatpush2.bf16.msra.mxu0 0
        %2691 = vmatprep.subr.bf16.mxu0 0
        %2692 = vmatpush2.bf16.msra.mxu0 0
        %2693 = vmatprep.subr.bf16.mxu0 0
        %2694 = vmatpush2.bf16.msra.mxu0 0
        %2695 = vmatprep.subr.bf16.mxu0 0
        %2696 = vmatpush2.bf16.msra.mxu0 0
        %2697 = vmatprep.mubr.bf16.mxu0 0
        %2698 = vmatmul.mubr.bf16.gmra.mxu0 %v2654
        %v2699 = vpop.f32.mrf.mxu0
        %v2700 = vadd.f32 0.0, %v2699
        %v2701 = vpop.f32.mrf.mxu0
        %v2702 = vpop.f32.mrf.mxu0
        %v2703 = vadd.f32 0.0, %v2702
        %v2704 = vpop.f32.mrf.mxu0
        %2705 = vmatprep.mubr.bf16.mxu0 0
        %2706 = vmatmul.mubr.bf16.gmra.mxu0 %v2657
        %v2707 = vpop.f32.mrf.mxu0
        %v2708 = vadd.f32 0.0, %v2707
        %v2709 = vpop.f32.mrf.mxu0
        %v2710 = vpop.f32.mrf.mxu0
        %v2711 = vadd.f32 0.0, %v2710
        %v2712 = vpop.f32.mrf.mxu0
        %2713 = vmatprep.mubr.bf16.mxu0 0
        %2714 = vmatmul.mubr.bf16.gmra.mxu0 %v2660
        %v2715 = vpop.f32.mrf.mxu0
        %v2716 = vadd.f32 0.0, %v2715
        %v2717 = vpop.f32.mrf.mxu0
        %v2718 = vpop.f32.mrf.mxu0
        %v2719 = vadd.f32 0.0, %v2718
        %v2720 = vpop.f32.mrf.mxu0
        %2721 = vmatprep.mubr.bf16.mxu0 0
        %2722 = vmatmul.mubr.bf16.gmra.mxu0 %v2663
        %v2723 = vpop.f32.mrf.mxu0
        %v2724 = vadd.f32 0.0, %v2723
        %v2725 = vpop.f32.mrf.mxu0
        %v2726 = vpop.f32.mrf.mxu0
        %v2727 = vadd.f32 0.0, %v2726
        %v2728 = vpop.f32.mrf.mxu0
        %2729 = vdwg.mxu0
        %2732 = vxpose.xlu0.c.b16.start [1/8] %v2629, 128
        %2733 = vxpose.xlu0.c.b16.cont [2/8] %v2630, 128
        %2734 = vxpose.xlu0.c.b16.cont [3/8] 0, 128
        %2735 = vxpose.xlu0.c.b16.cont [4/8] 0, 128
        %2736 = vxpose.xlu0.c.b16.cont [5/8] 0, 128
        %2737 = vxpose.xlu0.c.b16.cont [6/8] 0, 128
        %2738 = vxpose.xlu0.c.b16.cont [7/8] 0, 128
        %2739 = vxpose.xlu0.c.b16.end [8/8] 0, 128
        %v2740 = vpop.trf.xlu0
        %v2741 = vpop.trf.xlu0
        %v2742 = vpop.trf.xlu0
        %v2743 = vpop.trf.xlu0
        %v2744 = vpop.trf.xlu0
        %v2745 = vpop.trf.xlu0
        %v2746 = vpop.trf.xlu0
        %v2747 = vpop.trf.xlu0
        %v2749 = vsel %vm471, %v2740, 0
        %v2752 = vsel %vm471, %v2741, 0
        %v2755 = vsel %vm471, %v2742, 0
        %v2758 = vsel %vm471, %v2743, 0
        %2760 = vmatprep.subr.bf16.mxu0 0
        %2761 = vmatpush1.bf16.msra.mxu0 0
        %2762 = vmatprep.subr.bf16.mxu0 0
        %2763 = vmatpush1.bf16.msra.mxu0 0
        %2764 = vmatprep.subr.bf16.mxu0 0
        %2765 = vmatpush1.bf16.msra.mxu0 0
        %2766 = vmatprep.subr.bf16.mxu0 0
        %2767 = vmatpush1.bf16.msra.mxu0 0
        %2768 = vmatprep.subr.bf16.mxu0 0
        %2769 = vmatpush1.bf16.msra.mxu0 0
        %2770 = vmatprep.subr.bf16.mxu0 0
        %2771 = vmatpush1.bf16.msra.mxu0 0
        %2772 = vmatprep.subr.bf16.mxu0 0
        %2773 = vmatpush1.bf16.msra.mxu0 %v420
        %2774 = vmatprep.subr.bf16.mxu0 0
        %2775 = vmatpush1.bf16.msra.mxu0 %v419
        %2776 = vmatprep.subr.bf16.mxu0 0
        %2777 = vmatpush2.bf16.msra.mxu0 0
        %2778 = vmatprep.subr.bf16.mxu0 0
        %2779 = vmatpush2.bf16.msra.mxu0 0
        %2780 = vmatprep.subr.bf16.mxu0 0
        %2781 = vmatpush2.bf16.msra.mxu0 0
        %2782 = vmatprep.subr.bf16.mxu0 0
        %2783 = vmatpush2.bf16.msra.mxu0 0
        %2784 = vmatprep.subr.bf16.mxu0 0
        %2785 = vmatpush2.bf16.msra.mxu0 0
        %2786 = vmatprep.subr.bf16.mxu0 0
        %2787 = vmatpush2.bf16.msra.mxu0 0
        %2788 = vmatprep.subr.bf16.mxu0 0
        %2789 = vmatpush2.bf16.msra.mxu0 0
        %2790 = vmatprep.subr.bf16.mxu0 0
        %2791 = vmatpush2.bf16.msra.mxu0 0
        %2792 = vmatprep.mubr.bf16.mxu0 0
        %2793 = vmatmul.mubr.bf16.gmra.mxu0 %v2749
        %v2794 = vpop.f32.mrf.mxu0
        %v2795 = vadd.f32 %v2700, %v2794
        %v2796 = vpop.f32.mrf.mxu0
        %v2797 = vpop.f32.mrf.mxu0
        %v2798 = vadd.f32 %v2703, %v2797
        %v2799 = vpop.f32.mrf.mxu0
        %2800 = vmatprep.mubr.bf16.mxu0 0
        %2801 = vmatmul.mubr.bf16.gmra.mxu0 %v2752
        %v2802 = vpop.f32.mrf.mxu0
        %v2803 = vadd.f32 %v2708, %v2802
        %v2804 = vpop.f32.mrf.mxu0
        %v2805 = vpop.f32.mrf.mxu0
        %v2806 = vadd.f32 %v2711, %v2805
        %v2807 = vpop.f32.mrf.mxu0
        %2808 = vmatprep.mubr.bf16.mxu0 0
        %2809 = vmatmul.mubr.bf16.gmra.mxu0 %v2755
        %v2810 = vpop.f32.mrf.mxu0
        %v2811 = vadd.f32 %v2716, %v2810
        %v2812 = vpop.f32.mrf.mxu0
        %v2813 = vpop.f32.mrf.mxu0
        %v2814 = vadd.f32 %v2719, %v2813
        %v2815 = vpop.f32.mrf.mxu0
        %2816 = vmatprep.mubr.bf16.mxu0 0
        %2817 = vmatmul.mubr.bf16.gmra.mxu0 %v2758
        %v2818 = vpop.f32.mrf.mxu0
        %v2819 = vadd.f32 %v2724, %v2818
        %v2820 = vpop.f32.mrf.mxu0
        %v2821 = vpop.f32.mrf.mxu0
        %v2822 = vadd.f32 %v2727, %v2821
        %v2823 = vpop.f32.mrf.mxu0
        %2824 = vdwg.mxu0
        %2825 = vset.pattern.permute.xlu0 3
        %2826 = vperm.xlu0 %2825, %v411
        %v2827 = vpop.permute.xlu0 %2826
        %2829 = vset.pattern.permute.xlu0 3
        %2830 = vperm.xlu0 %2829, %v412
        %v2831 = vpop.permute.xlu0 %2830
        %2833 = vset.pattern.permute.xlu0 3
        %2834 = vperm.xlu0 %2833, %v413
        %v2835 = vpop.permute.xlu0 %2834
        %2837 = vset.pattern.permute.xlu0 3
        %2838 = vperm.xlu0 %2837, %v414
        %v2839 = vpop.permute.xlu0 %2838
        %2841 = vset.pattern.permute.xlu0 3
        %2842 = vperm.xlu0 %2841, %v415
        %v2843 = vpop.permute.xlu0 %2842
        %2845 = vset.pattern.permute.xlu0 3
        %2846 = vperm.xlu0 %2845, %v416
        %v2847 = vpop.permute.xlu0 %2846
        %2849 = vset.pattern.permute.xlu0 3
        %2850 = vperm.xlu0 %2849, %v417
        %v2851 = vpop.permute.xlu0 %2850
        %2853 = vset.pattern.permute.xlu0 3
        %2854 = vperm.xlu0 %2853, %v418
        %v2855 = vpop.permute.xlu0 %2854
        %v2857 = vadd.f32 %v2795, %v2827
        %v2858 = vadd.f32 %v2798, %v2831
        %v2859 = vadd.f32 %v2803, %v2835
        %v2860 = vadd.f32 %v2806, %v2839
        %v2861 = vadd.f32 %v2811, %v2843
        %v2862 = vadd.f32 %v2814, %v2847
        %v2863 = vadd.f32 %v2819, %v2851
        %v2864 = vadd.f32 %v2822, %v2855
        %v2865 = vmax.f32 %v2857, 0.0
        %v2866 = vmax.f32 %v2858, 0.0
        %v2867 = vmax.f32 %v2859, 0.0
        %v2868 = vmax.f32 %v2860, 0.0
        %v2869 = vmax.f32 %v2861, 0.0
        %v2870 = vmax.f32 %v2862, 0.0
        %v2871 = vmax.f32 %v2863, 0.0
        %v2872 = vmax.f32 %v2864, 0.0
        %v2873 = vld [vmem:[%s3] sm:$0xf]
        %v2874 = vld [vmem:[%s3 + $0x4] sm:$0xf]
        %v2875 = vld [vmem:[%s3 + $0x8] sm:$0xf]
        %v2876 = vld [vmem:[%s3 + $0xc] sm:$0xf]
        %v2877 = vld [vmem:[%s3 + $0x10] sm:$0xf]
        %v2878 = vld [vmem:[%s3 + $0x14] sm:$0xf]
        %v2879 = vld [vmem:[%s3 + $0x18] sm:$0xf]
        %v2880 = vld [vmem:[%s3 + $0x1c] sm:$0xf]
        %v2881 = vpack.c.bf16 %v2866, %v2865
        %v2882 = vpack.c.bf16 %v2868, %v2867
        %v2883 = vpack.c.bf16 %v2870, %v2869
        %v2884 = vpack.c.bf16 %v2872, %v2871
        %2885 = vset.pattern.permute.xlu0 4
        %2886 = vperm.xlu0 %2885, %v411
        %v2887 = vpop.permute.xlu0 %2886
        %2889 = vset.pattern.permute.xlu0 4
        %2890 = vperm.xlu0 %2889, %v412
        %v2891 = vpop.permute.xlu0 %2890
        %2893 = vset.pattern.permute.xlu0 4
        %2894 = vperm.xlu0 %2893, %v413
        %v2895 = vpop.permute.xlu0 %2894
        %2897 = vset.pattern.permute.xlu0 4
        %2898 = vperm.xlu0 %2897, %v414
        %v2899 = vpop.permute.xlu0 %2898
        %v2909 = vunpack.c.l.b16 %v2873
        %v2910 = vunpack.c.l.b16 %v2874
        %v2911 = vunpack.c.l.b16 %v2875
        %v2912 = vunpack.c.l.b16 %v2876
        %v2913 = vunpack.c.l.b16 %v2877
        %v2914 = vunpack.c.l.b16 %v2878
        %v2915 = vunpack.c.l.b16 %v2879
        %v2916 = vunpack.c.l.b16 %v2880
        %v2917 = vpack.c.b16 %v2910, %v2909
        %v2918 = vpack.c.b16 %v2912, %v2911
        %v2919 = vpack.c.b16 %v2914, %v2913
        %v2920 = vpack.c.b16 %v2916, %v2915
        %2925 = vxpose.xlu0.c.b16.start [1/8] %v2917, 128
        %2926 = vxpose.xlu0.c.b16.cont [2/8] %v2918, 128
        %2927 = vxpose.xlu0.c.b16.cont [3/8] %v2919, 128
        %2928 = vxpose.xlu0.c.b16.cont [4/8] %v2920, 128
        %2929 = vxpose.xlu0.c.b16.cont [5/8] 0, 128
        %2930 = vxpose.xlu0.c.b16.cont [6/8] 0, 128
        %2931 = vxpose.xlu0.c.b16.cont [7/8] 0, 128
        %2932 = vxpose.xlu0.c.b16.end [8/8] 0, 128
        %v2933 = vpop.trf.xlu0
        %v2934 = vpop.trf.xlu0
        %v2935 = vpop.trf.xlu0
        %v2936 = vpop.trf.xlu0
        %v2937 = vpop.trf.xlu0
        %v2938 = vpop.trf.xlu0
        %v2939 = vpop.trf.xlu0
        %v2940 = vpop.trf.xlu0
        %vm2941 = vcmask 523264
        %v2943 = vsel %vm2941, %v2933, 0
        %v2946 = vsel %vm2941, %v2934, 0
        %2948 = vmatprep.subr.bf16.mxu0 0
        %2949 = vmatpush1.bf16.msra.mxu0 0
        %2950 = vmatprep.subr.bf16.mxu0 0
        %2951 = vmatpush1.bf16.msra.mxu0 0
        %2952 = vmatprep.subr.bf16.mxu0 0
        %2953 = vmatpush1.bf16.msra.mxu0 0
        %2954 = vmatprep.subr.bf16.mxu0 0
        %2955 = vmatpush1.bf16.msra.mxu0 0
        %2956 = vmatprep.subr.bf16.mxu0 0
        %2957 = vmatpush1.bf16.msra.mxu0 %v2884
        %2958 = vmatprep.subr.bf16.mxu0 0
        %2959 = vmatpush1.bf16.msra.mxu0 %v2883
        %2960 = vmatprep.subr.bf16.mxu0 0
        %2961 = vmatpush1.bf16.msra.mxu0 %v2882
        %2962 = vmatprep.subr.bf16.mxu0 0
        %2963 = vmatpush1.bf16.msra.mxu0 %v2881
        %2964 = vmatprep.subr.bf16.mxu0 0
        %2965 = vmatpush2.bf16.msra.mxu0 0
        %2966 = vmatprep.subr.bf16.mxu0 0
        %2967 = vmatpush2.bf16.msra.mxu0 0
        %2968 = vmatprep.subr.bf16.mxu0 0
        %2969 = vmatpush2.bf16.msra.mxu0 0
        %2970 = vmatprep.subr.bf16.mxu0 0
        %2971 = vmatpush2.bf16.msra.mxu0 0
        %2972 = vmatprep.subr.bf16.mxu0 0
        %2973 = vmatpush2.bf16.msra.mxu0 0
        %2974 = vmatprep.subr.bf16.mxu0 0
        %2975 = vmatpush2.bf16.msra.mxu0 0
        %2976 = vmatprep.subr.bf16.mxu0 0
        %2977 = vmatpush2.bf16.msra.mxu0 0
        %2978 = vmatprep.subr.bf16.mxu0 0
        %2979 = vmatpush2.bf16.msra.mxu0 0
        %2980 = vmatprep.mubr.bf16.mxu0 0
        %2981 = vmatmul.mubr.bf16.gmra.mxu0 %v2943
        %v2982 = vpop.f32.mrf.mxu0
        %v2983 = vadd.f32 %v2887, %v2982
        %v2984 = vpop.f32.mrf.mxu0
        %v2985 = vpop.f32.mrf.mxu0
        %v2986 = vadd.f32 %v2891, %v2985
        %v2987 = vpop.f32.mrf.mxu0
        %2988 = vmatprep.mubr.bf16.mxu0 0
        %2989 = vmatmul.mubr.bf16.gmra.mxu0 %v2946
        %v2990 = vpop.f32.mrf.mxu0
        %v2991 = vadd.f32 %v2895, %v2990
        %v2992 = vpop.f32.mrf.mxu0
        %v2993 = vpop.f32.mrf.mxu0
        %v2994 = vadd.f32 %v2899, %v2993
        %v2995 = vpop.f32.mrf.mxu0
        %2996 = vdwg.mxu0
        %v2997 = vadd.f32 %v399, %v2983
        %v2998 = vadd.f32 %v400, %v2986
        %v2999 = vadd.f32 %v401, %v2991
        %v3000 = vadd.f32 %v402, %v2994
        %v3001 = vmul.f32 %v2496, 0.25
        %v3002 = vmul.f32 %v2497, 0.25
        %v3003 = vmul.f32 %v2498, 0.25
        %v3004 = vmul.f32 %v2499, 0.25
        %v3005 = vmul.f32 %v2500, 0.25
        %v3006 = vmul.f32 %v2501, 0.25
        %v3007 = vmul.f32 %v2502, 0.25
        %v3008 = vmul.f32 %v2503, 0.25
        %v3009 = vmul.f32 %v2504, 0.25
        %v3010 = vmul.f32 %v2505, 0.25
        %v3011 = vmul.f32 %v2506, 0.25
        %v3012 = vmul.f32 %v2507, 0.25
        %v3013 = vmul.f32 %v2508, 0.25
        %v3014 = vmul.f32 %v2509, 0.25
        %v3015 = vmul.f32 %v2510, 0.25
        %v3016 = vmul.f32 %v2511, 0.25
        %3017 = vst [vmem:[%s385] sm:$0xff] %v3001
        %3018 = vst [vmem:[%s385 + $0x8] sm:$0xff] %v3002
        %3019 = vst [vmem:[%s385 + $0x10] sm:$0xff] %v3003
        %3020 = vst [vmem:[%s385 + $0x18] sm:$0xff] %v3004
        %3021 = vst [vmem:[%s385 + $0x20] sm:$0xff] %v3005
        %3022 = vst [vmem:[%s385 + $0x28] sm:$0xff] %v3006
        %3023 = vst [vmem:[%s385 + $0x30] sm:$0xff] %v3007
        %3024 = vst [vmem:[%s385 + $0x38] sm:$0xff] %v3008
        %3025 = vst [vmem:[%s385 + $0x40] sm:$0xff] %v3009
        %3026 = vst [vmem:[%s385 + $0x48] sm:$0xff] %v3010
        %3027 = vst [vmem:[%s385 + $0x50] sm:$0xff] %v3011
        %3028 = vst [vmem:[%s385 + $0x58] sm:$0xff] %v3012
        %3029 = vst [vmem:[%s385 + $0x60] sm:$0xff] %v3013
        %3030 = vst [vmem:[%s385 + $0x68] sm:$0xff] %v3014
        %3031 = vst [vmem:[%s385 + $0x70] sm:$0xff] %v3015
        %3032 = vst [vmem:[%s385 + $0x78] sm:$0xff] %v3016
        %v3033 = vmul.f32 %v2512, 0.25
        %v3034 = vmul.f32 %v2513, 0.25
        %v3035 = vmul.f32 %v2514, 0.25
        %v3036 = vmul.f32 %v2515, 0.25
        %v3037 = vmul.f32 %v2516, 0.25
        %v3038 = vmul.f32 %v2517, 0.25
        %v3039 = vmul.f32 %v2518, 0.25
        %v3040 = vmul.f32 %v2519, 0.25
        %v3041 = vmul.f32 %v2520, 0.25
        %v3042 = vmul.f32 %v2521, 0.25
        %v3043 = vmul.f32 %v2522, 0.25
        %v3044 = vmul.f32 %v2523, 0.25
        %v3045 = vmul.f32 %v2524, 0.25
        %v3046 = vmul.f32 %v2525, 0.25
        %v3047 = vmul.f32 %v2526, 0.25
        %v3048 = vmul.f32 %v2527, 0.25
        %3049 = vxpose.xlu0.b32.start [1/16] %v3033, 128
        %3050 = vxpose.xlu0.b32.cont [2/16] %v3034, 128
        %3051 = vxpose.xlu0.b32.cont [3/16] %v3035, 128
        %3052 = vxpose.xlu0.b32.cont [4/16] %v3036, 128
        %3053 = vxpose.xlu0.b32.cont [5/16] %v3037, 128
        %3054 = vxpose.xlu0.b32.cont [6/16] %v3038, 128
        %3055 = vxpose.xlu0.b32.cont [7/16] %v3039, 128
        %3056 = vxpose.xlu0.b32.cont [8/16] %v3040, 128
        %3057 = vxpose.xlu0.b32.cont [9/16] %v3041, 128
        %3058 = vxpose.xlu0.b32.cont [10/16] %v3042, 128
        %3059 = vxpose.xlu0.b32.cont [11/16] %v3043, 128
        %3060 = vxpose.xlu0.b32.cont [12/16] %v3044, 128
        %3061 = vxpose.xlu0.b32.cont [13/16] %v3045, 128
        %3062 = vxpose.xlu0.b32.cont [14/16] %v3046, 128
        %3063 = vxpose.xlu0.b32.cont [15/16] %v3047, 128
        %3064 = vxpose.xlu0.b32.end [16/16] %v3048, 128
        %v3065 = vpop.trf.xlu0
        %v3066 = vpop.trf.xlu0
        %v3067 = vpop.trf.xlu0
        %v3068 = vpop.trf.xlu0
        %v3069 = vpop.trf.xlu0
        %v3070 = vpop.trf.xlu0
        %v3071 = vpop.trf.xlu0
        %v3072 = vpop.trf.xlu0
        %v3073 = vpop.trf.xlu0
        %v3074 = vpop.trf.xlu0
        %v3075 = vpop.trf.xlu0
        %v3076 = vpop.trf.xlu0
        %v3077 = vpop.trf.xlu0
        %v3078 = vpop.trf.xlu0
        %v3079 = vpop.trf.xlu0
        %v3080 = vpop.trf.xlu0
        %3081 = vst [vmem:[%s392] sm:$0xff] %v3065
        %3082 = vst [vmem:[%s392 + $0x8] sm:$0xff] %v3066
        %3083 = vst [vmem:[%s392 + $0x10] sm:$0xff] %v3067
        %3084 = vst [vmem:[%s392 + $0x18] sm:$0xff] %v3068
        %3085 = vst [vmem:[%s392 + $0x20] sm:$0xff] %v3069
        %3086 = vst [vmem:[%s392 + $0x28] sm:$0xff] %v3070
        %3087 = vst [vmem:[%s392 + $0x30] sm:$0xff] %v3071
        %3088 = vst [vmem:[%s392 + $0x38] sm:$0xff] %v3072
        %3089 = vst [vmem:[%s392 + $0x40] sm:$0xff] %v3073
        %3090 = vst [vmem:[%s392 + $0x48] sm:$0xff] %v3074
        %3091 = vst [vmem:[%s392 + $0x50] sm:$0xff] %v3075
        %3092 = vst [vmem:[%s392 + $0x58] sm:$0xff] %v3076
        %3093 = vst [vmem:[%s392 + $0x60] sm:$0xff] %v3077
        %3094 = vst [vmem:[%s392 + $0x68] sm:$0xff] %v3078
        %3095 = vst [vmem:[%s392 + $0x70] sm:$0xff] %v3079
        %3096 = vst [vmem:[%s392 + $0x78] sm:$0xff] %v3080
        %s3097 = scalar_lea.vmem %s2, 32
        %v3098 = vld [vmem:[%s3097] sm:$0xff]
        %v3099 = vld [vmem:[%s3097 + $0x8] sm:$0xff]
        %v3100 = vld [vmem:[%s3097 + $0x10] sm:$0xff]
        %v3101 = vld [vmem:[%s3097 + $0x18] sm:$0xff]
        %v3102 = vld [vmem:[%s4] sm:$0xff]
        %v3103 = vld [vmem:[%s4 + $0x8] sm:$0xff]
        %v3104 = vld [vmem:[%s4 + $0x10] sm:$0xff]
        %v3105 = vld [vmem:[%s4 + $0x18] sm:$0xff]
        %v3106 = vld [vmem:[%s4 + $0x20] sm:$0xff]
        %v3107 = vld [vmem:[%s4 + $0x28] sm:$0xff]
        %v3108 = vld [vmem:[%s4 + $0x30] sm:$0xff]
        %v3109 = vld [vmem:[%s4 + $0x38] sm:$0xff]
        %v3110 = vpack.c.bf16 %v2998, %v2997
        %v3111 = vpack.c.bf16 %v3000, %v2999
        %v3116 = vunpack.c.l.b16 %v3098
        %v3117 = vunpack.c.l.b16 %v3099
        %v3118 = vunpack.c.l.b16 %v3100
        %v3119 = vunpack.c.l.b16 %v3101
        %v3120 = vpack.c.b16 %v3117, %v3116
        %v3121 = vpack.c.b16 %v3119, %v3118
        %3124 = vxpose.xlu0.c.b16.start [1/8] %v3120, 128
        %3125 = vxpose.xlu0.c.b16.cont [2/8] %v3121, 128
        %3126 = vxpose.xlu0.c.b16.cont [3/8] 0, 128
        %3127 = vxpose.xlu0.c.b16.cont [4/8] 0, 128
        %3128 = vxpose.xlu0.c.b16.cont [5/8] 0, 128
        %3129 = vxpose.xlu0.c.b16.cont [6/8] 0, 128
        %3130 = vxpose.xlu0.c.b16.cont [7/8] 0, 128
        %3131 = vxpose.xlu0.c.b16.end [8/8] 0, 128
        %v3132 = vpop.trf.xlu0
        %v3133 = vpop.trf.xlu0
        %v3134 = vpop.trf.xlu0
        %v3135 = vpop.trf.xlu0
        %v3136 = vpop.trf.xlu0
        %v3137 = vpop.trf.xlu0
        %v3138 = vpop.trf.xlu0
        %v3139 = vpop.trf.xlu0
        %v3141 = vsel %vm471, %v3132, 0
        %v3144 = vsel %vm471, %v3133, 0
        %v3147 = vsel %vm471, %v3134, 0
        %v3150 = vsel %vm471, %v3135, 0
        %v3153 = vsel %vm471, %v3136, 0
        %v3156 = vsel %vm471, %v3137, 0
        %3158 = vmatprep.subr.bf16.mxu0 0
        %3159 = vmatpush1.bf16.msra.mxu0 0
        %3160 = vmatprep.subr.bf16.mxu0 0
        %3161 = vmatpush1.bf16.msra.mxu0 0
        %3162 = vmatprep.subr.bf16.mxu0 0
        %3163 = vmatpush1.bf16.msra.mxu0 0
        %3164 = vmatprep.subr.bf16.mxu0 0
        %3165 = vmatpush1.bf16.msra.mxu0 0
        %3166 = vmatprep.subr.bf16.mxu0 0
        %3167 = vmatpush1.bf16.msra.mxu0 0
        %3168 = vmatprep.subr.bf16.mxu0 0
        %3169 = vmatpush1.bf16.msra.mxu0 0
        %3170 = vmatprep.subr.bf16.mxu0 0
        %3171 = vmatpush1.bf16.msra.mxu0 %v3111
        %3172 = vmatprep.subr.bf16.mxu0 0
        %3173 = vmatpush1.bf16.msra.mxu0 %v3110
        %3174 = vmatprep.subr.bf16.mxu0 0
        %3175 = vmatpush2.bf16.msra.mxu0 0
        %3176 = vmatprep.subr.bf16.mxu0 0
        %3177 = vmatpush2.bf16.msra.mxu0 0
        %3178 = vmatprep.subr.bf16.mxu0 0
        %3179 = vmatpush2.bf16.msra.mxu0 0
        %3180 = vmatprep.subr.bf16.mxu0 0
        %3181 = vmatpush2.bf16.msra.mxu0 0
        %3182 = vmatprep.subr.bf16.mxu0 0
        %3183 = vmatpush2.bf16.msra.mxu0 0
        %3184 = vmatprep.subr.bf16.mxu0 0
        %3185 = vmatpush2.bf16.msra.mxu0 0
        %3186 = vmatprep.subr.bf16.mxu0 0
        %3187 = vmatpush2.bf16.msra.mxu0 0
        %3188 = vmatprep.subr.bf16.mxu0 0
        %3189 = vmatpush2.bf16.msra.mxu0 0
        %3190 = vmatprep.mubr.bf16.mxu0 0
        %3191 = vmatmul.mubr.bf16.gmra.mxu0 %v3141
        %v3192 = vpop.f32.mrf.mxu0
        %v3193 = vadd.f32 0.0, %v3192
        %v3194 = vpop.f32.mrf.mxu0
        %v3195 = vpop.f32.mrf.mxu0
        %v3196 = vadd.f32 0.0, %v3195
        %v3197 = vpop.f32.mrf.mxu0
        %3198 = vmatprep.mubr.bf16.mxu0 0
        %3199 = vmatmul.mubr.bf16.gmra.mxu0 %v3144
        %v3200 = vpop.f32.mrf.mxu0
        %v3201 = vadd.f32 0.0, %v3200
        %v3202 = vpop.f32.mrf.mxu0
        %v3203 = vpop.f32.mrf.mxu0
        %v3204 = vadd.f32 0.0, %v3203
        %v3205 = vpop.f32.mrf.mxu0
        %3206 = vmatprep.mubr.bf16.mxu0 0
        %3207 = vmatmul.mubr.bf16.gmra.mxu0 %v3147
        %v3208 = vpop.f32.mrf.mxu0
        %v3209 = vadd.f32 0.0, %v3208
        %v3210 = vpop.f32.mrf.mxu0
        %v3211 = vpop.f32.mrf.mxu0
        %v3212 = vadd.f32 0.0, %v3211
        %v3213 = vpop.f32.mrf.mxu0
        %3214 = vmatprep.mubr.bf16.mxu0 0
        %3215 = vmatmul.mubr.bf16.gmra.mxu0 %v3150
        %v3216 = vpop.f32.mrf.mxu0
        %v3217 = vadd.f32 0.0, %v3216
        %v3218 = vpop.f32.mrf.mxu0
        %v3219 = vpop.f32.mrf.mxu0
        %v3220 = vadd.f32 0.0, %v3219
        %v3221 = vpop.f32.mrf.mxu0
        %3222 = vmatprep.mubr.bf16.mxu0 0
        %3223 = vmatmul.mubr.bf16.gmra.mxu0 %v3153
        %v3224 = vpop.f32.mrf.mxu0
        %v3225 = vadd.f32 0.0, %v3224
        %v3226 = vpop.f32.mrf.mxu0
        %v3227 = vpop.f32.mrf.mxu0
        %v3228 = vadd.f32 0.0, %v3227
        %v3229 = vpop.f32.mrf.mxu0
        %3230 = vmatprep.mubr.bf16.mxu0 0
        %3231 = vmatmul.mubr.bf16.gmra.mxu0 %v3156
        %v3232 = vpop.f32.mrf.mxu0
        %v3233 = vadd.f32 0.0, %v3232
        %v3234 = vpop.f32.mrf.mxu0
        %v3235 = vpop.f32.mrf.mxu0
        %v3236 = vadd.f32 0.0, %v3235
        %v3237 = vpop.f32.mrf.mxu0
        %3238 = vdwg.mxu0
        %3240 = vset.pattern.permute.xlu0 5
        %3241 = vperm.xlu0 %3240, %v3102
        %v3242 = vpop.permute.xlu0 %3241
        %3245 = vset.pattern.permute.xlu0 5
        %3246 = vperm.xlu0 %3245, %v3103
        %v3247 = vpop.permute.xlu0 %3246
        %3250 = vset.pattern.permute.xlu0 5
        %3251 = vperm.xlu0 %3250, %v3104
        %v3252 = vpop.permute.xlu0 %3251
        %3255 = vset.pattern.permute.xlu0 5
        %3256 = vperm.xlu0 %3255, %v3105
        %v3257 = vpop.permute.xlu0 %3256
        %v3259 = vadd.f32 %v3193, %v3242
        %v3260 = vadd.f32 %v3196, %v3247
        %v3261 = vadd.f32 %v3201, %v3252
        %v3262 = vadd.f32 %v3204, %v3257
        %3263 = vset.pattern.permute.xlu0 6
        %3264 = vperm.xlu0 %3263, %v3102
        %v3265 = vpop.permute.xlu0 %3264
        %3267 = vset.pattern.permute.xlu0 6
        %3268 = vperm.xlu0 %3267, %v3103
        %v3269 = vpop.permute.xlu0 %3268
        %3271 = vset.pattern.permute.xlu0 6
        %3272 = vperm.xlu0 %3271, %v3104
        %v3273 = vpop.permute.xlu0 %3272
        %3275 = vset.pattern.permute.xlu0 6
        %3276 = vperm.xlu0 %3275, %v3105
        %v3277 = vpop.permute.xlu0 %3276
        %3280 = vset.pattern.permute.xlu0 6
        %3281 = vperm.xlu0 %3280, %v3106
        %v3282 = vpop.permute.xlu0 %3281
        %3285 = vset.pattern.permute.xlu0 6
        %3286 = vperm.xlu0 %3285, %v3107
        %v3287 = vpop.permute.xlu0 %3286
        %3290 = vset.pattern.permute.xlu0 6
        %3291 = vperm.xlu0 %3290, %v3108
        %v3292 = vpop.permute.xlu0 %3291
        %3295 = vset.pattern.permute.xlu0 6
        %3296 = vperm.xlu0 %3295, %v3109
        %v3297 = vpop.permute.xlu0 %3296
        %v3299 = vadd.f32 %v3209, %v3265
        %v3300 = vadd.f32 %v3212, %v3269
        %v3301 = vadd.f32 %v3217, %v3273
        %v3302 = vadd.f32 %v3220, %v3277
        %v3303 = vadd.f32 %v3225, %v3282
        %v3304 = vadd.f32 %v3228, %v3287
        %v3305 = vadd.f32 %v3233, %v3292
        %v3306 = vadd.f32 %v3236, %v3297
        %v3307 = vpack.c.bf16 %v3259, %v3259
        %v3308 = vpack.c.bf16 %v3299, %v3299
        %v3309 = vpack.c.bf16 %v3303, %v3303
        %3310 = vxpose.xlu0.c.b16.start [1/8] %v3307, 128
        %3311 = vxpose.xlu0.c.b16.cont [2/8] 0, 128
        %3312 = vxpose.xlu0.c.b16.cont [3/8] 0, 128
        %3313 = vxpose.xlu0.c.b16.cont [4/8] 0, 128
        %3314 = vxpose.xlu0.c.b16.cont [5/8] 0, 128
        %3315 = vxpose.xlu0.c.b16.cont [6/8] 0, 128
        %3316 = vxpose.xlu0.c.b16.cont [7/8] 0, 128
        %3317 = vxpose.xlu0.c.b16.end [8/8] 0, 128
        %v3318 = vpop.trf.xlu0
        %v3319 = vpop.trf.xlu0
        %v3320 = vpop.trf.xlu0
        %v3321 = vpop.trf.xlu0
        %v3322 = vpop.trf.xlu0
        %v3323 = vpop.trf.xlu0
        %v3324 = vpop.trf.xlu0
        %v3325 = vpop.trf.xlu0
        %v3327 = vsel %vm681, %v3318, 0
        %v3330 = vsel %vm681, %v3319, 0
        %v3333 = vsel %vm681, %v3320, 0
        %v3336 = vsel %vm681, %v3321, 0
        %v3339 = vsel %vm681, %v3322, 0
        %v3342 = vsel %vm681, %v3323, 0
        %v3345 = vsel %vm681, %v3324, 0
        %v3348 = vsel %vm681, %v3325, 0
        %v3351 = vsel %vm706, %v3308, 0
        %3353 = vmatprep.subr.bf16.mxu0 0
        %3354 = vmatpush1.bf16.msra.mxu0 0
        %3355 = vmatprep.subr.bf16.mxu0 0
        %3356 = vmatpush1.bf16.msra.mxu0 0
        %3357 = vmatprep.subr.bf16.mxu0 0
        %3358 = vmatpush1.bf16.msra.mxu0 0
        %3359 = vmatprep.subr.bf16.mxu0 0
        %3360 = vmatpush1.bf16.msra.mxu0 0
        %3361 = vmatprep.subr.bf16.mxu0 0
        %3362 = vmatpush1.bf16.msra.mxu0 0
        %3363 = vmatprep.subr.bf16.mxu0 0
        %3364 = vmatpush1.bf16.msra.mxu0 0
        %3365 = vmatprep.subr.bf16.mxu0 0
        %3366 = vmatpush1.bf16.msra.mxu0 0
        %3367 = vmatprep.subr.bf16.mxu0 0
        %3368 = vmatpush1.bf16.msra.mxu0 %v3351
        %3369 = vmatprep.subr.bf16.mxu0 0
        %3370 = vmatpush2.bf16.msra.mxu0 0
        %3371 = vmatprep.subr.bf16.mxu0 0
        %3372 = vmatpush2.bf16.msra.mxu0 0
        %3373 = vmatprep.subr.bf16.mxu0 0
        %3374 = vmatpush2.bf16.msra.mxu0 0
        %3375 = vmatprep.subr.bf16.mxu0 0
        %3376 = vmatpush2.bf16.msra.mxu0 0
        %3377 = vmatprep.subr.bf16.mxu0 0
        %3378 = vmatpush2.bf16.msra.mxu0 0
        %3379 = vmatprep.subr.bf16.mxu0 0
        %3380 = vmatpush2.bf16.msra.mxu0 0
        %3381 = vmatprep.subr.bf16.mxu0 0
        %3382 = vmatpush2.bf16.msra.mxu0 0
        %3383 = vmatprep.subr.bf16.mxu0 0
        %3384 = vmatpush2.bf16.msra.mxu0 0
        %3385 = vmatprep.mubr.bf16.mxu0 0
        %3386 = vmatmul.mubr.bf16.gmra.mxu0 %v3327
        %v3387 = vpop.f32.mrf.mxu0
        %v3388 = vadd.f32 0.0, %v3387
        %v3389 = vpop.f32.mrf.mxu0
        %v3390 = vpop.f32.mrf.mxu0
        %v3391 = vadd.f32 0.0, %v3390
        %v3392 = vpop.f32.mrf.mxu0
        %3393 = vmatprep.mubr.bf16.mxu0 0
        %3394 = vmatmul.mubr.bf16.gmra.mxu0 %v3330
        %v3395 = vpop.f32.mrf.mxu0
        %v3396 = vadd.f32 0.0, %v3395
        %v3397 = vpop.f32.mrf.mxu0
        %v3398 = vpop.f32.mrf.mxu0
        %v3399 = vadd.f32 0.0, %v3398
        %v3400 = vpop.f32.mrf.mxu0
        %3401 = vmatprep.mubr.bf16.mxu0 0
        %3402 = vmatmul.mubr.bf16.gmra.mxu0 %v3333
        %v3403 = vpop.f32.mrf.mxu0
        %v3404 = vadd.f32 0.0, %v3403
        %v3405 = vpop.f32.mrf.mxu0
        %v3406 = vpop.f32.mrf.mxu0
        %v3407 = vadd.f32 0.0, %v3406
        %v3408 = vpop.f32.mrf.mxu0
        %3409 = vmatprep.mubr.bf16.mxu0 0
        %3410 = vmatmul.mubr.bf16.gmra.mxu0 %v3336
        %v3411 = vpop.f32.mrf.mxu0
        %v3412 = vadd.f32 0.0, %v3411
        %v3413 = vpop.f32.mrf.mxu0
        %v3414 = vpop.f32.mrf.mxu0
        %v3415 = vadd.f32 0.0, %v3414
        %v3416 = vpop.f32.mrf.mxu0
        %3417 = vmatprep.mubr.bf16.mxu0 0
        %3418 = vmatmul.mubr.bf16.gmra.mxu0 %v3339
        %v3419 = vpop.f32.mrf.mxu0
        %v3420 = vadd.f32 0.0, %v3419
        %v3421 = vpop.f32.mrf.mxu0
        %v3422 = vpop.f32.mrf.mxu0
        %v3423 = vadd.f32 0.0, %v3422
        %v3424 = vpop.f32.mrf.mxu0
        %3425 = vmatprep.mubr.bf16.mxu0 0
        %3426 = vmatmul.mubr.bf16.gmra.mxu0 %v3342
        %v3427 = vpop.f32.mrf.mxu0
        %v3428 = vadd.f32 0.0, %v3427
        %v3429 = vpop.f32.mrf.mxu0
        %v3430 = vpop.f32.mrf.mxu0
        %v3431 = vadd.f32 0.0, %v3430
        %v3432 = vpop.f32.mrf.mxu0
        %3433 = vmatprep.mubr.bf16.mxu0 0
        %3434 = vmatmul.mubr.bf16.gmra.mxu0 %v3345
        %v3435 = vpop.f32.mrf.mxu0
        %v3436 = vadd.f32 0.0, %v3435
        %v3437 = vpop.f32.mrf.mxu0
        %v3438 = vpop.f32.mrf.mxu0
        %v3439 = vadd.f32 0.0, %v3438
        %v3440 = vpop.f32.mrf.mxu0
        %3441 = vmatprep.mubr.bf16.mxu0 0
        %3442 = vmatmul.mubr.bf16.gmra.mxu0 %v3348
        %v3443 = vpop.f32.mrf.mxu0
        %v3444 = vadd.f32 0.0, %v3443
        %v3445 = vpop.f32.mrf.mxu0
        %v3446 = vpop.f32.mrf.mxu0
        %v3447 = vadd.f32 0.0, %v3446
        %v3448 = vpop.f32.mrf.mxu0
        %3449 = vdwg.mxu0
        %3450 = vmax.xlane.f32.xlu0 %v3388
        %v3451 = vpop.xlane.xlu0 %3450
        %3452 = vmax.xlane.f32.xlu0 %v3391
        %v3453 = vpop.xlane.xlu0 %3452
        %3454 = vmax.xlane.f32.xlu0 %v3396
        %v3455 = vpop.xlane.xlu0 %3454
        %3456 = vmax.xlane.f32.xlu0 %v3399
        %v3457 = vpop.xlane.xlu0 %3456
        %3458 = vmax.xlane.f32.xlu0 %v3404
        %v3459 = vpop.xlane.xlu0 %3458
        %3460 = vmax.xlane.f32.xlu0 %v3407
        %v3461 = vpop.xlane.xlu0 %3460
        %3462 = vmax.xlane.f32.xlu0 %v3412
        %v3463 = vpop.xlane.xlu0 %3462
        %3464 = vmax.xlane.f32.xlu0 %v3415
        %v3465 = vpop.xlane.xlu0 %3464
        %3466 = vmax.xlane.f32.xlu0 %v3420
        %v3467 = vpop.xlane.xlu0 %3466
        %3468 = vmax.xlane.f32.xlu0 %v3423
        %v3469 = vpop.xlane.xlu0 %3468
        %3470 = vmax.xlane.f32.xlu0 %v3428
        %v3471 = vpop.xlane.xlu0 %3470
        %3472 = vmax.xlane.f32.xlu0 %v3431
        %v3473 = vpop.xlane.xlu0 %3472
        %3474 = vmax.xlane.f32.xlu0 %v3436
        %v3475 = vpop.xlane.xlu0 %3474
        %3476 = vmax.xlane.f32.xlu0 %v3439
        %v3477 = vpop.xlane.xlu0 %3476
        %3478 = vmax.xlane.f32.xlu0 %v3444
        %v3479 = vpop.xlane.xlu0 %3478
        %3480 = vmax.xlane.f32.xlu0 %v3447
        %v3481 = vpop.xlane.xlu0 %3480
        %v3482 = vsub.f32 %v3388, %v3451
        %v3483 = vsub.f32 %v3391, %v3453
        %v3484 = vsub.f32 %v3396, %v3455
        %v3485 = vsub.f32 %v3399, %v3457
        %v3486 = vsub.f32 %v3404, %v3459
        %v3487 = vsub.f32 %v3407, %v3461
        %v3488 = vsub.f32 %v3412, %v3463
        %v3489 = vsub.f32 %v3415, %v3465
        %v3490 = vsub.f32 %v3420, %v3467
        %v3491 = vsub.f32 %v3423, %v3469
        %v3492 = vsub.f32 %v3428, %v3471
        %v3493 = vsub.f32 %v3431, %v3473
        %v3494 = vsub.f32 %v3436, %v3475
        %v3495 = vsub.f32 %v3439, %v3477
        %v3496 = vsub.f32 %v3444, %v3479
        %v3497 = vsub.f32 %v3447, %v3481
        %v3498 = vmul.f32 %v3482, 1.442695
        %v3499 = vpow.pop %v3498
        %v3500 = vmul.f32 %v3483, 1.442695
        %v3501 = vpow.pop %v3500
        %v3502 = vmul.f32 %v3484, 1.442695
        %v3503 = vpow.pop %v3502
        %v3504 = vmul.f32 %v3485, 1.442695
        %v3505 = vpow.pop %v3504
        %v3506 = vmul.f32 %v3486, 1.442695
        %v3507 = vpow.pop %v3506
        %v3508 = vmul.f32 %v3487, 1.442695
        %v3509 = vpow.pop %v3508
        %v3510 = vmul.f32 %v3488, 1.442695
        %v3511 = vpow.pop %v3510
        %v3512 = vmul.f32 %v3489, 1.442695
        %v3513 = vpow.pop %v3512
        %v3514 = vmul.f32 %v3490, 1.442695
        %v3515 = vpow.pop %v3514
        %v3516 = vmul.f32 %v3491, 1.442695
        %v3517 = vpow.pop %v3516
        %v3518 = vmul.f32 %v3492, 1.442695
        %v3519 = vpow.pop %v3518
        %v3520 = vmul.f32 %v3493, 1.442695
        %v3521 = vpow.pop %v3520
        %v3522 = vmul.f32 %v3494, 1.442695
        %v3523 = vpow.pop %v3522
        %v3524 = vmul.f32 %v3495, 1.442695
        %v3525 = vpow.pop %v3524
        %v3526 = vmul.f32 %v3496, 1.442695
        %v3527 = vpow.pop %v3526
        %v3528 = vmul.f32 %v3497, 1.442695
        %v3529 = vpow.pop %v3528
        %3530 = vadd.xlane.f32.xlu0 %v3499
        %v3531 = vpop.xlane.xlu0 %3530
        %3532 = vadd.xlane.f32.xlu0 %v3501
        %v3533 = vpop.xlane.xlu0 %3532
        %3534 = vadd.xlane.f32.xlu0 %v3503
        %v3535 = vpop.xlane.xlu0 %3534
        %3536 = vadd.xlane.f32.xlu0 %v3505
        %v3537 = vpop.xlane.xlu0 %3536
        %3538 = vadd.xlane.f32.xlu0 %v3507
        %v3539 = vpop.xlane.xlu0 %3538
        %3540 = vadd.xlane.f32.xlu0 %v3509
        %v3541 = vpop.xlane.xlu0 %3540
        %3542 = vadd.xlane.f32.xlu0 %v3511
        %v3543 = vpop.xlane.xlu0 %3542
        %3544 = vadd.xlane.f32.xlu0 %v3513
        %v3545 = vpop.xlane.xlu0 %3544
        %3546 = vadd.xlane.f32.xlu0 %v3515
        %v3547 = vpop.xlane.xlu0 %3546
        %3548 = vadd.xlane.f32.xlu0 %v3517
        %v3549 = vpop.xlane.xlu0 %3548
        %3550 = vadd.xlane.f32.xlu0 %v3519
        %v3551 = vpop.xlane.xlu0 %3550
        %3552 = vadd.xlane.f32.xlu0 %v3521
        %v3553 = vpop.xlane.xlu0 %3552
        %3554 = vadd.xlane.f32.xlu0 %v3523
        %v3555 = vpop.xlane.xlu0 %3554
        %3556 = vadd.xlane.f32.xlu0 %v3525
        %v3557 = vpop.xlane.xlu0 %3556
        %3558 = vadd.xlane.f32.xlu0 %v3527
        %v3559 = vpop.xlane.xlu0 %3558
        %3560 = vadd.xlane.f32.xlu0 %v3529
        %v3561 = vpop.xlane.xlu0 %3560
        %v3562 = vrcp.pop %v3531
        %v3563 = vrcp.pop %v3533
        %v3564 = vrcp.pop %v3535
        %v3565 = vrcp.pop %v3537
        %v3566 = vrcp.pop %v3539
        %v3567 = vrcp.pop %v3541
        %v3568 = vrcp.pop %v3543
        %v3569 = vrcp.pop %v3545
        %v3570 = vrcp.pop %v3547
        %v3571 = vrcp.pop %v3549
        %v3572 = vrcp.pop %v3551
        %v3573 = vrcp.pop %v3553
        %v3574 = vrcp.pop %v3555
        %v3575 = vrcp.pop %v3557
        %v3576 = vrcp.pop %v3559
        %v3577 = vrcp.pop %v3561
        %v3578 = vmul.f32 %v3499, %v3562
        %v3579 = vmul.f32 %v3501, %v3563
        %v3580 = vmul.f32 %v3503, %v3564
        %v3581 = vmul.f32 %v3505, %v3565
        %v3582 = vmul.f32 %v3507, %v3566
        %v3583 = vmul.f32 %v3509, %v3567
        %v3584 = vmul.f32 %v3511, %v3568
        %v3585 = vmul.f32 %v3513, %v3569
        %v3586 = vmul.f32 %v3515, %v3570
        %v3587 = vmul.f32 %v3517, %v3571
        %v3588 = vmul.f32 %v3519, %v3572
        %v3589 = vmul.f32 %v3521, %v3573
        %v3590 = vmul.f32 %v3523, %v3574
        %v3591 = vmul.f32 %v3525, %v3575
        %v3592 = vmul.f32 %v3527, %v3576
        %v3593 = vmul.f32 %v3529, %v3577
        %v3594 = vpack.c.bf16 %v3579, %v3578
        %v3595 = vpack.c.bf16 %v3581, %v3580
        %v3596 = vpack.c.bf16 %v3583, %v3582
        %v3597 = vpack.c.bf16 %v3585, %v3584
        %v3598 = vpack.c.bf16 %v3587, %v3586
        %v3599 = vpack.c.bf16 %v3589, %v3588
        %v3600 = vpack.c.bf16 %v3591, %v3590
        %v3601 = vpack.c.bf16 %v3593, %v3592
        %3602 = vmatprep.subr.bf16.mxu0 0
        %3603 = vmatpush1.bf16.xpose.msra.mxu0 %v3601
        %3604 = vmatprep.subr.bf16.mxu0 0
        %3605 = vmatpush1.bf16.xpose.msra.mxu0 %v3600
        %3606 = vmatprep.subr.bf16.mxu0 0
        %3607 = vmatpush1.bf16.xpose.msra.mxu0 %v3599
        %3608 = vmatprep.subr.bf16.mxu0 0
        %3609 = vmatpush1.bf16.xpose.msra.mxu0 %v3598
        %3610 = vmatprep.subr.bf16.mxu0 0
        %3611 = vmatpush1.bf16.xpose.msra.mxu0 %v3597
        %3612 = vmatprep.subr.bf16.mxu0 0
        %3613 = vmatpush1.bf16.xpose.msra.mxu0 %v3596
        %3614 = vmatprep.subr.bf16.mxu0 0
        %3615 = vmatpush1.bf16.xpose.msra.mxu0 %v3595
        %3616 = vmatprep.subr.bf16.mxu0 0
        %3617 = vmatpush1.bf16.xpose.msra.mxu0 %v3594
        %3618 = vmatprep.subr.bf16.mxu0 0
        %3619 = vmatpush2.bf16.xpose.msra.mxu0 0
        %3620 = vmatprep.subr.bf16.mxu0 0
        %3621 = vmatpush2.bf16.xpose.msra.mxu0 0
        %3622 = vmatprep.subr.bf16.mxu0 0
        %3623 = vmatpush2.bf16.xpose.msra.mxu0 0
        %3624 = vmatprep.subr.bf16.mxu0 0
        %3625 = vmatpush2.bf16.xpose.msra.mxu0 0
        %3626 = vmatprep.subr.bf16.mxu0 0
        %3627 = vmatpush2.bf16.xpose.msra.mxu0 0
        %3628 = vmatprep.subr.bf16.mxu0 0
        %3629 = vmatpush2.bf16.xpose.msra.mxu0 0
        %3630 = vmatprep.subr.bf16.mxu0 0
        %3631 = vmatpush2.bf16.xpose.msra.mxu0 0
        %3632 = vmatprep.subr.bf16.mxu0 0
        %3633 = vmatpush2.bf16.xpose.msra.mxu0 0
        %3634 = vmatprep.mubr.bf16.mxu0 0
        %3635 = vmatmul.mubr.bf16.gmra.mxu0 %v3309
        %v3636 = vpop.f32.mrf.mxu0
        %v3637 = vadd.f32 0.0, %v3636
        %v3638 = vpop.f32.mrf.mxu0
        %v3639 = vpop.f32.mrf.mxu0
        %v3640 = vpop.f32.mrf.mxu0
        %3641 = vdwg.mxu0
        %v3642 = vpack.c.bf16 %v3260, %v3260
        %v3643 = vpack.c.bf16 %v3300, %v3300
        %v3644 = vpack.c.bf16 %v3304, %v3304
        %3645 = vxpose.xlu0.c.b16.start [1/8] %v3642, 128
        %3646 = vxpose.xlu0.c.b16.cont [2/8] 0, 128
        %3647 = vxpose.xlu0.c.b16.cont [3/8] 0, 128
        %3648 = vxpose.xlu0.c.b16.cont [4/8] 0, 128
        %3649 = vxpose.xlu0.c.b16.cont [5/8] 0, 128
        %3650 = vxpose.xlu0.c.b16.cont [6/8] 0, 128
        %3651 = vxpose.xlu0.c.b16.cont [7/8] 0, 128
        %3652 = vxpose.xlu0.c.b16.end [8/8] 0, 128
        %v3653 = vpop.trf.xlu0
        %v3654 = vpop.trf.xlu0
        %v3655 = vpop.trf.xlu0
        %v3656 = vpop.trf.xlu0
        %v3657 = vpop.trf.xlu0
        %v3658 = vpop.trf.xlu0
        %v3659 = vpop.trf.xlu0
        %v3660 = vpop.trf.xlu0
        %v3662 = vsel %vm681, %v3653, 0
        %v3665 = vsel %vm681, %v3654, 0
        %v3668 = vsel %vm681, %v3655, 0
        %v3671 = vsel %vm681, %v3656, 0
        %v3674 = vsel %vm681, %v3657, 0
        %v3677 = vsel %vm681, %v3658, 0
        %v3680 = vsel %vm681, %v3659, 0
        %v3683 = vsel %vm681, %v3660, 0
        %v3686 = vsel %vm706, %v3643, 0
        %3688 = vmatprep.subr.bf16.mxu0 0
        %3689 = vmatpush1.bf16.msra.mxu0 0
        %3690 = vmatprep.subr.bf16.mxu0 0
        %3691 = vmatpush1.bf16.msra.mxu0 0
        %3692 = vmatprep.subr.bf16.mxu0 0
        %3693 = vmatpush1.bf16.msra.mxu0 0
        %3694 = vmatprep.subr.bf16.mxu0 0
        %3695 = vmatpush1.bf16.msra.mxu0 0
        %3696 = vmatprep.subr.bf16.mxu0 0
        %3697 = vmatpush1.bf16.msra.mxu0 0
        %3698 = vmatprep.subr.bf16.mxu0 0
        %3699 = vmatpush1.bf16.msra.mxu0 0
        %3700 = vmatprep.subr.bf16.mxu0 0
        %3701 = vmatpush1.bf16.msra.mxu0 0
        %3702 = vmatprep.subr.bf16.mxu0 0
        %3703 = vmatpush1.bf16.msra.mxu0 %v3686
        %3704 = vmatprep.subr.bf16.mxu0 0
        %3705 = vmatpush2.bf16.msra.mxu0 0
        %3706 = vmatprep.subr.bf16.mxu0 0
        %3707 = vmatpush2.bf16.msra.mxu0 0
        %3708 = vmatprep.subr.bf16.mxu0 0
        %3709 = vmatpush2.bf16.msra.mxu0 0
        %3710 = vmatprep.subr.bf16.mxu0 0
        %3711 = vmatpush2.bf16.msra.mxu0 0
        %3712 = vmatprep.subr.bf16.mxu0 0
        %3713 = vmatpush2.bf16.msra.mxu0 0
        %3714 = vmatprep.subr.bf16.mxu0 0
        %3715 = vmatpush2.bf16.msra.mxu0 0
        %3716 = vmatprep.subr.bf16.mxu0 0
        %3717 = vmatpush2.bf16.msra.mxu0 0
        %3718 = vmatprep.subr.bf16.mxu0 0
        %3719 = vmatpush2.bf16.msra.mxu0 0
        %3720 = vmatprep.mubr.bf16.mxu0 0
        %3721 = vmatmul.mubr.bf16.gmra.mxu0 %v3662
        %v3722 = vpop.f32.mrf.mxu0
        %v3723 = vadd.f32 0.0, %v3722
        %v3724 = vpop.f32.mrf.mxu0
        %v3725 = vpop.f32.mrf.mxu0
        %v3726 = vadd.f32 0.0, %v3725
        %v3727 = vpop.f32.mrf.mxu0
        %3728 = vmatprep.mubr.bf16.mxu0 0
        %3729 = vmatmul.mubr.bf16.gmra.mxu0 %v3665
        %v3730 = vpop.f32.mrf.mxu0
        %v3731 = vadd.f32 0.0, %v3730
        %v3732 = vpop.f32.mrf.mxu0
        %v3733 = vpop.f32.mrf.mxu0
        %v3734 = vadd.f32 0.0, %v3733
        %v3735 = vpop.f32.mrf.mxu0
        %3736 = vmatprep.mubr.bf16.mxu0 0
        %3737 = vmatmul.mubr.bf16.gmra.mxu0 %v3668
        %v3738 = vpop.f32.mrf.mxu0
        %v3739 = vadd.f32 0.0, %v3738
        %v3740 = vpop.f32.mrf.mxu0
        %v3741 = vpop.f32.mrf.mxu0
        %v3742 = vadd.f32 0.0, %v3741
        %v3743 = vpop.f32.mrf.mxu0
        %3744 = vmatprep.mubr.bf16.mxu0 0
        %3745 = vmatmul.mubr.bf16.gmra.mxu0 %v3671
        %v3746 = vpop.f32.mrf.mxu0
        %v3747 = vadd.f32 0.0, %v3746
        %v3748 = vpop.f32.mrf.mxu0
        %v3749 = vpop.f32.mrf.mxu0
        %v3750 = vadd.f32 0.0, %v3749
        %v3751 = vpop.f32.mrf.mxu0
        %3752 = vmatprep.mubr.bf16.mxu0 0
        %3753 = vmatmul.mubr.bf16.gmra.mxu0 %v3674
        %v3754 = vpop.f32.mrf.mxu0
        %v3755 = vadd.f32 0.0, %v3754
        %v3756 = vpop.f32.mrf.mxu0
        %v3757 = vpop.f32.mrf.mxu0
        %v3758 = vadd.f32 0.0, %v3757
        %v3759 = vpop.f32.mrf.mxu0
        %3760 = vmatprep.mubr.bf16.mxu0 0
        %3761 = vmatmul.mubr.bf16.gmra.mxu0 %v3677
        %v3762 = vpop.f32.mrf.mxu0
        %v3763 = vadd.f32 0.0, %v3762
        %v3764 = vpop.f32.mrf.mxu0
        %v3765 = vpop.f32.mrf.mxu0
        %v3766 = vadd.f32 0.0, %v3765
        %v3767 = vpop.f32.mrf.mxu0
        %3768 = vmatprep.mubr.bf16.mxu0 0
        %3769 = vmatmul.mubr.bf16.gmra.mxu0 %v3680
        %v3770 = vpop.f32.mrf.mxu0
        %v3771 = vadd.f32 0.0, %v3770
        %v3772 = vpop.f32.mrf.mxu0
        %v3773 = vpop.f32.mrf.mxu0
        %v3774 = vadd.f32 0.0, %v3773
        %v3775 = vpop.f32.mrf.mxu0
        %3776 = vmatprep.mubr.bf16.mxu0 0
        %3777 = vmatmul.mubr.bf16.gmra.mxu0 %v3683
        %v3778 = vpop.f32.mrf.mxu0
        %v3779 = vadd.f32 0.0, %v3778
        %v3780 = vpop.f32.mrf.mxu0
        %v3781 = vpop.f32.mrf.mxu0
        %v3782 = vadd.f32 0.0, %v3781
        %v3783 = vpop.f32.mrf.mxu0
        %3784 = vdwg.mxu0
        %3785 = vmax.xlane.f32.xlu0 %v3723
        %v3786 = vpop.xlane.xlu0 %3785
        %3787 = vmax.xlane.f32.xlu0 %v3726
        %v3788 = vpop.xlane.xlu0 %3787
        %3789 = vmax.xlane.f32.xlu0 %v3731
        %v3790 = vpop.xlane.xlu0 %3789
        %3791 = vmax.xlane.f32.xlu0 %v3734
        %v3792 = vpop.xlane.xlu0 %3791
        %3793 = vmax.xlane.f32.xlu0 %v3739
        %v3794 = vpop.xlane.xlu0 %3793
        %3795 = vmax.xlane.f32.xlu0 %v3742
        %v3796 = vpop.xlane.xlu0 %3795
        %3797 = vmax.xlane.f32.xlu0 %v3747
        %v3798 = vpop.xlane.xlu0 %3797
        %3799 = vmax.xlane.f32.xlu0 %v3750
        %v3800 = vpop.xlane.xlu0 %3799
        %3801 = vmax.xlane.f32.xlu0 %v3755
        %v3802 = vpop.xlane.xlu0 %3801
        %3803 = vmax.xlane.f32.xlu0 %v3758
        %v3804 = vpop.xlane.xlu0 %3803
        %3805 = vmax.xlane.f32.xlu0 %v3763
        %v3806 = vpop.xlane.xlu0 %3805
        %3807 = vmax.xlane.f32.xlu0 %v3766
        %v3808 = vpop.xlane.xlu0 %3807
        %3809 = vmax.xlane.f32.xlu0 %v3771
        %v3810 = vpop.xlane.xlu0 %3809
        %3811 = vmax.xlane.f32.xlu0 %v3774
        %v3812 = vpop.xlane.xlu0 %3811
        %3813 = vmax.xlane.f32.xlu0 %v3779
        %v3814 = vpop.xlane.xlu0 %3813
        %3815 = vmax.xlane.f32.xlu0 %v3782
        %v3816 = vpop.xlane.xlu0 %3815
        %v3817 = vsub.f32 %v3723, %v3786
        %v3818 = vsub.f32 %v3726, %v3788
        %v3819 = vsub.f32 %v3731, %v3790
        %v3820 = vsub.f32 %v3734, %v3792
        %v3821 = vsub.f32 %v3739, %v3794
        %v3822 = vsub.f32 %v3742, %v3796
        %v3823 = vsub.f32 %v3747, %v3798
        %v3824 = vsub.f32 %v3750, %v3800
        %v3825 = vsub.f32 %v3755, %v3802
        %v3826 = vsub.f32 %v3758, %v3804
        %v3827 = vsub.f32 %v3763, %v3806
        %v3828 = vsub.f32 %v3766, %v3808
        %v3829 = vsub.f32 %v3771, %v3810
        %v3830 = vsub.f32 %v3774, %v3812
        %v3831 = vsub.f32 %v3779, %v3814
        %v3832 = vsub.f32 %v3782, %v3816
        %v3833 = vmul.f32 %v3817, 1.442695
        %v3834 = vpow.pop %v3833
        %v3835 = vmul.f32 %v3818, 1.442695
        %v3836 = vpow.pop %v3835
        %v3837 = vmul.f32 %v3819, 1.442695
        %v3838 = vpow.pop %v3837
        %v3839 = vmul.f32 %v3820, 1.442695
        %v3840 = vpow.pop %v3839
        %v3841 = vmul.f32 %v3821, 1.442695
        %v3842 = vpow.pop %v3841
        %v3843 = vmul.f32 %v3822, 1.442695
        %v3844 = vpow.pop %v3843
        %v3845 = vmul.f32 %v3823, 1.442695
        %v3846 = vpow.pop %v3845
        %v3847 = vmul.f32 %v3824, 1.442695
        %v3848 = vpow.pop %v3847
        %v3849 = vmul.f32 %v3825, 1.442695
        %v3850 = vpow.pop %v3849
        %v3851 = vmul.f32 %v3826, 1.442695
        %v3852 = vpow.pop %v3851
        %v3853 = vmul.f32 %v3827, 1.442695
        %v3854 = vpow.pop %v3853
        %v3855 = vmul.f32 %v3828, 1.442695
        %v3856 = vpow.pop %v3855
        %v3857 = vmul.f32 %v3829, 1.442695
        %v3858 = vpow.pop %v3857
        %v3859 = vmul.f32 %v3830, 1.442695
        %v3860 = vpow.pop %v3859
        %v3861 = vmul.f32 %v3831, 1.442695
        %v3862 = vpow.pop %v3861
        %v3863 = vmul.f32 %v3832, 1.442695
        %v3864 = vpow.pop %v3863
        %3865 = vadd.xlane.f32.xlu0 %v3834
        %v3866 = vpop.xlane.xlu0 %3865
        %3867 = vadd.xlane.f32.xlu0 %v3836
        %v3868 = vpop.xlane.xlu0 %3867
        %3869 = vadd.xlane.f32.xlu0 %v3838
        %v3870 = vpop.xlane.xlu0 %3869
        %3871 = vadd.xlane.f32.xlu0 %v3840
        %v3872 = vpop.xlane.xlu0 %3871
        %3873 = vadd.xlane.f32.xlu0 %v3842
        %v3874 = vpop.xlane.xlu0 %3873
        %3875 = vadd.xlane.f32.xlu0 %v3844
        %v3876 = vpop.xlane.xlu0 %3875
        %3877 = vadd.xlane.f32.xlu0 %v3846
        %v3878 = vpop.xlane.xlu0 %3877
        %3879 = vadd.xlane.f32.xlu0 %v3848
        %v3880 = vpop.xlane.xlu0 %3879
        %3881 = vadd.xlane.f32.xlu0 %v3850
        %v3882 = vpop.xlane.xlu0 %3881
        %3883 = vadd.xlane.f32.xlu0 %v3852
        %v3884 = vpop.xlane.xlu0 %3883
        %3885 = vadd.xlane.f32.xlu0 %v3854
        %v3886 = vpop.xlane.xlu0 %3885
        %3887 = vadd.xlane.f32.xlu0 %v3856
        %v3888 = vpop.xlane.xlu0 %3887
        %3889 = vadd.xlane.f32.xlu0 %v3858
        %v3890 = vpop.xlane.xlu0 %3889
        %3891 = vadd.xlane.f32.xlu0 %v3860
        %v3892 = vpop.xlane.xlu0 %3891
        %3893 = vadd.xlane.f32.xlu0 %v3862
        %v3894 = vpop.xlane.xlu0 %3893
        %3895 = vadd.xlane.f32.xlu0 %v3864
        %v3896 = vpop.xlane.xlu0 %3895
        %v3897 = vrcp.pop %v3866
        %v3898 = vrcp.pop %v3868
        %v3899 = vrcp.pop %v3870
        %v3900 = vrcp.pop %v3872
        %v3901 = vrcp.pop %v3874
        %v3902 = vrcp.pop %v3876
        %v3903 = vrcp.pop %v3878
        %v3904 = vrcp.pop %v3880
        %v3905 = vrcp.pop %v3882
        %v3906 = vrcp.pop %v3884
        %v3907 = vrcp.pop %v3886
        %v3908 = vrcp.pop %v3888
        %v3909 = vrcp.pop %v3890
        %v3910 = vrcp.pop %v3892
        %v3911 = vrcp.pop %v3894
        %v3912 = vrcp.pop %v3896
        %v3913 = vmul.f32 %v3834, %v3897
        %v3914 = vmul.f32 %v3836, %v3898
        %v3915 = vmul.f32 %v3838, %v3899
        %v3916 = vmul.f32 %v3840, %v3900
        %v3917 = vmul.f32 %v3842, %v3901
        %v3918 = vmul.f32 %v3844, %v3902
        %v3919 = vmul.f32 %v3846, %v3903
        %v3920 = vmul.f32 %v3848, %v3904
        %v3921 = vmul.f32 %v3850, %v3905
        %v3922 = vmul.f32 %v3852, %v3906
        %v3923 = vmul.f32 %v3854, %v3907
        %v3924 = vmul.f32 %v3856, %v3908
        %v3925 = vmul.f32 %v3858, %v3909
        %v3926 = vmul.f32 %v3860, %v3910
        %v3927 = vmul.f32 %v3862, %v3911
        %v3928 = vmul.f32 %v3864, %v3912
        %v3929 = vpack.c.bf16 %v3914, %v3913
        %v3930 = vpack.c.bf16 %v3916, %v3915
        %v3931 = vpack.c.bf16 %v3918, %v3917
        %v3932 = vpack.c.bf16 %v3920, %v3919
        %v3933 = vpack.c.bf16 %v3922, %v3921
        %v3934 = vpack.c.bf16 %v3924, %v3923
        %v3935 = vpack.c.bf16 %v3926, %v3925
        %v3936 = vpack.c.bf16 %v3928, %v3927
        %3937 = vmatprep.subr.bf16.mxu0 0
        %3938 = vmatpush1.bf16.xpose.msra.mxu0 %v3936
        %3939 = vmatprep.subr.bf16.mxu0 0
        %3940 = vmatpush1.bf16.xpose.msra.mxu0 %v3935
        %3941 = vmatprep.subr.bf16.mxu0 0
        %3942 = vmatpush1.bf16.xpose.msra.mxu0 %v3934
        %3943 = vmatprep.subr.bf16.mxu0 0
        %3944 = vmatpush1.bf16.xpose.msra.mxu0 %v3933
        %3945 = vmatprep.subr.bf16.mxu0 0
        %3946 = vmatpush1.bf16.xpose.msra.mxu0 %v3932
        %3947 = vmatprep.subr.bf16.mxu0 0
        %3948 = vmatpush1.bf16.xpose.msra.mxu0 %v3931
        %3949 = vmatprep.subr.bf16.mxu0 0
        %3950 = vmatpush1.bf16.xpose.msra.mxu0 %v3930
        %3951 = vmatprep.subr.bf16.mxu0 0
        %3952 = vmatpush1.bf16.xpose.msra.mxu0 %v3929
        %3953 = vmatprep.subr.bf16.mxu0 0
        %3954 = vmatpush2.bf16.xpose.msra.mxu0 0
        %3955 = vmatprep.subr.bf16.mxu0 0
        %3956 = vmatpush2.bf16.xpose.msra.mxu0 0
        %3957 = vmatprep.subr.bf16.mxu0 0
        %3958 = vmatpush2.bf16.xpose.msra.mxu0 0
        %3959 = vmatprep.subr.bf16.mxu0 0
        %3960 = vmatpush2.bf16.xpose.msra.mxu0 0
        %3961 = vmatprep.subr.bf16.mxu0 0
        %3962 = vmatpush2.bf16.xpose.msra.mxu0 0
        %3963 = vmatprep.subr.bf16.mxu0 0
        %3964 = vmatpush2.bf16.xpose.msra.mxu0 0
        %3965 = vmatprep.subr.bf16.mxu0 0
        %3966 = vmatpush2.bf16.xpose.msra.mxu0 0
        %3967 = vmatprep.subr.bf16.mxu0 0
        %3968 = vmatpush2.bf16.xpose.msra.mxu0 0
        %3969 = vmatprep.mubr.bf16.mxu0 0
        %3970 = vmatmul.mubr.bf16.gmra.mxu0 %v3644
        %v3971 = vpop.f32.mrf.mxu0
        %v3972 = vadd.f32 0.0, %v3971
        %v3973 = vpop.f32.mrf.mxu0
        %v3974 = vpop.f32.mrf.mxu0
        %v3975 = vpop.f32.mrf.mxu0
        %3976 = vdwg.mxu0
        %v3977 = vpack.c.bf16 %v3261, %v3261
        %v3978 = vpack.c.bf16 %v3301, %v3301
        %v3979 = vpack.c.bf16 %v3305, %v3305
        %3980 = vxpose.xlu0.c.b16.start [1/8] %v3977, 128
        %3981 = vxpose.xlu0.c.b16.cont [2/8] 0, 128
        %3982 = vxpose.xlu0.c.b16.cont [3/8] 0, 128
        %3983 = vxpose.xlu0.c.b16.cont [4/8] 0, 128
        %3984 = vxpose.xlu0.c.b16.cont [5/8] 0, 128
        %3985 = vxpose.xlu0.c.b16.cont [6/8] 0, 128
        %3986 = vxpose.xlu0.c.b16.cont [7/8] 0, 128
        %3987 = vxpose.xlu0.c.b16.end [8/8] 0, 128
        %v3988 = vpop.trf.xlu0
        %v3989 = vpop.trf.xlu0
        %v3990 = vpop.trf.xlu0
        %v3991 = vpop.trf.xlu0
        %v3992 = vpop.trf.xlu0
        %v3993 = vpop.trf.xlu0
        %v3994 = vpop.trf.xlu0
        %v3995 = vpop.trf.xlu0
        %v3997 = vsel %vm681, %v3988, 0
        %v4000 = vsel %vm681, %v3989, 0
        %v4003 = vsel %vm681, %v3990, 0
        %v4006 = vsel %vm681, %v3991, 0
        %v4009 = vsel %vm681, %v3992, 0
        %v4012 = vsel %vm681, %v3993, 0
        %v4015 = vsel %vm681, %v3994, 0
        %v4018 = vsel %vm681, %v3995, 0
        %v4021 = vsel %vm706, %v3978, 0
        %4023 = vmatprep.subr.bf16.mxu0 0
        %4024 = vmatpush1.bf16.msra.mxu0 0
        %4025 = vmatprep.subr.bf16.mxu0 0
        %4026 = vmatpush1.bf16.msra.mxu0 0
        %4027 = vmatprep.subr.bf16.mxu0 0
        %4028 = vmatpush1.bf16.msra.mxu0 0
        %4029 = vmatprep.subr.bf16.mxu0 0
        %4030 = vmatpush1.bf16.msra.mxu0 0
        %4031 = vmatprep.subr.bf16.mxu0 0
        %4032 = vmatpush1.bf16.msra.mxu0 0
        %4033 = vmatprep.subr.bf16.mxu0 0
        %4034 = vmatpush1.bf16.msra.mxu0 0
        %4035 = vmatprep.subr.bf16.mxu0 0
        %4036 = vmatpush1.bf16.msra.mxu0 0
        %4037 = vmatprep.subr.bf16.mxu0 0
        %4038 = vmatpush1.bf16.msra.mxu0 %v4021
        %4039 = vmatprep.subr.bf16.mxu0 0
        %4040 = vmatpush2.bf16.msra.mxu0 0
        %4041 = vmatprep.subr.bf16.mxu0 0
        %4042 = vmatpush2.bf16.msra.mxu0 0
        %4043 = vmatprep.subr.bf16.mxu0 0
        %4044 = vmatpush2.bf16.msra.mxu0 0
        %4045 = vmatprep.subr.bf16.mxu0 0
        %4046 = vmatpush2.bf16.msra.mxu0 0
        %4047 = vmatprep.subr.bf16.mxu0 0
        %4048 = vmatpush2.bf16.msra.mxu0 0
        %4049 = vmatprep.subr.bf16.mxu0 0
        %4050 = vmatpush2.bf16.msra.mxu0 0
        %4051 = vmatprep.subr.bf16.mxu0 0
        %4052 = vmatpush2.bf16.msra.mxu0 0
        %4053 = vmatprep.subr.bf16.mxu0 0
        %4054 = vmatpush2.bf16.msra.mxu0 0
        %4055 = vmatprep.mubr.bf16.mxu0 0
        %4056 = vmatmul.mubr.bf16.gmra.mxu0 %v3997
        %v4057 = vpop.f32.mrf.mxu0
        %v4058 = vadd.f32 0.0, %v4057
        %v4059 = vpop.f32.mrf.mxu0
        %v4060 = vpop.f32.mrf.mxu0
        %v4061 = vadd.f32 0.0, %v4060
        %v4062 = vpop.f32.mrf.mxu0
        %4063 = vmatprep.mubr.bf16.mxu0 0
        %4064 = vmatmul.mubr.bf16.gmra.mxu0 %v4000
        %v4065 = vpop.f32.mrf.mxu0
        %v4066 = vadd.f32 0.0, %v4065
        %v4067 = vpop.f32.mrf.mxu0
        %v4068 = vpop.f32.mrf.mxu0
        %v4069 = vadd.f32 0.0, %v4068
        %v4070 = vpop.f32.mrf.mxu0
        %4071 = vmatprep.mubr.bf16.mxu0 0
        %4072 = vmatmul.mubr.bf16.gmra.mxu0 %v4003
        %v4073 = vpop.f32.mrf.mxu0
        %v4074 = vadd.f32 0.0, %v4073
        %v4075 = vpop.f32.mrf.mxu0
        %v4076 = vpop.f32.mrf.mxu0
        %v4077 = vadd.f32 0.0, %v4076
        %v4078 = vpop.f32.mrf.mxu0
        %4079 = vmatprep.mubr.bf16.mxu0 0
        %4080 = vmatmul.mubr.bf16.gmra.mxu0 %v4006
        %v4081 = vpop.f32.mrf.mxu0
        %v4082 = vadd.f32 0.0, %v4081
        %v4083 = vpop.f32.mrf.mxu0
        %v4084 = vpop.f32.mrf.mxu0
        %v4085 = vadd.f32 0.0, %v4084
        %v4086 = vpop.f32.mrf.mxu0
        %4087 = vmatprep.mubr.bf16.mxu0 0
        %4088 = vmatmul.mubr.bf16.gmra.mxu0 %v4009
        %v4089 = vpop.f32.mrf.mxu0
        %v4090 = vadd.f32 0.0, %v4089
        %v4091 = vpop.f32.mrf.mxu0
        %v4092 = vpop.f32.mrf.mxu0
        %v4093 = vadd.f32 0.0, %v4092
        %v4094 = vpop.f32.mrf.mxu0
        %4095 = vmatprep.mubr.bf16.mxu0 0
        %4096 = vmatmul.mubr.bf16.gmra.mxu0 %v4012
        %v4097 = vpop.f32.mrf.mxu0
        %v4098 = vadd.f32 0.0, %v4097
        %v4099 = vpop.f32.mrf.mxu0
        %v4100 = vpop.f32.mrf.mxu0
        %v4101 = vadd.f32 0.0, %v4100
        %v4102 = vpop.f32.mrf.mxu0
        %4103 = vmatprep.mubr.bf16.mxu0 0
        %4104 = vmatmul.mubr.bf16.gmra.mxu0 %v4015
        %v4105 = vpop.f32.mrf.mxu0
        %v4106 = vadd.f32 0.0, %v4105
        %v4107 = vpop.f32.mrf.mxu0
        %v4108 = vpop.f32.mrf.mxu0
        %v4109 = vadd.f32 0.0, %v4108
        %v4110 = vpop.f32.mrf.mxu0
        %4111 = vmatprep.mubr.bf16.mxu0 0
        %4112 = vmatmul.mubr.bf16.gmra.mxu0 %v4018
        %v4113 = vpop.f32.mrf.mxu0
        %v4114 = vadd.f32 0.0, %v4113
        %v4115 = vpop.f32.mrf.mxu0
        %v4116 = vpop.f32.mrf.mxu0
        %v4117 = vadd.f32 0.0, %v4116
        %v4118 = vpop.f32.mrf.mxu0
        %4119 = vdwg.mxu0
        %4120 = vmax.xlane.f32.xlu0 %v4058
        %v4121 = vpop.xlane.xlu0 %4120
        %4122 = vmax.xlane.f32.xlu0 %v4061
        %v4123 = vpop.xlane.xlu0 %4122
        %4124 = vmax.xlane.f32.xlu0 %v4066
        %v4125 = vpop.xlane.xlu0 %4124
        %4126 = vmax.xlane.f32.xlu0 %v4069
        %v4127 = vpop.xlane.xlu0 %4126
        %4128 = vmax.xlane.f32.xlu0 %v4074
        %v4129 = vpop.xlane.xlu0 %4128
        %4130 = vmax.xlane.f32.xlu0 %v4077
        %v4131 = vpop.xlane.xlu0 %4130
        %4132 = vmax.xlane.f32.xlu0 %v4082
        %v4133 = vpop.xlane.xlu0 %4132
        %4134 = vmax.xlane.f32.xlu0 %v4085
        %v4135 = vpop.xlane.xlu0 %4134
        %4136 = vmax.xlane.f32.xlu0 %v4090
        %v4137 = vpop.xlane.xlu0 %4136
        %4138 = vmax.xlane.f32.xlu0 %v4093
        %v4139 = vpop.xlane.xlu0 %4138
        %4140 = vmax.xlane.f32.xlu0 %v4098
        %v4141 = vpop.xlane.xlu0 %4140
        %4142 = vmax.xlane.f32.xlu0 %v4101
        %v4143 = vpop.xlane.xlu0 %4142
        %4144 = vmax.xlane.f32.xlu0 %v4106
        %v4145 = vpop.xlane.xlu0 %4144
        %4146 = vmax.xlane.f32.xlu0 %v4109
        %v4147 = vpop.xlane.xlu0 %4146
        %4148 = vmax.xlane.f32.xlu0 %v4114
        %v4149 = vpop.xlane.xlu0 %4148
        %4150 = vmax.xlane.f32.xlu0 %v4117
        %v4151 = vpop.xlane.xlu0 %4150
        %v4152 = vsub.f32 %v4058, %v4121
        %v4153 = vsub.f32 %v4061, %v4123
        %v4154 = vsub.f32 %v4066, %v4125
        %v4155 = vsub.f32 %v4069, %v4127
        %v4156 = vsub.f32 %v4074, %v4129
        %v4157 = vsub.f32 %v4077, %v4131
        %v4158 = vsub.f32 %v4082, %v4133
        %v4159 = vsub.f32 %v4085, %v4135
        %v4160 = vsub.f32 %v4090, %v4137
        %v4161 = vsub.f32 %v4093, %v4139
        %v4162 = vsub.f32 %v4098, %v4141
        %v4163 = vsub.f32 %v4101, %v4143
        %v4164 = vsub.f32 %v4106, %v4145
        %v4165 = vsub.f32 %v4109, %v4147
        %v4166 = vsub.f32 %v4114, %v4149
        %v4167 = vsub.f32 %v4117, %v4151
        %v4168 = vmul.f32 %v4152, 1.442695
        %v4169 = vpow.pop %v4168
        %v4170 = vmul.f32 %v4153, 1.442695
        %v4171 = vpow.pop %v4170
        %v4172 = vmul.f32 %v4154, 1.442695
        %v4173 = vpow.pop %v4172
        %v4174 = vmul.f32 %v4155, 1.442695
        %v4175 = vpow.pop %v4174
        %v4176 = vmul.f32 %v4156, 1.442695
        %v4177 = vpow.pop %v4176
        %v4178 = vmul.f32 %v4157, 1.442695
        %v4179 = vpow.pop %v4178
        %v4180 = vmul.f32 %v4158, 1.442695
        %v4181 = vpow.pop %v4180
        %v4182 = vmul.f32 %v4159, 1.442695
        %v4183 = vpow.pop %v4182
        %v4184 = vmul.f32 %v4160, 1.442695
        %v4185 = vpow.pop %v4184
        %v4186 = vmul.f32 %v4161, 1.442695
        %v4187 = vpow.pop %v4186
        %v4188 = vmul.f32 %v4162, 1.442695
        %v4189 = vpow.pop %v4188
        %v4190 = vmul.f32 %v4163, 1.442695
        %v4191 = vpow.pop %v4190
        %v4192 = vmul.f32 %v4164, 1.442695
        %v4193 = vpow.pop %v4192
        %v4194 = vmul.f32 %v4165, 1.442695
        %v4195 = vpow.pop %v4194
        %v4196 = vmul.f32 %v4166, 1.442695
        %v4197 = vpow.pop %v4196
        %v4198 = vmul.f32 %v4167, 1.442695
        %v4199 = vpow.pop %v4198
        %4200 = vadd.xlane.f32.xlu0 %v4169
        %v4201 = vpop.xlane.xlu0 %4200
        %4202 = vadd.xlane.f32.xlu0 %v4171
        %v4203 = vpop.xlane.xlu0 %4202
        %4204 = vadd.xlane.f32.xlu0 %v4173
        %v4205 = vpop.xlane.xlu0 %4204
        %4206 = vadd.xlane.f32.xlu0 %v4175
        %v4207 = vpop.xlane.xlu0 %4206
        %4208 = vadd.xlane.f32.xlu0 %v4177
        %v4209 = vpop.xlane.xlu0 %4208
        %4210 = vadd.xlane.f32.xlu0 %v4179
        %v4211 = vpop.xlane.xlu0 %4210
        %4212 = vadd.xlane.f32.xlu0 %v4181
        %v4213 = vpop.xlane.xlu0 %4212
        %4214 = vadd.xlane.f32.xlu0 %v4183
        %v4215 = vpop.xlane.xlu0 %4214
        %4216 = vadd.xlane.f32.xlu0 %v4185
        %v4217 = vpop.xlane.xlu0 %4216
        %4218 = vadd.xlane.f32.xlu0 %v4187
        %v4219 = vpop.xlane.xlu0 %4218
        %4220 = vadd.xlane.f32.xlu0 %v4189
        %v4221 = vpop.xlane.xlu0 %4220
        %4222 = vadd.xlane.f32.xlu0 %v4191
        %v4223 = vpop.xlane.xlu0 %4222
        %4224 = vadd.xlane.f32.xlu0 %v4193
        %v4225 = vpop.xlane.xlu0 %4224
        %4226 = vadd.xlane.f32.xlu0 %v4195
        %v4227 = vpop.xlane.xlu0 %4226
        %4228 = vadd.xlane.f32.xlu0 %v4197
        %v4229 = vpop.xlane.xlu0 %4228
        %4230 = vadd.xlane.f32.xlu0 %v4199
        %v4231 = vpop.xlane.xlu0 %4230
        %v4232 = vrcp.pop %v4201
        %v4233 = vrcp.pop %v4203
        %v4234 = vrcp.pop %v4205
        %v4235 = vrcp.pop %v4207
        %v4236 = vrcp.pop %v4209
        %v4237 = vrcp.pop %v4211
        %v4238 = vrcp.pop %v4213
        %v4239 = vrcp.pop %v4215
        %v4240 = vrcp.pop %v4217
        %v4241 = vrcp.pop %v4219
        %v4242 = vrcp.pop %v4221
        %v4243 = vrcp.pop %v4223
        %v4244 = vrcp.pop %v4225
        %v4245 = vrcp.pop %v4227
        %v4246 = vrcp.pop %v4229
        %v4247 = vrcp.pop %v4231
        %v4248 = vmul.f32 %v4169, %v4232
        %v4249 = vmul.f32 %v4171, %v4233
        %v4250 = vmul.f32 %v4173, %v4234
        %v4251 = vmul.f32 %v4175, %v4235
        %v4252 = vmul.f32 %v4177, %v4236
        %v4253 = vmul.f32 %v4179, %v4237
        %v4254 = vmul.f32 %v4181, %v4238
        %v4255 = vmul.f32 %v4183, %v4239
        %v4256 = vmul.f32 %v4185, %v4240
        %v4257 = vmul.f32 %v4187, %v4241
        %v4258 = vmul.f32 %v4189, %v4242
        %v4259 = vmul.f32 %v4191, %v4243
        %v4260 = vmul.f32 %v4193, %v4244
        %v4261 = vmul.f32 %v4195, %v4245
        %v4262 = vmul.f32 %v4197, %v4246
        %v4263 = vmul.f32 %v4199, %v4247
        %v4264 = vpack.c.bf16 %v4249, %v4248
        %v4265 = vpack.c.bf16 %v4251, %v4250
        %v4266 = vpack.c.bf16 %v4253, %v4252
        %v4267 = vpack.c.bf16 %v4255, %v4254
        %v4268 = vpack.c.bf16 %v4257, %v4256
        %v4269 = vpack.c.bf16 %v4259, %v4258
        %v4270 = vpack.c.bf16 %v4261, %v4260
        %v4271 = vpack.c.bf16 %v4263, %v4262
        %4272 = vmatprep.subr.bf16.mxu0 0
        %4273 = vmatpush1.bf16.xpose.msra.mxu0 %v4271
        %4274 = vmatprep.subr.bf16.mxu0 0
        %4275 = vmatpush1.bf16.xpose.msra.mxu0 %v4270
        %4276 = vmatprep.subr.bf16.mxu0 0
        %4277 = vmatpush1.bf16.xpose.msra.mxu0 %v4269
        %4278 = vmatprep.subr.bf16.mxu0 0
        %4279 = vmatpush1.bf16.xpose.msra.mxu0 %v4268
        %4280 = vmatprep.subr.bf16.mxu0 0
        %4281 = vmatpush1.bf16.xpose.msra.mxu0 %v4267
        %4282 = vmatprep.subr.bf16.mxu0 0
        %4283 = vmatpush1.bf16.xpose.msra.mxu0 %v4266
        %4284 = vmatprep.subr.bf16.mxu0 0
        %4285 = vmatpush1.bf16.xpose.msra.mxu0 %v4265
        %4286 = vmatprep.subr.bf16.mxu0 0
        %4287 = vmatpush1.bf16.xpose.msra.mxu0 %v4264
        %4288 = vmatprep.subr.bf16.mxu0 0
        %4289 = vmatpush2.bf16.xpose.msra.mxu0 0
        %4290 = vmatprep.subr.bf16.mxu0 0
        %4291 = vmatpush2.bf16.xpose.msra.mxu0 0
        %4292 = vmatprep.subr.bf16.mxu0 0
        %4293 = vmatpush2.bf16.xpose.msra.mxu0 0
        %4294 = vmatprep.subr.bf16.mxu0 0
        %4295 = vmatpush2.bf16.xpose.msra.mxu0 0
        %4296 = vmatprep.subr.bf16.mxu0 0
        %4297 = vmatpush2.bf16.xpose.msra.mxu0 0
        %4298 = vmatprep.subr.bf16.mxu0 0
        %4299 = vmatpush2.bf16.xpose.msra.mxu0 0
        %4300 = vmatprep.subr.bf16.mxu0 0
        %4301 = vmatpush2.bf16.xpose.msra.mxu0 0
        %4302 = vmatprep.subr.bf16.mxu0 0
        %4303 = vmatpush2.bf16.xpose.msra.mxu0 0
        %4304 = vmatprep.mubr.bf16.mxu0 0
        %4305 = vmatmul.mubr.bf16.gmra.mxu0 %v3979
        %v4306 = vpop.f32.mrf.mxu0
        %v4307 = vadd.f32 0.0, %v4306
        %v4308 = vpop.f32.mrf.mxu0
        %v4309 = vpop.f32.mrf.mxu0
        %v4310 = vpop.f32.mrf.mxu0
        %4311 = vdwg.mxu0
        %v4312 = vpack.c.bf16 %v3262, %v3262
        %v4313 = vpack.c.bf16 %v3302, %v3302
        %v4314 = vpack.c.bf16 %v3306, %v3306
        %4315 = vxpose.xlu0.c.b16.start [1/8] %v4312, 128
        %4316 = vxpose.xlu0.c.b16.cont [2/8] 0, 128
        %4317 = vxpose.xlu0.c.b16.cont [3/8] 0, 128
        %4318 = vxpose.xlu0.c.b16.cont [4/8] 0, 128
        %4319 = vxpose.xlu0.c.b16.cont [5/8] 0, 128
        %4320 = vxpose.xlu0.c.b16.cont [6/8] 0, 128
        %4321 = vxpose.xlu0.c.b16.cont [7/8] 0, 128
        %4322 = vxpose.xlu0.c.b16.end [8/8] 0, 128
        %v4323 = vpop.trf.xlu0
        %v4324 = vpop.trf.xlu0
        %v4325 = vpop.trf.xlu0
        %v4326 = vpop.trf.xlu0
        %v4327 = vpop.trf.xlu0
        %v4328 = vpop.trf.xlu0
        %v4329 = vpop.trf.xlu0
        %v4330 = vpop.trf.xlu0
        %v4332 = vsel %vm681, %v4323, 0
        %v4335 = vsel %vm681, %v4324, 0
        %v4338 = vsel %vm681, %v4325, 0
        %v4341 = vsel %vm681, %v4326, 0
        %v4344 = vsel %vm681, %v4327, 0
        %v4347 = vsel %vm681, %v4328, 0
        %v4350 = vsel %vm681, %v4329, 0
        %v4353 = vsel %vm681, %v4330, 0
        %v4356 = vsel %vm706, %v4313, 0
        %4358 = vmatprep.subr.bf16.mxu0 0
        %4359 = vmatpush1.bf16.msra.mxu0 0
        %4360 = vmatprep.subr.bf16.mxu0 0
        %4361 = vmatpush1.bf16.msra.mxu0 0
        %4362 = vmatprep.subr.bf16.mxu0 0
        %4363 = vmatpush1.bf16.msra.mxu0 0
        %4364 = vmatprep.subr.bf16.mxu0 0
        %4365 = vmatpush1.bf16.msra.mxu0 0
        %4366 = vmatprep.subr.bf16.mxu0 0
        %4367 = vmatpush1.bf16.msra.mxu0 0
        %4368 = vmatprep.subr.bf16.mxu0 0
        %4369 = vmatpush1.bf16.msra.mxu0 0
        %4370 = vmatprep.subr.bf16.mxu0 0
        %4371 = vmatpush1.bf16.msra.mxu0 0
        %4372 = vmatprep.subr.bf16.mxu0 0
        %4373 = vmatpush1.bf16.msra.mxu0 %v4356
        %4374 = vmatprep.subr.bf16.mxu0 0
        %4375 = vmatpush2.bf16.msra.mxu0 0
        %4376 = vmatprep.subr.bf16.mxu0 0
        %4377 = vmatpush2.bf16.msra.mxu0 0
        %4378 = vmatprep.subr.bf16.mxu0 0
        %4379 = vmatpush2.bf16.msra.mxu0 0
        %4380 = vmatprep.subr.bf16.mxu0 0
        %4381 = vmatpush2.bf16.msra.mxu0 0
        %4382 = vmatprep.subr.bf16.mxu0 0
        %4383 = vmatpush2.bf16.msra.mxu0 0
        %4384 = vmatprep.subr.bf16.mxu0 0
        %4385 = vmatpush2.bf16.msra.mxu0 0
        %4386 = vmatprep.subr.bf16.mxu0 0
        %4387 = vmatpush2.bf16.msra.mxu0 0
        %4388 = vmatprep.subr.bf16.mxu0 0
        %4389 = vmatpush2.bf16.msra.mxu0 0
        %4390 = vmatprep.mubr.bf16.mxu0 0
        %4391 = vmatmul.mubr.bf16.gmra.mxu0 %v4332
        %v4392 = vpop.f32.mrf.mxu0
        %v4393 = vadd.f32 0.0, %v4392
        %v4394 = vpop.f32.mrf.mxu0
        %v4395 = vpop.f32.mrf.mxu0
        %v4396 = vadd.f32 0.0, %v4395
        %v4397 = vpop.f32.mrf.mxu0
        %4398 = vmatprep.mubr.bf16.mxu0 0
        %4399 = vmatmul.mubr.bf16.gmra.mxu0 %v4335
        %v4400 = vpop.f32.mrf.mxu0
        %v4401 = vadd.f32 0.0, %v4400
        %v4402 = vpop.f32.mrf.mxu0
        %v4403 = vpop.f32.mrf.mxu0
        %v4404 = vadd.f32 0.0, %v4403
        %v4405 = vpop.f32.mrf.mxu0
        %4406 = vmatprep.mubr.bf16.mxu0 0
        %4407 = vmatmul.mubr.bf16.gmra.mxu0 %v4338
        %v4408 = vpop.f32.mrf.mxu0
        %v4409 = vadd.f32 0.0, %v4408
        %v4410 = vpop.f32.mrf.mxu0
        %v4411 = vpop.f32.mrf.mxu0
        %v4412 = vadd.f32 0.0, %v4411
        %v4413 = vpop.f32.mrf.mxu0
        %4414 = vmatprep.mubr.bf16.mxu0 0
        %4415 = vmatmul.mubr.bf16.gmra.mxu0 %v4341
        %v4416 = vpop.f32.mrf.mxu0
        %v4417 = vadd.f32 0.0, %v4416
        %v4418 = vpop.f32.mrf.mxu0
        %v4419 = vpop.f32.mrf.mxu0
        %v4420 = vadd.f32 0.0, %v4419
        %v4421 = vpop.f32.mrf.mxu0
        %4422 = vmatprep.mubr.bf16.mxu0 0
        %4423 = vmatmul.mubr.bf16.gmra.mxu0 %v4344
        %v4424 = vpop.f32.mrf.mxu0
        %v4425 = vadd.f32 0.0, %v4424
        %v4426 = vpop.f32.mrf.mxu0
        %v4427 = vpop.f32.mrf.mxu0
        %v4428 = vadd.f32 0.0, %v4427
        %v4429 = vpop.f32.mrf.mxu0
        %4430 = vmatprep.mubr.bf16.mxu0 0
        %4431 = vmatmul.mubr.bf16.gmra.mxu0 %v4347
        %v4432 = vpop.f32.mrf.mxu0
        %v4433 = vadd.f32 0.0, %v4432
        %v4434 = vpop.f32.mrf.mxu0
        %v4435 = vpop.f32.mrf.mxu0
        %v4436 = vadd.f32 0.0, %v4435
        %v4437 = vpop.f32.mrf.mxu0
        %4438 = vmatprep.mubr.bf16.mxu0 0
        %4439 = vmatmul.mubr.bf16.gmra.mxu0 %v4350
        %v4440 = vpop.f32.mrf.mxu0
        %v4441 = vadd.f32 0.0, %v4440
        %v4442 = vpop.f32.mrf.mxu0
        %v4443 = vpop.f32.mrf.mxu0
        %v4444 = vadd.f32 0.0, %v4443
        %v4445 = vpop.f32.mrf.mxu0
        %4446 = vmatprep.mubr.bf16.mxu0 0
        %4447 = vmatmul.mubr.bf16.gmra.mxu0 %v4353
        %v4448 = vpop.f32.mrf.mxu0
        %v4449 = vadd.f32 0.0, %v4448
        %v4450 = vpop.f32.mrf.mxu0
        %v4451 = vpop.f32.mrf.mxu0
        %v4452 = vadd.f32 0.0, %v4451
        %v4453 = vpop.f32.mrf.mxu0
        %4454 = vdwg.mxu0
        %4455 = vmax.xlane.f32.xlu0 %v4393
        %v4456 = vpop.xlane.xlu0 %4455
        %4457 = vmax.xlane.f32.xlu0 %v4396
        %v4458 = vpop.xlane.xlu0 %4457
        %4459 = vmax.xlane.f32.xlu0 %v4401
        %v4460 = vpop.xlane.xlu0 %4459
        %4461 = vmax.xlane.f32.xlu0 %v4404
        %v4462 = vpop.xlane.xlu0 %4461
        %4463 = vmax.xlane.f32.xlu0 %v4409
        %v4464 = vpop.xlane.xlu0 %4463
        %4465 = vmax.xlane.f32.xlu0 %v4412
        %v4466 = vpop.xlane.xlu0 %4465
        %4467 = vmax.xlane.f32.xlu0 %v4417
        %v4468 = vpop.xlane.xlu0 %4467
        %4469 = vmax.xlane.f32.xlu0 %v4420
        %v4470 = vpop.xlane.xlu0 %4469
        %4471 = vmax.xlane.f32.xlu0 %v4425
        %v4472 = vpop.xlane.xlu0 %4471
        %4473 = vmax.xlane.f32.xlu0 %v4428
        %v4474 = vpop.xlane.xlu0 %4473
        %4475 = vmax.xlane.f32.xlu0 %v4433
        %v4476 = vpop.xlane.xlu0 %4475
        %4477 = vmax.xlane.f32.xlu0 %v4436
        %v4478 = vpop.xlane.xlu0 %4477
        %4479 = vmax.xlane.f32.xlu0 %v4441
        %v4480 = vpop.xlane.xlu0 %4479
        %4481 = vmax.xlane.f32.xlu0 %v4444
        %v4482 = vpop.xlane.xlu0 %4481
        %4483 = vmax.xlane.f32.xlu0 %v4449
        %v4484 = vpop.xlane.xlu0 %4483
        %4485 = vmax.xlane.f32.xlu0 %v4452
        %v4486 = vpop.xlane.xlu0 %4485
        %v4487 = vsub.f32 %v4393, %v4456
        %v4488 = vsub.f32 %v4396, %v4458
        %v4489 = vsub.f32 %v4401, %v4460
        %v4490 = vsub.f32 %v4404, %v4462
        %v4491 = vsub.f32 %v4409, %v4464
        %v4492 = vsub.f32 %v4412, %v4466
        %v4493 = vsub.f32 %v4417, %v4468
        %v4494 = vsub.f32 %v4420, %v4470
        %v4495 = vsub.f32 %v4425, %v4472
        %v4496 = vsub.f32 %v4428, %v4474
        %v4497 = vsub.f32 %v4433, %v4476
        %v4498 = vsub.f32 %v4436, %v4478
        %v4499 = vsub.f32 %v4441, %v4480
        %v4500 = vsub.f32 %v4444, %v4482
        %v4501 = vsub.f32 %v4449, %v4484
        %v4502 = vsub.f32 %v4452, %v4486
        %v4503 = vmul.f32 %v4487, 1.442695
        %v4504 = vpow.pop %v4503
        %v4505 = vmul.f32 %v4488, 1.442695
        %v4506 = vpow.pop %v4505
        %v4507 = vmul.f32 %v4489, 1.442695
        %v4508 = vpow.pop %v4507
        %v4509 = vmul.f32 %v4490, 1.442695
        %v4510 = vpow.pop %v4509
        %v4511 = vmul.f32 %v4491, 1.442695
        %v4512 = vpow.pop %v4511
        %v4513 = vmul.f32 %v4492, 1.442695
        %v4514 = vpow.pop %v4513
        %v4515 = vmul.f32 %v4493, 1.442695
        %v4516 = vpow.pop %v4515
        %v4517 = vmul.f32 %v4494, 1.442695
        %v4518 = vpow.pop %v4517
        %v4519 = vmul.f32 %v4495, 1.442695
        %v4520 = vpow.pop %v4519
        %v4521 = vmul.f32 %v4496, 1.442695
        %v4522 = vpow.pop %v4521
        %v4523 = vmul.f32 %v4497, 1.442695
        %v4524 = vpow.pop %v4523
        %v4525 = vmul.f32 %v4498, 1.442695
        %v4526 = vpow.pop %v4525
        %v4527 = vmul.f32 %v4499, 1.442695
        %v4528 = vpow.pop %v4527
        %v4529 = vmul.f32 %v4500, 1.442695
        %v4530 = vpow.pop %v4529
        %v4531 = vmul.f32 %v4501, 1.442695
        %v4532 = vpow.pop %v4531
        %v4533 = vmul.f32 %v4502, 1.442695
        %v4534 = vpow.pop %v4533
        %4535 = vadd.xlane.f32.xlu0 %v4504
        %v4536 = vpop.xlane.xlu0 %4535
        %4537 = vadd.xlane.f32.xlu0 %v4506
        %v4538 = vpop.xlane.xlu0 %4537
        %4539 = vadd.xlane.f32.xlu0 %v4508
        %v4540 = vpop.xlane.xlu0 %4539
        %4541 = vadd.xlane.f32.xlu0 %v4510
        %v4542 = vpop.xlane.xlu0 %4541
        %4543 = vadd.xlane.f32.xlu0 %v4512
        %v4544 = vpop.xlane.xlu0 %4543
        %4545 = vadd.xlane.f32.xlu0 %v4514
        %v4546 = vpop.xlane.xlu0 %4545
        %4547 = vadd.xlane.f32.xlu0 %v4516
        %v4548 = vpop.xlane.xlu0 %4547
        %4549 = vadd.xlane.f32.xlu0 %v4518
        %v4550 = vpop.xlane.xlu0 %4549
        %4551 = vadd.xlane.f32.xlu0 %v4520
        %v4552 = vpop.xlane.xlu0 %4551
        %4553 = vadd.xlane.f32.xlu0 %v4522
        %v4554 = vpop.xlane.xlu0 %4553
        %4555 = vadd.xlane.f32.xlu0 %v4524
        %v4556 = vpop.xlane.xlu0 %4555
        %4557 = vadd.xlane.f32.xlu0 %v4526
        %v4558 = vpop.xlane.xlu0 %4557
        %4559 = vadd.xlane.f32.xlu0 %v4528
        %v4560 = vpop.xlane.xlu0 %4559
        %4561 = vadd.xlane.f32.xlu0 %v4530
        %v4562 = vpop.xlane.xlu0 %4561
        %4563 = vadd.xlane.f32.xlu0 %v4532
        %v4564 = vpop.xlane.xlu0 %4563
        %4565 = vadd.xlane.f32.xlu0 %v4534
        %v4566 = vpop.xlane.xlu0 %4565
        %v4567 = vrcp.pop %v4536
        %v4568 = vrcp.pop %v4538
        %v4569 = vrcp.pop %v4540
        %v4570 = vrcp.pop %v4542
        %v4571 = vrcp.pop %v4544
        %v4572 = vrcp.pop %v4546
        %v4573 = vrcp.pop %v4548
        %v4574 = vrcp.pop %v4550
        %v4575 = vrcp.pop %v4552
        %v4576 = vrcp.pop %v4554
        %v4577 = vrcp.pop %v4556
        %v4578 = vrcp.pop %v4558
        %v4579 = vrcp.pop %v4560
        %v4580 = vrcp.pop %v4562
        %v4581 = vrcp.pop %v4564
        %v4582 = vrcp.pop %v4566
        %v4583 = vmul.f32 %v4504, %v4567
        %v4584 = vmul.f32 %v4506, %v4568
        %v4585 = vmul.f32 %v4508, %v4569
        %v4586 = vmul.f32 %v4510, %v4570
        %v4587 = vmul.f32 %v4512, %v4571
        %v4588 = vmul.f32 %v4514, %v4572
        %v4589 = vmul.f32 %v4516, %v4573
        %v4590 = vmul.f32 %v4518, %v4574
        %v4591 = vmul.f32 %v4520, %v4575
        %v4592 = vmul.f32 %v4522, %v4576
        %v4593 = vmul.f32 %v4524, %v4577
        %v4594 = vmul.f32 %v4526, %v4578
        %v4595 = vmul.f32 %v4528, %v4579
        %v4596 = vmul.f32 %v4530, %v4580
        %v4597 = vmul.f32 %v4532, %v4581
        %v4598 = vmul.f32 %v4534, %v4582
        %v4599 = vpack.c.bf16 %v4584, %v4583
        %v4600 = vpack.c.bf16 %v4586, %v4585
        %v4601 = vpack.c.bf16 %v4588, %v4587
        %v4602 = vpack.c.bf16 %v4590, %v4589
        %v4603 = vpack.c.bf16 %v4592, %v4591
        %v4604 = vpack.c.bf16 %v4594, %v4593
        %v4605 = vpack.c.bf16 %v4596, %v4595
        %v4606 = vpack.c.bf16 %v4598, %v4597
        %4607 = vmatprep.subr.bf16.mxu0 0
        %4608 = vmatpush1.bf16.xpose.msra.mxu0 %v4606
        %4609 = vmatprep.subr.bf16.mxu0 0
        %4610 = vmatpush1.bf16.xpose.msra.mxu0 %v4605
        %4611 = vmatprep.subr.bf16.mxu0 0
        %4612 = vmatpush1.bf16.xpose.msra.mxu0 %v4604
        %4613 = vmatprep.subr.bf16.mxu0 0
        %4614 = vmatpush1.bf16.xpose.msra.mxu0 %v4603
        %4615 = vmatprep.subr.bf16.mxu0 0
        %4616 = vmatpush1.bf16.xpose.msra.mxu0 %v4602
        %4617 = vmatprep.subr.bf16.mxu0 0
        %4618 = vmatpush1.bf16.xpose.msra.mxu0 %v4601
        %4619 = vmatprep.subr.bf16.mxu0 0
        %4620 = vmatpush1.bf16.xpose.msra.mxu0 %v4600
        %4621 = vmatprep.subr.bf16.mxu0 0
        %4622 = vmatpush1.bf16.xpose.msra.mxu0 %v4599
        %4623 = vmatprep.subr.bf16.mxu0 0
        %4624 = vmatpush2.bf16.xpose.msra.mxu0 0
        %4625 = vmatprep.subr.bf16.mxu0 0
        %4626 = vmatpush2.bf16.xpose.msra.mxu0 0
        %4627 = vmatprep.subr.bf16.mxu0 0
        %4628 = vmatpush2.bf16.xpose.msra.mxu0 0
        %4629 = vmatprep.subr.bf16.mxu0 0
        %4630 = vmatpush2.bf16.xpose.msra.mxu0 0
        %4631 = vmatprep.subr.bf16.mxu0 0
        %4632 = vmatpush2.bf16.xpose.msra.mxu0 0
        %4633 = vmatprep.subr.bf16.mxu0 0
        %4634 = vmatpush2.bf16.xpose.msra.mxu0 0
        %4635 = vmatprep.subr.bf16.mxu0 0
        %4636 = vmatpush2.bf16.xpose.msra.mxu0 0
        %4637 = vmatprep.subr.bf16.mxu0 0
        %4638 = vmatpush2.bf16.xpose.msra.mxu0 0
        %4639 = vmatprep.mubr.bf16.mxu0 0
        %4640 = vmatmul.mubr.bf16.gmra.mxu0 %v4314
        %v4641 = vpop.f32.mrf.mxu0
        %v4642 = vadd.f32 0.0, %v4641
        %v4643 = vpop.f32.mrf.mxu0
        %v4644 = vpop.f32.mrf.mxu0
        %v4645 = vpop.f32.mrf.mxu0
        %4646 = vdwg.mxu0
        %v4647 = vpack.c.bf16 %v3972, %v3637
        %v4648 = vpack.c.bf16 %v4642, %v4307
        %4649 = vset.pattern.permute.xlu0 7
        %4650 = vperm.xlu0 %4649, %v3102
        %v4651 = vpop.permute.xlu0 %4650
        %4653 = vset.pattern.permute.xlu0 7
        %4654 = vperm.xlu0 %4653, %v3103
        %v4655 = vpop.permute.xlu0 %4654
        %4657 = vset.pattern.permute.xlu0 7
        %4658 = vperm.xlu0 %4657, %v3104
        %v4659 = vpop.permute.xlu0 %4658
        %4661 = vset.pattern.permute.xlu0 7
        %4662 = vperm.xlu0 %4661, %v3105
        %v4663 = vpop.permute.xlu0 %4662
        %4665 = vrot.lane.b32.xlu0 %v3120, 32
        %v4666 = vpop.permute.xlu0 %4665
        %4667 = vrot.lane.b32.xlu0 %v3121, 32
        %v4668 = vpop.permute.xlu0 %4667
        %4671 = vxpose.xlu0.c.b16.start [1/8] %v4666, 128
        %4672 = vxpose.xlu0.c.b16.cont [2/8] %v4668, 128
        %4673 = vxpose.xlu0.c.b16.cont [3/8] 0, 128
        %4674 = vxpose.xlu0.c.b16.cont [4/8] 0, 128
        %4675 = vxpose.xlu0.c.b16.cont [5/8] 0, 128
        %4676 = vxpose.xlu0.c.b16.cont [6/8] 0, 128
        %4677 = vxpose.xlu0.c.b16.cont [7/8] 0, 128
        %4678 = vxpose.xlu0.c.b16.end [8/8] 0, 128
        %v4679 = vpop.trf.xlu0
        %v4680 = vpop.trf.xlu0
        %v4681 = vpop.trf.xlu0
        %v4682 = vpop.trf.xlu0
        %v4683 = vpop.trf.xlu0
        %v4684 = vpop.trf.xlu0
        %v4685 = vpop.trf.xlu0
        %v4686 = vpop.trf.xlu0
        %v4688 = vsel %vm471, %v4679, 0
        %v4691 = vsel %vm471, %v4680, 0
        %4693 = vmatprep.subr.bf16.mxu0 0
        %4694 = vmatpush1.bf16.msra.mxu0 0
        %4695 = vmatprep.subr.bf16.mxu0 0
        %4696 = vmatpush1.bf16.msra.mxu0 0
        %4697 = vmatprep.subr.bf16.mxu0 0
        %4698 = vmatpush1.bf16.msra.mxu0 0
        %4699 = vmatprep.subr.bf16.mxu0 0
        %4700 = vmatpush1.bf16.msra.mxu0 0
        %4701 = vmatprep.subr.bf16.mxu0 0
        %4702 = vmatpush1.bf16.msra.mxu0 0
        %4703 = vmatprep.subr.bf16.mxu0 0
        %4704 = vmatpush1.bf16.msra.mxu0 0
        %4705 = vmatprep.subr.bf16.mxu0 0
        %4706 = vmatpush1.bf16.msra.mxu0 %v4648
        %4707 = vmatprep.subr.bf16.mxu0 0
        %4708 = vmatpush1.bf16.msra.mxu0 %v4647
        %4709 = vmatprep.subr.bf16.mxu0 0
        %4710 = vmatpush2.bf16.msra.mxu0 0
        %4711 = vmatprep.subr.bf16.mxu0 0
        %4712 = vmatpush2.bf16.msra.mxu0 0
        %4713 = vmatprep.subr.bf16.mxu0 0
        %4714 = vmatpush2.bf16.msra.mxu0 0
        %4715 = vmatprep.subr.bf16.mxu0 0
        %4716 = vmatpush2.bf16.msra.mxu0 0
        %4717 = vmatprep.subr.bf16.mxu0 0
        %4718 = vmatpush2.bf16.msra.mxu0 0
        %4719 = vmatprep.subr.bf16.mxu0 0
        %4720 = vmatpush2.bf16.msra.mxu0 0
        %4721 = vmatprep.subr.bf16.mxu0 0
        %4722 = vmatpush2.bf16.msra.mxu0 0
        %4723 = vmatprep.subr.bf16.mxu0 0
        %4724 = vmatpush2.bf16.msra.mxu0 0
        %4725 = vmatprep.mubr.bf16.mxu0 0
        %4726 = vmatmul.mubr.bf16.gmra.mxu0 %v4688
        %v4727 = vpop.f32.mrf.mxu0
        %v4728 = vadd.f32 %v4651, %v4727
        %v4729 = vpop.f32.mrf.mxu0
        %v4730 = vpop.f32.mrf.mxu0
        %v4731 = vadd.f32 %v4655, %v4730
        %v4732 = vpop.f32.mrf.mxu0
        %4733 = vmatprep.mubr.bf16.mxu0 0
        %4734 = vmatmul.mubr.bf16.gmra.mxu0 %v4691
        %v4735 = vpop.f32.mrf.mxu0
        %v4736 = vadd.f32 %v4659, %v4735
        %v4737 = vpop.f32.mrf.mxu0
        %v4738 = vpop.f32.mrf.mxu0
        %v4739 = vadd.f32 %v4663, %v4738
        %v4740 = vpop.f32.mrf.mxu0
        %4741 = vdwg.mxu0
        %v4742 = vpack.c.bf16 %v4731, %v4728
        %v4743 = vpack.c.bf16 %v4739, %v4736
        %v4744 = vunpack.c.h.b16 %v3098
        %v4745 = vunpack.c.h.b16 %v3099
        %v4746 = vunpack.c.h.b16 %v3100
        %v4747 = vunpack.c.h.b16 %v3101
        %v4748 = vpack.c.b16 %v4745, %v4744
        %v4749 = vpack.c.b16 %v4747, %v4746
        %4750 = vrot.lane.b32.xlu0 %v4748, 64
        %v4751 = vpop.permute.xlu0 %4750
        %4752 = vrot.lane.b32.xlu0 %v4749, 64
        %v4753 = vpop.permute.xlu0 %4752
        %4756 = vxpose.xlu0.c.b16.start [1/8] %v4751, 128
        %4757 = vxpose.xlu0.c.b16.cont [2/8] %v4753, 128
        %4758 = vxpose.xlu0.c.b16.cont [3/8] 0, 128
        %4759 = vxpose.xlu0.c.b16.cont [4/8] 0, 128
        %4760 = vxpose.xlu0.c.b16.cont [5/8] 0, 128
        %4761 = vxpose.xlu0.c.b16.cont [6/8] 0, 128
        %4762 = vxpose.xlu0.c.b16.cont [7/8] 0, 128
        %4763 = vxpose.xlu0.c.b16.end [8/8] 0, 128
        %v4764 = vpop.trf.xlu0
        %v4765 = vpop.trf.xlu0
        %v4766 = vpop.trf.xlu0
        %v4767 = vpop.trf.xlu0
        %v4768 = vpop.trf.xlu0
        %v4769 = vpop.trf.xlu0
        %v4770 = vpop.trf.xlu0
        %v4771 = vpop.trf.xlu0
        %v4773 = vsel %vm471, %v4764, 0
        %v4776 = vsel %vm471, %v4765, 0
        %v4779 = vsel %vm471, %v4766, 0
        %v4782 = vsel %vm471, %v4767, 0
        %4784 = vmatprep.subr.bf16.mxu0 0
        %4785 = vmatpush1.bf16.msra.mxu0 0
        %4786 = vmatprep.subr.bf16.mxu0 0
        %4787 = vmatpush1.bf16.msra.mxu0 0
        %4788 = vmatprep.subr.bf16.mxu0 0
        %4789 = vmatpush1.bf16.msra.mxu0 0
        %4790 = vmatprep.subr.bf16.mxu0 0
        %4791 = vmatpush1.bf16.msra.mxu0 0
        %4792 = vmatprep.subr.bf16.mxu0 0
        %4793 = vmatpush1.bf16.msra.mxu0 0
        %4794 = vmatprep.subr.bf16.mxu0 0
        %4795 = vmatpush1.bf16.msra.mxu0 0
        %4796 = vmatprep.subr.bf16.mxu0 0
        %4797 = vmatpush1.bf16.msra.mxu0 %v4743
        %4798 = vmatprep.subr.bf16.mxu0 0
        %4799 = vmatpush1.bf16.msra.mxu0 %v4742
        %4800 = vmatprep.subr.bf16.mxu0 0
        %4801 = vmatpush2.bf16.msra.mxu0 0
        %4802 = vmatprep.subr.bf16.mxu0 0
        %4803 = vmatpush2.bf16.msra.mxu0 0
        %4804 = vmatprep.subr.bf16.mxu0 0
        %4805 = vmatpush2.bf16.msra.mxu0 0
        %4806 = vmatprep.subr.bf16.mxu0 0
        %4807 = vmatpush2.bf16.msra.mxu0 0
        %4808 = vmatprep.subr.bf16.mxu0 0
        %4809 = vmatpush2.bf16.msra.mxu0 0
        %4810 = vmatprep.subr.bf16.mxu0 0
        %4811 = vmatpush2.bf16.msra.mxu0 0
        %4812 = vmatprep.subr.bf16.mxu0 0
        %4813 = vmatpush2.bf16.msra.mxu0 0
        %4814 = vmatprep.subr.bf16.mxu0 0
        %4815 = vmatpush2.bf16.msra.mxu0 0
        %4816 = vmatprep.mubr.bf16.mxu0 0
        %4817 = vmatmul.mubr.bf16.gmra.mxu0 %v4773
        %v4818 = vpop.f32.mrf.mxu0
        %v4819 = vadd.f32 0.0, %v4818
        %v4820 = vpop.f32.mrf.mxu0
        %v4821 = vpop.f32.mrf.mxu0
        %v4822 = vadd.f32 0.0, %v4821
        %v4823 = vpop.f32.mrf.mxu0
        %4824 = vmatprep.mubr.bf16.mxu0 0
        %4825 = vmatmul.mubr.bf16.gmra.mxu0 %v4776
        %v4826 = vpop.f32.mrf.mxu0
        %v4827 = vadd.f32 0.0, %v4826
        %v4828 = vpop.f32.mrf.mxu0
        %v4829 = vpop.f32.mrf.mxu0
        %v4830 = vadd.f32 0.0, %v4829
        %v4831 = vpop.f32.mrf.mxu0
        %4832 = vmatprep.mubr.bf16.mxu0 0
        %4833 = vmatmul.mubr.bf16.gmra.mxu0 %v4779
        %v4834 = vpop.f32.mrf.mxu0
        %v4835 = vadd.f32 0.0, %v4834
        %v4836 = vpop.f32.mrf.mxu0
        %v4837 = vpop.f32.mrf.mxu0
        %v4838 = vadd.f32 0.0, %v4837
        %v4839 = vpop.f32.mrf.mxu0
        %4840 = vmatprep.mubr.bf16.mxu0 0
        %4841 = vmatmul.mubr.bf16.gmra.mxu0 %v4782
        %v4842 = vpop.f32.mrf.mxu0
        %v4843 = vadd.f32 0.0, %v4842
        %v4844 = vpop.f32.mrf.mxu0
        %v4845 = vpop.f32.mrf.mxu0
        %v4846 = vadd.f32 0.0, %v4845
        %v4847 = vpop.f32.mrf.mxu0
        %4848 = vdwg.mxu0
        %4851 = vxpose.xlu0.c.b16.start [1/8] %v4748, 128
        %4852 = vxpose.xlu0.c.b16.cont [2/8] %v4749, 128
        %4853 = vxpose.xlu0.c.b16.cont [3/8] 0, 128
        %4854 = vxpose.xlu0.c.b16.cont [4/8] 0, 128
        %4855 = vxpose.xlu0.c.b16.cont [5/8] 0, 128
        %4856 = vxpose.xlu0.c.b16.cont [6/8] 0, 128
        %4857 = vxpose.xlu0.c.b16.cont [7/8] 0, 128
        %4858 = vxpose.xlu0.c.b16.end [8/8] 0, 128
        %v4859 = vpop.trf.xlu0
        %v4860 = vpop.trf.xlu0
        %v4861 = vpop.trf.xlu0
        %v4862 = vpop.trf.xlu0
        %v4863 = vpop.trf.xlu0
        %v4864 = vpop.trf.xlu0
        %v4865 = vpop.trf.xlu0
        %v4866 = vpop.trf.xlu0
        %v4868 = vsel %vm471, %v4859, 0
        %v4871 = vsel %vm471, %v4860, 0
        %v4874 = vsel %vm471, %v4861, 0
        %v4877 = vsel %vm471, %v4862, 0
        %4879 = vmatprep.subr.bf16.mxu0 0
        %4880 = vmatpush1.bf16.msra.mxu0 0
        %4881 = vmatprep.subr.bf16.mxu0 0
        %4882 = vmatpush1.bf16.msra.mxu0 0
        %4883 = vmatprep.subr.bf16.mxu0 0
        %4884 = vmatpush1.bf16.msra.mxu0 0
        %4885 = vmatprep.subr.bf16.mxu0 0
        %4886 = vmatpush1.bf16.msra.mxu0 0
        %4887 = vmatprep.subr.bf16.mxu0 0
        %4888 = vmatpush1.bf16.msra.mxu0 0
        %4889 = vmatprep.subr.bf16.mxu0 0
        %4890 = vmatpush1.bf16.msra.mxu0 0
        %4891 = vmatprep.subr.bf16.mxu0 0
        %4892 = vmatpush1.bf16.msra.mxu0 %v3111
        %4893 = vmatprep.subr.bf16.mxu0 0
        %4894 = vmatpush1.bf16.msra.mxu0 %v3110
        %4895 = vmatprep.subr.bf16.mxu0 0
        %4896 = vmatpush2.bf16.msra.mxu0 0
        %4897 = vmatprep.subr.bf16.mxu0 0
        %4898 = vmatpush2.bf16.msra.mxu0 0
        %4899 = vmatprep.subr.bf16.mxu0 0
        %4900 = vmatpush2.bf16.msra.mxu0 0
        %4901 = vmatprep.subr.bf16.mxu0 0
        %4902 = vmatpush2.bf16.msra.mxu0 0
        %4903 = vmatprep.subr.bf16.mxu0 0
        %4904 = vmatpush2.bf16.msra.mxu0 0
        %4905 = vmatprep.subr.bf16.mxu0 0
        %4906 = vmatpush2.bf16.msra.mxu0 0
        %4907 = vmatprep.subr.bf16.mxu0 0
        %4908 = vmatpush2.bf16.msra.mxu0 0
        %4909 = vmatprep.subr.bf16.mxu0 0
        %4910 = vmatpush2.bf16.msra.mxu0 0
        %4911 = vmatprep.mubr.bf16.mxu0 0
        %4912 = vmatmul.mubr.bf16.gmra.mxu0 %v4868
        %v4913 = vpop.f32.mrf.mxu0
        %v4914 = vadd.f32 %v4819, %v4913
        %v4915 = vpop.f32.mrf.mxu0
        %v4916 = vpop.f32.mrf.mxu0
        %v4917 = vadd.f32 %v4822, %v4916
        %v4918 = vpop.f32.mrf.mxu0
        %4919 = vmatprep.mubr.bf16.mxu0 0
        %4920 = vmatmul.mubr.bf16.gmra.mxu0 %v4871
        %v4921 = vpop.f32.mrf.mxu0
        %v4922 = vadd.f32 %v4827, %v4921
        %v4923 = vpop.f32.mrf.mxu0
        %v4924 = vpop.f32.mrf.mxu0
        %v4925 = vadd.f32 %v4830, %v4924
        %v4926 = vpop.f32.mrf.mxu0
        %4927 = vmatprep.mubr.bf16.mxu0 0
        %4928 = vmatmul.mubr.bf16.gmra.mxu0 %v4874
        %v4929 = vpop.f32.mrf.mxu0
        %v4930 = vadd.f32 %v4835, %v4929
        %v4931 = vpop.f32.mrf.mxu0
        %v4932 = vpop.f32.mrf.mxu0
        %v4933 = vadd.f32 %v4838, %v4932
        %v4934 = vpop.f32.mrf.mxu0
        %4935 = vmatprep.mubr.bf16.mxu0 0
        %4936 = vmatmul.mubr.bf16.gmra.mxu0 %v4877
        %v4937 = vpop.f32.mrf.mxu0
        %v4938 = vadd.f32 %v4843, %v4937
        %v4939 = vpop.f32.mrf.mxu0
        %v4940 = vpop.f32.mrf.mxu0
        %v4941 = vadd.f32 %v4846, %v4940
        %v4942 = vpop.f32.mrf.mxu0
        %4943 = vdwg.mxu0
        %4944 = vset.pattern.permute.xlu0 8
        %4945 = vperm.xlu0 %4944, %v3102
        %v4946 = vpop.permute.xlu0 %4945
        %4948 = vset.pattern.permute.xlu0 8
        %4949 = vperm.xlu0 %4948, %v3103
        %v4950 = vpop.permute.xlu0 %4949
        %4952 = vset.pattern.permute.xlu0 8
        %4953 = vperm.xlu0 %4952, %v3104
        %v4954 = vpop.permute.xlu0 %4953
        %4956 = vset.pattern.permute.xlu0 8
        %4957 = vperm.xlu0 %4956, %v3105
        %v4958 = vpop.permute.xlu0 %4957
        %4960 = vset.pattern.permute.xlu0 8
        %4961 = vperm.xlu0 %4960, %v3106
        %v4962 = vpop.permute.xlu0 %4961
        %4964 = vset.pattern.permute.xlu0 8
        %4965 = vperm.xlu0 %4964, %v3107
        %v4966 = vpop.permute.xlu0 %4965
        %4968 = vset.pattern.permute.xlu0 8
        %4969 = vperm.xlu0 %4968, %v3108
        %v4970 = vpop.permute.xlu0 %4969
        %4972 = vset.pattern.permute.xlu0 8
        %4973 = vperm.xlu0 %4972, %v3109
        %v4974 = vpop.permute.xlu0 %4973
        %v4976 = vadd.f32 %v4914, %v4946
        %v4977 = vadd.f32 %v4917, %v4950
        %v4978 = vadd.f32 %v4922, %v4954
        %v4979 = vadd.f32 %v4925, %v4958
        %v4980 = vadd.f32 %v4930, %v4962
        %v4981 = vadd.f32 %v4933, %v4966
        %v4982 = vadd.f32 %v4938, %v4970
        %v4983 = vadd.f32 %v4941, %v4974
        %v4984 = vmax.f32 %v4976, 0.0
        %v4985 = vmax.f32 %v4977, 0.0
        %v4986 = vmax.f32 %v4978, 0.0
        %v4987 = vmax.f32 %v4979, 0.0
        %v4988 = vmax.f32 %v4980, 0.0
        %v4989 = vmax.f32 %v4981, 0.0
        %v4990 = vmax.f32 %v4982, 0.0
        %v4991 = vmax.f32 %v4983, 0.0
        %s4992 = scalar_lea.vmem %s3, 32
        %v4993 = vld [vmem:[%s4992] sm:$0xf]
        %v4994 = vld [vmem:[%s4992 + $0x4] sm:$0xf]
        %v4995 = vld [vmem:[%s4992 + $0x8] sm:$0xf]
        %v4996 = vld [vmem:[%s4992 + $0xc] sm:$0xf]
        %v4997 = vld [vmem:[%s4992 + $0x10] sm:$0xf]
        %v4998 = vld [vmem:[%s4992 + $0x14] sm:$0xf]
        %v4999 = vld [vmem:[%s4992 + $0x18] sm:$0xf]
        %v5000 = vld [vmem:[%s4992 + $0x1c] sm:$0xf]
        %v5001 = vpack.c.bf16 %v4985, %v4984
        %v5002 = vpack.c.bf16 %v4987, %v4986
        %v5003 = vpack.c.bf16 %v4989, %v4988
        %v5004 = vpack.c.bf16 %v4991, %v4990
        %5005 = vset.pattern.permute.xlu0 9
        %5006 = vperm.xlu0 %5005, %v3102
        %v5007 = vpop.permute.xlu0 %5006
        %5009 = vset.pattern.permute.xlu0 9
        %5010 = vperm.xlu0 %5009, %v3103
        %v5011 = vpop.permute.xlu0 %5010
        %5013 = vset.pattern.permute.xlu0 9
        %5014 = vperm.xlu0 %5013, %v3104
        %v5015 = vpop.permute.xlu0 %5014
        %5017 = vset.pattern.permute.xlu0 9
        %5018 = vperm.xlu0 %5017, %v3105
        %v5019 = vpop.permute.xlu0 %5018
        %v5029 = vunpack.c.l.b16 %v4993
        %v5030 = vunpack.c.l.b16 %v4994
        %v5031 = vunpack.c.l.b16 %v4995
        %v5032 = vunpack.c.l.b16 %v4996
        %v5033 = vunpack.c.l.b16 %v4997
        %v5034 = vunpack.c.l.b16 %v4998
        %v5035 = vunpack.c.l.b16 %v4999
        %v5036 = vunpack.c.l.b16 %v5000
        %v5037 = vpack.c.b16 %v5030, %v5029
        %v5038 = vpack.c.b16 %v5032, %v5031
        %v5039 = vpack.c.b16 %v5034, %v5033
        %v5040 = vpack.c.b16 %v5036, %v5035
        %5045 = vxpose.xlu0.c.b16.start [1/8] %v5037, 128
        %5046 = vxpose.xlu0.c.b16.cont [2/8] %v5038, 128
        %5047 = vxpose.xlu0.c.b16.cont [3/8] %v5039, 128
        %5048 = vxpose.xlu0.c.b16.cont [4/8] %v5040, 128
        %5049 = vxpose.xlu0.c.b16.cont [5/8] 0, 128
        %5050 = vxpose.xlu0.c.b16.cont [6/8] 0, 128
        %5051 = vxpose.xlu0.c.b16.cont [7/8] 0, 128
        %5052 = vxpose.xlu0.c.b16.end [8/8] 0, 128
        %v5053 = vpop.trf.xlu0
        %v5054 = vpop.trf.xlu0
        %v5055 = vpop.trf.xlu0
        %v5056 = vpop.trf.xlu0
        %v5057 = vpop.trf.xlu0
        %v5058 = vpop.trf.xlu0
        %v5059 = vpop.trf.xlu0
        %v5060 = vpop.trf.xlu0
        %v5062 = vsel %vm2941, %v5053, 0
        %v5065 = vsel %vm2941, %v5054, 0
        %5067 = vmatprep.subr.bf16.mxu0 0
        %5068 = vmatpush1.bf16.msra.mxu0 0
        %5069 = vmatprep.subr.bf16.mxu0 0
        %5070 = vmatpush1.bf16.msra.mxu0 0
        %5071 = vmatprep.subr.bf16.mxu0 0
        %5072 = vmatpush1.bf16.msra.mxu0 0
        %5073 = vmatprep.subr.bf16.mxu0 0
        %5074 = vmatpush1.bf16.msra.mxu0 0
        %5075 = vmatprep.subr.bf16.mxu0 0
        %5076 = vmatpush1.bf16.msra.mxu0 %v5004
        %5077 = vmatprep.subr.bf16.mxu0 0
        %5078 = vmatpush1.bf16.msra.mxu0 %v5003
        %5079 = vmatprep.subr.bf16.mxu0 0
        %5080 = vmatpush1.bf16.msra.mxu0 %v5002
        %5081 = vmatprep.subr.bf16.mxu0 0
        %5082 = vmatpush1.bf16.msra.mxu0 %v5001
        %5083 = vmatprep.subr.bf16.mxu0 0
        %5084 = vmatpush2.bf16.msra.mxu0 0
        %5085 = vmatprep.subr.bf16.mxu0 0
        %5086 = vmatpush2.bf16.msra.mxu0 0
        %5087 = vmatprep.subr.bf16.mxu0 0
        %5088 = vmatpush2.bf16.msra.mxu0 0
        %5089 = vmatprep.subr.bf16.mxu0 0
        %5090 = vmatpush2.bf16.msra.mxu0 0
        %5091 = vmatprep.subr.bf16.mxu0 0
        %5092 = vmatpush2.bf16.msra.mxu0 0
        %5093 = vmatprep.subr.bf16.mxu0 0
        %5094 = vmatpush2.bf16.msra.mxu0 0
        %5095 = vmatprep.subr.bf16.mxu0 0
        %5096 = vmatpush2.bf16.msra.mxu0 0
        %5097 = vmatprep.subr.bf16.mxu0 0
        %5098 = vmatpush2.bf16.msra.mxu0 0
        %5099 = vmatprep.mubr.bf16.mxu0 0
        %5100 = vmatmul.mubr.bf16.gmra.mxu0 %v5062
        %v5101 = vpop.f32.mrf.mxu0
        %v5102 = vadd.f32 %v5007, %v5101
        %v5103 = vpop.f32.mrf.mxu0
        %v5104 = vpop.f32.mrf.mxu0
        %v5105 = vadd.f32 %v5011, %v5104
        %v5106 = vpop.f32.mrf.mxu0
        %5107 = vmatprep.mubr.bf16.mxu0 0
        %5108 = vmatmul.mubr.bf16.gmra.mxu0 %v5065
        %v5109 = vpop.f32.mrf.mxu0
        %v5110 = vadd.f32 %v5015, %v5109
        %v5111 = vpop.f32.mrf.mxu0
        %v5112 = vpop.f32.mrf.mxu0
        %v5113 = vadd.f32 %v5019, %v5112
        %v5114 = vpop.f32.mrf.mxu0
        %5115 = vdwg.mxu0
        %v5116 = vadd.f32 %v2997, %v5102
        %v5117 = vadd.f32 %v2998, %v5105
        %v5118 = vadd.f32 %v2999, %v5110
        %v5119 = vadd.f32 %v3000, %v5113
        %s5120 = scalar_lea.vmem %s2, 64
        %v5121 = vld [vmem:[%s5120] sm:$0xff]
        %v5122 = vld [vmem:[%s5120 + $0x8] sm:$0xff]
        %v5123 = vld [vmem:[%s5120 + $0x10] sm:$0xff]
        %v5124 = vld [vmem:[%s5120 + $0x18] sm:$0xff]
        %v5125 = vpack.c.bf16 %v5117, %v5116
        %v5126 = vpack.c.bf16 %v5119, %v5118
        %5127 = vset.pattern.permute.xlu0 10
        %5128 = vperm.xlu0 %5127, %v3102
        %v5129 = vpop.permute.xlu0 %5128
        %5131 = vset.pattern.permute.xlu0 10
        %5132 = vperm.xlu0 %5131, %v3103
        %v5133 = vpop.permute.xlu0 %5132
        %5135 = vset.pattern.permute.xlu0 10
        %5136 = vperm.xlu0 %5135, %v3104
        %v5137 = vpop.permute.xlu0 %5136
        %5139 = vset.pattern.permute.xlu0 10
        %5140 = vperm.xlu0 %5139, %v3105
        %v5141 = vpop.permute.xlu0 %5140
        %v5147 = vunpack.c.l.b16 %v5121
        %v5148 = vunpack.c.l.b16 %v5122
        %v5149 = vunpack.c.l.b16 %v5123
        %v5150 = vunpack.c.l.b16 %v5124
        %v5151 = vpack.c.b16 %v5148, %v5147
        %v5152 = vpack.c.b16 %v5150, %v5149
        %5155 = vxpose.xlu0.c.b16.start [1/8] %v5151, 128
        %5156 = vxpose.xlu0.c.b16.cont [2/8] %v5152, 128
        %5157 = vxpose.xlu0.c.b16.cont [3/8] 0, 128
        %5158 = vxpose.xlu0.c.b16.cont [4/8] 0, 128
        %5159 = vxpose.xlu0.c.b16.cont [5/8] 0, 128
        %5160 = vxpose.xlu0.c.b16.cont [6/8] 0, 128
        %5161 = vxpose.xlu0.c.b16.cont [7/8] 0, 128
        %5162 = vxpose.xlu0.c.b16.end [8/8] 0, 128
        %v5163 = vpop.trf.xlu0
        %v5164 = vpop.trf.xlu0
        %v5165 = vpop.trf.xlu0
        %v5166 = vpop.trf.xlu0
        %v5167 = vpop.trf.xlu0
        %v5168 = vpop.trf.xlu0
        %v5169 = vpop.trf.xlu0
        %v5170 = vpop.trf.xlu0
        %v5172 = vsel %vm471, %v5163, 0
        %v5175 = vsel %vm471, %v5164, 0
        %5177 = vmatprep.subr.bf16.mxu0 0
        %5178 = vmatpush1.bf16.msra.mxu0 0
        %5179 = vmatprep.subr.bf16.mxu0 0
        %5180 = vmatpush1.bf16.msra.mxu0 0
        %5181 = vmatprep.subr.bf16.mxu0 0
        %5182 = vmatpush1.bf16.msra.mxu0 0
        %5183 = vmatprep.subr.bf16.mxu0 0
        %5184 = vmatpush1.bf16.msra.mxu0 0
        %5185 = vmatprep.subr.bf16.mxu0 0
        %5186 = vmatpush1.bf16.msra.mxu0 0
        %5187 = vmatprep.subr.bf16.mxu0 0
        %5188 = vmatpush1.bf16.msra.mxu0 0
        %5189 = vmatprep.subr.bf16.mxu0 0
        %5190 = vmatpush1.bf16.msra.mxu0 %v422
        %5191 = vmatprep.subr.bf16.mxu0 0
        %5192 = vmatpush1.bf16.msra.mxu0 %v421
        %5193 = vmatprep.subr.bf16.mxu0 0
        %5194 = vmatpush2.bf16.msra.mxu0 0
        %5195 = vmatprep.subr.bf16.mxu0 0
        %5196 = vmatpush2.bf16.msra.mxu0 0
        %5197 = vmatprep.subr.bf16.mxu0 0
        %5198 = vmatpush2.bf16.msra.mxu0 0
        %5199 = vmatprep.subr.bf16.mxu0 0
        %5200 = vmatpush2.bf16.msra.mxu0 0
        %5201 = vmatprep.subr.bf16.mxu0 0
        %5202 = vmatpush2.bf16.msra.mxu0 0
        %5203 = vmatprep.subr.bf16.mxu0 0
        %5204 = vmatpush2.bf16.msra.mxu0 0
        %5205 = vmatprep.subr.bf16.mxu0 0
        %5206 = vmatpush2.bf16.msra.mxu0 0
        %5207 = vmatprep.subr.bf16.mxu0 0
        %5208 = vmatpush2.bf16.msra.mxu0 0
        %5209 = vmatprep.mubr.bf16.mxu0 0
        %5210 = vmatmul.mubr.bf16.gmra.mxu0 %v5172
        %v5211 = vpop.f32.mrf.mxu0
        %v5212 = vadd.f32 %v5129, %v5211
        %v5213 = vpop.f32.mrf.mxu0
        %v5214 = vpop.f32.mrf.mxu0
        %v5215 = vadd.f32 %v5133, %v5214
        %v5216 = vpop.f32.mrf.mxu0
        %5217 = vmatprep.mubr.bf16.mxu0 0
        %5218 = vmatmul.mubr.bf16.gmra.mxu0 %v5175
        %v5219 = vpop.f32.mrf.mxu0
        %v5220 = vadd.f32 %v5137, %v5219
        %v5221 = vpop.f32.mrf.mxu0
        %v5222 = vpop.f32.mrf.mxu0
        %v5223 = vadd.f32 %v5141, %v5222
        %v5224 = vpop.f32.mrf.mxu0
        %5225 = vdwg.mxu0
        %5226 = vset.pattern.permute.xlu0 11
        %5227 = vperm.xlu0 %5226, %v3102
        %v5228 = vpop.permute.xlu0 %5227
        %5230 = vset.pattern.permute.xlu0 11
        %5231 = vperm.xlu0 %5230, %v3103
        %v5232 = vpop.permute.xlu0 %5231
        %5234 = vset.pattern.permute.xlu0 11
        %5235 = vperm.xlu0 %5234, %v3104
        %v5236 = vpop.permute.xlu0 %5235
        %5238 = vset.pattern.permute.xlu0 11
        %5239 = vperm.xlu0 %5238, %v3105
        %v5240 = vpop.permute.xlu0 %5239
        %5242 = vset.pattern.permute.xlu0 11
        %5243 = vperm.xlu0 %5242, %v3106
        %v5244 = vpop.permute.xlu0 %5243
        %5246 = vset.pattern.permute.xlu0 11
        %5247 = vperm.xlu0 %5246, %v3107
        %v5248 = vpop.permute.xlu0 %5247
        %5250 = vset.pattern.permute.xlu0 11
        %5251 = vperm.xlu0 %5250, %v3108
        %v5252 = vpop.permute.xlu0 %5251
        %5254 = vset.pattern.permute.xlu0 11
        %5255 = vperm.xlu0 %5254, %v3109
        %v5256 = vpop.permute.xlu0 %5255
        %5258 = vrot.lane.b32.xlu0 %v5151, 96
        %v5259 = vpop.permute.xlu0 %5258
        %5260 = vrot.lane.b32.xlu0 %v5152, 96
        %v5261 = vpop.permute.xlu0 %5260
        %5264 = vxpose.xlu0.c.b16.start [1/8] %v5259, 128
        %5265 = vxpose.xlu0.c.b16.cont [2/8] %v5261, 128
        %5266 = vxpose.xlu0.c.b16.cont [3/8] 0, 128
        %5267 = vxpose.xlu0.c.b16.cont [4/8] 0, 128
        %5268 = vxpose.xlu0.c.b16.cont [5/8] 0, 128
        %5269 = vxpose.xlu0.c.b16.cont [6/8] 0, 128
        %5270 = vxpose.xlu0.c.b16.cont [7/8] 0, 128
        %5271 = vxpose.xlu0.c.b16.end [8/8] 0, 128
        %v5272 = vpop.trf.xlu0
        %v5273 = vpop.trf.xlu0
        %v5274 = vpop.trf.xlu0
        %v5275 = vpop.trf.xlu0
        %v5276 = vpop.trf.xlu0
        %v5277 = vpop.trf.xlu0
        %v5278 = vpop.trf.xlu0
        %v5279 = vpop.trf.xlu0
        %v5281 = vsel %vm471, %v5272, 0
        %v5284 = vsel %vm471, %v5273, 0
        %v5287 = vsel %vm471, %v5274, 0
        %v5290 = vsel %vm471, %v5275, 0
        %5292 = vmatprep.subr.bf16.mxu0 0
        %5293 = vmatpush1.bf16.msra.mxu0 0
        %5294 = vmatprep.subr.bf16.mxu0 0
        %5295 = vmatpush1.bf16.msra.mxu0 0
        %5296 = vmatprep.subr.bf16.mxu0 0
        %5297 = vmatpush1.bf16.msra.mxu0 0
        %5298 = vmatprep.subr.bf16.mxu0 0
        %5299 = vmatpush1.bf16.msra.mxu0 0
        %5300 = vmatprep.subr.bf16.mxu0 0
        %5301 = vmatpush1.bf16.msra.mxu0 0
        %5302 = vmatprep.subr.bf16.mxu0 0
        %5303 = vmatpush1.bf16.msra.mxu0 0
        %5304 = vmatprep.subr.bf16.mxu0 0
        %5305 = vmatpush1.bf16.msra.mxu0 %v5126
        %5306 = vmatprep.subr.bf16.mxu0 0
        %5307 = vmatpush1.bf16.msra.mxu0 %v5125
        %5308 = vmatprep.subr.bf16.mxu0 0
        %5309 = vmatpush2.bf16.msra.mxu0 0
        %5310 = vmatprep.subr.bf16.mxu0 0
        %5311 = vmatpush2.bf16.msra.mxu0 0
        %5312 = vmatprep.subr.bf16.mxu0 0
        %5313 = vmatpush2.bf16.msra.mxu0 0
        %5314 = vmatprep.subr.bf16.mxu0 0
        %5315 = vmatpush2.bf16.msra.mxu0 0
        %5316 = vmatprep.subr.bf16.mxu0 0
        %5317 = vmatpush2.bf16.msra.mxu0 0
        %5318 = vmatprep.subr.bf16.mxu0 0
        %5319 = vmatpush2.bf16.msra.mxu0 0
        %5320 = vmatprep.subr.bf16.mxu0 0
        %5321 = vmatpush2.bf16.msra.mxu0 0
        %5322 = vmatprep.subr.bf16.mxu0 0
        %5323 = vmatpush2.bf16.msra.mxu0 0
        %5324 = vmatprep.mubr.bf16.mxu0 0
        %5325 = vmatmul.mubr.bf16.gmra.mxu0 %v5281
        %v5326 = vpop.f32.mrf.mxu0
        %v5327 = vadd.f32 %v5228, %v5326
        %v5328 = vpop.f32.mrf.mxu0
        %v5329 = vpop.f32.mrf.mxu0
        %v5330 = vadd.f32 %v5232, %v5329
        %v5331 = vpop.f32.mrf.mxu0
        %5332 = vmatprep.mubr.bf16.mxu0 0
        %5333 = vmatmul.mubr.bf16.gmra.mxu0 %v5284
        %v5334 = vpop.f32.mrf.mxu0
        %v5335 = vadd.f32 %v5236, %v5334
        %v5336 = vpop.f32.mrf.mxu0
        %v5337 = vpop.f32.mrf.mxu0
        %v5338 = vadd.f32 %v5240, %v5337
        %v5339 = vpop.f32.mrf.mxu0
        %5340 = vmatprep.mubr.bf16.mxu0 0
        %5341 = vmatmul.mubr.bf16.gmra.mxu0 %v5287
        %v5342 = vpop.f32.mrf.mxu0
        %v5343 = vadd.f32 %v5244, %v5342
        %v5344 = vpop.f32.mrf.mxu0
        %v5345 = vpop.f32.mrf.mxu0
        %v5346 = vadd.f32 %v5248, %v5345
        %v5347 = vpop.f32.mrf.mxu0
        %5348 = vmatprep.mubr.bf16.mxu0 0
        %5349 = vmatmul.mubr.bf16.gmra.mxu0 %v5290
        %v5350 = vpop.f32.mrf.mxu0
        %v5351 = vadd.f32 %v5252, %v5350
        %v5352 = vpop.f32.mrf.mxu0
        %v5353 = vpop.f32.mrf.mxu0
        %v5354 = vadd.f32 %v5256, %v5353
        %v5355 = vpop.f32.mrf.mxu0
        %5356 = vdwg.mxu0
        %v5357 = vpack.c.bf16 %v5212, %v5212
        %v5358 = vpack.c.bf16 %v5327, %v5327
        %v5359 = vpack.c.bf16 %v5343, %v5343
        %5360 = vxpose.xlu0.c.b16.start [1/8] %v5357, 128
        %5361 = vxpose.xlu0.c.b16.cont [2/8] 0, 128
        %5362 = vxpose.xlu0.c.b16.cont [3/8] 0, 128
        %5363 = vxpose.xlu0.c.b16.cont [4/8] 0, 128
        %5364 = vxpose.xlu0.c.b16.cont [5/8] 0, 128
        %5365 = vxpose.xlu0.c.b16.cont [6/8] 0, 128
        %5366 = vxpose.xlu0.c.b16.cont [7/8] 0, 128
        %5367 = vxpose.xlu0.c.b16.end [8/8] 0, 128
        %v5368 = vpop.trf.xlu0
        %v5369 = vpop.trf.xlu0
        %v5370 = vpop.trf.xlu0
        %v5371 = vpop.trf.xlu0
        %v5372 = vpop.trf.xlu0
        %v5373 = vpop.trf.xlu0
        %v5374 = vpop.trf.xlu0
        %v5375 = vpop.trf.xlu0
        %v5377 = vsel %vm681, %v5368, 0
        %v5380 = vsel %vm681, %v5369, 0
        %v5383 = vsel %vm681, %v5370, 0
        %v5386 = vsel %vm681, %v5371, 0
        %v5389 = vsel %vm681, %v5372, 0
        %v5392 = vsel %vm681, %v5373, 0
        %v5395 = vsel %vm681, %v5374, 0
        %v5398 = vsel %vm681, %v5375, 0
        %v5401 = vsel %vm706, %v5358, 0
        %5403 = vmatprep.subr.bf16.mxu0 0
        %5404 = vmatpush1.bf16.msra.mxu0 0
        %5405 = vmatprep.subr.bf16.mxu0 0
        %5406 = vmatpush1.bf16.msra.mxu0 0
        %5407 = vmatprep.subr.bf16.mxu0 0
        %5408 = vmatpush1.bf16.msra.mxu0 0
        %5409 = vmatprep.subr.bf16.mxu0 0
        %5410 = vmatpush1.bf16.msra.mxu0 0
        %5411 = vmatprep.subr.bf16.mxu0 0
        %5412 = vmatpush1.bf16.msra.mxu0 0
        %5413 = vmatprep.subr.bf16.mxu0 0
        %5414 = vmatpush1.bf16.msra.mxu0 0
        %5415 = vmatprep.subr.bf16.mxu0 0
        %5416 = vmatpush1.bf16.msra.mxu0 0
        %5417 = vmatprep.subr.bf16.mxu0 0
        %5418 = vmatpush1.bf16.msra.mxu0 %v5401
        %5419 = vmatprep.subr.bf16.mxu0 0
        %5420 = vmatpush2.bf16.msra.mxu0 0
        %5421 = vmatprep.subr.bf16.mxu0 0
        %5422 = vmatpush2.bf16.msra.mxu0 0
        %5423 = vmatprep.subr.bf16.mxu0 0
        %5424 = vmatpush2.bf16.msra.mxu0 0
        %5425 = vmatprep.subr.bf16.mxu0 0
        %5426 = vmatpush2.bf16.msra.mxu0 0
        %5427 = vmatprep.subr.bf16.mxu0 0
        %5428 = vmatpush2.bf16.msra.mxu0 0
        %5429 = vmatprep.subr.bf16.mxu0 0
        %5430 = vmatpush2.bf16.msra.mxu0 0
        %5431 = vmatprep.subr.bf16.mxu0 0
        %5432 = vmatpush2.bf16.msra.mxu0 0
        %5433 = vmatprep.subr.bf16.mxu0 0
        %5434 = vmatpush2.bf16.msra.mxu0 0
        %5435 = vmatprep.mubr.bf16.mxu0 0
        %5436 = vmatmul.mubr.bf16.gmra.mxu0 %v5377
        %v5437 = vpop.f32.mrf.mxu0
        %v5438 = vadd.f32 0.0, %v5437
        %v5439 = vpop.f32.mrf.mxu0
        %v5440 = vpop.f32.mrf.mxu0
        %v5441 = vadd.f32 0.0, %v5440
        %v5442 = vpop.f32.mrf.mxu0
        %5443 = vmatprep.mubr.bf16.mxu0 0
        %5444 = vmatmul.mubr.bf16.gmra.mxu0 %v5380
        %v5445 = vpop.f32.mrf.mxu0
        %v5446 = vadd.f32 0.0, %v5445
        %v5447 = vpop.f32.mrf.mxu0
        %v5448 = vpop.f32.mrf.mxu0
        %v5449 = vadd.f32 0.0, %v5448
        %v5450 = vpop.f32.mrf.mxu0
        %5451 = vmatprep.mubr.bf16.mxu0 0
        %5452 = vmatmul.mubr.bf16.gmra.mxu0 %v5383
        %v5453 = vpop.f32.mrf.mxu0
        %v5454 = vadd.f32 0.0, %v5453
        %v5455 = vpop.f32.mrf.mxu0
        %v5456 = vpop.f32.mrf.mxu0
        %v5457 = vadd.f32 0.0, %v5456
        %v5458 = vpop.f32.mrf.mxu0
        %5459 = vmatprep.mubr.bf16.mxu0 0
        %5460 = vmatmul.mubr.bf16.gmra.mxu0 %v5386
        %v5461 = vpop.f32.mrf.mxu0
        %v5462 = vadd.f32 0.0, %v5461
        %v5463 = vpop.f32.mrf.mxu0
        %v5464 = vpop.f32.mrf.mxu0
        %v5465 = vadd.f32 0.0, %v5464
        %v5466 = vpop.f32.mrf.mxu0
        %5467 = vmatprep.mubr.bf16.mxu0 0
        %5468 = vmatmul.mubr.bf16.gmra.mxu0 %v5389
        %v5469 = vpop.f32.mrf.mxu0
        %v5470 = vadd.f32 0.0, %v5469
        %v5471 = vpop.f32.mrf.mxu0
        %v5472 = vpop.f32.mrf.mxu0
        %v5473 = vadd.f32 0.0, %v5472
        %v5474 = vpop.f32.mrf.mxu0
        %5475 = vmatprep.mubr.bf16.mxu0 0
        %5476 = vmatmul.mubr.bf16.gmra.mxu0 %v5392
        %v5477 = vpop.f32.mrf.mxu0
        %v5478 = vadd.f32 0.0, %v5477
        %v5479 = vpop.f32.mrf.mxu0
        %v5480 = vpop.f32.mrf.mxu0
        %v5481 = vadd.f32 0.0, %v5480
        %v5482 = vpop.f32.mrf.mxu0
        %5483 = vmatprep.mubr.bf16.mxu0 0
        %5484 = vmatmul.mubr.bf16.gmra.mxu0 %v5395
        %v5485 = vpop.f32.mrf.mxu0
        %v5486 = vadd.f32 0.0, %v5485
        %v5487 = vpop.f32.mrf.mxu0
        %v5488 = vpop.f32.mrf.mxu0
        %v5489 = vadd.f32 0.0, %v5488
        %v5490 = vpop.f32.mrf.mxu0
        %5491 = vmatprep.mubr.bf16.mxu0 0
        %5492 = vmatmul.mubr.bf16.gmra.mxu0 %v5398
        %v5493 = vpop.f32.mrf.mxu0
        %v5494 = vadd.f32 0.0, %v5493
        %v5495 = vpop.f32.mrf.mxu0
        %v5496 = vpop.f32.mrf.mxu0
        %v5497 = vadd.f32 0.0, %v5496
        %v5498 = vpop.f32.mrf.mxu0
        %5499 = vdwg.mxu0
        %5500 = vmax.xlane.f32.xlu0 %v5438
        %v5501 = vpop.xlane.xlu0 %5500
        %5502 = vmax.xlane.f32.xlu0 %v5441
        %v5503 = vpop.xlane.xlu0 %5502
        %5504 = vmax.xlane.f32.xlu0 %v5446
        %v5505 = vpop.xlane.xlu0 %5504
        %5506 = vmax.xlane.f32.xlu0 %v5449
        %v5507 = vpop.xlane.xlu0 %5506
        %5508 = vmax.xlane.f32.xlu0 %v5454
        %v5509 = vpop.xlane.xlu0 %5508
        %5510 = vmax.xlane.f32.xlu0 %v5457
        %v5511 = vpop.xlane.xlu0 %5510
        %5512 = vmax.xlane.f32.xlu0 %v5462
        %v5513 = vpop.xlane.xlu0 %5512
        %5514 = vmax.xlane.f32.xlu0 %v5465
        %v5515 = vpop.xlane.xlu0 %5514
        %5516 = vmax.xlane.f32.xlu0 %v5470
        %v5517 = vpop.xlane.xlu0 %5516
        %5518 = vmax.xlane.f32.xlu0 %v5473
        %v5519 = vpop.xlane.xlu0 %5518
        %5520 = vmax.xlane.f32.xlu0 %v5478
        %v5521 = vpop.xlane.xlu0 %5520
        %5522 = vmax.xlane.f32.xlu0 %v5481
        %v5523 = vpop.xlane.xlu0 %5522
        %5524 = vmax.xlane.f32.xlu0 %v5486
        %v5525 = vpop.xlane.xlu0 %5524
        %5526 = vmax.xlane.f32.xlu0 %v5489
        %v5527 = vpop.xlane.xlu0 %5526
        %5528 = vmax.xlane.f32.xlu0 %v5494
        %v5529 = vpop.xlane.xlu0 %5528
        %5530 = vmax.xlane.f32.xlu0 %v5497
        %v5531 = vpop.xlane.xlu0 %5530
        %v5532 = vsub.f32 %v5438, %v5501
        %v5533 = vsub.f32 %v5441, %v5503
        %v5534 = vsub.f32 %v5446, %v5505
        %v5535 = vsub.f32 %v5449, %v5507
        %v5536 = vsub.f32 %v5454, %v5509
        %v5537 = vsub.f32 %v5457, %v5511
        %v5538 = vsub.f32 %v5462, %v5513
        %v5539 = vsub.f32 %v5465, %v5515
        %v5540 = vsub.f32 %v5470, %v5517
        %v5541 = vsub.f32 %v5473, %v5519
        %v5542 = vsub.f32 %v5478, %v5521
        %v5543 = vsub.f32 %v5481, %v5523
        %v5544 = vsub.f32 %v5486, %v5525
        %v5545 = vsub.f32 %v5489, %v5527
        %v5546 = vsub.f32 %v5494, %v5529
        %v5547 = vsub.f32 %v5497, %v5531
        %v5548 = vmul.f32 %v5532, 1.442695
        %v5549 = vpow.pop %v5548
        %v5550 = vmul.f32 %v5533, 1.442695
        %v5551 = vpow.pop %v5550
        %v5552 = vmul.f32 %v5534, 1.442695
        %v5553 = vpow.pop %v5552
        %v5554 = vmul.f32 %v5535, 1.442695
        %v5555 = vpow.pop %v5554
        %v5556 = vmul.f32 %v5536, 1.442695
        %v5557 = vpow.pop %v5556
        %v5558 = vmul.f32 %v5537, 1.442695
        %v5559 = vpow.pop %v5558
        %v5560 = vmul.f32 %v5538, 1.442695
        %v5561 = vpow.pop %v5560
        %v5562 = vmul.f32 %v5539, 1.442695
        %v5563 = vpow.pop %v5562
        %v5564 = vmul.f32 %v5540, 1.442695
        %v5565 = vpow.pop %v5564
        %v5566 = vmul.f32 %v5541, 1.442695
        %v5567 = vpow.pop %v5566
        %v5568 = vmul.f32 %v5542, 1.442695
        %v5569 = vpow.pop %v5568
        %v5570 = vmul.f32 %v5543, 1.442695
        %v5571 = vpow.pop %v5570
        %v5572 = vmul.f32 %v5544, 1.442695
        %v5573 = vpow.pop %v5572
        %v5574 = vmul.f32 %v5545, 1.442695
        %v5575 = vpow.pop %v5574
        %v5576 = vmul.f32 %v5546, 1.442695
        %v5577 = vpow.pop %v5576
        %v5578 = vmul.f32 %v5547, 1.442695
        %v5579 = vpow.pop %v5578
        %5580 = vadd.xlane.f32.xlu0 %v5549
        %v5581 = vpop.xlane.xlu0 %5580
        %5582 = vadd.xlane.f32.xlu0 %v5551
        %v5583 = vpop.xlane.xlu0 %5582
        %5584 = vadd.xlane.f32.xlu0 %v5553
        %v5585 = vpop.xlane.xlu0 %5584
        %5586 = vadd.xlane.f32.xlu0 %v5555
        %v5587 = vpop.xlane.xlu0 %5586
        %5588 = vadd.xlane.f32.xlu0 %v5557
        %v5589 = vpop.xlane.xlu0 %5588
        %5590 = vadd.xlane.f32.xlu0 %v5559
        %v5591 = vpop.xlane.xlu0 %5590
        %5592 = vadd.xlane.f32.xlu0 %v5561
        %v5593 = vpop.xlane.xlu0 %5592
        %5594 = vadd.xlane.f32.xlu0 %v5563
        %v5595 = vpop.xlane.xlu0 %5594
        %5596 = vadd.xlane.f32.xlu0 %v5565
        %v5597 = vpop.xlane.xlu0 %5596
        %5598 = vadd.xlane.f32.xlu0 %v5567
        %v5599 = vpop.xlane.xlu0 %5598
        %5600 = vadd.xlane.f32.xlu0 %v5569
        %v5601 = vpop.xlane.xlu0 %5600
        %5602 = vadd.xlane.f32.xlu0 %v5571
        %v5603 = vpop.xlane.xlu0 %5602
        %5604 = vadd.xlane.f32.xlu0 %v5573
        %v5605 = vpop.xlane.xlu0 %5604
        %5606 = vadd.xlane.f32.xlu0 %v5575
        %v5607 = vpop.xlane.xlu0 %5606
        %5608 = vadd.xlane.f32.xlu0 %v5577
        %v5609 = vpop.xlane.xlu0 %5608
        %5610 = vadd.xlane.f32.xlu0 %v5579
        %v5611 = vpop.xlane.xlu0 %5610
        %v5612 = vrcp.pop %v5581
        %v5613 = vrcp.pop %v5583
        %v5614 = vrcp.pop %v5585
        %v5615 = vrcp.pop %v5587
        %v5616 = vrcp.pop %v5589
        %v5617 = vrcp.pop %v5591
        %v5618 = vrcp.pop %v5593
        %v5619 = vrcp.pop %v5595
        %v5620 = vrcp.pop %v5597
        %v5621 = vrcp.pop %v5599
        %v5622 = vrcp.pop %v5601
        %v5623 = vrcp.pop %v5603
        %v5624 = vrcp.pop %v5605
        %v5625 = vrcp.pop %v5607
        %v5626 = vrcp.pop %v5609
        %v5627 = vrcp.pop %v5611
        %v5628 = vmul.f32 %v5549, %v5612
        %v5629 = vmul.f32 %v5551, %v5613
        %v5630 = vmul.f32 %v5553, %v5614
        %v5631 = vmul.f32 %v5555, %v5615
        %v5632 = vmul.f32 %v5557, %v5616
        %v5633 = vmul.f32 %v5559, %v5617
        %v5634 = vmul.f32 %v5561, %v5618
        %v5635 = vmul.f32 %v5563, %v5619
        %v5636 = vmul.f32 %v5565, %v5620
        %v5637 = vmul.f32 %v5567, %v5621
        %v5638 = vmul.f32 %v5569, %v5622
        %v5639 = vmul.f32 %v5571, %v5623
        %v5640 = vmul.f32 %v5573, %v5624
        %v5641 = vmul.f32 %v5575, %v5625
        %v5642 = vmul.f32 %v5577, %v5626
        %v5643 = vmul.f32 %v5579, %v5627
        %v5644 = vpack.c.bf16 %v5629, %v5628
        %v5645 = vpack.c.bf16 %v5631, %v5630
        %v5646 = vpack.c.bf16 %v5633, %v5632
        %v5647 = vpack.c.bf16 %v5635, %v5634
        %v5648 = vpack.c.bf16 %v5637, %v5636
        %v5649 = vpack.c.bf16 %v5639, %v5638
        %v5650 = vpack.c.bf16 %v5641, %v5640
        %v5651 = vpack.c.bf16 %v5643, %v5642
        %5652 = vmatprep.subr.bf16.mxu0 0
        %5653 = vmatpush1.bf16.xpose.msra.mxu0 %v5651
        %5654 = vmatprep.subr.bf16.mxu0 0
        %5655 = vmatpush1.bf16.xpose.msra.mxu0 %v5650
        %5656 = vmatprep.subr.bf16.mxu0 0
        %5657 = vmatpush1.bf16.xpose.msra.mxu0 %v5649
        %5658 = vmatprep.subr.bf16.mxu0 0
        %5659 = vmatpush1.bf16.xpose.msra.mxu0 %v5648
        %5660 = vmatprep.subr.bf16.mxu0 0
        %5661 = vmatpush1.bf16.xpose.msra.mxu0 %v5647
        %5662 = vmatprep.subr.bf16.mxu0 0
        %5663 = vmatpush1.bf16.xpose.msra.mxu0 %v5646
        %5664 = vmatprep.subr.bf16.mxu0 0
        %5665 = vmatpush1.bf16.xpose.msra.mxu0 %v5645
        %5666 = vmatprep.subr.bf16.mxu0 0
        %5667 = vmatpush1.bf16.xpose.msra.mxu0 %v5644
        %5668 = vmatprep.subr.bf16.mxu0 0
        %5669 = vmatpush2.bf16.xpose.msra.mxu0 0
        %5670 = vmatprep.subr.bf16.mxu0 0
        %5671 = vmatpush2.bf16.xpose.msra.mxu0 0
        %5672 = vmatprep.subr.bf16.mxu0 0
        %5673 = vmatpush2.bf16.xpose.msra.mxu0 0
        %5674 = vmatprep.subr.bf16.mxu0 0
        %5675 = vmatpush2.bf16.xpose.msra.mxu0 0
        %5676 = vmatprep.subr.bf16.mxu0 0
        %5677 = vmatpush2.bf16.xpose.msra.mxu0 0
        %5678 = vmatprep.subr.bf16.mxu0 0
        %5679 = vmatpush2.bf16.xpose.msra.mxu0 0
        %5680 = vmatprep.subr.bf16.mxu0 0
        %5681 = vmatpush2.bf16.xpose.msra.mxu0 0
        %5682 = vmatprep.subr.bf16.mxu0 0
        %5683 = vmatpush2.bf16.xpose.msra.mxu0 0
        %5684 = vmatprep.mubr.bf16.mxu0 0
        %5685 = vmatmul.mubr.bf16.gmra.mxu0 %v5359
        %v5686 = vpop.f32.mrf.mxu0
        %v5687 = vadd.f32 0.0, %v5686
        %v5688 = vpop.f32.mrf.mxu0
        %v5689 = vpop.f32.mrf.mxu0
        %v5690 = vpop.f32.mrf.mxu0
        %5691 = vdwg.mxu0
        %v5692 = vpack.c.bf16 %v5215, %v5215
        %v5693 = vpack.c.bf16 %v5330, %v5330
        %v5694 = vpack.c.bf16 %v5346, %v5346
        %5695 = vxpose.xlu0.c.b16.start [1/8] %v5692, 128
        %5696 = vxpose.xlu0.c.b16.cont [2/8] 0, 128
        %5697 = vxpose.xlu0.c.b16.cont [3/8] 0, 128
        %5698 = vxpose.xlu0.c.b16.cont [4/8] 0, 128
        %5699 = vxpose.xlu0.c.b16.cont [5/8] 0, 128
        %5700 = vxpose.xlu0.c.b16.cont [6/8] 0, 128
        %5701 = vxpose.xlu0.c.b16.cont [7/8] 0, 128
        %5702 = vxpose.xlu0.c.b16.end [8/8] 0, 128
        %v5703 = vpop.trf.xlu0
        %v5704 = vpop.trf.xlu0
        %v5705 = vpop.trf.xlu0
        %v5706 = vpop.trf.xlu0
        %v5707 = vpop.trf.xlu0
        %v5708 = vpop.trf.xlu0
        %v5709 = vpop.trf.xlu0
        %v5710 = vpop.trf.xlu0
        %v5712 = vsel %vm681, %v5703, 0
        %v5715 = vsel %vm681, %v5704, 0
        %v5718 = vsel %vm681, %v5705, 0
        %v5721 = vsel %vm681, %v5706, 0
        %v5724 = vsel %vm681, %v5707, 0
        %v5727 = vsel %vm681, %v5708, 0
        %v5730 = vsel %vm681, %v5709, 0
        %v5733 = vsel %vm681, %v5710, 0
        %v5736 = vsel %vm706, %v5693, 0
        %5738 = vmatprep.subr.bf16.mxu0 0
        %5739 = vmatpush1.bf16.msra.mxu0 0
        %5740 = vmatprep.subr.bf16.mxu0 0
        %5741 = vmatpush1.bf16.msra.mxu0 0
        %5742 = vmatprep.subr.bf16.mxu0 0
        %5743 = vmatpush1.bf16.msra.mxu0 0
        %5744 = vmatprep.subr.bf16.mxu0 0
        %5745 = vmatpush1.bf16.msra.mxu0 0
        %5746 = vmatprep.subr.bf16.mxu0 0
        %5747 = vmatpush1.bf16.msra.mxu0 0
        %5748 = vmatprep.subr.bf16.mxu0 0
        %5749 = vmatpush1.bf16.msra.mxu0 0
        %5750 = vmatprep.subr.bf16.mxu0 0
        %5751 = vmatpush1.bf16.msra.mxu0 0
        %5752 = vmatprep.subr.bf16.mxu0 0
        %5753 = vmatpush1.bf16.msra.mxu0 %v5736
        %5754 = vmatprep.subr.bf16.mxu0 0
        %5755 = vmatpush2.bf16.msra.mxu0 0
        %5756 = vmatprep.subr.bf16.mxu0 0
        %5757 = vmatpush2.bf16.msra.mxu0 0
        %5758 = vmatprep.subr.bf16.mxu0 0
        %5759 = vmatpush2.bf16.msra.mxu0 0
        %5760 = vmatprep.subr.bf16.mxu0 0
        %5761 = vmatpush2.bf16.msra.mxu0 0
        %5762 = vmatprep.subr.bf16.mxu0 0
        %5763 = vmatpush2.bf16.msra.mxu0 0
        %5764 = vmatprep.subr.bf16.mxu0 0
        %5765 = vmatpush2.bf16.msra.mxu0 0
        %5766 = vmatprep.subr.bf16.mxu0 0
        %5767 = vmatpush2.bf16.msra.mxu0 0
        %5768 = vmatprep.subr.bf16.mxu0 0
        %5769 = vmatpush2.bf16.msra.mxu0 0
        %5770 = vmatprep.mubr.bf16.mxu0 0
        %5771 = vmatmul.mubr.bf16.gmra.mxu0 %v5712
        %v5772 = vpop.f32.mrf.mxu0
        %v5773 = vadd.f32 0.0, %v5772
        %v5774 = vpop.f32.mrf.mxu0
        %v5775 = vpop.f32.mrf.mxu0
        %v5776 = vadd.f32 0.0, %v5775
        %v5777 = vpop.f32.mrf.mxu0
        %5778 = vmatprep.mubr.bf16.mxu0 0
        %5779 = vmatmul.mubr.bf16.gmra.mxu0 %v5715
        %v5780 = vpop.f32.mrf.mxu0
        %v5781 = vadd.f32 0.0, %v5780
        %v5782 = vpop.f32.mrf.mxu0
        %v5783 = vpop.f32.mrf.mxu0
        %v5784 = vadd.f32 0.0, %v5783
        %v5785 = vpop.f32.mrf.mxu0
        %5786 = vmatprep.mubr.bf16.mxu0 0
        %5787 = vmatmul.mubr.bf16.gmra.mxu0 %v5718
        %v5788 = vpop.f32.mrf.mxu0
        %v5789 = vadd.f32 0.0, %v5788
        %v5790 = vpop.f32.mrf.mxu0
        %v5791 = vpop.f32.mrf.mxu0
        %v5792 = vadd.f32 0.0, %v5791
        %v5793 = vpop.f32.mrf.mxu0
        %5794 = vmatprep.mubr.bf16.mxu0 0
        %5795 = vmatmul.mubr.bf16.gmra.mxu0 %v5721
        %v5796 = vpop.f32.mrf.mxu0
        %v5797 = vadd.f32 0.0, %v5796
        %v5798 = vpop.f32.mrf.mxu0
        %v5799 = vpop.f32.mrf.mxu0
        %v5800 = vadd.f32 0.0, %v5799
        %v5801 = vpop.f32.mrf.mxu0
        %5802 = vmatprep.mubr.bf16.mxu0 0
        %5803 = vmatmul.mubr.bf16.gmra.mxu0 %v5724
        %v5804 = vpop.f32.mrf.mxu0
        %v5805 = vadd.f32 0.0, %v5804
        %v5806 = vpop.f32.mrf.mxu0
        %v5807 = vpop.f32.mrf.mxu0
        %v5808 = vadd.f32 0.0, %v5807
        %v5809 = vpop.f32.mrf.mxu0
        %5810 = vmatprep.mubr.bf16.mxu0 0
        %5811 = vmatmul.mubr.bf16.gmra.mxu0 %v5727
        %v5812 = vpop.f32.mrf.mxu0
        %v5813 = vadd.f32 0.0, %v5812
        %v5814 = vpop.f32.mrf.mxu0
        %v5815 = vpop.f32.mrf.mxu0
        %v5816 = vadd.f32 0.0, %v5815
        %v5817 = vpop.f32.mrf.mxu0
        %5818 = vmatprep.mubr.bf16.mxu0 0
        %5819 = vmatmul.mubr.bf16.gmra.mxu0 %v5730
        %v5820 = vpop.f32.mrf.mxu0
        %v5821 = vadd.f32 0.0, %v5820
        %v5822 = vpop.f32.mrf.mxu0
        %v5823 = vpop.f32.mrf.mxu0
        %v5824 = vadd.f32 0.0, %v5823
        %v5825 = vpop.f32.mrf.mxu0
        %5826 = vmatprep.mubr.bf16.mxu0 0
        %5827 = vmatmul.mubr.bf16.gmra.mxu0 %v5733
        %v5828 = vpop.f32.mrf.mxu0
        %v5829 = vadd.f32 0.0, %v5828
        %v5830 = vpop.f32.mrf.mxu0
        %v5831 = vpop.f32.mrf.mxu0
        %v5832 = vadd.f32 0.0, %v5831
        %v5833 = vpop.f32.mrf.mxu0
        %5834 = vdwg.mxu0
        %5835 = vmax.xlane.f32.xlu0 %v5773
        %v5836 = vpop.xlane.xlu0 %5835
        %5837 = vmax.xlane.f32.xlu0 %v5776
        %v5838 = vpop.xlane.xlu0 %5837
        %5839 = vmax.xlane.f32.xlu0 %v5781
        %v5840 = vpop.xlane.xlu0 %5839
        %5841 = vmax.xlane.f32.xlu0 %v5784
        %v5842 = vpop.xlane.xlu0 %5841
        %5843 = vmax.xlane.f32.xlu0 %v5789
        %v5844 = vpop.xlane.xlu0 %5843
        %5845 = vmax.xlane.f32.xlu0 %v5792
        %v5846 = vpop.xlane.xlu0 %5845
        %5847 = vmax.xlane.f32.xlu0 %v5797
        %v5848 = vpop.xlane.xlu0 %5847
        %5849 = vmax.xlane.f32.xlu0 %v5800
        %v5850 = vpop.xlane.xlu0 %5849
        %5851 = vmax.xlane.f32.xlu0 %v5805
        %v5852 = vpop.xlane.xlu0 %5851
        %5853 = vmax.xlane.f32.xlu0 %v5808
        %v5854 = vpop.xlane.xlu0 %5853
        %5855 = vmax.xlane.f32.xlu0 %v5813
        %v5856 = vpop.xlane.xlu0 %5855
        %5857 = vmax.xlane.f32.xlu0 %v5816
        %v5858 = vpop.xlane.xlu0 %5857
        %5859 = vmax.xlane.f32.xlu0 %v5821
        %v5860 = vpop.xlane.xlu0 %5859
        %5861 = vmax.xlane.f32.xlu0 %v5824
        %v5862 = vpop.xlane.xlu0 %5861
        %5863 = vmax.xlane.f32.xlu0 %v5829
        %v5864 = vpop.xlane.xlu0 %5863
        %5865 = vmax.xlane.f32.xlu0 %v5832
        %v5866 = vpop.xlane.xlu0 %5865
        %v5867 = vsub.f32 %v5773, %v5836
        %v5868 = vsub.f32 %v5776, %v5838
        %v5869 = vsub.f32 %v5781, %v5840
        %v5870 = vsub.f32 %v5784, %v5842
        %v5871 = vsub.f32 %v5789, %v5844
        %v5872 = vsub.f32 %v5792, %v5846
        %v5873 = vsub.f32 %v5797, %v5848
        %v5874 = vsub.f32 %v5800, %v5850
        %v5875 = vsub.f32 %v5805, %v5852
        %v5876 = vsub.f32 %v5808, %v5854
        %v5877 = vsub.f32 %v5813, %v5856
        %v5878 = vsub.f32 %v5816, %v5858
        %v5879 = vsub.f32 %v5821, %v5860
        %v5880 = vsub.f32 %v5824, %v5862
        %v5881 = vsub.f32 %v5829, %v5864
        %v5882 = vsub.f32 %v5832, %v5866
        %v5883 = vmul.f32 %v5867, 1.442695
        %v5884 = vpow.pop %v5883
        %v5885 = vmul.f32 %v5868, 1.442695
        %v5886 = vpow.pop %v5885
        %v5887 = vmul.f32 %v5869, 1.442695
        %v5888 = vpow.pop %v5887
        %v5889 = vmul.f32 %v5870, 1.442695
        %v5890 = vpow.pop %v5889
        %v5891 = vmul.f32 %v5871, 1.442695
        %v5892 = vpow.pop %v5891
        %v5893 = vmul.f32 %v5872, 1.442695
        %v5894 = vpow.pop %v5893
        %v5895 = vmul.f32 %v5873, 1.442695
        %v5896 = vpow.pop %v5895
        %v5897 = vmul.f32 %v5874, 1.442695
        %v5898 = vpow.pop %v5897
        %v5899 = vmul.f32 %v5875, 1.442695
        %v5900 = vpow.pop %v5899
        %v5901 = vmul.f32 %v5876, 1.442695
        %v5902 = vpow.pop %v5901
        %v5903 = vmul.f32 %v5877, 1.442695
        %v5904 = vpow.pop %v5903
        %v5905 = vmul.f32 %v5878, 1.442695
        %v5906 = vpow.pop %v5905
        %v5907 = vmul.f32 %v5879, 1.442695
        %v5908 = vpow.pop %v5907
        %v5909 = vmul.f32 %v5880, 1.442695
        %v5910 = vpow.pop %v5909
        %v5911 = vmul.f32 %v5881, 1.442695
        %v5912 = vpow.pop %v5911
        %v5913 = vmul.f32 %v5882, 1.442695
        %v5914 = vpow.pop %v5913
        %5915 = vadd.xlane.f32.xlu0 %v5884
        %v5916 = vpop.xlane.xlu0 %5915
        %5917 = vadd.xlane.f32.xlu0 %v5886
        %v5918 = vpop.xlane.xlu0 %5917
        %5919 = vadd.xlane.f32.xlu0 %v5888
        %v5920 = vpop.xlane.xlu0 %5919
        %5921 = vadd.xlane.f32.xlu0 %v5890
        %v5922 = vpop.xlane.xlu0 %5921
        %5923 = vadd.xlane.f32.xlu0 %v5892
        %v5924 = vpop.xlane.xlu0 %5923
        %5925 = vadd.xlane.f32.xlu0 %v5894
        %v5926 = vpop.xlane.xlu0 %5925
        %5927 = vadd.xlane.f32.xlu0 %v5896
        %v5928 = vpop.xlane.xlu0 %5927
        %5929 = vadd.xlane.f32.xlu0 %v5898
        %v5930 = vpop.xlane.xlu0 %5929
        %5931 = vadd.xlane.f32.xlu0 %v5900
        %v5932 = vpop.xlane.xlu0 %5931
        %5933 = vadd.xlane.f32.xlu0 %v5902
        %v5934 = vpop.xlane.xlu0 %5933
        %5935 = vadd.xlane.f32.xlu0 %v5904
        %v5936 = vpop.xlane.xlu0 %5935
        %5937 = vadd.xlane.f32.xlu0 %v5906
        %v5938 = vpop.xlane.xlu0 %5937
        %5939 = vadd.xlane.f32.xlu0 %v5908
        %v5940 = vpop.xlane.xlu0 %5939
        %5941 = vadd.xlane.f32.xlu0 %v5910
        %v5942 = vpop.xlane.xlu0 %5941
        %5943 = vadd.xlane.f32.xlu0 %v5912
        %v5944 = vpop.xlane.xlu0 %5943
        %5945 = vadd.xlane.f32.xlu0 %v5914
        %v5946 = vpop.xlane.xlu0 %5945
        %v5947 = vrcp.pop %v5916
        %v5948 = vrcp.pop %v5918
        %v5949 = vrcp.pop %v5920
        %v5950 = vrcp.pop %v5922
        %v5951 = vrcp.pop %v5924
        %v5952 = vrcp.pop %v5926
        %v5953 = vrcp.pop %v5928
        %v5954 = vrcp.pop %v5930
        %v5955 = vrcp.pop %v5932
        %v5956 = vrcp.pop %v5934
        %v5957 = vrcp.pop %v5936
        %v5958 = vrcp.pop %v5938
        %v5959 = vrcp.pop %v5940
        %v5960 = vrcp.pop %v5942
        %v5961 = vrcp.pop %v5944
        %v5962 = vrcp.pop %v5946
        %v5963 = vmul.f32 %v5884, %v5947
        %v5964 = vmul.f32 %v5886, %v5948
        %v5965 = vmul.f32 %v5888, %v5949
        %v5966 = vmul.f32 %v5890, %v5950
        %v5967 = vmul.f32 %v5892, %v5951
        %v5968 = vmul.f32 %v5894, %v5952
        %v5969 = vmul.f32 %v5896, %v5953
        %v5970 = vmul.f32 %v5898, %v5954
        %v5971 = vmul.f32 %v5900, %v5955
        %v5972 = vmul.f32 %v5902, %v5956
        %v5973 = vmul.f32 %v5904, %v5957
        %v5974 = vmul.f32 %v5906, %v5958
        %v5975 = vmul.f32 %v5908, %v5959
        %v5976 = vmul.f32 %v5910, %v5960
        %v5977 = vmul.f32 %v5912, %v5961
        %v5978 = vmul.f32 %v5914, %v5962
        %v5979 = vpack.c.bf16 %v5964, %v5963
        %v5980 = vpack.c.bf16 %v5966, %v5965
        %v5981 = vpack.c.bf16 %v5968, %v5967
        %v5982 = vpack.c.bf16 %v5970, %v5969
        %v5983 = vpack.c.bf16 %v5972, %v5971
        %v5984 = vpack.c.bf16 %v5974, %v5973
        %v5985 = vpack.c.bf16 %v5976, %v5975
        %v5986 = vpack.c.bf16 %v5978, %v5977
        %5987 = vmatprep.subr.bf16.mxu0 0
        %5988 = vmatpush1.bf16.xpose.msra.mxu0 %v5986
        %5989 = vmatprep.subr.bf16.mxu0 0
        %5990 = vmatpush1.bf16.xpose.msra.mxu0 %v5985
        %5991 = vmatprep.subr.bf16.mxu0 0
        %5992 = vmatpush1.bf16.xpose.msra.mxu0 %v5984
        %5993 = vmatprep.subr.bf16.mxu0 0
        %5994 = vmatpush1.bf16.xpose.msra.mxu0 %v5983
        %5995 = vmatprep.subr.bf16.mxu0 0
        %5996 = vmatpush1.bf16.xpose.msra.mxu0 %v5982
        %5997 = vmatprep.subr.bf16.mxu0 0
        %5998 = vmatpush1.bf16.xpose.msra.mxu0 %v5981
        %5999 = vmatprep.subr.bf16.mxu0 0
        %6000 = vmatpush1.bf16.xpose.msra.mxu0 %v5980
        %6001 = vmatprep.subr.bf16.mxu0 0
        %6002 = vmatpush1.bf16.xpose.msra.mxu0 %v5979
        %6003 = vmatprep.subr.bf16.mxu0 0
        %6004 = vmatpush2.bf16.xpose.msra.mxu0 0
        %6005 = vmatprep.subr.bf16.mxu0 0
        %6006 = vmatpush2.bf16.xpose.msra.mxu0 0
        %6007 = vmatprep.subr.bf16.mxu0 0
        %6008 = vmatpush2.bf16.xpose.msra.mxu0 0
        %6009 = vmatprep.subr.bf16.mxu0 0
        %6010 = vmatpush2.bf16.xpose.msra.mxu0 0
        %6011 = vmatprep.subr.bf16.mxu0 0
        %6012 = vmatpush2.bf16.xpose.msra.mxu0 0
        %6013 = vmatprep.subr.bf16.mxu0 0
        %6014 = vmatpush2.bf16.xpose.msra.mxu0 0
        %6015 = vmatprep.subr.bf16.mxu0 0
        %6016 = vmatpush2.bf16.xpose.msra.mxu0 0
        %6017 = vmatprep.subr.bf16.mxu0 0
        %6018 = vmatpush2.bf16.xpose.msra.mxu0 0
        %6019 = vmatprep.mubr.bf16.mxu0 0
        %6020 = vmatmul.mubr.bf16.gmra.mxu0 %v5694
        %v6021 = vpop.f32.mrf.mxu0
        %v6022 = vadd.f32 0.0, %v6021
        %v6023 = vpop.f32.mrf.mxu0
        %v6024 = vpop.f32.mrf.mxu0
        %v6025 = vpop.f32.mrf.mxu0
        %6026 = vdwg.mxu0
        %v6027 = vpack.c.bf16 %v5220, %v5220
        %v6028 = vpack.c.bf16 %v5335, %v5335
        %v6029 = vpack.c.bf16 %v5351, %v5351
        %6030 = vxpose.xlu0.c.b16.start [1/8] %v6027, 128
        %6031 = vxpose.xlu0.c.b16.cont [2/8] 0, 128
        %6032 = vxpose.xlu0.c.b16.cont [3/8] 0, 128
        %6033 = vxpose.xlu0.c.b16.cont [4/8] 0, 128
        %6034 = vxpose.xlu0.c.b16.cont [5/8] 0, 128
        %6035 = vxpose.xlu0.c.b16.cont [6/8] 0, 128
        %6036 = vxpose.xlu0.c.b16.cont [7/8] 0, 128
        %6037 = vxpose.xlu0.c.b16.end [8/8] 0, 128
        %v6038 = vpop.trf.xlu0
        %v6039 = vpop.trf.xlu0
        %v6040 = vpop.trf.xlu0
        %v6041 = vpop.trf.xlu0
        %v6042 = vpop.trf.xlu0
        %v6043 = vpop.trf.xlu0
        %v6044 = vpop.trf.xlu0
        %v6045 = vpop.trf.xlu0
        %v6047 = vsel %vm681, %v6038, 0
        %v6050 = vsel %vm681, %v6039, 0
        %v6053 = vsel %vm681, %v6040, 0
        %v6056 = vsel %vm681, %v6041, 0
        %v6059 = vsel %vm681, %v6042, 0
        %v6062 = vsel %vm681, %v6043, 0
        %v6065 = vsel %vm681, %v6044, 0
        %v6068 = vsel %vm681, %v6045, 0
        %v6071 = vsel %vm706, %v6028, 0
        %6073 = vmatprep.subr.bf16.mxu0 0
        %6074 = vmatpush1.bf16.msra.mxu0 0
        %6075 = vmatprep.subr.bf16.mxu0 0
        %6076 = vmatpush1.bf16.msra.mxu0 0
        %6077 = vmatprep.subr.bf16.mxu0 0
        %6078 = vmatpush1.bf16.msra.mxu0 0
        %6079 = vmatprep.subr.bf16.mxu0 0
        %6080 = vmatpush1.bf16.msra.mxu0 0
        %6081 = vmatprep.subr.bf16.mxu0 0
        %6082 = vmatpush1.bf16.msra.mxu0 0
        %6083 = vmatprep.subr.bf16.mxu0 0
        %6084 = vmatpush1.bf16.msra.mxu0 0
        %6085 = vmatprep.subr.bf16.mxu0 0
        %6086 = vmatpush1.bf16.msra.mxu0 0
        %6087 = vmatprep.subr.bf16.mxu0 0
        %6088 = vmatpush1.bf16.msra.mxu0 %v6071
        %6089 = vmatprep.subr.bf16.mxu0 0
        %6090 = vmatpush2.bf16.msra.mxu0 0
        %6091 = vmatprep.subr.bf16.mxu0 0
        %6092 = vmatpush2.bf16.msra.mxu0 0
        %6093 = vmatprep.subr.bf16.mxu0 0
        %6094 = vmatpush2.bf16.msra.mxu0 0
        %6095 = vmatprep.subr.bf16.mxu0 0
        %6096 = vmatpush2.bf16.msra.mxu0 0
        %6097 = vmatprep.subr.bf16.mxu0 0
        %6098 = vmatpush2.bf16.msra.mxu0 0
        %6099 = vmatprep.subr.bf16.mxu0 0
        %6100 = vmatpush2.bf16.msra.mxu0 0
        %6101 = vmatprep.subr.bf16.mxu0 0
        %6102 = vmatpush2.bf16.msra.mxu0 0
        %6103 = vmatprep.subr.bf16.mxu0 0
        %6104 = vmatpush2.bf16.msra.mxu0 0
        %6105 = vmatprep.mubr.bf16.mxu0 0
        %6106 = vmatmul.mubr.bf16.gmra.mxu0 %v6047
        %v6107 = vpop.f32.mrf.mxu0
        %v6108 = vadd.f32 0.0, %v6107
        %v6109 = vpop.f32.mrf.mxu0
        %v6110 = vpop.f32.mrf.mxu0
        %v6111 = vadd.f32 0.0, %v6110
        %v6112 = vpop.f32.mrf.mxu0
        %6113 = vmatprep.mubr.bf16.mxu0 0
        %6114 = vmatmul.mubr.bf16.gmra.mxu0 %v6050
        %v6115 = vpop.f32.mrf.mxu0
        %v6116 = vadd.f32 0.0, %v6115
        %v6117 = vpop.f32.mrf.mxu0
        %v6118 = vpop.f32.mrf.mxu0
        %v6119 = vadd.f32 0.0, %v6118
        %v6120 = vpop.f32.mrf.mxu0
        %6121 = vmatprep.mubr.bf16.mxu0 0
        %6122 = vmatmul.mubr.bf16.gmra.mxu0 %v6053
        %v6123 = vpop.f32.mrf.mxu0
        %v6124 = vadd.f32 0.0, %v6123
        %v6125 = vpop.f32.mrf.mxu0
        %v6126 = vpop.f32.mrf.mxu0
        %v6127 = vadd.f32 0.0, %v6126
        %v6128 = vpop.f32.mrf.mxu0
        %6129 = vmatprep.mubr.bf16.mxu0 0
        %6130 = vmatmul.mubr.bf16.gmra.mxu0 %v6056
        %v6131 = vpop.f32.mrf.mxu0
        %v6132 = vadd.f32 0.0, %v6131
        %v6133 = vpop.f32.mrf.mxu0
        %v6134 = vpop.f32.mrf.mxu0
        %v6135 = vadd.f32 0.0, %v6134
        %v6136 = vpop.f32.mrf.mxu0
        %6137 = vmatprep.mubr.bf16.mxu0 0
        %6138 = vmatmul.mubr.bf16.gmra.mxu0 %v6059
        %v6139 = vpop.f32.mrf.mxu0
        %v6140 = vadd.f32 0.0, %v6139
        %v6141 = vpop.f32.mrf.mxu0
        %v6142 = vpop.f32.mrf.mxu0
        %v6143 = vadd.f32 0.0, %v6142
        %v6144 = vpop.f32.mrf.mxu0
        %6145 = vmatprep.mubr.bf16.mxu0 0
        %6146 = vmatmul.mubr.bf16.gmra.mxu0 %v6062
        %v6147 = vpop.f32.mrf.mxu0
        %v6148 = vadd.f32 0.0, %v6147
        %v6149 = vpop.f32.mrf.mxu0
        %v6150 = vpop.f32.mrf.mxu0
        %v6151 = vadd.f32 0.0, %v6150
        %v6152 = vpop.f32.mrf.mxu0
        %6153 = vmatprep.mubr.bf16.mxu0 0
        %6154 = vmatmul.mubr.bf16.gmra.mxu0 %v6065
        %v6155 = vpop.f32.mrf.mxu0
        %v6156 = vadd.f32 0.0, %v6155
        %v6157 = vpop.f32.mrf.mxu0
        %v6158 = vpop.f32.mrf.mxu0
        %v6159 = vadd.f32 0.0, %v6158
        %v6160 = vpop.f32.mrf.mxu0
        %6161 = vmatprep.mubr.bf16.mxu0 0
        %6162 = vmatmul.mubr.bf16.gmra.mxu0 %v6068
        %v6163 = vpop.f32.mrf.mxu0
        %v6164 = vadd.f32 0.0, %v6163
        %v6165 = vpop.f32.mrf.mxu0
        %v6166 = vpop.f32.mrf.mxu0
        %v6167 = vadd.f32 0.0, %v6166
        %v6168 = vpop.f32.mrf.mxu0
        %6169 = vdwg.mxu0
        %6170 = vmax.xlane.f32.xlu0 %v6108
        %v6171 = vpop.xlane.xlu0 %6170
        %6172 = vmax.xlane.f32.xlu0 %v6111
        %v6173 = vpop.xlane.xlu0 %6172
        %6174 = vmax.xlane.f32.xlu0 %v6116
        %v6175 = vpop.xlane.xlu0 %6174
        %6176 = vmax.xlane.f32.xlu0 %v6119
        %v6177 = vpop.xlane.xlu0 %6176
        %6178 = vmax.xlane.f32.xlu0 %v6124
        %v6179 = vpop.xlane.xlu0 %6178
        %6180 = vmax.xlane.f32.xlu0 %v6127
        %v6181 = vpop.xlane.xlu0 %6180
        %6182 = vmax.xlane.f32.xlu0 %v6132
        %v6183 = vpop.xlane.xlu0 %6182
        %6184 = vmax.xlane.f32.xlu0 %v6135
        %v6185 = vpop.xlane.xlu0 %6184
        %6186 = vmax.xlane.f32.xlu0 %v6140
        %v6187 = vpop.xlane.xlu0 %6186
        %6188 = vmax.xlane.f32.xlu0 %v6143
        %v6189 = vpop.xlane.xlu0 %6188
        %6190 = vmax.xlane.f32.xlu0 %v6148
        %v6191 = vpop.xlane.xlu0 %6190
        %6192 = vmax.xlane.f32.xlu0 %v6151
        %v6193 = vpop.xlane.xlu0 %6192
        %6194 = vmax.xlane.f32.xlu0 %v6156
        %v6195 = vpop.xlane.xlu0 %6194
        %6196 = vmax.xlane.f32.xlu0 %v6159
        %v6197 = vpop.xlane.xlu0 %6196
        %6198 = vmax.xlane.f32.xlu0 %v6164
        %v6199 = vpop.xlane.xlu0 %6198
        %6200 = vmax.xlane.f32.xlu0 %v6167
        %v6201 = vpop.xlane.xlu0 %6200
        %v6202 = vsub.f32 %v6108, %v6171
        %v6203 = vsub.f32 %v6111, %v6173
        %v6204 = vsub.f32 %v6116, %v6175
        %v6205 = vsub.f32 %v6119, %v6177
        %v6206 = vsub.f32 %v6124, %v6179
        %v6207 = vsub.f32 %v6127, %v6181
        %v6208 = vsub.f32 %v6132, %v6183
        %v6209 = vsub.f32 %v6135, %v6185
        %v6210 = vsub.f32 %v6140, %v6187
        %v6211 = vsub.f32 %v6143, %v6189
        %v6212 = vsub.f32 %v6148, %v6191
        %v6213 = vsub.f32 %v6151, %v6193
        %v6214 = vsub.f32 %v6156, %v6195
        %v6215 = vsub.f32 %v6159, %v6197
        %v6216 = vsub.f32 %v6164, %v6199
        %v6217 = vsub.f32 %v6167, %v6201
        %v6218 = vmul.f32 %v6202, 1.442695
        %v6219 = vpow.pop %v6218
        %v6220 = vmul.f32 %v6203, 1.442695
        %v6221 = vpow.pop %v6220
        %v6222 = vmul.f32 %v6204, 1.442695
        %v6223 = vpow.pop %v6222
        %v6224 = vmul.f32 %v6205, 1.442695
        %v6225 = vpow.pop %v6224
        %v6226 = vmul.f32 %v6206, 1.442695
        %v6227 = vpow.pop %v6226
        %v6228 = vmul.f32 %v6207, 1.442695
        %v6229 = vpow.pop %v6228
        %v6230 = vmul.f32 %v6208, 1.442695
        %v6231 = vpow.pop %v6230
        %v6232 = vmul.f32 %v6209, 1.442695
        %v6233 = vpow.pop %v6232
        %v6234 = vmul.f32 %v6210, 1.442695
        %v6235 = vpow.pop %v6234
        %v6236 = vmul.f32 %v6211, 1.442695
        %v6237 = vpow.pop %v6236
        %v6238 = vmul.f32 %v6212, 1.442695
        %v6239 = vpow.pop %v6238
        %v6240 = vmul.f32 %v6213, 1.442695
        %v6241 = vpow.pop %v6240
        %v6242 = vmul.f32 %v6214, 1.442695
        %v6243 = vpow.pop %v6242
        %v6244 = vmul.f32 %v6215, 1.442695
        %v6245 = vpow.pop %v6244
        %v6246 = vmul.f32 %v6216, 1.442695
        %v6247 = vpow.pop %v6246
        %v6248 = vmul.f32 %v6217, 1.442695
        %v6249 = vpow.pop %v6248
        %6250 = vadd.xlane.f32.xlu0 %v6219
        %v6251 = vpop.xlane.xlu0 %6250
        %6252 = vadd.xlane.f32.xlu0 %v6221
        %v6253 = vpop.xlane.xlu0 %6252
        %6254 = vadd.xlane.f32.xlu0 %v6223
        %v6255 = vpop.xlane.xlu0 %6254
        %6256 = vadd.xlane.f32.xlu0 %v6225
        %v6257 = vpop.xlane.xlu0 %6256
        %6258 = vadd.xlane.f32.xlu0 %v6227
        %v6259 = vpop.xlane.xlu0 %6258
        %6260 = vadd.xlane.f32.xlu0 %v6229
        %v6261 = vpop.xlane.xlu0 %6260
        %6262 = vadd.xlane.f32.xlu0 %v6231
        %v6263 = vpop.xlane.xlu0 %6262
        %6264 = vadd.xlane.f32.xlu0 %v6233
        %v6265 = vpop.xlane.xlu0 %6264
        %6266 = vadd.xlane.f32.xlu0 %v6235
        %v6267 = vpop.xlane.xlu0 %6266
        %6268 = vadd.xlane.f32.xlu0 %v6237
        %v6269 = vpop.xlane.xlu0 %6268
        %6270 = vadd.xlane.f32.xlu0 %v6239
        %v6271 = vpop.xlane.xlu0 %6270
        %6272 = vadd.xlane.f32.xlu0 %v6241
        %v6273 = vpop.xlane.xlu0 %6272
        %6274 = vadd.xlane.f32.xlu0 %v6243
        %v6275 = vpop.xlane.xlu0 %6274
        %6276 = vadd.xlane.f32.xlu0 %v6245
        %v6277 = vpop.xlane.xlu0 %6276
        %6278 = vadd.xlane.f32.xlu0 %v6247
        %v6279 = vpop.xlane.xlu0 %6278
        %6280 = vadd.xlane.f32.xlu0 %v6249
        %v6281 = vpop.xlane.xlu0 %6280
        %v6282 = vrcp.pop %v6251
        %v6283 = vrcp.pop %v6253
        %v6284 = vrcp.pop %v6255
        %v6285 = vrcp.pop %v6257
        %v6286 = vrcp.pop %v6259
        %v6287 = vrcp.pop %v6261
        %v6288 = vrcp.pop %v6263
        %v6289 = vrcp.pop %v6265
        %v6290 = vrcp.pop %v6267
        %v6291 = vrcp.pop %v6269
        %v6292 = vrcp.pop %v6271
        %v6293 = vrcp.pop %v6273
        %v6294 = vrcp.pop %v6275
        %v6295 = vrcp.pop %v6277
        %v6296 = vrcp.pop %v6279
        %v6297 = vrcp.pop %v6281
        %v6298 = vmul.f32 %v6219, %v6282
        %v6299 = vmul.f32 %v6221, %v6283
        %v6300 = vmul.f32 %v6223, %v6284
        %v6301 = vmul.f32 %v6225, %v6285
        %v6302 = vmul.f32 %v6227, %v6286
        %v6303 = vmul.f32 %v6229, %v6287
        %v6304 = vmul.f32 %v6231, %v6288
        %v6305 = vmul.f32 %v6233, %v6289
        %v6306 = vmul.f32 %v6235, %v6290
        %v6307 = vmul.f32 %v6237, %v6291
        %v6308 = vmul.f32 %v6239, %v6292
        %v6309 = vmul.f32 %v6241, %v6293
        %v6310 = vmul.f32 %v6243, %v6294
        %v6311 = vmul.f32 %v6245, %v6295
        %v6312 = vmul.f32 %v6247, %v6296
        %v6313 = vmul.f32 %v6249, %v6297
        %v6314 = vpack.c.bf16 %v6299, %v6298
        %v6315 = vpack.c.bf16 %v6301, %v6300
        %v6316 = vpack.c.bf16 %v6303, %v6302
        %v6317 = vpack.c.bf16 %v6305, %v6304
        %v6318 = vpack.c.bf16 %v6307, %v6306
        %v6319 = vpack.c.bf16 %v6309, %v6308
        %v6320 = vpack.c.bf16 %v6311, %v6310
        %v6321 = vpack.c.bf16 %v6313, %v6312
        %6322 = vmatprep.subr.bf16.mxu0 0
        %6323 = vmatpush1.bf16.xpose.msra.mxu0 %v6321
        %6324 = vmatprep.subr.bf16.mxu0 0
        %6325 = vmatpush1.bf16.xpose.msra.mxu0 %v6320
        %6326 = vmatprep.subr.bf16.mxu0 0
        %6327 = vmatpush1.bf16.xpose.msra.mxu0 %v6319
        %6328 = vmatprep.subr.bf16.mxu0 0
        %6329 = vmatpush1.bf16.xpose.msra.mxu0 %v6318
        %6330 = vmatprep.subr.bf16.mxu0 0
        %6331 = vmatpush1.bf16.xpose.msra.mxu0 %v6317
        %6332 = vmatprep.subr.bf16.mxu0 0
        %6333 = vmatpush1.bf16.xpose.msra.mxu0 %v6316
        %6334 = vmatprep.subr.bf16.mxu0 0
        %6335 = vmatpush1.bf16.xpose.msra.mxu0 %v6315
        %6336 = vmatprep.subr.bf16.mxu0 0
        %6337 = vmatpush1.bf16.xpose.msra.mxu0 %v6314
        %6338 = vmatprep.subr.bf16.mxu0 0
        %6339 = vmatpush2.bf16.xpose.msra.mxu0 0
        %6340 = vmatprep.subr.bf16.mxu0 0
        %6341 = vmatpush2.bf16.xpose.msra.mxu0 0
        %6342 = vmatprep.subr.bf16.mxu0 0
        %6343 = vmatpush2.bf16.xpose.msra.mxu0 0
        %6344 = vmatprep.subr.bf16.mxu0 0
        %6345 = vmatpush2.bf16.xpose.msra.mxu0 0
        %6346 = vmatprep.subr.bf16.mxu0 0
        %6347 = vmatpush2.bf16.xpose.msra.mxu0 0
        %6348 = vmatprep.subr.bf16.mxu0 0
        %6349 = vmatpush2.bf16.xpose.msra.mxu0 0
        %6350 = vmatprep.subr.bf16.mxu0 0
        %6351 = vmatpush2.bf16.xpose.msra.mxu0 0
        %6352 = vmatprep.subr.bf16.mxu0 0
        %6353 = vmatpush2.bf16.xpose.msra.mxu0 0
        %6354 = vmatprep.mubr.bf16.mxu0 0
        %6355 = vmatmul.mubr.bf16.gmra.mxu0 %v6029
        %v6356 = vpop.f32.mrf.mxu0
        %v6357 = vadd.f32 0.0, %v6356
        %v6358 = vpop.f32.mrf.mxu0
        %v6359 = vpop.f32.mrf.mxu0
        %v6360 = vpop.f32.mrf.mxu0
        %6361 = vdwg.mxu0
        %v6362 = vpack.c.bf16 %v5223, %v5223
        %v6363 = vpack.c.bf16 %v5338, %v5338
        %v6364 = vpack.c.bf16 %v5354, %v5354
        %6365 = vxpose.xlu0.c.b16.start [1/8] %v6362, 128
        %6366 = vxpose.xlu0.c.b16.cont [2/8] 0, 128
        %6367 = vxpose.xlu0.c.b16.cont [3/8] 0, 128
        %6368 = vxpose.xlu0.c.b16.cont [4/8] 0, 128
        %6369 = vxpose.xlu0.c.b16.cont [5/8] 0, 128
        %6370 = vxpose.xlu0.c.b16.cont [6/8] 0, 128
        %6371 = vxpose.xlu0.c.b16.cont [7/8] 0, 128
        %6372 = vxpose.xlu0.c.b16.end [8/8] 0, 128
        %v6373 = vpop.trf.xlu0
        %v6374 = vpop.trf.xlu0
        %v6375 = vpop.trf.xlu0
        %v6376 = vpop.trf.xlu0
        %v6377 = vpop.trf.xlu0
        %v6378 = vpop.trf.xlu0
        %v6379 = vpop.trf.xlu0
        %v6380 = vpop.trf.xlu0
        %v6382 = vsel %vm681, %v6373, 0
        %v6385 = vsel %vm681, %v6374, 0
        %v6388 = vsel %vm681, %v6375, 0
        %v6391 = vsel %vm681, %v6376, 0
        %v6394 = vsel %vm681, %v6377, 0
        %v6397 = vsel %vm681, %v6378, 0
        %v6400 = vsel %vm681, %v6379, 0
        %v6403 = vsel %vm681, %v6380, 0
        %v6406 = vsel %vm706, %v6363, 0
        %6408 = vmatprep.subr.bf16.mxu0 0
        %6409 = vmatpush1.bf16.msra.mxu0 0
        %6410 = vmatprep.subr.bf16.mxu0 0
        %6411 = vmatpush1.bf16.msra.mxu0 0
        %6412 = vmatprep.subr.bf16.mxu0 0
        %6413 = vmatpush1.bf16.msra.mxu0 0
        %6414 = vmatprep.subr.bf16.mxu0 0
        %6415 = vmatpush1.bf16.msra.mxu0 0
        %6416 = vmatprep.subr.bf16.mxu0 0
        %6417 = vmatpush1.bf16.msra.mxu0 0
        %6418 = vmatprep.subr.bf16.mxu0 0
        %6419 = vmatpush1.bf16.msra.mxu0 0
        %6420 = vmatprep.subr.bf16.mxu0 0
        %6421 = vmatpush1.bf16.msra.mxu0 0
        %6422 = vmatprep.subr.bf16.mxu0 0
        %6423 = vmatpush1.bf16.msra.mxu0 %v6406
        %6424 = vmatprep.subr.bf16.mxu0 0
        %6425 = vmatpush2.bf16.msra.mxu0 0
        %6426 = vmatprep.subr.bf16.mxu0 0
        %6427 = vmatpush2.bf16.msra.mxu0 0
        %6428 = vmatprep.subr.bf16.mxu0 0
        %6429 = vmatpush2.bf16.msra.mxu0 0
        %6430 = vmatprep.subr.bf16.mxu0 0
        %6431 = vmatpush2.bf16.msra.mxu0 0
        %6432 = vmatprep.subr.bf16.mxu0 0
        %6433 = vmatpush2.bf16.msra.mxu0 0
        %6434 = vmatprep.subr.bf16.mxu0 0
        %6435 = vmatpush2.bf16.msra.mxu0 0
        %6436 = vmatprep.subr.bf16.mxu0 0
        %6437 = vmatpush2.bf16.msra.mxu0 0
        %6438 = vmatprep.subr.bf16.mxu0 0
        %6439 = vmatpush2.bf16.msra.mxu0 0
        %6440 = vmatprep.mubr.bf16.mxu0 0
        %6441 = vmatmul.mubr.bf16.gmra.mxu0 %v6382
        %v6442 = vpop.f32.mrf.mxu0
        %v6443 = vadd.f32 0.0, %v6442
        %v6444 = vpop.f32.mrf.mxu0
        %v6445 = vpop.f32.mrf.mxu0
        %v6446 = vadd.f32 0.0, %v6445
        %v6447 = vpop.f32.mrf.mxu0
        %6448 = vmatprep.mubr.bf16.mxu0 0
        %6449 = vmatmul.mubr.bf16.gmra.mxu0 %v6385
        %v6450 = vpop.f32.mrf.mxu0
        %v6451 = vadd.f32 0.0, %v6450
        %v6452 = vpop.f32.mrf.mxu0
        %v6453 = vpop.f32.mrf.mxu0
        %v6454 = vadd.f32 0.0, %v6453
        %v6455 = vpop.f32.mrf.mxu0
        %6456 = vmatprep.mubr.bf16.mxu0 0
        %6457 = vmatmul.mubr.bf16.gmra.mxu0 %v6388
        %v6458 = vpop.f32.mrf.mxu0
        %v6459 = vadd.f32 0.0, %v6458
        %v6460 = vpop.f32.mrf.mxu0
        %v6461 = vpop.f32.mrf.mxu0
        %v6462 = vadd.f32 0.0, %v6461
        %v6463 = vpop.f32.mrf.mxu0
        %6464 = vmatprep.mubr.bf16.mxu0 0
        %6465 = vmatmul.mubr.bf16.gmra.mxu0 %v6391
        %v6466 = vpop.f32.mrf.mxu0
        %v6467 = vadd.f32 0.0, %v6466
        %v6468 = vpop.f32.mrf.mxu0
        %v6469 = vpop.f32.mrf.mxu0
        %v6470 = vadd.f32 0.0, %v6469
        %v6471 = vpop.f32.mrf.mxu0
        %6472 = vmatprep.mubr.bf16.mxu0 0
        %6473 = vmatmul.mubr.bf16.gmra.mxu0 %v6394
        %v6474 = vpop.f32.mrf.mxu0
        %v6475 = vadd.f32 0.0, %v6474
        %v6476 = vpop.f32.mrf.mxu0
        %v6477 = vpop.f32.mrf.mxu0
        %v6478 = vadd.f32 0.0, %v6477
        %v6479 = vpop.f32.mrf.mxu0
        %6480 = vmatprep.mubr.bf16.mxu0 0
        %6481 = vmatmul.mubr.bf16.gmra.mxu0 %v6397
        %v6482 = vpop.f32.mrf.mxu0
        %v6483 = vadd.f32 0.0, %v6482
        %v6484 = vpop.f32.mrf.mxu0
        %v6485 = vpop.f32.mrf.mxu0
        %v6486 = vadd.f32 0.0, %v6485
        %v6487 = vpop.f32.mrf.mxu0
        %6488 = vmatprep.mubr.bf16.mxu0 0
        %6489 = vmatmul.mubr.bf16.gmra.mxu0 %v6400
        %v6490 = vpop.f32.mrf.mxu0
        %v6491 = vadd.f32 0.0, %v6490
        %v6492 = vpop.f32.mrf.mxu0
        %v6493 = vpop.f32.mrf.mxu0
        %v6494 = vadd.f32 0.0, %v6493
        %v6495 = vpop.f32.mrf.mxu0
        %6496 = vmatprep.mubr.bf16.mxu0 0
        %6497 = vmatmul.mubr.bf16.gmra.mxu0 %v6403
        %v6498 = vpop.f32.mrf.mxu0
        %v6499 = vadd.f32 0.0, %v6498
        %v6500 = vpop.f32.mrf.mxu0
        %v6501 = vpop.f32.mrf.mxu0
        %v6502 = vadd.f32 0.0, %v6501
        %v6503 = vpop.f32.mrf.mxu0
        %6504 = vdwg.mxu0
        %6505 = vmax.xlane.f32.xlu0 %v6443
        %v6506 = vpop.xlane.xlu0 %6505
        %6507 = vmax.xlane.f32.xlu0 %v6446
        %v6508 = vpop.xlane.xlu0 %6507
        %6509 = vmax.xlane.f32.xlu0 %v6451
        %v6510 = vpop.xlane.xlu0 %6509
        %6511 = vmax.xlane.f32.xlu0 %v6454
        %v6512 = vpop.xlane.xlu0 %6511
        %6513 = vmax.xlane.f32.xlu0 %v6459
        %v6514 = vpop.xlane.xlu0 %6513
        %6515 = vmax.xlane.f32.xlu0 %v6462
        %v6516 = vpop.xlane.xlu0 %6515
        %6517 = vmax.xlane.f32.xlu0 %v6467
        %v6518 = vpop.xlane.xlu0 %6517
        %6519 = vmax.xlane.f32.xlu0 %v6470
        %v6520 = vpop.xlane.xlu0 %6519
        %6521 = vmax.xlane.f32.xlu0 %v6475
        %v6522 = vpop.xlane.xlu0 %6521
        %6523 = vmax.xlane.f32.xlu0 %v6478
        %v6524 = vpop.xlane.xlu0 %6523
        %6525 = vmax.xlane.f32.xlu0 %v6483
        %v6526 = vpop.xlane.xlu0 %6525
        %6527 = vmax.xlane.f32.xlu0 %v6486
        %v6528 = vpop.xlane.xlu0 %6527
        %6529 = vmax.xlane.f32.xlu0 %v6491
        %v6530 = vpop.xlane.xlu0 %6529
        %6531 = vmax.xlane.f32.xlu0 %v6494
        %v6532 = vpop.xlane.xlu0 %6531
        %6533 = vmax.xlane.f32.xlu0 %v6499
        %v6534 = vpop.xlane.xlu0 %6533
        %6535 = vmax.xlane.f32.xlu0 %v6502
        %v6536 = vpop.xlane.xlu0 %6535
        %v6537 = vsub.f32 %v6443, %v6506
        %v6538 = vsub.f32 %v6446, %v6508
        %v6539 = vsub.f32 %v6451, %v6510
        %v6540 = vsub.f32 %v6454, %v6512
        %v6541 = vsub.f32 %v6459, %v6514
        %v6542 = vsub.f32 %v6462, %v6516
        %v6543 = vsub.f32 %v6467, %v6518
        %v6544 = vsub.f32 %v6470, %v6520
        %v6545 = vsub.f32 %v6475, %v6522
        %v6546 = vsub.f32 %v6478, %v6524
        %v6547 = vsub.f32 %v6483, %v6526
        %v6548 = vsub.f32 %v6486, %v6528
        %v6549 = vsub.f32 %v6491, %v6530
        %v6550 = vsub.f32 %v6494, %v6532
        %v6551 = vsub.f32 %v6499, %v6534
        %v6552 = vsub.f32 %v6502, %v6536
        %v6553 = vmul.f32 %v6537, 1.442695
        %v6554 = vpow.pop %v6553
        %v6555 = vmul.f32 %v6538, 1.442695
        %v6556 = vpow.pop %v6555
        %v6557 = vmul.f32 %v6539, 1.442695
        %v6558 = vpow.pop %v6557
        %v6559 = vmul.f32 %v6540, 1.442695
        %v6560 = vpow.pop %v6559
        %v6561 = vmul.f32 %v6541, 1.442695
        %v6562 = vpow.pop %v6561
        %v6563 = vmul.f32 %v6542, 1.442695
        %v6564 = vpow.pop %v6563
        %v6565 = vmul.f32 %v6543, 1.442695
        %v6566 = vpow.pop %v6565
        %v6567 = vmul.f32 %v6544, 1.442695
        %v6568 = vpow.pop %v6567
        %v6569 = vmul.f32 %v6545, 1.442695
        %v6570 = vpow.pop %v6569
        %v6571 = vmul.f32 %v6546, 1.442695
        %v6572 = vpow.pop %v6571
        %v6573 = vmul.f32 %v6547, 1.442695
        %v6574 = vpow.pop %v6573
        %v6575 = vmul.f32 %v6548, 1.442695
        %v6576 = vpow.pop %v6575
        %v6577 = vmul.f32 %v6549, 1.442695
        %v6578 = vpow.pop %v6577
        %v6579 = vmul.f32 %v6550, 1.442695
        %v6580 = vpow.pop %v6579
        %v6581 = vmul.f32 %v6551, 1.442695
        %v6582 = vpow.pop %v6581
        %v6583 = vmul.f32 %v6552, 1.442695
        %v6584 = vpow.pop %v6583
        %6585 = vadd.xlane.f32.xlu0 %v6554
        %v6586 = vpop.xlane.xlu0 %6585
        %6587 = vadd.xlane.f32.xlu0 %v6556
        %v6588 = vpop.xlane.xlu0 %6587
        %6589 = vadd.xlane.f32.xlu0 %v6558
        %v6590 = vpop.xlane.xlu0 %6589
        %6591 = vadd.xlane.f32.xlu0 %v6560
        %v6592 = vpop.xlane.xlu0 %6591
        %6593 = vadd.xlane.f32.xlu0 %v6562
        %v6594 = vpop.xlane.xlu0 %6593
        %6595 = vadd.xlane.f32.xlu0 %v6564
        %v6596 = vpop.xlane.xlu0 %6595
        %6597 = vadd.xlane.f32.xlu0 %v6566
        %v6598 = vpop.xlane.xlu0 %6597
        %6599 = vadd.xlane.f32.xlu0 %v6568
        %v6600 = vpop.xlane.xlu0 %6599
        %6601 = vadd.xlane.f32.xlu0 %v6570
        %v6602 = vpop.xlane.xlu0 %6601
        %6603 = vadd.xlane.f32.xlu0 %v6572
        %v6604 = vpop.xlane.xlu0 %6603
        %6605 = vadd.xlane.f32.xlu0 %v6574
        %v6606 = vpop.xlane.xlu0 %6605
        %6607 = vadd.xlane.f32.xlu0 %v6576
        %v6608 = vpop.xlane.xlu0 %6607
        %6609 = vadd.xlane.f32.xlu0 %v6578
        %v6610 = vpop.xlane.xlu0 %6609
        %6611 = vadd.xlane.f32.xlu0 %v6580
        %v6612 = vpop.xlane.xlu0 %6611
        %6613 = vadd.xlane.f32.xlu0 %v6582
        %v6614 = vpop.xlane.xlu0 %6613
        %6615 = vadd.xlane.f32.xlu0 %v6584
        %v6616 = vpop.xlane.xlu0 %6615
        %v6617 = vrcp.pop %v6586
        %v6618 = vrcp.pop %v6588
        %v6619 = vrcp.pop %v6590
        %v6620 = vrcp.pop %v6592
        %v6621 = vrcp.pop %v6594
        %v6622 = vrcp.pop %v6596
        %v6623 = vrcp.pop %v6598
        %v6624 = vrcp.pop %v6600
        %v6625 = vrcp.pop %v6602
        %v6626 = vrcp.pop %v6604
        %v6627 = vrcp.pop %v6606
        %v6628 = vrcp.pop %v6608
        %v6629 = vrcp.pop %v6610
        %v6630 = vrcp.pop %v6612
        %v6631 = vrcp.pop %v6614
        %v6632 = vrcp.pop %v6616
        %v6633 = vmul.f32 %v6554, %v6617
        %v6634 = vmul.f32 %v6556, %v6618
        %v6635 = vmul.f32 %v6558, %v6619
        %v6636 = vmul.f32 %v6560, %v6620
        %v6637 = vmul.f32 %v6562, %v6621
        %v6638 = vmul.f32 %v6564, %v6622
        %v6639 = vmul.f32 %v6566, %v6623
        %v6640 = vmul.f32 %v6568, %v6624
        %v6641 = vmul.f32 %v6570, %v6625
        %v6642 = vmul.f32 %v6572, %v6626
        %v6643 = vmul.f32 %v6574, %v6627
        %v6644 = vmul.f32 %v6576, %v6628
        %v6645 = vmul.f32 %v6578, %v6629
        %v6646 = vmul.f32 %v6580, %v6630
        %v6647 = vmul.f32 %v6582, %v6631
        %v6648 = vmul.f32 %v6584, %v6632
        %v6649 = vpack.c.bf16 %v6634, %v6633
        %v6650 = vpack.c.bf16 %v6636, %v6635
        %v6651 = vpack.c.bf16 %v6638, %v6637
        %v6652 = vpack.c.bf16 %v6640, %v6639
        %v6653 = vpack.c.bf16 %v6642, %v6641
        %v6654 = vpack.c.bf16 %v6644, %v6643
        %v6655 = vpack.c.bf16 %v6646, %v6645
        %v6656 = vpack.c.bf16 %v6648, %v6647
        %6657 = vmatprep.subr.bf16.mxu0 0
        %6658 = vmatpush1.bf16.xpose.msra.mxu0 %v6656
        %6659 = vmatprep.subr.bf16.mxu0 0
        %6660 = vmatpush1.bf16.xpose.msra.mxu0 %v6655
        %6661 = vmatprep.subr.bf16.mxu0 0
        %6662 = vmatpush1.bf16.xpose.msra.mxu0 %v6654
        %6663 = vmatprep.subr.bf16.mxu0 0
        %6664 = vmatpush1.bf16.xpose.msra.mxu0 %v6653
        %6665 = vmatprep.subr.bf16.mxu0 0
        %6666 = vmatpush1.bf16.xpose.msra.mxu0 %v6652
        %6667 = vmatprep.subr.bf16.mxu0 0
        %6668 = vmatpush1.bf16.xpose.msra.mxu0 %v6651
        %6669 = vmatprep.subr.bf16.mxu0 0
        %6670 = vmatpush1.bf16.xpose.msra.mxu0 %v6650
        %6671 = vmatprep.subr.bf16.mxu0 0
        %6672 = vmatpush1.bf16.xpose.msra.mxu0 %v6649
        %6673 = vmatprep.subr.bf16.mxu0 0
        %6674 = vmatpush2.bf16.xpose.msra.mxu0 0
        %6675 = vmatprep.subr.bf16.mxu0 0
        %6676 = vmatpush2.bf16.xpose.msra.mxu0 0
        %6677 = vmatprep.subr.bf16.mxu0 0
        %6678 = vmatpush2.bf16.xpose.msra.mxu0 0
        %6679 = vmatprep.subr.bf16.mxu0 0
        %6680 = vmatpush2.bf16.xpose.msra.mxu0 0
        %6681 = vmatprep.subr.bf16.mxu0 0
        %6682 = vmatpush2.bf16.xpose.msra.mxu0 0
        %6683 = vmatprep.subr.bf16.mxu0 0
        %6684 = vmatpush2.bf16.xpose.msra.mxu0 0
        %6685 = vmatprep.subr.bf16.mxu0 0
        %6686 = vmatpush2.bf16.xpose.msra.mxu0 0
        %6687 = vmatprep.subr.bf16.mxu0 0
        %6688 = vmatpush2.bf16.xpose.msra.mxu0 0
        %6689 = vmatprep.mubr.bf16.mxu0 0
        %6690 = vmatmul.mubr.bf16.gmra.mxu0 %v6364
        %v6691 = vpop.f32.mrf.mxu0
        %v6692 = vadd.f32 0.0, %v6691
        %v6693 = vpop.f32.mrf.mxu0
        %v6694 = vpop.f32.mrf.mxu0
        %v6695 = vpop.f32.mrf.mxu0
        %6696 = vdwg.mxu0
        %v6697 = vpack.c.bf16 %v6022, %v5687
        %v6698 = vpack.c.bf16 %v6692, %v6357
        %6699 = vset.pattern.permute.xlu0 12
        %6700 = vperm.xlu0 %6699, %v3102
        %v6701 = vpop.permute.xlu0 %6700
        %6703 = vset.pattern.permute.xlu0 12
        %6704 = vperm.xlu0 %6703, %v3103
        %v6705 = vpop.permute.xlu0 %6704
        %6707 = vset.pattern.permute.xlu0 12
        %6708 = vperm.xlu0 %6707, %v3104
        %v6709 = vpop.permute.xlu0 %6708
        %6711 = vset.pattern.permute.xlu0 12
        %6712 = vperm.xlu0 %6711, %v3105
        %v6713 = vpop.permute.xlu0 %6712
        %6715 = vrot.lane.b32.xlu0 %v5151, 32
        %v6716 = vpop.permute.xlu0 %6715
        %6717 = vrot.lane.b32.xlu0 %v5152, 32
        %v6718 = vpop.permute.xlu0 %6717
        %6721 = vxpose.xlu0.c.b16.start [1/8] %v6716, 128
        %6722 = vxpose.xlu0.c.b16.cont [2/8] %v6718, 128
        %6723 = vxpose.xlu0.c.b16.cont [3/8] 0, 128
        %6724 = vxpose.xlu0.c.b16.cont [4/8] 0, 128
        %6725 = vxpose.xlu0.c.b16.cont [5/8] 0, 128
        %6726 = vxpose.xlu0.c.b16.cont [6/8] 0, 128
        %6727 = vxpose.xlu0.c.b16.cont [7/8] 0, 128
        %6728 = vxpose.xlu0.c.b16.end [8/8] 0, 128
        %v6729 = vpop.trf.xlu0
        %v6730 = vpop.trf.xlu0
        %v6731 = vpop.trf.xlu0
        %v6732 = vpop.trf.xlu0
        %v6733 = vpop.trf.xlu0
        %v6734 = vpop.trf.xlu0
        %v6735 = vpop.trf.xlu0
        %v6736 = vpop.trf.xlu0
        %v6738 = vsel %vm471, %v6729, 0
        %v6741 = vsel %vm471, %v6730, 0
        %6743 = vmatprep.subr.bf16.mxu0 0
        %6744 = vmatpush1.bf16.msra.mxu0 0
        %6745 = vmatprep.subr.bf16.mxu0 0
        %6746 = vmatpush1.bf16.msra.mxu0 0
        %6747 = vmatprep.subr.bf16.mxu0 0
        %6748 = vmatpush1.bf16.msra.mxu0 0
        %6749 = vmatprep.subr.bf16.mxu0 0
        %6750 = vmatpush1.bf16.msra.mxu0 0
        %6751 = vmatprep.subr.bf16.mxu0 0
        %6752 = vmatpush1.bf16.msra.mxu0 0
        %6753 = vmatprep.subr.bf16.mxu0 0
        %6754 = vmatpush1.bf16.msra.mxu0 0
        %6755 = vmatprep.subr.bf16.mxu0 0
        %6756 = vmatpush1.bf16.msra.mxu0 %v6698
        %6757 = vmatprep.subr.bf16.mxu0 0
        %6758 = vmatpush1.bf16.msra.mxu0 %v6697
        %6759 = vmatprep.subr.bf16.mxu0 0
        %6760 = vmatpush2.bf16.msra.mxu0 0
        %6761 = vmatprep.subr.bf16.mxu0 0
        %6762 = vmatpush2.bf16.msra.mxu0 0
        %6763 = vmatprep.subr.bf16.mxu0 0
        %6764 = vmatpush2.bf16.msra.mxu0 0
        %6765 = vmatprep.subr.bf16.mxu0 0
        %6766 = vmatpush2.bf16.msra.mxu0 0
        %6767 = vmatprep.subr.bf16.mxu0 0
        %6768 = vmatpush2.bf16.msra.mxu0 0
        %6769 = vmatprep.subr.bf16.mxu0 0
        %6770 = vmatpush2.bf16.msra.mxu0 0
        %6771 = vmatprep.subr.bf16.mxu0 0
        %6772 = vmatpush2.bf16.msra.mxu0 0
        %6773 = vmatprep.subr.bf16.mxu0 0
        %6774 = vmatpush2.bf16.msra.mxu0 0
        %6775 = vmatprep.mubr.bf16.mxu0 0
        %6776 = vmatmul.mubr.bf16.gmra.mxu0 %v6738
        %v6777 = vpop.f32.mrf.mxu0
        %v6778 = vadd.f32 %v6701, %v6777
        %v6779 = vpop.f32.mrf.mxu0
        %v6780 = vpop.f32.mrf.mxu0
        %v6781 = vadd.f32 %v6705, %v6780
        %v6782 = vpop.f32.mrf.mxu0
        %6783 = vmatprep.mubr.bf16.mxu0 0
        %6784 = vmatmul.mubr.bf16.gmra.mxu0 %v6741
        %v6785 = vpop.f32.mrf.mxu0
        %v6786 = vadd.f32 %v6709, %v6785
        %v6787 = vpop.f32.mrf.mxu0
        %v6788 = vpop.f32.mrf.mxu0
        %v6789 = vadd.f32 %v6713, %v6788
        %v6790 = vpop.f32.mrf.mxu0
        %6791 = vdwg.mxu0
        %v6792 = vpack.c.bf16 %v6781, %v6778
        %v6793 = vpack.c.bf16 %v6789, %v6786
        %v6794 = vunpack.c.h.b16 %v5121
        %v6795 = vunpack.c.h.b16 %v5122
        %v6796 = vunpack.c.h.b16 %v5123
        %v6797 = vunpack.c.h.b16 %v5124
        %v6798 = vpack.c.b16 %v6795, %v6794
        %v6799 = vpack.c.b16 %v6797, %v6796
        %6800 = vrot.lane.b32.xlu0 %v6798, 64
        %v6801 = vpop.permute.xlu0 %6800
        %6802 = vrot.lane.b32.xlu0 %v6799, 64
        %v6803 = vpop.permute.xlu0 %6802
        %6806 = vxpose.xlu0.c.b16.start [1/8] %v6801, 128
        %6807 = vxpose.xlu0.c.b16.cont [2/8] %v6803, 128
        %6808 = vxpose.xlu0.c.b16.cont [3/8] 0, 128
        %6809 = vxpose.xlu0.c.b16.cont [4/8] 0, 128
        %6810 = vxpose.xlu0.c.b16.cont [5/8] 0, 128
        %6811 = vxpose.xlu0.c.b16.cont [6/8] 0, 128
        %6812 = vxpose.xlu0.c.b16.cont [7/8] 0, 128
        %6813 = vxpose.xlu0.c.b16.end [8/8] 0, 128
        %v6814 = vpop.trf.xlu0
        %v6815 = vpop.trf.xlu0
        %v6816 = vpop.trf.xlu0
        %v6817 = vpop.trf.xlu0
        %v6818 = vpop.trf.xlu0
        %v6819 = vpop.trf.xlu0
        %v6820 = vpop.trf.xlu0
        %v6821 = vpop.trf.xlu0
        %v6823 = vsel %vm471, %v6814, 0
        %v6826 = vsel %vm471, %v6815, 0
        %v6829 = vsel %vm471, %v6816, 0
        %v6832 = vsel %vm471, %v6817, 0
        %6834 = vmatprep.subr.bf16.mxu0 0
        %6835 = vmatpush1.bf16.msra.mxu0 0
        %6836 = vmatprep.subr.bf16.mxu0 0
        %6837 = vmatpush1.bf16.msra.mxu0 0
        %6838 = vmatprep.subr.bf16.mxu0 0
        %6839 = vmatpush1.bf16.msra.mxu0 0
        %6840 = vmatprep.subr.bf16.mxu0 0
        %6841 = vmatpush1.bf16.msra.mxu0 0
        %6842 = vmatprep.subr.bf16.mxu0 0
        %6843 = vmatpush1.bf16.msra.mxu0 0
        %6844 = vmatprep.subr.bf16.mxu0 0
        %6845 = vmatpush1.bf16.msra.mxu0 0
        %6846 = vmatprep.subr.bf16.mxu0 0
        %6847 = vmatpush1.bf16.msra.mxu0 %v6793
        %6848 = vmatprep.subr.bf16.mxu0 0
        %6849 = vmatpush1.bf16.msra.mxu0 %v6792
        %6850 = vmatprep.subr.bf16.mxu0 0
        %6851 = vmatpush2.bf16.msra.mxu0 0
        %6852 = vmatprep.subr.bf16.mxu0 0
        %6853 = vmatpush2.bf16.msra.mxu0 0
        %6854 = vmatprep.subr.bf16.mxu0 0
        %6855 = vmatpush2.bf16.msra.mxu0 0
        %6856 = vmatprep.subr.bf16.mxu0 0
        %6857 = vmatpush2.bf16.msra.mxu0 0
        %6858 = vmatprep.subr.bf16.mxu0 0
        %6859 = vmatpush2.bf16.msra.mxu0 0
        %6860 = vmatprep.subr.bf16.mxu0 0
        %6861 = vmatpush2.bf16.msra.mxu0 0
        %6862 = vmatprep.subr.bf16.mxu0 0
        %6863 = vmatpush2.bf16.msra.mxu0 0
        %6864 = vmatprep.subr.bf16.mxu0 0
        %6865 = vmatpush2.bf16.msra.mxu0 0
        %6866 = vmatprep.mubr.bf16.mxu0 0
        %6867 = vmatmul.mubr.bf16.gmra.mxu0 %v6823
        %v6868 = vpop.f32.mrf.mxu0
        %v6869 = vadd.f32 0.0, %v6868
        %v6870 = vpop.f32.mrf.mxu0
        %v6871 = vpop.f32.mrf.mxu0
        %v6872 = vadd.f32 0.0, %v6871
        %v6873 = vpop.f32.mrf.mxu0
        %6874 = vmatprep.mubr.bf16.mxu0 0
        %6875 = vmatmul.mubr.bf16.gmra.mxu0 %v6826
        %v6876 = vpop.f32.mrf.mxu0
        %v6877 = vadd.f32 0.0, %v6876
        %v6878 = vpop.f32.mrf.mxu0
        %v6879 = vpop.f32.mrf.mxu0
        %v6880 = vadd.f32 0.0, %v6879
        %v6881 = vpop.f32.mrf.mxu0
        %6882 = vmatprep.mubr.bf16.mxu0 0
        %6883 = vmatmul.mubr.bf16.gmra.mxu0 %v6829
        %v6884 = vpop.f32.mrf.mxu0
        %v6885 = vadd.f32 0.0, %v6884
        %v6886 = vpop.f32.mrf.mxu0
        %v6887 = vpop.f32.mrf.mxu0
        %v6888 = vadd.f32 0.0, %v6887
        %v6889 = vpop.f32.mrf.mxu0
        %6890 = vmatprep.mubr.bf16.mxu0 0
        %6891 = vmatmul.mubr.bf16.gmra.mxu0 %v6832
        %v6892 = vpop.f32.mrf.mxu0
        %v6893 = vadd.f32 0.0, %v6892
        %v6894 = vpop.f32.mrf.mxu0
        %v6895 = vpop.f32.mrf.mxu0
        %v6896 = vadd.f32 0.0, %v6895
        %v6897 = vpop.f32.mrf.mxu0
        %6898 = vdwg.mxu0
        %6901 = vxpose.xlu0.c.b16.start [1/8] %v6798, 128
        %6902 = vxpose.xlu0.c.b16.cont [2/8] %v6799, 128
        %6903 = vxpose.xlu0.c.b16.cont [3/8] 0, 128
        %6904 = vxpose.xlu0.c.b16.cont [4/8] 0, 128
        %6905 = vxpose.xlu0.c.b16.cont [5/8] 0, 128
        %6906 = vxpose.xlu0.c.b16.cont [6/8] 0, 128
        %6907 = vxpose.xlu0.c.b16.cont [7/8] 0, 128
        %6908 = vxpose.xlu0.c.b16.end [8/8] 0, 128
        %v6909 = vpop.trf.xlu0
        %v6910 = vpop.trf.xlu0
        %v6911 = vpop.trf.xlu0
        %v6912 = vpop.trf.xlu0
        %v6913 = vpop.trf.xlu0
        %v6914 = vpop.trf.xlu0
        %v6915 = vpop.trf.xlu0
        %v6916 = vpop.trf.xlu0
        %v6918 = vsel %vm471, %v6909, 0
        %v6921 = vsel %vm471, %v6910, 0
        %v6924 = vsel %vm471, %v6911, 0
        %v6927 = vsel %vm471, %v6912, 0
        %6929 = vmatprep.subr.bf16.mxu0 0
        %6930 = vmatpush1.bf16.msra.mxu0 0
        %6931 = vmatprep.subr.bf16.mxu0 0
        %6932 = vmatpush1.bf16.msra.mxu0 0
        %6933 = vmatprep.subr.bf16.mxu0 0
        %6934 = vmatpush1.bf16.msra.mxu0 0
        %6935 = vmatprep.subr.bf16.mxu0 0
        %6936 = vmatpush1.bf16.msra.mxu0 0
        %6937 = vmatprep.subr.bf16.mxu0 0
        %6938 = vmatpush1.bf16.msra.mxu0 0
        %6939 = vmatprep.subr.bf16.mxu0 0
        %6940 = vmatpush1.bf16.msra.mxu0 0
        %6941 = vmatprep.subr.bf16.mxu0 0
        %6942 = vmatpush1.bf16.msra.mxu0 %v422
        %6943 = vmatprep.subr.bf16.mxu0 0
        %6944 = vmatpush1.bf16.msra.mxu0 %v421
        %6945 = vmatprep.subr.bf16.mxu0 0
        %6946 = vmatpush2.bf16.msra.mxu0 0
        %6947 = vmatprep.subr.bf16.mxu0 0
        %6948 = vmatpush2.bf16.msra.mxu0 0
        %6949 = vmatprep.subr.bf16.mxu0 0
        %6950 = vmatpush2.bf16.msra.mxu0 0
        %6951 = vmatprep.subr.bf16.mxu0 0
        %6952 = vmatpush2.bf16.msra.mxu0 0
        %6953 = vmatprep.subr.bf16.mxu0 0
        %6954 = vmatpush2.bf16.msra.mxu0 0
        %6955 = vmatprep.subr.bf16.mxu0 0
        %6956 = vmatpush2.bf16.msra.mxu0 0
        %6957 = vmatprep.subr.bf16.mxu0 0
        %6958 = vmatpush2.bf16.msra.mxu0 0
        %6959 = vmatprep.subr.bf16.mxu0 0
        %6960 = vmatpush2.bf16.msra.mxu0 0
        %6961 = vmatprep.mubr.bf16.mxu0 0
        %6962 = vmatmul.mubr.bf16.gmra.mxu0 %v6918
        %v6963 = vpop.f32.mrf.mxu0
        %v6964 = vadd.f32 %v6869, %v6963
        %v6965 = vpop.f32.mrf.mxu0
        %v6966 = vpop.f32.mrf.mxu0
        %v6967 = vadd.f32 %v6872, %v6966
        %v6968 = vpop.f32.mrf.mxu0
        %6969 = vmatprep.mubr.bf16.mxu0 0
        %6970 = vmatmul.mubr.bf16.gmra.mxu0 %v6921
        %v6971 = vpop.f32.mrf.mxu0
        %v6972 = vadd.f32 %v6877, %v6971
        %v6973 = vpop.f32.mrf.mxu0
        %v6974 = vpop.f32.mrf.mxu0
        %v6975 = vadd.f32 %v6880, %v6974
        %v6976 = vpop.f32.mrf.mxu0
        %6977 = vmatprep.mubr.bf16.mxu0 0
        %6978 = vmatmul.mubr.bf16.gmra.mxu0 %v6924
        %v6979 = vpop.f32.mrf.mxu0
        %v6980 = vadd.f32 %v6885, %v6979
        %v6981 = vpop.f32.mrf.mxu0
        %v6982 = vpop.f32.mrf.mxu0
        %v6983 = vadd.f32 %v6888, %v6982
        %v6984 = vpop.f32.mrf.mxu0
        %6985 = vmatprep.mubr.bf16.mxu0 0
        %6986 = vmatmul.mubr.bf16.gmra.mxu0 %v6927
        %v6987 = vpop.f32.mrf.mxu0
        %v6988 = vadd.f32 %v6893, %v6987
        %v6989 = vpop.f32.mrf.mxu0
        %v6990 = vpop.f32.mrf.mxu0
        %v6991 = vadd.f32 %v6896, %v6990
        %v6992 = vpop.f32.mrf.mxu0
        %6993 = vdwg.mxu0
        %6994 = vset.pattern.permute.xlu0 13
        %6995 = vperm.xlu0 %6994, %v3102
        %v6996 = vpop.permute.xlu0 %6995
        %6998 = vset.pattern.permute.xlu0 13
        %6999 = vperm.xlu0 %6998, %v3103
        %v7000 = vpop.permute.xlu0 %6999
        %7002 = vset.pattern.permute.xlu0 13
        %7003 = vperm.xlu0 %7002, %v3104
        %v7004 = vpop.permute.xlu0 %7003
        %7006 = vset.pattern.permute.xlu0 13
        %7007 = vperm.xlu0 %7006, %v3105
        %v7008 = vpop.permute.xlu0 %7007
        %7010 = vset.pattern.permute.xlu0 13
        %7011 = vperm.xlu0 %7010, %v3106
        %v7012 = vpop.permute.xlu0 %7011
        %7014 = vset.pattern.permute.xlu0 13
        %7015 = vperm.xlu0 %7014, %v3107
        %v7016 = vpop.permute.xlu0 %7015
        %7018 = vset.pattern.permute.xlu0 13
        %7019 = vperm.xlu0 %7018, %v3108
        %v7020 = vpop.permute.xlu0 %7019
        %7022 = vset.pattern.permute.xlu0 13
        %7023 = vperm.xlu0 %7022, %v3109
        %v7024 = vpop.permute.xlu0 %7023
        %v7026 = vadd.f32 %v6964, %v6996
        %v7027 = vadd.f32 %v6967, %v7000
        %v7028 = vadd.f32 %v6972, %v7004
        %v7029 = vadd.f32 %v6975, %v7008
        %v7030 = vadd.f32 %v6980, %v7012
        %v7031 = vadd.f32 %v6983, %v7016
        %v7032 = vadd.f32 %v6988, %v7020
        %v7033 = vadd.f32 %v6991, %v7024
        %v7034 = vmax.f32 %v7026, 0.0
        %v7035 = vmax.f32 %v7027, 0.0
        %v7036 = vmax.f32 %v7028, 0.0
        %v7037 = vmax.f32 %v7029, 0.0
        %v7038 = vmax.f32 %v7030, 0.0
        %v7039 = vmax.f32 %v7031, 0.0
        %v7040 = vmax.f32 %v7032, 0.0
        %v7041 = vmax.f32 %v7033, 0.0
        %s7042 = scalar_lea.vmem %s3, 64
        %v7043 = vld [vmem:[%s7042] sm:$0xf]
        %v7044 = vld [vmem:[%s7042 + $0x4] sm:$0xf]
        %v7045 = vld [vmem:[%s7042 + $0x8] sm:$0xf]
        %v7046 = vld [vmem:[%s7042 + $0xc] sm:$0xf]
        %v7047 = vld [vmem:[%s7042 + $0x10] sm:$0xf]
        %v7048 = vld [vmem:[%s7042 + $0x14] sm:$0xf]
        %v7049 = vld [vmem:[%s7042 + $0x18] sm:$0xf]
        %v7050 = vld [vmem:[%s7042 + $0x1c] sm:$0xf]
        %v7051 = vpack.c.bf16 %v7035, %v7034
        %v7052 = vpack.c.bf16 %v7037, %v7036
        %v7053 = vpack.c.bf16 %v7039, %v7038
        %v7054 = vpack.c.bf16 %v7041, %v7040
        %7055 = vset.pattern.permute.xlu0 14
        %7056 = vperm.xlu0 %7055, %v3102
        %v7057 = vpop.permute.xlu0 %7056
        %7059 = vset.pattern.permute.xlu0 14
        %7060 = vperm.xlu0 %7059, %v3103
        %v7061 = vpop.permute.xlu0 %7060
        %7063 = vset.pattern.permute.xlu0 14
        %7064 = vperm.xlu0 %7063, %v3104
        %v7065 = vpop.permute.xlu0 %7064
        %7067 = vset.pattern.permute.xlu0 14
        %7068 = vperm.xlu0 %7067, %v3105
        %v7069 = vpop.permute.xlu0 %7068
        %v7079 = vunpack.c.l.b16 %v7043
        %v7080 = vunpack.c.l.b16 %v7044
        %v7081 = vunpack.c.l.b16 %v7045
        %v7082 = vunpack.c.l.b16 %v7046
        %v7083 = vunpack.c.l.b16 %v7047
        %v7084 = vunpack.c.l.b16 %v7048
        %v7085 = vunpack.c.l.b16 %v7049
        %v7086 = vunpack.c.l.b16 %v7050
        %v7087 = vpack.c.b16 %v7080, %v7079
        %v7088 = vpack.c.b16 %v7082, %v7081
        %v7089 = vpack.c.b16 %v7084, %v7083
        %v7090 = vpack.c.b16 %v7086, %v7085
        %7095 = vxpose.xlu0.c.b16.start [1/8] %v7087, 128
        %7096 = vxpose.xlu0.c.b16.cont [2/8] %v7088, 128
        %7097 = vxpose.xlu0.c.b16.cont [3/8] %v7089, 128
        %7098 = vxpose.xlu0.c.b16.cont [4/8] %v7090, 128
        %7099 = vxpose.xlu0.c.b16.cont [5/8] 0, 128
        %7100 = vxpose.xlu0.c.b16.cont [6/8] 0, 128
        %7101 = vxpose.xlu0.c.b16.cont [7/8] 0, 128
        %7102 = vxpose.xlu0.c.b16.end [8/8] 0, 128
        %v7103 = vpop.trf.xlu0
        %v7104 = vpop.trf.xlu0
        %v7105 = vpop.trf.xlu0
        %v7106 = vpop.trf.xlu0
        %v7107 = vpop.trf.xlu0
        %v7108 = vpop.trf.xlu0
        %v7109 = vpop.trf.xlu0
        %v7110 = vpop.trf.xlu0
        %v7112 = vsel %vm2941, %v7103, 0
        %v7115 = vsel %vm2941, %v7104, 0
        %7117 = vmatprep.subr.bf16.mxu0 0
        %7118 = vmatpush1.bf16.msra.mxu0 0
        %7119 = vmatprep.subr.bf16.mxu0 0
        %7120 = vmatpush1.bf16.msra.mxu0 0
        %7121 = vmatprep.subr.bf16.mxu0 0
        %7122 = vmatpush1.bf16.msra.mxu0 0
        %7123 = vmatprep.subr.bf16.mxu0 0
        %7124 = vmatpush1.bf16.msra.mxu0 0
        %7125 = vmatprep.subr.bf16.mxu0 0
        %7126 = vmatpush1.bf16.msra.mxu0 %v7054
        %7127 = vmatprep.subr.bf16.mxu0 0
        %7128 = vmatpush1.bf16.msra.mxu0 %v7053
        %7129 = vmatprep.subr.bf16.mxu0 0
        %7130 = vmatpush1.bf16.msra.mxu0 %v7052
        %7131 = vmatprep.subr.bf16.mxu0 0
        %7132 = vmatpush1.bf16.msra.mxu0 %v7051
        %7133 = vmatprep.subr.bf16.mxu0 0
        %7134 = vmatpush2.bf16.msra.mxu0 0
        %7135 = vmatprep.subr.bf16.mxu0 0
        %7136 = vmatpush2.bf16.msra.mxu0 0
        %7137 = vmatprep.subr.bf16.mxu0 0
        %7138 = vmatpush2.bf16.msra.mxu0 0
        %7139 = vmatprep.subr.bf16.mxu0 0
        %7140 = vmatpush2.bf16.msra.mxu0 0
        %7141 = vmatprep.subr.bf16.mxu0 0
        %7142 = vmatpush2.bf16.msra.mxu0 0
        %7143 = vmatprep.subr.bf16.mxu0 0
        %7144 = vmatpush2.bf16.msra.mxu0 0
        %7145 = vmatprep.subr.bf16.mxu0 0
        %7146 = vmatpush2.bf16.msra.mxu0 0
        %7147 = vmatprep.subr.bf16.mxu0 0
        %7148 = vmatpush2.bf16.msra.mxu0 0
        %7149 = vmatprep.mubr.bf16.mxu0 0
        %7150 = vmatmul.mubr.bf16.gmra.mxu0 %v7112
        %v7151 = vpop.f32.mrf.mxu0
        %v7152 = vadd.f32 %v7057, %v7151
        %v7153 = vpop.f32.mrf.mxu0
        %v7154 = vpop.f32.mrf.mxu0
        %v7155 = vadd.f32 %v7061, %v7154
        %v7156 = vpop.f32.mrf.mxu0
        %7157 = vmatprep.mubr.bf16.mxu0 0
        %7158 = vmatmul.mubr.bf16.gmra.mxu0 %v7115
        %v7159 = vpop.f32.mrf.mxu0
        %v7160 = vadd.f32 %v7065, %v7159
        %v7161 = vpop.f32.mrf.mxu0
        %v7162 = vpop.f32.mrf.mxu0
        %v7163 = vadd.f32 %v7069, %v7162
        %v7164 = vpop.f32.mrf.mxu0
        %7165 = vdwg.mxu0
        %v7166 = vadd.f32 %v403, %v7152
        %v7167 = vadd.f32 %v404, %v7155
        %v7168 = vadd.f32 %v405, %v7160
        %v7169 = vadd.f32 %v406, %v7163
        %7170 = vst [vmem:[%s372] sm:$0xff] %v7166
        %7171 = vst [vmem:[%s372 + $0x8] sm:$0xff] %v7167
        %7172 = vst [vmem:[%s372 + $0x10] sm:$0xff] %v7168
        %7173 = vst [vmem:[%s372 + $0x18] sm:$0xff] %v7169
        %v7174 = vsub.f32 %v7166, %v403
        %v7175 = vsub.f32 %v7167, %v404
        %v7176 = vsub.f32 %v7168, %v405
        %v7177 = vsub.f32 %v7169, %v406
        %v7178 = vld [vmem:[%s5] sm:$0xf]
        %v7179 = vld [vmem:[%s5 + $0x4] sm:$0xf]
        %v7180 = vld [vmem:[%s5 + $0x8] sm:$0xf]
        %v7181 = vld [vmem:[%s5 + $0xc] sm:$0xf]
        %v7182 = vpack.c.bf16 %v7175, %v7174
        %v7183 = vpack.c.bf16 %v7177, %v7176
        %v7184 = vld [vmem:[%s4] sm:$0xff]
        %v7185 = vld [vmem:[%s4 + $0x8] sm:$0xff]
        %v7186 = vld [vmem:[%s4 + $0x10] sm:$0xff]
        %v7187 = vld [vmem:[%s4 + $0x18] sm:$0xff]
        %v7188 = vld [vmem:[%s4 + $0x20] sm:$0xff]
        %v7189 = vld [vmem:[%s4 + $0x28] sm:$0xff]
        %v7190 = vld [vmem:[%s4 + $0x30] sm:$0xff]
        %v7191 = vld [vmem:[%s4 + $0x38] sm:$0xff]
        %7193 = vset.pattern.permute.xlu0 15
        %7194 = vperm.xlu0 %7193, %v7184
        %v7195 = vpop.permute.xlu0 %7194
        %7198 = vset.pattern.permute.xlu0 15
        %7199 = vperm.xlu0 %7198, %v7185
        %v7200 = vpop.permute.xlu0 %7199
        %7203 = vset.pattern.permute.xlu0 15
        %7204 = vperm.xlu0 %7203, %v7186
        %v7205 = vpop.permute.xlu0 %7204
        %7208 = vset.pattern.permute.xlu0 15
        %7209 = vperm.xlu0 %7208, %v7187
        %v7210 = vpop.permute.xlu0 %7209
        %7213 = vset.pattern.permute.xlu0 15
        %7214 = vperm.xlu0 %7213, %v7188
        %v7215 = vpop.permute.xlu0 %7214
        %7218 = vset.pattern.permute.xlu0 15
        %7219 = vperm.xlu0 %7218, %v7189
        %v7220 = vpop.permute.xlu0 %7219
        %7223 = vset.pattern.permute.xlu0 15
        %7224 = vperm.xlu0 %7223, %v7190
        %v7225 = vpop.permute.xlu0 %7224
        %7228 = vset.pattern.permute.xlu0 15
        %7229 = vperm.xlu0 %7228, %v7191
        %v7230 = vpop.permute.xlu0 %7229
        %v7236 = vunpack.c.l.b16 %v7178
        %v7237 = vunpack.c.l.b16 %v7179
        %v7238 = vunpack.c.l.b16 %v7180
        %v7239 = vunpack.c.l.b16 %v7181
        %v7240 = vpack.c.b16 %v7237, %v7236
        %v7241 = vpack.c.b16 %v7239, %v7238
        %7244 = vxpose.xlu0.c.b16.start [1/8] %v7240, 128
        %7245 = vxpose.xlu0.c.b16.cont [2/8] %v7241, 128
        %7246 = vxpose.xlu0.c.b16.cont [3/8] 0, 128
        %7247 = vxpose.xlu0.c.b16.cont [4/8] 0, 128
        %7248 = vxpose.xlu0.c.b16.cont [5/8] 0, 128
        %7249 = vxpose.xlu0.c.b16.cont [6/8] 0, 128
        %7250 = vxpose.xlu0.c.b16.cont [7/8] 0, 128
        %7251 = vxpose.xlu0.c.b16.end [8/8] 0, 128
        %v7252 = vpop.trf.xlu0
        %v7253 = vpop.trf.xlu0
        %v7254 = vpop.trf.xlu0
        %v7255 = vpop.trf.xlu0
        %v7256 = vpop.trf.xlu0
        %v7257 = vpop.trf.xlu0
        %v7258 = vpop.trf.xlu0
        %v7259 = vpop.trf.xlu0
        %v7261 = vsel %vm471, %v7252, 0
        %v7264 = vsel %vm471, %v7253, 0
        %v7267 = vsel %vm471, %v7254, 0
        %v7270 = vsel %vm471, %v7255, 0
        %7272 = vmatprep.subr.bf16.mxu0 0
        %7273 = vmatpush1.bf16.msra.mxu0 0
        %7274 = vmatprep.subr.bf16.mxu0 0
        %7275 = vmatpush1.bf16.msra.mxu0 0
        %7276 = vmatprep.subr.bf16.mxu0 0
        %7277 = vmatpush1.bf16.msra.mxu0 0
        %7278 = vmatprep.subr.bf16.mxu0 0
        %7279 = vmatpush1.bf16.msra.mxu0 0
        %7280 = vmatprep.subr.bf16.mxu0 0
        %7281 = vmatpush1.bf16.msra.mxu0 0
        %7282 = vmatprep.subr.bf16.mxu0 0
        %7283 = vmatpush1.bf16.msra.mxu0 0
        %7284 = vmatprep.subr.bf16.mxu0 0
        %7285 = vmatpush1.bf16.msra.mxu0 %v7183
        %7286 = vmatprep.subr.bf16.mxu0 0
        %7287 = vmatpush1.bf16.msra.mxu0 %v7182
        %7288 = vmatprep.subr.bf16.mxu0 0
        %7289 = vmatpush2.bf16.msra.mxu0 0
        %7290 = vmatprep.subr.bf16.mxu0 0
        %7291 = vmatpush2.bf16.msra.mxu0 0
        %7292 = vmatprep.subr.bf16.mxu0 0
        %7293 = vmatpush2.bf16.msra.mxu0 0
        %7294 = vmatprep.subr.bf16.mxu0 0
        %7295 = vmatpush2.bf16.msra.mxu0 0
        %7296 = vmatprep.subr.bf16.mxu0 0
        %7297 = vmatpush2.bf16.msra.mxu0 0
        %7298 = vmatprep.subr.bf16.mxu0 0
        %7299 = vmatpush2.bf16.msra.mxu0 0
        %7300 = vmatprep.subr.bf16.mxu0 0
        %7301 = vmatpush2.bf16.msra.mxu0 0
        %7302 = vmatprep.subr.bf16.mxu0 0
        %7303 = vmatpush2.bf16.msra.mxu0 0
        %7304 = vmatprep.mubr.bf16.mxu0 0
        %7305 = vmatmul.mubr.bf16.gmra.mxu0 %v7261
        %v7306 = vpop.f32.mrf.mxu0
        %v7307 = vadd.f32 %v7195, %v7306
        %v7308 = vpop.f32.mrf.mxu0
        %v7309 = vpop.f32.mrf.mxu0
        %v7310 = vadd.f32 %v7200, %v7309
        %v7311 = vpop.f32.mrf.mxu0
        %7312 = vmatprep.mubr.bf16.mxu0 0
        %7313 = vmatmul.mubr.bf16.gmra.mxu0 %v7264
        %v7314 = vpop.f32.mrf.mxu0
        %v7315 = vadd.f32 %v7205, %v7314
        %v7316 = vpop.f32.mrf.mxu0
        %v7317 = vpop.f32.mrf.mxu0
        %v7318 = vadd.f32 %v7210, %v7317
        %v7319 = vpop.f32.mrf.mxu0
        %7320 = vmatprep.mubr.bf16.mxu0 0
        %7321 = vmatmul.mubr.bf16.gmra.mxu0 %v7267
        %v7322 = vpop.f32.mrf.mxu0
        %v7323 = vadd.f32 %v7215, %v7322
        %v7324 = vpop.f32.mrf.mxu0
        %v7325 = vpop.f32.mrf.mxu0
        %v7326 = vadd.f32 %v7220, %v7325
        %v7327 = vpop.f32.mrf.mxu0
        %7328 = vmatprep.mubr.bf16.mxu0 0
        %7329 = vmatmul.mubr.bf16.gmra.mxu0 %v7270
        %v7330 = vpop.f32.mrf.mxu0
        %v7331 = vadd.f32 %v7225, %v7330
        %v7332 = vpop.f32.mrf.mxu0
        %v7333 = vpop.f32.mrf.mxu0
        %v7334 = vadd.f32 %v7230, %v7333
        %v7335 = vpop.f32.mrf.mxu0
        %7336 = vdwg.mxu0
        %7337 = vadd.xlane.f32.xlu0 %v7307
        %v7338 = vpop.xlane.xlu0 %7337
        %7339 = vadd.xlane.f32.xlu0 %v7310
        %v7340 = vpop.xlane.xlu0 %7339
        %7341 = vadd.xlane.f32.xlu0 %v7315
        %v7342 = vpop.xlane.xlu0 %7341
        %7343 = vadd.xlane.f32.xlu0 %v7318
        %v7344 = vpop.xlane.xlu0 %7343
        %7345 = vadd.xlane.f32.xlu0 %v7323
        %v7346 = vpop.xlane.xlu0 %7345
        %7347 = vadd.xlane.f32.xlu0 %v7326
        %v7348 = vpop.xlane.xlu0 %7347
        %7349 = vadd.xlane.f32.xlu0 %v7331
        %v7350 = vpop.xlane.xlu0 %7349
        %7351 = vadd.xlane.f32.xlu0 %v7334
        %v7352 = vpop.xlane.xlu0 %7351
        %v7353 = vrcp.pop 128.0
        %v7354 = vmul.f32 %v7338, %v7353
        %v7355 = vmul.f32 %v7340, %v7353
        %v7356 = vmul.f32 %v7342, %v7353
        %v7357 = vmul.f32 %v7344, %v7353
        %v7358 = vmul.f32 %v7346, %v7353
        %v7359 = vmul.f32 %v7348, %v7353
        %v7360 = vmul.f32 %v7350, %v7353
        %v7361 = vmul.f32 %v7352, %v7353
        %v7362 = vsub.f32 %v7307, %v7354
        %v7363 = vsub.f32 %v7310, %v7355
        %v7364 = vsub.f32 %v7315, %v7356
        %v7365 = vsub.f32 %v7318, %v7357
        %v7366 = vsub.f32 %v7323, %v7358
        %v7367 = vsub.f32 %v7326, %v7359
        %v7368 = vsub.f32 %v7331, %v7360
        %v7369 = vsub.f32 %v7334, %v7361
        %v7370 = vmul.f32 %v7362, %v7362
        %v7371 = vmul.f32 %v7363, %v7363
        %v7372 = vmul.f32 %v7364, %v7364
        %v7373 = vmul.f32 %v7365, %v7365
        %v7374 = vmul.f32 %v7366, %v7366
        %v7375 = vmul.f32 %v7367, %v7367
        %v7376 = vmul.f32 %v7368, %v7368
        %v7377 = vmul.f32 %v7369, %v7369
        %7378 = vadd.xlane.f32.xlu0 %v7370
        %v7379 = vpop.xlane.xlu0 %7378
        %7380 = vadd.xlane.f32.xlu0 %v7371
        %v7381 = vpop.xlane.xlu0 %7380
        %7382 = vadd.xlane.f32.xlu0 %v7372
        %v7383 = vpop.xlane.xlu0 %7382
        %7384 = vadd.xlane.f32.xlu0 %v7373
        %v7385 = vpop.xlane.xlu0 %7384
        %7386 = vadd.xlane.f32.xlu0 %v7374
        %v7387 = vpop.xlane.xlu0 %7386
        %7388 = vadd.xlane.f32.xlu0 %v7375
        %v7389 = vpop.xlane.xlu0 %7388
        %7390 = vadd.xlane.f32.xlu0 %v7376
        %v7391 = vpop.xlane.xlu0 %7390
        %7392 = vadd.xlane.f32.xlu0 %v7377
        %v7393 = vpop.xlane.xlu0 %7392
        %v7394 = vmul.f32 %v7379, %v7353
        %v7395 = vmul.f32 %v7381, %v7353
        %v7396 = vmul.f32 %v7383, %v7353
        %v7397 = vmul.f32 %v7385, %v7353
        %v7398 = vmul.f32 %v7387, %v7353
        %v7399 = vmul.f32 %v7389, %v7353
        %v7400 = vmul.f32 %v7391, %v7353
        %v7401 = vmul.f32 %v7393, %v7353
        %v7402 = vadd.f32 %v7394, 0.001
        %v7403 = vadd.f32 %v7395, 0.001
        %v7404 = vadd.f32 %v7396, 0.001
        %v7405 = vadd.f32 %v7397, 0.001
        %v7406 = vadd.f32 %v7398, 0.001
        %v7407 = vadd.f32 %v7399, 0.001
        %v7408 = vadd.f32 %v7400, 0.001
        %v7409 = vadd.f32 %v7401, 0.001
        %v7410 = vrsqrt.pop %v7402
        %v7411 = vrsqrt.pop %v7403
        %v7412 = vrsqrt.pop %v7404
        %v7413 = vrsqrt.pop %v7405
        %v7414 = vrsqrt.pop %v7406
        %v7415 = vrsqrt.pop %v7407
        %v7416 = vrsqrt.pop %v7408
        %v7417 = vrsqrt.pop %v7409
        %v7418 = vmul.f32 %v7362, %v7410
        %v7419 = vmul.f32 %v7363, %v7411
        %v7420 = vmul.f32 %v7364, %v7412
        %v7421 = vmul.f32 %v7365, %v7413
        %v7422 = vmul.f32 %v7366, %v7414
        %v7423 = vmul.f32 %v7367, %v7415
        %v7424 = vmul.f32 %v7368, %v7416
        %v7425 = vmul.f32 %v7369, %v7417
        %7426 = vset.pattern.permute.xlu0 16
        %7427 = vperm.xlu0 %7426, %v7184
        %v7428 = vpop.permute.xlu0 %7427
        %7430 = vset.pattern.permute.xlu0 16
        %7431 = vperm.xlu0 %7430, %v7185
        %v7432 = vpop.permute.xlu0 %7431
        %7434 = vset.pattern.permute.xlu0 16
        %7435 = vperm.xlu0 %7434, %v7186
        %v7436 = vpop.permute.xlu0 %7435
        %7438 = vset.pattern.permute.xlu0 16
        %7439 = vperm.xlu0 %7438, %v7187
        %v7440 = vpop.permute.xlu0 %7439
        %7442 = vset.pattern.permute.xlu0 16
        %7443 = vperm.xlu0 %7442, %v7188
        %v7444 = vpop.permute.xlu0 %7443
        %7446 = vset.pattern.permute.xlu0 16
        %7447 = vperm.xlu0 %7446, %v7189
        %v7448 = vpop.permute.xlu0 %7447
        %7450 = vset.pattern.permute.xlu0 16
        %7451 = vperm.xlu0 %7450, %v7190
        %v7452 = vpop.permute.xlu0 %7451
        %7454 = vset.pattern.permute.xlu0 16
        %7455 = vperm.xlu0 %7454, %v7191
        %v7456 = vpop.permute.xlu0 %7455
        %v7458 = vmul.f32 %v7418, %v7428
        %v7459 = vmul.f32 %v7419, %v7432
        %v7460 = vmul.f32 %v7420, %v7436
        %v7461 = vmul.f32 %v7421, %v7440
        %v7462 = vmul.f32 %v7422, %v7444
        %v7463 = vmul.f32 %v7423, %v7448
        %v7464 = vmul.f32 %v7424, %v7452
        %v7465 = vmul.f32 %v7425, %v7456
        %7466 = vset.pattern.permute.xlu0 17
        %7467 = vperm.xlu0 %7466, %v7184
        %v7468 = vpop.permute.xlu0 %7467
        %7470 = vset.pattern.permute.xlu0 17
        %7471 = vperm.xlu0 %7470, %v7185
        %v7472 = vpop.permute.xlu0 %7471
        %7474 = vset.pattern.permute.xlu0 17
        %7475 = vperm.xlu0 %7474, %v7186
        %v7476 = vpop.permute.xlu0 %7475
        %7478 = vset.pattern.permute.xlu0 17
        %7479 = vperm.xlu0 %7478, %v7187
        %v7480 = vpop.permute.xlu0 %7479
        %7482 = vset.pattern.permute.xlu0 17
        %7483 = vperm.xlu0 %7482, %v7188
        %v7484 = vpop.permute.xlu0 %7483
        %7486 = vset.pattern.permute.xlu0 17
        %7487 = vperm.xlu0 %7486, %v7189
        %v7488 = vpop.permute.xlu0 %7487
        %7490 = vset.pattern.permute.xlu0 17
        %7491 = vperm.xlu0 %7490, %v7190
        %v7492 = vpop.permute.xlu0 %7491
        %7494 = vset.pattern.permute.xlu0 17
        %7495 = vperm.xlu0 %7494, %v7191
        %v7496 = vpop.permute.xlu0 %7495
        %v7498 = vadd.f32 %v7458, %v7468
        %v7499 = vadd.f32 %v7459, %v7472
        %v7500 = vadd.f32 %v7460, %v7476
        %v7501 = vadd.f32 %v7461, %v7480
        %v7502 = vadd.f32 %v7462, %v7484
        %v7503 = vadd.f32 %v7463, %v7488
        %v7504 = vadd.f32 %v7464, %v7492
        %v7505 = vadd.f32 %v7465, %v7496
        %v7506 = vmax.f32 %v7498, 0.0
        %v7507 = vmax.f32 %v7499, 0.0
        %v7508 = vmax.f32 %v7500, 0.0
        %v7509 = vmax.f32 %v7501, 0.0
        %v7510 = vmax.f32 %v7502, 0.0
        %v7511 = vmax.f32 %v7503, 0.0
        %v7512 = vmax.f32 %v7504, 0.0
        %v7513 = vmax.f32 %v7505, 0.0
        %v7514 = vld [vmem:[%s5] sm:$0xf]
        %v7515 = vld [vmem:[%s5 + $0x4] sm:$0xf]
        %v7516 = vld [vmem:[%s5 + $0x8] sm:$0xf]
        %v7517 = vld [vmem:[%s5 + $0xc] sm:$0xf]
        %v7518 = vld [vmem:[%s5 + $0x10] sm:$0xf]
        %v7519 = vld [vmem:[%s5 + $0x14] sm:$0xf]
        %v7520 = vld [vmem:[%s5 + $0x18] sm:$0xf]
        %v7521 = vld [vmem:[%s5 + $0x1c] sm:$0xf]
        %v7522 = vpack.c.bf16 %v7507, %v7506
        %v7523 = vpack.c.bf16 %v7509, %v7508
        %v7524 = vpack.c.bf16 %v7511, %v7510
        %v7525 = vpack.c.bf16 %v7513, %v7512
        %v7526 = vld [vmem:[%s4] sm:$0xff]
        %v7527 = vld [vmem:[%s4 + $0x8] sm:$0xff]
        %7529 = vset.pattern.permute.xlu0 18
        %7530 = vperm.xlu0 %7529, %v7526
        %v7531 = vpop.permute.xlu0 %7530
        %7534 = vset.pattern.permute.xlu0 18
        %7535 = vperm.xlu0 %7534, %v7527
        %v7536 = vpop.permute.xlu0 %7535
        %v7546 = vunpack.c.l.b16 %v7514
        %v7547 = vunpack.c.l.b16 %v7515
        %v7548 = vunpack.c.l.b16 %v7516
        %v7549 = vunpack.c.l.b16 %v7517
        %v7550 = vunpack.c.l.b16 %v7518
        %v7551 = vunpack.c.l.b16 %v7519
        %v7552 = vunpack.c.l.b16 %v7520
        %v7553 = vunpack.c.l.b16 %v7521
        %v7554 = vpack.c.b16 %v7547, %v7546
        %v7555 = vpack.c.b16 %v7549, %v7548
        %v7556 = vpack.c.b16 %v7551, %v7550
        %v7557 = vpack.c.b16 %v7553, %v7552
        %7558 = vrot.lane.b32.xlu0 %v7554, 64
        %v7559 = vpop.permute.xlu0 %7558
        %7560 = vrot.lane.b32.xlu0 %v7555, 64
        %v7561 = vpop.permute.xlu0 %7560
        %7562 = vrot.lane.b32.xlu0 %v7556, 64
        %v7563 = vpop.permute.xlu0 %7562
        %7564 = vrot.lane.b32.xlu0 %v7557, 64
        %v7565 = vpop.permute.xlu0 %7564
        %7570 = vxpose.xlu0.c.b16.start [1/8] %v7559, 128
        %7571 = vxpose.xlu0.c.b16.cont [2/8] %v7561, 128
        %7572 = vxpose.xlu0.c.b16.cont [3/8] %v7563, 128
        %7573 = vxpose.xlu0.c.b16.cont [4/8] %v7565, 128
        %7574 = vxpose.xlu0.c.b16.cont [5/8] 0, 128
        %7575 = vxpose.xlu0.c.b16.cont [6/8] 0, 128
        %7576 = vxpose.xlu0.c.b16.cont [7/8] 0, 128
        %7577 = vxpose.xlu0.c.b16.end [8/8] 0, 128
        %v7578 = vpop.trf.xlu0
        %v7579 = vpop.trf.xlu0
        %v7580 = vpop.trf.xlu0
        %v7581 = vpop.trf.xlu0
        %v7582 = vpop.trf.xlu0
        %v7583 = vpop.trf.xlu0
        %v7584 = vpop.trf.xlu0
        %v7585 = vpop.trf.xlu0
        %v7587 = vsel %vm2941, %v7578, 0
        %7589 = vmatprep.subr.bf16.mxu0 0
        %7590 = vmatpush1.bf16.msra.mxu0 0
        %7591 = vmatprep.subr.bf16.mxu0 0
        %7592 = vmatpush1.bf16.msra.mxu0 0
        %7593 = vmatprep.subr.bf16.mxu0 0
        %7594 = vmatpush1.bf16.msra.mxu0 0
        %7595 = vmatprep.subr.bf16.mxu0 0
        %7596 = vmatpush1.bf16.msra.mxu0 0
        %7597 = vmatprep.subr.bf16.mxu0 0
        %7598 = vmatpush1.bf16.msra.mxu0 %v7525
        %7599 = vmatprep.subr.bf16.mxu0 0
        %7600 = vmatpush1.bf16.msra.mxu0 %v7524
        %7601 = vmatprep.subr.bf16.mxu0 0
        %7602 = vmatpush1.bf16.msra.mxu0 %v7523
        %7603 = vmatprep.subr.bf16.mxu0 0
        %7604 = vmatpush1.bf16.msra.mxu0 %v7522
        %7605 = vmatprep.subr.bf16.mxu0 0
        %7606 = vmatpush2.bf16.msra.mxu0 0
        %7607 = vmatprep.subr.bf16.mxu0 0
        %7608 = vmatpush2.bf16.msra.mxu0 0
        %7609 = vmatprep.subr.bf16.mxu0 0
        %7610 = vmatpush2.bf16.msra.mxu0 0
        %7611 = vmatprep.subr.bf16.mxu0 0
        %7612 = vmatpush2.bf16.msra.mxu0 0
        %7613 = vmatprep.subr.bf16.mxu0 0
        %7614 = vmatpush2.bf16.msra.mxu0 0
        %7615 = vmatprep.subr.bf16.mxu0 0
        %7616 = vmatpush2.bf16.msra.mxu0 0
        %7617 = vmatprep.subr.bf16.mxu0 0
        %7618 = vmatpush2.bf16.msra.mxu0 0
        %7619 = vmatprep.subr.bf16.mxu0 0
        %7620 = vmatpush2.bf16.msra.mxu0 0
        %7621 = vmatprep.mubr.bf16.mxu0 0
        %7622 = vmatmul.mubr.bf16.gmra.mxu0 %v7587
        %v7623 = vpop.f32.mrf.mxu0
        %v7624 = vadd.f32 %v7531, %v7623
        %v7625 = vpop.f32.mrf.mxu0
        %v7626 = vpop.f32.mrf.mxu0
        %v7627 = vadd.f32 %v7536, %v7626
        %v7628 = vpop.f32.mrf.mxu0
        %7629 = vdwg.mxu0
        %7630 = vadd.xlane.f32.xlu0 %v7624
        %v7631 = vpop.xlane.xlu0 %7630
        %7632 = vadd.xlane.f32.xlu0 %v7627
        %v7633 = vpop.xlane.xlu0 %7632
        %v7634 = vmul.f32 %v7631, %v7353
        %v7635 = vmul.f32 %v7633, %v7353
        %v7636 = vsub.f32 %v7624, %v7634
        %v7637 = vsub.f32 %v7627, %v7635
        %v7638 = vmul.f32 %v7636, %v7636
        %v7639 = vmul.f32 %v7637, %v7637
        %7640 = vadd.xlane.f32.xlu0 %v7638
        %v7641 = vpop.xlane.xlu0 %7640
        %7642 = vadd.xlane.f32.xlu0 %v7639
        %v7643 = vpop.xlane.xlu0 %7642
        %v7644 = vmul.f32 %v7641, %v7353
        %v7645 = vmul.f32 %v7643, %v7353
        %v7646 = vadd.f32 %v7644, 0.001
        %v7647 = vadd.f32 %v7645, 0.001
        %v7648 = vrsqrt.pop %v7646
        %v7649 = vrsqrt.pop %v7647
        %v7650 = vmul.f32 %v7636, %v7648
        %v7651 = vmul.f32 %v7637, %v7649
        %7652 = vset.pattern.permute.xlu0 19
        %7653 = vperm.xlu0 %7652, %v7526
        %v7654 = vpop.permute.xlu0 %7653
        %7656 = vset.pattern.permute.xlu0 19
        %7657 = vperm.xlu0 %7656, %v7527
        %v7658 = vpop.permute.xlu0 %7657
        %v7660 = vmul.f32 %v7650, %v7654
        %v7661 = vmul.f32 %v7651, %v7658
        %7662 = vset.pattern.permute.xlu0 20
        %7663 = vperm.xlu0 %7662, %v7526
        %v7664 = vpop.permute.xlu0 %7663
        %7666 = vset.pattern.permute.xlu0 20
        %7667 = vperm.xlu0 %7666, %v7527
        %v7668 = vpop.permute.xlu0 %7667
        %v7670 = vadd.f32 %v7660, %v7664
        %v7671 = vadd.f32 %v7661, %v7668
        %v7672 = vmax.f32 %v7670, 0.0
        %v7673 = vmax.f32 %v7671, 0.0
        %v7674 = vld [vmem:[%s5] sm:$0xf]
        %v7675 = vld [vmem:[%s5 + $0x4] sm:$0xf]
        %v7676 = vpack.c.bf16 %v7673, %v7672
        %v7677 = vld [vmem:[%s4] sm:$0xf]
        %7679 = vset.pattern.permute.xlu0 21
        %7680 = vperm.xlu0 %7679, %v7677
        %v7681 = vpop.permute.xlu0 %7680
        %v7685 = vunpack.c.l.b16 %v7674
        %v7686 = vunpack.c.l.b16 %v7675
        %v7687 = vpack.c.b16 %v7686, %v7685
        %7688 = vrot.lane.b32.xlu0 %v7687, 48
        %v7689 = vpop.permute.xlu0 %7688
        %7691 = vxpose.xlu0.c.b16.start [1/8] %v7689, 128
        %7692 = vxpose.xlu0.c.b16.cont [2/8] 0, 128
        %7693 = vxpose.xlu0.c.b16.cont [3/8] 0, 128
        %7694 = vxpose.xlu0.c.b16.cont [4/8] 0, 128
        %7695 = vxpose.xlu0.c.b16.cont [5/8] 0, 128
        %7696 = vxpose.xlu0.c.b16.cont [6/8] 0, 128
        %7697 = vxpose.xlu0.c.b16.cont [7/8] 0, 128
        %7698 = vxpose.xlu0.c.b16.end [8/8] 0, 128
        %v7699 = vpop.trf.xlu0
        %v7700 = vpop.trf.xlu0
        %v7701 = vpop.trf.xlu0
        %v7702 = vpop.trf.xlu0
        %v7703 = vpop.trf.xlu0
        %v7704 = vpop.trf.xlu0
        %v7705 = vpop.trf.xlu0
        %v7706 = vpop.trf.xlu0
        %vm7707 = vcmask 130048
        %v7709 = vsel %vm7707, %v7699, 0
        %7711 = vmatprep.subr.bf16.mxu0 0
        %7712 = vmatpush1.bf16.msra.mxu0 0
        %7713 = vmatprep.subr.bf16.mxu0 0
        %7714 = vmatpush1.bf16.msra.mxu0 0
        %7715 = vmatprep.subr.bf16.mxu0 0
        %7716 = vmatpush1.bf16.msra.mxu0 0
        %7717 = vmatprep.subr.bf16.mxu0 0
        %7718 = vmatpush1.bf16.msra.mxu0 0
        %7719 = vmatprep.subr.bf16.mxu0 0
        %7720 = vmatpush1.bf16.msra.mxu0 0
        %7721 = vmatprep.subr.bf16.mxu0 0
        %7722 = vmatpush1.bf16.msra.mxu0 0
        %7723 = vmatprep.subr.bf16.mxu0 0
        %7724 = vmatpush1.bf16.msra.mxu0 0
        %7725 = vmatprep.subr.bf16.mxu0 0
        %7726 = vmatpush1.bf16.msra.mxu0 %v7676
        %7727 = vmatprep.subr.bf16.mxu0 0
        %7728 = vmatpush2.bf16.msra.mxu0 0
        %7729 = vmatprep.subr.bf16.mxu0 0
        %7730 = vmatpush2.bf16.msra.mxu0 0
        %7731 = vmatprep.subr.bf16.mxu0 0
        %7732 = vmatpush2.bf16.msra.mxu0 0
        %7733 = vmatprep.subr.bf16.mxu0 0
        %7734 = vmatpush2.bf16.msra.mxu0 0
        %7735 = vmatprep.subr.bf16.mxu0 0
        %7736 = vmatpush2.bf16.msra.mxu0 0
        %7737 = vmatprep.subr.bf16.mxu0 0
        %7738 = vmatpush2.bf16.msra.mxu0 0
        %7739 = vmatprep.subr.bf16.mxu0 0
        %7740 = vmatpush2.bf16.msra.mxu0 0
        %7741 = vmatprep.subr.bf16.mxu0 0
        %7742 = vmatpush2.bf16.msra.mxu0 0
        %7743 = vmatprep.mubr.bf16.mxu0 0
        %7744 = vmatmul.mubr.bf16.gmra.mxu0 %v7709
        %v7745 = vpop.f32.mrf.mxu0
        %v7746 = vadd.f32 %v7681, %v7745
        %v7747 = vpop.f32.mrf.mxu0
        %v7748 = vpop.f32.mrf.mxu0
        %v7749 = vpop.f32.mrf.mxu0
        %7750 = vdwg.mxu0
        %v7751 = vsel %vm706, %v7746, 0.0
        %7752 = vadd.xlane.f32.xlu0 %v7751
        %v7753 = vpop.xlane.xlu0 %7752
        %v7754 = vmul.f32 %v7753, %v7353
        %v7755 = vsub.f32 %v7746, %v7754
        %v7756 = vmul.f32 %v7755, %v7755
        %v7757 = vsel %vm706, %v7756, 0.0
        %7758 = vadd.xlane.f32.xlu0 %v7757
        %v7759 = vpop.xlane.xlu0 %7758
        %v7760 = vmul.f32 %v7759, %v7353
        %v7761 = vadd.f32 %v7760, 0.001
        %v7762 = vrsqrt.pop %v7761
        %v7763 = vmul.f32 %v7755, %v7762
        %7764 = vset.pattern.permute.xlu0 22
        %7765 = vperm.xlu0 %7764, %v7677
        %v7766 = vpop.permute.xlu0 %7765
        %v7768 = vmul.f32 %v7763, %v7766
        %7769 = vset.pattern.permute.xlu0 23
        %7770 = vperm.xlu0 %7769, %v7677
        %v7771 = vpop.permute.xlu0 %7770
        %v7773 = vadd.f32 %v7768, %v7771
        %v7774 = vmax.f32 %v7773, 0.0
        %v7775 = vld [vmem:[%s5] sm:$0x3]
        %v7776 = vpack.c.bf16 %v7774, %v7774
        %v7777 = vld [vmem:[%s4] sm:$0x1]
        %7779 = vset.pattern.permute.xlu0 24
        %7780 = vperm.xlu0 %7779, %v7777
        %v7781 = vpop.permute.xlu0 %7780
        %v7784 = vunpack.c.l.b16 %v7775
        %v7785 = vpack.c.b16 %v7784, %v7784
        %7786 = vrot.lane.b32.xlu0 %v7785, 44
        %v7787 = vpop.permute.xlu0 %7786
        %7789 = vxpose.xlu0.c.b16.start [1/8] %v7787, 128
        %7790 = vxpose.xlu0.c.b16.cont [2/8] 0, 128
        %7791 = vxpose.xlu0.c.b16.cont [3/8] 0, 128
        %7792 = vxpose.xlu0.c.b16.cont [4/8] 0, 128
        %7793 = vxpose.xlu0.c.b16.cont [5/8] 0, 128
        %7794 = vxpose.xlu0.c.b16.cont [6/8] 0, 128
        %7795 = vxpose.xlu0.c.b16.cont [7/8] 0, 128
        %7796 = vxpose.xlu0.c.b16.end [8/8] 0, 128
        %v7797 = vpop.trf.xlu0
        %v7798 = vpop.trf.xlu0
        %v7799 = vpop.trf.xlu0
        %v7800 = vpop.trf.xlu0
        %v7801 = vpop.trf.xlu0
        %v7802 = vpop.trf.xlu0
        %v7803 = vpop.trf.xlu0
        %v7804 = vpop.trf.xlu0
        %vm7805 = vcmask 31744
        %v7807 = vsel %vm7805, %v7797, 0
        %vm7809 = vcmask 1041408
        %v7811 = vsel %vm7809, %v7776, 0
        %7813 = vmatprep.subr.bf16.mxu0 0
        %7814 = vmatpush1.bf16.msra.mxu0 0
        %7815 = vmatprep.subr.bf16.mxu0 0
        %7816 = vmatpush1.bf16.msra.mxu0 0
        %7817 = vmatprep.subr.bf16.mxu0 0
        %7818 = vmatpush1.bf16.msra.mxu0 0
        %7819 = vmatprep.subr.bf16.mxu0 0
        %7820 = vmatpush1.bf16.msra.mxu0 0
        %7821 = vmatprep.subr.bf16.mxu0 0
        %7822 = vmatpush1.bf16.msra.mxu0 0
        %7823 = vmatprep.subr.bf16.mxu0 0
        %7824 = vmatpush1.bf16.msra.mxu0 0
        %7825 = vmatprep.subr.bf16.mxu0 0
        %7826 = vmatpush1.bf16.msra.mxu0 0
        %7827 = vmatprep.subr.bf16.mxu0 0
        %7828 = vmatpush1.bf16.msra.mxu0 %v7811
        %7829 = vmatprep.subr.bf16.mxu0 0
        %7830 = vmatpush2.bf16.msra.mxu0 0
        %7831 = vmatprep.subr.bf16.mxu0 0
        %7832 = vmatpush2.bf16.msra.mxu0 0
        %7833 = vmatprep.subr.bf16.mxu0 0
        %7834 = vmatpush2.bf16.msra.mxu0 0
        %7835 = vmatprep.subr.bf16.mxu0 0
        %7836 = vmatpush2.bf16.msra.mxu0 0
        %7837 = vmatprep.subr.bf16.mxu0 0
        %7838 = vmatpush2.bf16.msra.mxu0 0
        %7839 = vmatprep.subr.bf16.mxu0 0
        %7840 = vmatpush2.bf16.msra.mxu0 0
        %7841 = vmatprep.subr.bf16.mxu0 0
        %7842 = vmatpush2.bf16.msra.mxu0 0
        %7843 = vmatprep.subr.bf16.mxu0 0
        %7844 = vmatpush2.bf16.msra.mxu0 0
        %7845 = vmatprep.mubr.bf16.mxu0 0
        %7846 = vmatmul.mubr.bf16.gmra.mxu0 %v7807
        %v7847 = vpop.f32.mrf.mxu0
        %v7848 = vadd.f32 %v7781, %v7847
        %v7849 = vpop.f32.mrf.mxu0
        %v7850 = vpop.f32.mrf.mxu0
        %v7851 = vpop.f32.mrf.mxu0
        %7852 = vdwg.mxu0
        %7853 = vst [vmem:[%s378] sm:$0x1] %v7848
        %s7854 = sand.u32 %s177, 1
        %s7855 = scalar_lea.sflag [#allocation4], %s7854
        %s7856 = sand.u32 %s177, 1
        %s7857 = smul.addr %s7856, 32
        %s7858 = scalar_lea.vmem [#allocation5], %s7857
        %s7859 = sand.u32 %s33, 1
        %s7860 = scalar_lea.sflag [#allocation7], %s7859
        %s7861 = sand.u32 %s203, 1
        %s7862 = scalar_lea.vmem [#allocation6], %s7861
        %s7863 = sand.u32 %s33, 1
        %s7864 = scalar_lea.sflag [#allocation7], %s7863
        %s7865 = sand.u32 %s229, 1
        %s7866 = smul.addr %s7865, 128
        %s7867 = scalar_lea.vmem [#allocation8], %s7866
        %s7868 = sand.u32 %s255, 1
        %s7869 = scalar_lea.sflag [#allocation10], %s7868
        %s7870 = sand.u32 %s255, 1
        %s7871 = smul.addr %s7870, 128
        %s7872 = scalar_lea.vmem [#allocation9], %s7871
        // Predicated region
        $region49: #{layer_block_forward.1} parent=43 // pred_check
          %p7873 = pneg %p187
        $region50: #{layer_block_forward.1} parent=43 // pred_check_branch
          %7875 = sbr.rel (%p7873) target = $region52
        $region51: #{layer_block_forward.1} parent=43 // pred_region
          %s7877 = ssub.s32 512, 512
          %7878 = vsyncadd %s7855, %s7877
          %s7879 = smul.addr %s33, 4
          %s7880 = smul.addr %s7879, 128
          %s7881 = scalar_lea.hbm %s6, %s7880
          %s7882 = sshll.u32 %s7858, 4
          %s7883 = int_to_ptr.vmem [resolvable:$true] %s7882
          %7888 = dma.vmem_to_hbm [thread:$0]  %s7883, 512, %s7881, %s7855, 128, 128, 8
        $region52: #{layer_block_forward.1} parent=43 // pred_fallthru
          _
        // Predicated region
        $region53: #{layer_block_forward.1} parent=43 // pred_check
          %p7889 = pneg %p213
        $region54: #{layer_block_forward.1} parent=43 // pred_check_branch
          %7891 = sbr.rel (%p7889) target = $region56
        $region55: #{layer_block_forward.1} parent=43 // pred_region
          %s7893 = ssub.s32 16, 16
          %7894 = vsyncadd %s7860, %s7893
          %s7895 = smul.addr %s33, 16
          %s7896 = scalar_lea.hbm %s7, %s7895
          %s7898 = sshll.u32 %s7862, 4
          %s7899 = int_to_ptr.vmem [resolvable:$true] %s7898
          %7901 = dma.vmem_to_hbm [thread:$0]  %s7899, 16, %s7896, %s7860
        $region56: #{layer_block_forward.1} parent=43 // pred_fallthru
          _
        // Predicated region
        $region57: #{layer_block_forward.1} parent=43 // pred_check
          %p7902 = pneg %p239
        $region58: #{layer_block_forward.1} parent=43 // pred_check_branch
          %7904 = sbr.rel (%p7902) target = $region60
        $region59: #{layer_block_forward.1} parent=43 // pred_region
          %s7906 = ssub.s32 2048, 2048
          %7907 = vsyncadd %s7864, %s7906
          %s7908 = smul.addr %s33, 16
          %s7909 = smul.addr %s7908, 128
          %s7910 = scalar_lea.hbm %s8, %s7909
          %s7911 = sshll.u32 %s7867, 4
          %s7912 = int_to_ptr.vmem [resolvable:$true] %s7911
          %7917 = dma.vmem_to_hbm [thread:$0]  %s7912, 2048, %s7910, %s7864, 128, 128, 8
        $region60: #{layer_block_forward.1} parent=43 // pred_fallthru
          _
        // Predicated region
        $region61: #{layer_block_forward.1} parent=43 // pred_check
          %p7918 = pneg %p265
        $region62: #{layer_block_forward.1} parent=43 // pred_check_branch
          %7920 = sbr.rel (%p7918) target = $region64
        $region63: #{layer_block_forward.1} parent=43 // pred_region
          %s7922 = ssub.s32 2048, 2048
          %7923 = vsyncadd %s7869, %s7922
          %s7924 = smul.addr %s33, 16
          %s7925 = smul.addr %s7924, 128
          %s7926 = scalar_lea.hbm %s9, %s7925
          %s7927 = sshll.u32 %s7872, 4
          %s7928 = int_to_ptr.vmem [resolvable:$true] %s7927
          %7933 = dma.vmem_to_hbm [thread:$0]  %s7928, 2048, %s7926, %s7869, 128, 128, 8
        $region64: #{layer_block_forward.1} parent=43 // pred_fallthru
          _
      $region44: #{layer_block_forward.1} parent=5 // pred_fallthru
        _
      %p7934 = scmp.le.s32.totalorder 2, %s28
      // Predicated region
      $region65: #{layer_block_forward.1} parent=5 // pred_check
        %p7935 = pneg %p7934
      $region66: #{layer_block_forward.1} parent=5 // pred_check_branch
        %7937 = sbr.rel (%p7935) target = $region68
      $region67: #{layer_block_forward.1} parent=5 // pred_region
        %s7938 = ssub.s32 %s28, 2
        // Predicated region
        $region69: #{layer_block_forward.1} parent=67 // pred_check
          %p7939 = pneg %p193
        $region70: #{layer_block_forward.1} parent=67 // pred_check_branch
          %7941 = sbr.rel (%p7939) target = $region72
        $region71: #{layer_block_forward.1} parent=67 // pred_region
          %s7942 = sand.u32 %s178, 1
          %s7943 = scalar_lea.sflag [#allocation4], %s7942
          %s7944 = sand.u32 %s178, 1
          %s7945 = smul.addr %s7944, 32
          %s7946 = scalar_lea.vmem [#allocation5], %s7945
          %7947 = dma.done %s7943, 512
        $region72: #{layer_block_forward.1} parent=67 // pred_fallthru
          _
        // Predicated region
        $region73: #{layer_block_forward.1} parent=67 // pred_check
          %p7948 = pneg %p219
        $region74: #{layer_block_forward.1} parent=67 // pred_check_branch
          %7950 = sbr.rel (%p7948) target = $region76
        $region75: #{layer_block_forward.1} parent=67 // pred_region
          %s7951 = sand.u32 %s34, 1
          %s7952 = scalar_lea.sflag [#allocation7], %s7951
          %s7953 = sand.u32 %s204, 1
          %s7954 = scalar_lea.vmem [#allocation6], %s7953
          %7955 = dma.done %s7952, 16
        $region76: #{layer_block_forward.1} parent=67 // pred_fallthru
          _
        // Predicated region
        $region77: #{layer_block_forward.1} parent=67 // pred_check
          %p7956 = pneg %p245
        $region78: #{layer_block_forward.1} parent=67 // pred_check_branch
          %7958 = sbr.rel (%p7956) target = $region80
        $region79: #{layer_block_forward.1} parent=67 // pred_region
          %s7959 = sand.u32 %s34, 1
          %s7960 = scalar_lea.sflag [#allocation7], %s7959
          %s7961 = sand.u32 %s230, 1
          %s7962 = smul.addr %s7961, 128
          %s7963 = scalar_lea.vmem [#allocation8], %s7962
          %7964 = dma.done %s7960, 2048
        $region80: #{layer_block_forward.1} parent=67 // pred_fallthru
          _
        // Predicated region
        $region81: #{layer_block_forward.1} parent=67 // pred_check
          %p7965 = pneg %p271
        $region82: #{layer_block_forward.1} parent=67 // pred_check_branch
          %7967 = sbr.rel (%p7965) target = $region84
        $region83: #{layer_block_forward.1} parent=67 // pred_region
          %s7968 = sand.u32 %s256, 1
          %s7969 = scalar_lea.sflag [#allocation10], %s7968
          %s7970 = sand.u32 %s256, 1
          %s7971 = smul.addr %s7970, 128
          %s7972 = scalar_lea.vmem [#allocation9], %s7971
          %7973 = dma.done %s7969, 2048
        $region84: #{layer_block_forward.1} parent=67 // pred_fallthru
          _
      $region68: #{layer_block_forward.1} parent=5 // pred_fallthru
        _
    $region6: #{layer_block_forward.1} parent=1 // loop_footer
      %s32 = sadd.s32 1, %s28
    $region7: #{layer_block_forward.1} parent=1 // loop_footer_branch
      %27 = sbr.rel target = $region3
    $region8: #{layer_block_forward.1} parent=1 // loop_exit
      _
    %7974 = vsyncpa [#allocation3], 1
    %s7975 = scalar_lea.sflag [#allocation3], 1
    %7976 = vsyncpa %s7975, 1
    %7977 = vsyncpa [#allocation4], 1
    %s7978 = scalar_lea.sflag [#allocation4], 1
    %7979 = vsyncpa %s7978, 1
    %7980 = vsyncpa [#allocation7], 1
    %s7981 = scalar_lea.sflag [#allocation7], 1
    %7982 = vsyncpa %s7981, 1
    %7983 = vsyncpa [#allocation10], 1
    %s7984 = scalar_lea.sflag [#allocation10], 1
    %7985 = vsyncpa %s7984, 1

</llo_original>
